<compile_context>
chip_gen: v5e
topology: v5e:2x2
jax: 0.10.0
libtpu: 0.0.40
codegen_flags: <defaults>
</compile_context>

<pallas_src>
import jax
import jax.numpy as jnp
from jax.experimental import pallas as pl
from jax.experimental.pallas import tpu as pltpu


# ----------------------------- fused Pallas kernel ---------------------------


def _make_fused_lstm_kernel(L, T, Tc, Bb, E, H, Cp):
    """Kernel for ONE batch block: x (time-major, flattened) -> L LSTM layers
    -> capture h_n[-1] at t=len-1 -> lane-padded FC."""
    chunk_starts = list(range(0, T, Tc))

    def kernel(*refs):
        x_ref = refs[0]                      # (T*Bb, E)   f32
        lens_ref = refs[1]                   # (Bb, 1)     int32
        w_ih_refs = refs[2:2 + L]            # layer 0: (E,4H); others: (H,4H)
        (w_hh_ref,                           # (L, H, 4H)
         b_ref,                              # (L, 1, 4H)
         fcw_ref,                            # (H, Cp)
         fcb_ref,                            # (1, Cp)
         out_ref,                            # (Bb, Cp)
         proj_ref,                           # scratch (Tc*Bb, 4H)
         seq_ref) = refs[2 + L:]             # scratch (T*Bb, H)

        lens = lens_ref[...]                 # (Bb, 1) int32
        h_last = jnp.zeros((Bb, H), jnp.float32)

        for l in range(L):                   # static layer loop
            last_layer = (l == L - 1)
            bias = b_ref[l]                  # (1, 4H), loaded once per layer
            h = jnp.zeros((Bb, H), jnp.float32)
            c = jnp.zeros((Bb, H), jnp.float32)

            for c0 in chunk_starts:          # static time-chunk loop
                csz = min(Tc, T - c0)

                # ---- batched-over-time input projection for this chunk ----
                if l == 0:
                    in2 = x_ref[pl.ds(c0 * Bb, csz * Bb), :]       # (csz*Bb, E)
                else:
                    in2 = seq_ref[pl.ds(c0 * Bb, csz * Bb), :]     # (csz*Bb, H)
                proj_ref[pl.ds(0, csz * Bb), :] = (
                    jnp.dot(in2, w_ih_refs[l][...],
                            preferred_element_type=jnp.float32) + bias)

                # ---- serial recurrence over the chunk ----
                def step(t, carry, c0=c0, l=l, last_layer=last_layer):
                    h, cs, hl = carry
                    base = pl.multiple_of(t * Bb, Bb)
                    gates = proj_ref[pl.ds(base, Bb), :] + jnp.dot(
                        h, w_hh_ref[l],
                        preferred_element_type=jnp.float32)        # (Bb, 4H)
                    # gate order [i, f, o | g]: sigmoid 3H, tanh H only.
                    sig = jax.nn.sigmoid(gates[:, :3 * H])
                    g_g = jnp.tanh(gates[:, 3 * H:])
                    i_g = sig[:, 0:H]
                    f_g = sig[:, H:2 * H]
                    o_g = sig[:, 2 * H:3 * H]
                    c_new = f_g * cs + i_g * g_g
                    h_new = o_g * jnp.tanh(c_new)
                    t_abs = t + c0
                    if last_layer:
                        # capture h_n[-1] at t == len-1 for each batch row
                        hl = jnp.where(lens == t_abs + 1, h_new, hl)
                    else:
                        sb = pl.multiple_of(t_abs * Bb, Bb)
                        seq_ref[pl.ds(sb, Bb), :] = h_new
                    return h_new, c_new, hl

                h, c, h_last = jax.lax.fori_loop(
                    0, csz, step, (h, c, h_last), unroll=min(csz, 8))

        # ---- fused, lane-padded FC on h_n[-1] ----
        out_ref[...] = (
            jnp.dot(h_last, fcw_ref[...], preferred_element_type=jnp.float32)
            + fcb_ref[...])

    return kernel


# ------------------------------- parameters ----------------------------------


def _reorder_gates(w, H):
    """PyTorch gate column order [i | f | g | o] -> [i | f | o | g]."""
    i = w[..., 0 * H:1 * H]
    f = w[..., 1 * H:2 * H]
    g = w[..., 2 * H:3 * H]
    o = w[..., 3 * H:4 * H]
    return jnp.concatenate([i, f, o, g], axis=-1)


def build_params(key, vocab_size, embed_dim, hidden_dim, layer_dim, num_classes):
    keys = jax.random.split(key, 3 + 4 * layer_dim)
    ki = iter(keys)
    H = hidden_dim

    # nn.Embedding: N(0,1) init, padding_idx=-1 row (== vocab_size-1) zeroed.
    emb = jax.random.normal(next(ki), (vocab_size, embed_dim), jnp.float32)
    emb = emb.at[vocab_size - 1].set(0.0)

    bound = 1.0 / jnp.sqrt(hidden_dim)
    w_ih_t, w_hh_t, bias = [], [], []
    for layer in range(layer_dim):
        in_dim = embed_dim if layer == 0 else hidden_dim
        w_ih = jax.random.uniform(next(ki), (4 * H, in_dim),
                                  jnp.float32, -bound, bound)
        w_hh = jax.random.uniform(next(ki), (4 * H, H),
                                  jnp.float32, -bound, bound)
        b_ih = jax.random.uniform(next(ki), (4 * H,), jnp.float32, -bound, bound)
        b_hh = jax.random.uniform(next(ki), (4 * H,), jnp.float32, -bound, bound)
        w_ih_t.append(_reorder_gates(w_ih.T, H))                  # (in_dim, 4H)
        w_hh_t.append(_reorder_gates(w_hh.T, H))                  # (H, 4H)
        bias.append(_reorder_gates((b_ih + b_hh).reshape(1, 4 * H), H))

    fc_w = jax.random.uniform(next(ki), (num_classes, H),
                              jnp.float32, -bound, bound)
    fc_b = jax.random.uniform(next(ki), (num_classes,),
                              jnp.float32, -bound, bound)

    # TODO(synk): bf16 activations/weights with f32 MXU accumulation would
    # halve VMEM/HBM bytes at production H; kept f32 to match the f32 torch ref.
    return {
        "embedding": emb,
        "w_ih_t": tuple(w_ih_t),                # L arrays (different Din for l=0)
        "w_hh_t": jnp.stack(w_hh_t),            # (L, H, 4H)
        "b": jnp.stack(bias),                   # (L, 1, 4H)
        "fc_w_t": fc_w.T,                       # (H, C)
        "fc_b": fc_b.reshape(1, num_classes),   # (1, C)
        "hidden_dim": hidden_dim,
        "layer_dim": layer_dim,
    }


# --------------------------------- forward -----------------------------------


def lstm_model_forward(params, input_ids, input_lens, *, batch_block=8):
    emb_w = params["embedding"]
    H = params["hidden_dim"]
    L = params["layer_dim"]
    C = params["fc_b"].shape[-1]
    B, T = input_ids.shape
    E = emb_w.shape[1]

    Bb = batch_block                       # 8-sublane batch block per grid step
    NB = max(1, -(-B // Bb))
    Bp = NB * Bb

    ids_p = jnp.zeros((Bp, T), input_ids.dtype).at[:B, :].set(input_ids)
    lens_p = jnp.ones((Bp,), jnp.int32).at[:B].set(input_lens.astype(jnp.int32))

    # Embedding lookup + max_norm=5.0 renorm of the looked-up vectors
    # (forward-equivalent to nn.Embedding(max_norm)); laid out per batch block,
    # time-major, so the kernel slab-slices it without reshapes.
    # TODO(synk): fuse the gather into the kernel (scalar-prefetch ids + DMA
    # row gather from an HBM-resident table) to skip this HBM round trip.
    emb = emb_w[ids_p]                                           # (Bp, T, E)
    norms = jnp.linalg.norm(emb, axis=-1, keepdims=True)
    scale = jnp.where(norms > 5.0, 5.0 / (norms + 1e-7), 1.0)
    emb = (emb * scale).astype(jnp.float32)
    x_blk = (emb.reshape(NB, Bb, T, E)
                .transpose(0, 2, 1, 3)
                .reshape(NB, T * Bb, E))                         # (NB, T*Bb, E)

    # Lane-pad FC so the output store is an unmasked full-lane vst.
    Cp = max(128, int(pl.cdiv(C, 128)) * 128)
    fcw = jnp.zeros((H, Cp), jnp.float32).at[:, :C].set(params["fc_w_t"])
    fcb = jnp.zeros((1, Cp), jnp.float32).at[:, :C].set(params["fc_b"])

    # Time chunk so the per-layer projection scratch stays <= ~2 MiB.
    Tc = max(1, min(T, (2 * 1024 * 1024) // (Bb * 4 * H * 4)))

    kernel = _make_fused_lstm_kernel(L, T, Tc, Bb, E, H, Cp)

    def full_spec(shape):
        nd = len(shape)
        return pl.BlockSpec(tuple(shape), lambda b, nd=nd: (0,) * nd)

    in_specs = [
        pl.BlockSpec((None, T * Bb, E), lambda b: (b, 0, 0)),     # x block
        pl.BlockSpec((Bb, 1), lambda b: (b, 0)),                  # lens block
        *[full_spec(w.shape) for w in params["w_ih_t"]],
        full_spec(params["w_hh_t"].shape),
        full_spec(params["b"].shape),
        full_spec(fcw.shape),
        full_spec(fcb.shape),
    ]

    # Scoped-VMEM budget: double-buffered blocks + weights + scratch + slack.
    def nbytes(*arrs):
        return sum(int(a.size) * a.dtype.itemsize for a in arrs)

    weight_bytes = nbytes(*params["w_ih_t"], params["w_hh_t"], params["b"],
                          fcw, fcb)
    est = (2 * (T * Bb * E * 4 + Bb * 4 + Bb * Cp * 4)
           + 2 * weight_bytes
           + Tc * Bb * 4 * H * 4 + T * Bb * H * 4
           + (4 << 20))
    vmem_limit = int(min(max(est, 4 << 20), 64 << 20))

    out_p = pl.pallas_call(
        kernel,
        grid=(NB,),
        out_shape=jax.ShapeDtypeStruct((Bp, Cp), jnp.float32),
        in_specs=in_specs,
        out_specs=pl.BlockSpec((Bb, Cp), lambda b: (b, 0)),
        scratch_shapes=[
            pltpu.VMEM((Tc * Bb, 4 * H), jnp.float32),   # chunked input proj
            pltpu.VMEM((T * Bb, H), jnp.float32),        # inter-layer hiddens
        ],
        compiler_params=pltpu.CompilerParams(
            dimension_semantics=("parallel",),
            vmem_limit_bytes=vmem_limit,
        ),
    )(x_blk, lens_p.reshape(Bp, 1),
      *params["w_ih_t"], params["w_hh_t"], params["b"], fcw, fcb)

    return out_p[:B, :C]


# ----------------------------------- main -------------------------------------


if __name__ == "__main__":
    # Small but representative dims: H=128 keeps gate slices lane-aligned.
    vocab_size, embed_dim, hidden_dim, layer_dim, num_classes = 50, 64, 128, 3, 2
    B, T = 4, 8

    key = jax.random.PRNGKey(0)
    k_param, k_ids = jax.random.split(key)
    params = build_params(k_param, vocab_size, embed_dim, hidden_dim,
                          layer_dim, num_classes)

    input_ids = jax.random.randint(k_ids, (B, T), 0, vocab_size - 1,
                                   dtype=jnp.int32)
    # pack_padded_sequence(enforce_sorted=True) requires descending lengths >= 1.
    input_lens = jnp.array([8, 7, 5, 3], dtype=jnp.int32)

    out = lstm_model_forward(params, input_ids, input_lens)
    out = jax.block_until_ready(out)
    assert out.shape == (B, num_classes) and out.dtype == jnp.float32
    print("KERNEL_OK")
</pallas_src>

<mosaic_0001>
module attributes {stable_mosaic.version = 11 : i64} {
  func.func @kernel(%arg0: i32, %arg1: memref<1x64x64xf32, #tpu.memory_space<vmem>>, %arg2: memref<8x1xi32, #tpu.memory_space<vmem>>, %arg3: memref<64x512xf32, #tpu.memory_space<vmem>>, %arg4: memref<128x512xf32, #tpu.memory_space<vmem>>, %arg5: memref<128x512xf32, #tpu.memory_space<vmem>>, %arg6: memref<3x128x512xf32, #tpu.memory_space<vmem>>, %arg7: memref<3x1x512xf32, #tpu.memory_space<vmem>>, %arg8: memref<128x128xf32, #tpu.memory_space<vmem>>, %arg9: memref<1x128xf32, #tpu.memory_space<vmem>>, %arg10: memref<8x128xf32, #tpu.memory_space<vmem>>, %arg11: memref<64x512xf32, #tpu.memory_space<vmem>>, %arg12: memref<64x128xf32, #tpu.memory_space<vmem>>) attributes {dimension_semantics = [#tpu.dimension_semantics<parallel>], iteration_bounds = array<i64: 1>, scalar_prefetch = 0 : i64, scratch_operands = 2 : i64, tpu.core_type = #tpu.core_type<tc>, window_params = [{transform_indices = @transform_0, window_bounds = array<i64: 1, 64, 64>}, {transform_indices = @transform_1, window_bounds = array<i64: 8, 1>}, {pipeline_mode = #tpu.pipeline_mode<synchronous>, transform_indices = @transform_2, window_bounds = array<i64: 64, 512>}, {pipeline_mode = #tpu.pipeline_mode<synchronous>, transform_indices = @transform_3, window_bounds = array<i64: 128, 512>}, {pipeline_mode = #tpu.pipeline_mode<synchronous>, transform_indices = @transform_4, window_bounds = array<i64: 128, 512>}, {pipeline_mode = #tpu.pipeline_mode<synchronous>, transform_indices = @transform_5, window_bounds = array<i64: 3, 128, 512>}, {pipeline_mode = #tpu.pipeline_mode<synchronous>, transform_indices = @transform_6, window_bounds = array<i64: 3, 1, 512>}, {pipeline_mode = #tpu.pipeline_mode<synchronous>, transform_indices = @transform_7, window_bounds = array<i64: 128, 128>}, {pipeline_mode = #tpu.pipeline_mode<synchronous>, transform_indices = @transform_8, window_bounds = array<i64: 1, 128>}, {transform_indices = @transform_9, window_bounds = array<i64: 8, 128>}]} {
    %c0 = arith.constant 0 : index
    %c0_0 = arith.constant 0 : index
    %0 = vector.load %arg2[%c0, %c0_0] : memref<8x1xi32, #tpu.memory_space<vmem>>, vector<8x1xi32>
    %cst = arith.constant 0.000000e+00 : f32
    %1 = vector.broadcast %cst : f32 to vector<8x128xf32>
    %c0_1 = arith.constant 0 : index
    %c0_2 = arith.constant 0 : index
    %c0_3 = arith.constant 0 : index
    %2 = vector.load %arg7[%c0_1, %c0_2, %c0_3] : memref<3x1x512xf32, #tpu.memory_space<vmem>>, vector<1x1x512xf32>
    %3 = vector.shape_cast %2 : vector<1x1x512xf32> to vector<1x512xf32>
    %cst_4 = arith.constant 0.000000e+00 : f32
    %4 = vector.broadcast %cst_4 : f32 to vector<8x128xf32>
    %cst_5 = arith.constant 0.000000e+00 : f32
    %5 = vector.broadcast %cst_5 : f32 to vector<8x128xf32>
    %c0_6 = arith.constant 0 : index
    %c0_7 = arith.constant 0 : index
    %c0_8 = arith.constant 0 : index
    %6 = vector.load %arg1[%c0_6, %c0_7, %c0_8] : memref<1x64x64xf32, #tpu.memory_space<vmem>>, vector<1x64x64xf32>
    %7 = vector.shape_cast %6 : vector<1x64x64xf32> to vector<64x64xf32>
    %c0_9 = arith.constant 0 : index
    %c0_10 = arith.constant 0 : index
    %8 = vector.load %arg3[%c0_9, %c0_10] : memref<64x512xf32, #tpu.memory_space<vmem>>, vector<64x512xf32>
    %cst_11 = arith.constant dense<0.000000e+00> : vector<64x512xf32>
    %9 = tpu.matmul %7, %8, %cst_11 {dimension_numbers = #tpu.dot_dimension_numbers<[1], [0], [0], [1], [0, 0, 1, 1], [], []>} : vector<64x64xf32>, vector<64x512xf32>, vector<64x512xf32> -> vector<64x512xf32>
    %10 = vector.broadcast %3 : vector<1x512xf32> to vector<64x512xf32>
    %11 = arith.addf %9, %10 : vector<64x512xf32>
    %c0_12 = arith.constant 0 : index
    %c0_13 = arith.constant 0 : index
    %12 = vector.load %arg11[%c0_12, %c0_13] : memref<64x512xf32, #tpu.memory_space<vmem>>, vector<64x512xf32>
    tpu.vector_store %arg11[%c0_12, %c0_13], %11 {strides = array<i32>} : memref<64x512xf32, #tpu.memory_space<vmem>>, vector<64x512xf32>,
    %c0_i32 = arith.constant 0 : i32
    %c8_i32 = arith.constant 8 : i32
    %13 = arith.muli %c0_i32, %c8_i32 : i32
    %14 = tpu.assume_multiple %13, 8 : i32
    %15 = arith.index_cast %14 : i32 to index
    %c0_14 = arith.constant 0 : index
    %16 = vector.load %arg11[%15, %c0_14] : memref<64x512xf32, #tpu.memory_space<vmem>>, vector<8x512xf32>
    %c0_15 = arith.constant 0 : index
    %c0_16 = arith.constant 0 : index
    %c0_17 = arith.constant 0 : index
    %17 = vector.load %arg6[%c0_15, %c0_16, %c0_17] : memref<3x128x512xf32, #tpu.memory_space<vmem>>, vector<1x128x512xf32>
    %18 = vector.shape_cast %17 : vector<1x128x512xf32> to vector<128x512xf32>
    %cst_18 = arith.constant dense<0.000000e+00> : vector<8x512xf32>
    %19 = tpu.matmul %4, %18, %cst_18 {dimension_numbers = #tpu.dot_dimension_numbers<[1], [0], [0], [1], [0, 0, 1, 1], [], []>} : vector<8x128xf32>, vector<128x512xf32>, vector<8x512xf32> -> vector<8x512xf32>
    %20 = arith.addf %16, %19 : vector<8x512xf32>
    %21 = vector.extract_strided_slice %20 {offsets = [0, 0], sizes = [8, 384], strides = [1, 1]} : vector<8x512xf32> to vector<8x384xf32>
    %22 = arith.negf %21 : vector<8x384xf32>
    %23 = math.exp %22 : vector<8x384xf32>
    %cst_19 = arith.constant 1.000000e+00 : f32
    %24 = vector.broadcast %cst_19 : f32 to vector<8x384xf32>
    %25 = arith.addf %24, %23 : vector<8x384xf32>
    %26 = arith.divf %24, %25 : vector<8x384xf32>
    %27 = vector.extract_strided_slice %20 {offsets = [0, 384], sizes = [8, 128], strides = [1, 1]} : vector<8x512xf32> to vector<8x128xf32>
    %28 = math.tanh %27 : vector<8x128xf32>
    %29 = vector.extract_strided_slice %26 {offsets = [0, 0], sizes = [8, 128], strides = [1, 1]} : vector<8x384xf32> to vector<8x128xf32>
    %30 = vector.extract_strided_slice %26 {offsets = [0, 128], sizes = [8, 128], strides = [1, 1]} : vector<8x384xf32> to vector<8x128xf32>
    %31 = vector.extract_strided_slice %26 {offsets = [0, 256], sizes = [8, 128], strides = [1, 1]} : vector<8x384xf32> to vector<8x128xf32>
    %32 = arith.mulf %30, %5 : vector<8x128xf32>
    %33 = arith.mulf %29, %28 : vector<8x128xf32>
    %34 = arith.addf %32, %33 : vector<8x128xf32>
    %35 = math.tanh %34 : vector<8x128xf32>
    %36 = arith.mulf %31, %35 : vector<8x128xf32>
    %c0_i32_20 = arith.constant 0 : i32
    %37 = arith.addi %c0_i32, %c0_i32_20 : i32
    %c8_i32_21 = arith.constant 8 : i32
    %38 = arith.muli %37, %c8_i32_21 : i32
    %39 = tpu.assume_multiple %38, 8 : i32
    %40 = arith.index_cast %39 : i32 to index
    %c0_22 = arith.constant 0 : index
    %41 = vector.load %arg12[%40, %c0_22] : memref<64x128xf32, #tpu.memory_space<vmem>>, vector<8x128xf32>
    tpu.vector_store %arg12[%40, %c0_22], %36 {strides = array<i32>} : memref<64x128xf32, #tpu.memory_space<vmem>>, vector<8x128xf32>,
    %c1_i32 = arith.constant 1 : i32
    %c8_i32_23 = arith.constant 8 : i32
    %42 = arith.muli %c1_i32, %c8_i32_23 : i32
    %43 = tpu.assume_multiple %42, 8 : i32
    %44 = arith.index_cast %43 : i32 to index
    %c0_24 = arith.constant 0 : index
    %45 = vector.load %arg11[%44, %c0_24] : memref<64x512xf32, #tpu.memory_space<vmem>>, vector<8x512xf32>
    %c0_25 = arith.constant 0 : index
    %c0_26 = arith.constant 0 : index
    %c0_27 = arith.constant 0 : index
    %46 = vector.load %arg6[%c0_25, %c0_26, %c0_27] : memref<3x128x512xf32, #tpu.memory_space<vmem>>, vector<1x128x512xf32>
    %47 = vector.shape_cast %46 : vector<1x128x512xf32> to vector<128x512xf32>
    %cst_28 = arith.constant dense<0.000000e+00> : vector<8x512xf32>
    %48 = tpu.matmul %36, %47, %cst_28 {dimension_numbers = #tpu.dot_dimension_numbers<[1], [0], [0], [1], [0, 0, 1, 1], [], []>} : vector<8x128xf32>, vector<128x512xf32>, vector<8x512xf32> -> vector<8x512xf32>
    %49 = arith.addf %45, %48 : vector<8x512xf32>
    %50 = vector.extract_strided_slice %49 {offsets = [0, 0], sizes = [8, 384], strides = [1, 1]} : vector<8x512xf32> to vector<8x384xf32>
    %51 = arith.negf %50 : vector<8x384xf32>
    %52 = math.exp %51 : vector<8x384xf32>
    %cst_29 = arith.constant 1.000000e+00 : f32
    %53 = vector.broadcast %cst_29 : f32 to vector<8x384xf32>
    %54 = arith.addf %53, %52 : vector<8x384xf32>
    %55 = arith.divf %53, %54 : vector<8x384xf32>
    %56 = vector.extract_strided_slice %49 {offsets = [0, 384], sizes = [8, 128], strides = [1, 1]} : vector<8x512xf32> to vector<8x128xf32>
    %57 = math.tanh %56 : vector<8x128xf32>
    %58 = vector.extract_strided_slice %55 {offsets = [0, 0], sizes = [8, 128], strides = [1, 1]} : vector<8x384xf32> to vector<8x128xf32>
    %59 = vector.extract_strided_slice %55 {offsets = [0, 128], sizes = [8, 128], strides = [1, 1]} : vector<8x384xf32> to vector<8x128xf32>
    %60 = vector.extract_strided_slice %55 {offsets = [0, 256], sizes = [8, 128], strides = [1, 1]} : vector<8x384xf32> to vector<8x128xf32>
    %61 = arith.mulf %59, %34 : vector<8x128xf32>
    %62 = arith.mulf %58, %57 : vector<8x128xf32>
    %63 = arith.addf %61, %62 : vector<8x128xf32>
    %64 = math.tanh %63 : vector<8x128xf32>
    %65 = arith.mulf %60, %64 : vector<8x128xf32>
    %c0_i32_30 = arith.constant 0 : i32
    %66 = arith.addi %c1_i32, %c0_i32_30 : i32
    %c8_i32_31 = arith.constant 8 : i32
    %67 = arith.muli %66, %c8_i32_31 : i32
    %68 = tpu.assume_multiple %67, 8 : i32
    %69 = arith.index_cast %68 : i32 to index
    %c0_32 = arith.constant 0 : index
    %70 = vector.load %arg12[%69, %c0_32] : memref<64x128xf32, #tpu.memory_space<vmem>>, vector<8x128xf32>
    tpu.vector_store %arg12[%69, %c0_32], %65 {strides = array<i32>} : memref<64x128xf32, #tpu.memory_space<vmem>>, vector<8x128xf32>,
    %c2_i32 = arith.constant 2 : i32
    %c8_i32_33 = arith.constant 8 : i32
    %71 = arith.muli %c2_i32, %c8_i32_33 : i32
    %72 = tpu.assume_multiple %71, 8 : i32
    %73 = arith.index_cast %72 : i32 to index
    %c0_34 = arith.constant 0 : index
    %74 = vector.load %arg11[%73, %c0_34] : memref<64x512xf32, #tpu.memory_space<vmem>>, vector<8x512xf32>
    %c0_35 = arith.constant 0 : index
    %c0_36 = arith.constant 0 : index
    %c0_37 = arith.constant 0 : index
    %75 = vector.load %arg6[%c0_35, %c0_36, %c0_37] : memref<3x128x512xf32, #tpu.memory_space<vmem>>, vector<1x128x512xf32>
    %76 = vector.shape_cast %75 : vector<1x128x512xf32> to vector<128x512xf32>
    %cst_38 = arith.constant dense<0.000000e+00> : vector<8x512xf32>
    %77 = tpu.matmul %65, %76, %cst_38 {dimension_numbers = #tpu.dot_dimension_numbers<[1], [0], [0], [1], [0, 0, 1, 1], [], []>} : vector<8x128xf32>, vector<128x512xf32>, vector<8x512xf32> -> vector<8x512xf32>
    %78 = arith.addf %74, %77 : vector<8x512xf32>
    %79 = vector.extract_strided_slice %78 {offsets = [0, 0], sizes = [8, 384], strides = [1, 1]} : vector<8x512xf32> to vector<8x384xf32>
    %80 = arith.negf %79 : vector<8x384xf32>
    %81 = math.exp %80 : vector<8x384xf32>
    %cst_39 = arith.constant 1.000000e+00 : f32
    %82 = vector.broadcast %cst_39 : f32 to vector<8x384xf32>
    %83 = arith.addf %82, %81 : vector<8x384xf32>
    %84 = arith.divf %82, %83 : vector<8x384xf32>
    %85 = vector.extract_strided_slice %78 {offsets = [0, 384], sizes = [8, 128], strides = [1, 1]} : vector<8x512xf32> to vector<8x128xf32>
    %86 = math.tanh %85 : vector<8x128xf32>
    %87 = vector.extract_strided_slice %84 {offsets = [0, 0], sizes = [8, 128], strides = [1, 1]} : vector<8x384xf32> to vector<8x128xf32>
    %88 = vector.extract_strided_slice %84 {offsets = [0, 128], sizes = [8, 128], strides = [1, 1]} : vector<8x384xf32> to vector<8x128xf32>
    %89 = vector.extract_strided_slice %84 {offsets = [0, 256], sizes = [8, 128], strides = [1, 1]} : vector<8x384xf32> to vector<8x128xf32>
    %90 = arith.mulf %88, %63 : vector<8x128xf32>
    %91 = arith.mulf %87, %86 : vector<8x128xf32>
    %92 = arith.addf %90, %91 : vector<8x128xf32>
    %93 = math.tanh %92 : vector<8x128xf32>
    %94 = arith.mulf %89, %93 : vector<8x128xf32>
    %c0_i32_40 = arith.constant 0 : i32
    %95 = arith.addi %c2_i32, %c0_i32_40 : i32
    %c8_i32_41 = arith.constant 8 : i32
    %96 = arith.muli %95, %c8_i32_41 : i32
    %97 = tpu.assume_multiple %96, 8 : i32
    %98 = arith.index_cast %97 : i32 to index
    %c0_42 = arith.constant 0 : index
    %99 = vector.load %arg12[%98, %c0_42] : memref<64x128xf32, #tpu.memory_space<vmem>>, vector<8x128xf32>
    tpu.vector_store %arg12[%98, %c0_42], %94 {strides = array<i32>} : memref<64x128xf32, #tpu.memory_space<vmem>>, vector<8x128xf32>,
    %c3_i32 = arith.constant 3 : i32
    %c8_i32_43 = arith.constant 8 : i32
    %100 = arith.muli %c3_i32, %c8_i32_43 : i32
    %101 = tpu.assume_multiple %100, 8 : i32
    %102 = arith.index_cast %101 : i32 to index
    %c0_44 = arith.constant 0 : index
    %103 = vector.load %arg11[%102, %c0_44] : memref<64x512xf32, #tpu.memory_space<vmem>>, vector<8x512xf32>
    %c0_45 = arith.constant 0 : index
    %c0_46 = arith.constant 0 : index
    %c0_47 = arith.constant 0 : index
    %104 = vector.load %arg6[%c0_45, %c0_46, %c0_47] : memref<3x128x512xf32, #tpu.memory_space<vmem>>, vector<1x128x512xf32>
    %105 = vector.shape_cast %104 : vector<1x128x512xf32> to vector<128x512xf32>
    %cst_48 = arith.constant dense<0.000000e+00> : vector<8x512xf32>
    %106 = tpu.matmul %94, %105, %cst_48 {dimension_numbers = #tpu.dot_dimension_numbers<[1], [0], [0], [1], [0, 0, 1, 1], [], []>} : vector<8x128xf32>, vector<128x512xf32>, vector<8x512xf32> -> vector<8x512xf32>
    %107 = arith.addf %103, %106 : vector<8x512xf32>
    %108 = vector.extract_strided_slice %107 {offsets = [0, 0], sizes = [8, 384], strides = [1, 1]} : vector<8x512xf32> to vector<8x384xf32>
    %109 = arith.negf %108 : vector<8x384xf32>
    %110 = math.exp %109 : vector<8x384xf32>
    %cst_49 = arith.constant 1.000000e+00 : f32
    %111 = vector.broadcast %cst_49 : f32 to vector<8x384xf32>
    %112 = arith.addf %111, %110 : vector<8x384xf32>
    %113 = arith.divf %111, %112 : vector<8x384xf32>
    %114 = vector.extract_strided_slice %107 {offsets = [0, 384], sizes = [8, 128], strides = [1, 1]} : vector<8x512xf32> to vector<8x128xf32>
    %115 = math.tanh %114 : vector<8x128xf32>
    %116 = vector.extract_strided_slice %113 {offsets = [0, 0], sizes = [8, 128], strides = [1, 1]} : vector<8x384xf32> to vector<8x128xf32>
    %117 = vector.extract_strided_slice %113 {offsets = [0, 128], sizes = [8, 128], strides = [1, 1]} : vector<8x384xf32> to vector<8x128xf32>
    %118 = vector.extract_strided_slice %113 {offsets = [0, 256], sizes = [8, 128], strides = [1, 1]} : vector<8x384xf32> to vector<8x128xf32>
    %119 = arith.mulf %117, %92 : vector<8x128xf32>
    %120 = arith.mulf %116, %115 : vector<8x128xf32>
    %121 = arith.addf %119, %120 : vector<8x128xf32>
    %122 = math.tanh %121 : vector<8x128xf32>
    %123 = arith.mulf %118, %122 : vector<8x128xf32>
    %c0_i32_50 = arith.constant 0 : i32
    %124 = arith.addi %c3_i32, %c0_i32_50 : i32
    %c8_i32_51 = arith.constant 8 : i32
    %125 = arith.muli %124, %c8_i32_51 : i32
    %126 = tpu.assume_multiple %125, 8 : i32
    %127 = arith.index_cast %126 : i32 to index
    %c0_52 = arith.constant 0 : index
    %128 = vector.load %arg12[%127, %c0_52] : memref<64x128xf32, #tpu.memory_space<vmem>>, vector<8x128xf32>
    tpu.vector_store %arg12[%127, %c0_52], %123 {strides = array<i32>} : memref<64x128xf32, #tpu.memory_space<vmem>>, vector<8x128xf32>,
    %c4_i32 = arith.constant 4 : i32
    %c8_i32_53 = arith.constant 8 : i32
    %129 = arith.muli %c4_i32, %c8_i32_53 : i32
    %130 = tpu.assume_multiple %129, 8 : i32
    %131 = arith.index_cast %130 : i32 to index
    %c0_54 = arith.constant 0 : index
    %132 = vector.load %arg11[%131, %c0_54] : memref<64x512xf32, #tpu.memory_space<vmem>>, vector<8x512xf32>
    %c0_55 = arith.constant 0 : index
    %c0_56 = arith.constant 0 : index
    %c0_57 = arith.constant 0 : index
    %133 = vector.load %arg6[%c0_55, %c0_56, %c0_57] : memref<3x128x512xf32, #tpu.memory_space<vmem>>, vector<1x128x512xf32>
    %134 = vector.shape_cast %133 : vector<1x128x512xf32> to vector<128x512xf32>
    %cst_58 = arith.constant dense<0.000000e+00> : vector<8x512xf32>
    %135 = tpu.matmul %123, %134, %cst_58 {dimension_numbers = #tpu.dot_dimension_numbers<[1], [0], [0], [1], [0, 0, 1, 1], [], []>} : vector<8x128xf32>, vector<128x512xf32>, vector<8x512xf32> -> vector<8x512xf32>
    %136 = arith.addf %132, %135 : vector<8x512xf32>
    %137 = vector.extract_strided_slice %136 {offsets = [0, 0], sizes = [8, 384], strides = [1, 1]} : vector<8x512xf32> to vector<8x384xf32>
    %138 = arith.negf %137 : vector<8x384xf32>
    %139 = math.exp %138 : vector<8x384xf32>
    %cst_59 = arith.constant 1.000000e+00 : f32
    %140 = vector.broadcast %cst_59 : f32 to vector<8x384xf32>
    %141 = arith.addf %140, %139 : vector<8x384xf32>
    %142 = arith.divf %140, %141 : vector<8x384xf32>
    %143 = vector.extract_strided_slice %136 {offsets = [0, 384], sizes = [8, 128], strides = [1, 1]} : vector<8x512xf32> to vector<8x128xf32>
    %144 = math.tanh %143 : vector<8x128xf32>
    %145 = vector.extract_strided_slice %142 {offsets = [0, 0], sizes = [8, 128], strides = [1, 1]} : vector<8x384xf32> to vector<8x128xf32>
    %146 = vector.extract_strided_slice %142 {offsets = [0, 128], sizes = [8, 128], strides = [1, 1]} : vector<8x384xf32> to vector<8x128xf32>
    %147 = vector.extract_strided_slice %142 {offsets = [0, 256], sizes = [8, 128], strides = [1, 1]} : vector<8x384xf32> to vector<8x128xf32>
    %148 = arith.mulf %146, %121 : vector<8x128xf32>
    %149 = arith.mulf %145, %144 : vector<8x128xf32>
    %150 = arith.addf %148, %149 : vector<8x128xf32>
    %151 = math.tanh %150 : vector<8x128xf32>
    %152 = arith.mulf %147, %151 : vector<8x128xf32>
    %c0_i32_60 = arith.constant 0 : i32
    %153 = arith.addi %c4_i32, %c0_i32_60 : i32
    %c8_i32_61 = arith.constant 8 : i32
    %154 = arith.muli %153, %c8_i32_61 : i32
    %155 = tpu.assume_multiple %154, 8 : i32
    %156 = arith.index_cast %155 : i32 to index
    %c0_62 = arith.constant 0 : index
    %157 = vector.load %arg12[%156, %c0_62] : memref<64x128xf32, #tpu.memory_space<vmem>>, vector<8x128xf32>
    tpu.vector_store %arg12[%156, %c0_62], %152 {strides = array<i32>} : memref<64x128xf32, #tpu.memory_space<vmem>>, vector<8x128xf32>,
    %c5_i32 = arith.constant 5 : i32
    %c8_i32_63 = arith.constant 8 : i32
    %158 = arith.muli %c5_i32, %c8_i32_63 : i32
    %159 = tpu.assume_multiple %158, 8 : i32
    %160 = arith.index_cast %159 : i32 to index
    %c0_64 = arith.constant 0 : index
    %161 = vector.load %arg11[%160, %c0_64] : memref<64x512xf32, #tpu.memory_space<vmem>>, vector<8x512xf32>
    %c0_65 = arith.constant 0 : index
    %c0_66 = arith.constant 0 : index
    %c0_67 = arith.constant 0 : index
    %162 = vector.load %arg6[%c0_65, %c0_66, %c0_67] : memref<3x128x512xf32, #tpu.memory_space<vmem>>, vector<1x128x512xf32>
    %163 = vector.shape_cast %162 : vector<1x128x512xf32> to vector<128x512xf32>
    %cst_68 = arith.constant dense<0.000000e+00> : vector<8x512xf32>
    %164 = tpu.matmul %152, %163, %cst_68 {dimension_numbers = #tpu.dot_dimension_numbers<[1], [0], [0], [1], [0, 0, 1, 1], [], []>} : vector<8x128xf32>, vector<128x512xf32>, vector<8x512xf32> -> vector<8x512xf32>
    %165 = arith.addf %161, %164 : vector<8x512xf32>
    %166 = vector.extract_strided_slice %165 {offsets = [0, 0], sizes = [8, 384], strides = [1, 1]} : vector<8x512xf32> to vector<8x384xf32>
    %167 = arith.negf %166 : vector<8x384xf32>
    %168 = math.exp %167 : vector<8x384xf32>
    %cst_69 = arith.constant 1.000000e+00 : f32
    %169 = vector.broadcast %cst_69 : f32 to vector<8x384xf32>
    %170 = arith.addf %169, %168 : vector<8x384xf32>
    %171 = arith.divf %169, %170 : vector<8x384xf32>
    %172 = vector.extract_strided_slice %165 {offsets = [0, 384], sizes = [8, 128], strides = [1, 1]} : vector<8x512xf32> to vector<8x128xf32>
    %173 = math.tanh %172 : vector<8x128xf32>
    %174 = vector.extract_strided_slice %171 {offsets = [0, 0], sizes = [8, 128], strides = [1, 1]} : vector<8x384xf32> to vector<8x128xf32>
    %175 = vector.extract_strided_slice %171 {offsets = [0, 128], sizes = [8, 128], strides = [1, 1]} : vector<8x384xf32> to vector<8x128xf32>
    %176 = vector.extract_strided_slice %171 {offsets = [0, 256], sizes = [8, 128], strides = [1, 1]} : vector<8x384xf32> to vector<8x128xf32>
    %177 = arith.mulf %175, %150 : vector<8x128xf32>
    %178 = arith.mulf %174, %173 : vector<8x128xf32>
    %179 = arith.addf %177, %178 : vector<8x128xf32>
    %180 = math.tanh %179 : vector<8x128xf32>
    %181 = arith.mulf %176, %180 : vector<8x128xf32>
    %c0_i32_70 = arith.constant 0 : i32
    %182 = arith.addi %c5_i32, %c0_i32_70 : i32
    %c8_i32_71 = arith.constant 8 : i32
    %183 = arith.muli %182, %c8_i32_71 : i32
    %184 = tpu.assume_multiple %183, 8 : i32
    %185 = arith.index_cast %184 : i32 to index
    %c0_72 = arith.constant 0 : index
    %186 = vector.load %arg12[%185, %c0_72] : memref<64x128xf32, #tpu.memory_space<vmem>>, vector<8x128xf32>
    tpu.vector_store %arg12[%185, %c0_72], %181 {strides = array<i32>} : memref<64x128xf32, #tpu.memory_space<vmem>>, vector<8x128xf32>,
    %c6_i32 = arith.constant 6 : i32
    %c8_i32_73 = arith.constant 8 : i32
    %187 = arith.muli %c6_i32, %c8_i32_73 : i32
    %188 = tpu.assume_multiple %187, 8 : i32
    %189 = arith.index_cast %188 : i32 to index
    %c0_74 = arith.constant 0 : index
    %190 = vector.load %arg11[%189, %c0_74] : memref<64x512xf32, #tpu.memory_space<vmem>>, vector<8x512xf32>
    %c0_75 = arith.constant 0 : index
    %c0_76 = arith.constant 0 : index
    %c0_77 = arith.constant 0 : index
    %191 = vector.load %arg6[%c0_75, %c0_76, %c0_77] : memref<3x128x512xf32, #tpu.memory_space<vmem>>, vector<1x128x512xf32>
    %192 = vector.shape_cast %191 : vector<1x128x512xf32> to vector<128x512xf32>
    %cst_78 = arith.constant dense<0.000000e+00> : vector<8x512xf32>
    %193 = tpu.matmul %181, %192, %cst_78 {dimension_numbers = #tpu.dot_dimension_numbers<[1], [0], [0], [1], [0, 0, 1, 1], [], []>} : vector<8x128xf32>, vector<128x512xf32>, vector<8x512xf32> -> vector<8x512xf32>
    %194 = arith.addf %190, %193 : vector<8x512xf32>
    %195 = vector.extract_strided_slice %194 {offsets = [0, 0], sizes = [8, 384], strides = [1, 1]} : vector<8x512xf32> to vector<8x384xf32>
    %196 = arith.negf %195 : vector<8x384xf32>
    %197 = math.exp %196 : vector<8x384xf32>
    %cst_79 = arith.constant 1.000000e+00 : f32
    %198 = vector.broadcast %cst_79 : f32 to vector<8x384xf32>
    %199 = arith.addf %198, %197 : vector<8x384xf32>
    %200 = arith.divf %198, %199 : vector<8x384xf32>
    %201 = vector.extract_strided_slice %194 {offsets = [0, 384], sizes = [8, 128], strides = [1, 1]} : vector<8x512xf32> to vector<8x128xf32>
    %202 = math.tanh %201 : vector<8x128xf32>
    %203 = vector.extract_strided_slice %200 {offsets = [0, 0], sizes = [8, 128], strides = [1, 1]} : vector<8x384xf32> to vector<8x128xf32>
    %204 = vector.extract_strided_slice %200 {offsets = [0, 128], sizes = [8, 128], strides = [1, 1]} : vector<8x384xf32> to vector<8x128xf32>
    %205 = vector.extract_strided_slice %200 {offsets = [0, 256], sizes = [8, 128], strides = [1, 1]} : vector<8x384xf32> to vector<8x128xf32>
    %206 = arith.mulf %204, %179 : vector<8x128xf32>
    %207 = arith.mulf %203, %202 : vector<8x128xf32>
    %208 = arith.addf %206, %207 : vector<8x128xf32>
    %209 = math.tanh %208 : vector<8x128xf32>
    %210 = arith.mulf %205, %209 : vector<8x128xf32>
    %c0_i32_80 = arith.constant 0 : i32
    %211 = arith.addi %c6_i32, %c0_i32_80 : i32
    %c8_i32_81 = arith.constant 8 : i32
    %212 = arith.muli %211, %c8_i32_81 : i32
    %213 = tpu.assume_multiple %212, 8 : i32
    %214 = arith.index_cast %213 : i32 to index
    %c0_82 = arith.constant 0 : index
    %215 = vector.load %arg12[%214, %c0_82] : memref<64x128xf32, #tpu.memory_space<vmem>>, vector<8x128xf32>
    tpu.vector_store %arg12[%214, %c0_82], %210 {strides = array<i32>} : memref<64x128xf32, #tpu.memory_space<vmem>>, vector<8x128xf32>,
    %c7_i32 = arith.constant 7 : i32
    %c8_i32_83 = arith.constant 8 : i32
    %216 = arith.muli %c7_i32, %c8_i32_83 : i32
    %217 = tpu.assume_multiple %216, 8 : i32
    %218 = arith.index_cast %217 : i32 to index
    %c0_84 = arith.constant 0 : index
    %219 = vector.load %arg11[%218, %c0_84] : memref<64x512xf32, #tpu.memory_space<vmem>>, vector<8x512xf32>
    %c0_85 = arith.constant 0 : index
    %c0_86 = arith.constant 0 : index
    %c0_87 = arith.constant 0 : index
    %220 = vector.load %arg6[%c0_85, %c0_86, %c0_87] : memref<3x128x512xf32, #tpu.memory_space<vmem>>, vector<1x128x512xf32>
    %221 = vector.shape_cast %220 : vector<1x128x512xf32> to vector<128x512xf32>
    %cst_88 = arith.constant dense<0.000000e+00> : vector<8x512xf32>
    %222 = tpu.matmul %210, %221, %cst_88 {dimension_numbers = #tpu.dot_dimension_numbers<[1], [0], [0], [1], [0, 0, 1, 1], [], []>} : vector<8x128xf32>, vector<128x512xf32>, vector<8x512xf32> -> vector<8x512xf32>
    %223 = arith.addf %219, %222 : vector<8x512xf32>
    %224 = vector.extract_strided_slice %223 {offsets = [0, 0], sizes = [8, 384], strides = [1, 1]} : vector<8x512xf32> to vector<8x384xf32>
    %225 = arith.negf %224 : vector<8x384xf32>
    %226 = math.exp %225 : vector<8x384xf32>
    %cst_89 = arith.constant 1.000000e+00 : f32
    %227 = vector.broadcast %cst_89 : f32 to vector<8x384xf32>
    %228 = arith.addf %227, %226 : vector<8x384xf32>
    %229 = arith.divf %227, %228 : vector<8x384xf32>
    %230 = vector.extract_strided_slice %223 {offsets = [0, 384], sizes = [8, 128], strides = [1, 1]} : vector<8x512xf32> to vector<8x128xf32>
    %231 = math.tanh %230 : vector<8x128xf32>
    %232 = vector.extract_strided_slice %229 {offsets = [0, 0], sizes = [8, 128], strides = [1, 1]} : vector<8x384xf32> to vector<8x128xf32>
    %233 = vector.extract_strided_slice %229 {offsets = [0, 128], sizes = [8, 128], strides = [1, 1]} : vector<8x384xf32> to vector<8x128xf32>
    %234 = vector.extract_strided_slice %229 {offsets = [0, 256], sizes = [8, 128], strides = [1, 1]} : vector<8x384xf32> to vector<8x128xf32>
    %235 = arith.mulf %233, %208 : vector<8x128xf32>
    %236 = arith.mulf %232, %231 : vector<8x128xf32>
    %237 = arith.addf %235, %236 : vector<8x128xf32>
    %238 = math.tanh %237 : vector<8x128xf32>
    %239 = arith.mulf %234, %238 : vector<8x128xf32>
    %c0_i32_90 = arith.constant 0 : i32
    %240 = arith.addi %c7_i32, %c0_i32_90 : i32
    %c8_i32_91 = arith.constant 8 : i32
    %241 = arith.muli %240, %c8_i32_91 : i32
    %242 = tpu.assume_multiple %241, 8 : i32
    %243 = arith.index_cast %242 : i32 to index
    %c0_92 = arith.constant 0 : index
    %244 = vector.load %arg12[%243, %c0_92] : memref<64x128xf32, #tpu.memory_space<vmem>>, vector<8x128xf32>
    tpu.vector_store %arg12[%243, %c0_92], %239 {strides = array<i32>} : memref<64x128xf32, #tpu.memory_space<vmem>>, vector<8x128xf32>,
    %c8_i32_93 = arith.constant 8 : i32
    %c1 = arith.constant 1 : index
    %c0_94 = arith.constant 0 : index
    %c0_95 = arith.constant 0 : index
    %245 = vector.load %arg7[%c1, %c0_94, %c0_95] : memref<3x1x512xf32, #tpu.memory_space<vmem>>, vector<1x1x512xf32>
    %246 = vector.shape_cast %245 : vector<1x1x512xf32> to vector<1x512xf32>
    %cst_96 = arith.constant 0.000000e+00 : f32
    %247 = vector.broadcast %cst_96 : f32 to vector<8x128xf32>
    %cst_97 = arith.constant 0.000000e+00 : f32
    %248 = vector.broadcast %cst_97 : f32 to vector<8x128xf32>
    %c0_98 = arith.constant 0 : index
    %c0_99 = arith.constant 0 : index
    %249 = vector.load %arg12[%c0_98, %c0_99] : memref<64x128xf32, #tpu.memory_space<vmem>>, vector<64x128xf32>
    %c0_100 = arith.constant 0 : index
    %c0_101 = arith.constant 0 : index
    %250 = vector.load %arg4[%c0_100, %c0_101] : memref<128x512xf32, #tpu.memory_space<vmem>>, vector<128x512xf32>
    %cst_102 = arith.constant dense<0.000000e+00> : vector<64x512xf32>
    %251 = tpu.matmul %249, %250, %cst_102 {dimension_numbers = #tpu.dot_dimension_numbers<[1], [0], [0], [1], [0, 0, 1, 1], [], []>} : vector<64x128xf32>, vector<128x512xf32>, vector<64x512xf32> -> vector<64x512xf32>
    %252 = vector.broadcast %246 : vector<1x512xf32> to vector<64x512xf32>
    %253 = arith.addf %251, %252 : vector<64x512xf32>
    %c0_103 = arith.constant 0 : index
    %c0_104 = arith.constant 0 : index
    %254 = vector.load %arg11[%c0_103, %c0_104] : memref<64x512xf32, #tpu.memory_space<vmem>>, vector<64x512xf32>
    tpu.vector_store %arg11[%c0_103, %c0_104], %253 {strides = array<i32>} : memref<64x512xf32, #tpu.memory_space<vmem>>, vector<64x512xf32>,
    %c0_i32_105 = arith.constant 0 : i32
    %c8_i32_106 = arith.constant 8 : i32
    %255 = arith.muli %c0_i32_105, %c8_i32_106 : i32
    %256 = tpu.assume_multiple %255, 8 : i32
    %257 = arith.index_cast %256 : i32 to index
    %c0_107 = arith.constant 0 : index
    %258 = vector.load %arg11[%257, %c0_107] : memref<64x512xf32, #tpu.memory_space<vmem>>, vector<8x512xf32>
    %c1_108 = arith.constant 1 : index
    %c0_109 = arith.constant 0 : index
    %c0_110 = arith.constant 0 : index
    %259 = vector.load %arg6[%c1_108, %c0_109, %c0_110] : memref<3x128x512xf32, #tpu.memory_space<vmem>>, vector<1x128x512xf32>
    %260 = vector.shape_cast %259 : vector<1x128x512xf32> to vector<128x512xf32>
    %cst_111 = arith.constant dense<0.000000e+00> : vector<8x512xf32>
    %261 = tpu.matmul %247, %260, %cst_111 {dimension_numbers = #tpu.dot_dimension_numbers<[1], [0], [0], [1], [0, 0, 1, 1], [], []>} : vector<8x128xf32>, vector<128x512xf32>, vector<8x512xf32> -> vector<8x512xf32>
    %262 = arith.addf %258, %261 : vector<8x512xf32>
    %263 = vector.extract_strided_slice %262 {offsets = [0, 0], sizes = [8, 384], strides = [1, 1]} : vector<8x512xf32> to vector<8x384xf32>
    %264 = arith.negf %263 : vector<8x384xf32>
    %265 = math.exp %264 : vector<8x384xf32>
    %cst_112 = arith.constant 1.000000e+00 : f32
    %266 = vector.broadcast %cst_112 : f32 to vector<8x384xf32>
    %267 = arith.addf %266, %265 : vector<8x384xf32>
    %268 = arith.divf %266, %267 : vector<8x384xf32>
    %269 = vector.extract_strided_slice %262 {offsets = [0, 384], sizes = [8, 128], strides = [1, 1]} : vector<8x512xf32> to vector<8x128xf32>
    %270 = math.tanh %269 : vector<8x128xf32>
    %271 = vector.extract_strided_slice %268 {offsets = [0, 0], sizes = [8, 128], strides = [1, 1]} : vector<8x384xf32> to vector<8x128xf32>
    %272 = vector.extract_strided_slice %268 {offsets = [0, 128], sizes = [8, 128], strides = [1, 1]} : vector<8x384xf32> to vector<8x128xf32>
    %273 = vector.extract_strided_slice %268 {offsets = [0, 256], sizes = [8, 128], strides = [1, 1]} : vector<8x384xf32> to vector<8x128xf32>
    %274 = arith.mulf %272, %248 : vector<8x128xf32>
    %275 = arith.mulf %271, %270 : vector<8x128xf32>
    %276 = arith.addf %274, %275 : vector<8x128xf32>
    %277 = math.tanh %276 : vector<8x128xf32>
    %278 = arith.mulf %273, %277 : vector<8x128xf32>
    %c0_i32_113 = arith.constant 0 : i32
    %279 = arith.addi %c0_i32_105, %c0_i32_113 : i32
    %c8_i32_114 = arith.constant 8 : i32
    %280 = arith.muli %279, %c8_i32_114 : i32
    %281 = tpu.assume_multiple %280, 8 : i32
    %282 = arith.index_cast %281 : i32 to index
    %c0_115 = arith.constant 0 : index
    %283 = vector.load %arg12[%282, %c0_115] : memref<64x128xf32, #tpu.memory_space<vmem>>, vector<8x128xf32>
    tpu.vector_store %arg12[%282, %c0_115], %278 {strides = array<i32>} : memref<64x128xf32, #tpu.memory_space<vmem>>, vector<8x128xf32>,
    %c1_i32_116 = arith.constant 1 : i32
    %c8_i32_117 = arith.constant 8 : i32
    %284 = arith.muli %c1_i32_116, %c8_i32_117 : i32
    %285 = tpu.assume_multiple %284, 8 : i32
    %286 = arith.index_cast %285 : i32 to index
    %c0_118 = arith.constant 0 : index
    %287 = vector.load %arg11[%286, %c0_118] : memref<64x512xf32, #tpu.memory_space<vmem>>, vector<8x512xf32>
    %c1_119 = arith.constant 1 : index
    %c0_120 = arith.constant 0 : index
    %c0_121 = arith.constant 0 : index
    %288 = vector.load %arg6[%c1_119, %c0_120, %c0_121] : memref<3x128x512xf32, #tpu.memory_space<vmem>>, vector<1x128x512xf32>
    %289 = vector.shape_cast %288 : vector<1x128x512xf32> to vector<128x512xf32>
    %cst_122 = arith.constant dense<0.000000e+00> : vector<8x512xf32>
    %290 = tpu.matmul %278, %289, %cst_122 {dimension_numbers = #tpu.dot_dimension_numbers<[1], [0], [0], [1], [0, 0, 1, 1], [], []>} : vector<8x128xf32>, vector<128x512xf32>, vector<8x512xf32> -> vector<8x512xf32>
    %291 = arith.addf %287, %290 : vector<8x512xf32>
    %292 = vector.extract_strided_slice %291 {offsets = [0, 0], sizes = [8, 384], strides = [1, 1]} : vector<8x512xf32> to vector<8x384xf32>
    %293 = arith.negf %292 : vector<8x384xf32>
    %294 = math.exp %293 : vector<8x384xf32>
    %cst_123 = arith.constant 1.000000e+00 : f32
    %295 = vector.broadcast %cst_123 : f32 to vector<8x384xf32>
    %296 = arith.addf %295, %294 : vector<8x384xf32>
    %297 = arith.divf %295, %296 : vector<8x384xf32>
    %298 = vector.extract_strided_slice %291 {offsets = [0, 384], sizes = [8, 128], strides = [1, 1]} : vector<8x512xf32> to vector<8x128xf32>
    %299 = math.tanh %298 : vector<8x128xf32>
    %300 = vector.extract_strided_slice %297 {offsets = [0, 0], sizes = [8, 128], strides = [1, 1]} : vector<8x384xf32> to vector<8x128xf32>
    %301 = vector.extract_strided_slice %297 {offsets = [0, 128], sizes = [8, 128], strides = [1, 1]} : vector<8x384xf32> to vector<8x128xf32>
    %302 = vector.extract_strided_slice %297 {offsets = [0, 256], sizes = [8, 128], strides = [1, 1]} : vector<8x384xf32> to vector<8x128xf32>
    %303 = arith.mulf %301, %276 : vector<8x128xf32>
    %304 = arith.mulf %300, %299 : vector<8x128xf32>
    %305 = arith.addf %303, %304 : vector<8x128xf32>
    %306 = math.tanh %305 : vector<8x128xf32>
    %307 = arith.mulf %302, %306 : vector<8x128xf32>
    %c0_i32_124 = arith.constant 0 : i32
    %308 = arith.addi %c1_i32_116, %c0_i32_124 : i32
    %c8_i32_125 = arith.constant 8 : i32
    %309 = arith.muli %308, %c8_i32_125 : i32
    %310 = tpu.assume_multiple %309, 8 : i32
    %311 = arith.index_cast %310 : i32 to index
    %c0_126 = arith.constant 0 : index
    %312 = vector.load %arg12[%311, %c0_126] : memref<64x128xf32, #tpu.memory_space<vmem>>, vector<8x128xf32>
    tpu.vector_store %arg12[%311, %c0_126], %307 {strides = array<i32>} : memref<64x128xf32, #tpu.memory_space<vmem>>, vector<8x128xf32>,
    %c2_i32_127 = arith.constant 2 : i32
    %c8_i32_128 = arith.constant 8 : i32
    %313 = arith.muli %c2_i32_127, %c8_i32_128 : i32
    %314 = tpu.assume_multiple %313, 8 : i32
    %315 = arith.index_cast %314 : i32 to index
    %c0_129 = arith.constant 0 : index
    %316 = vector.load %arg11[%315, %c0_129] : memref<64x512xf32, #tpu.memory_space<vmem>>, vector<8x512xf32>
    %c1_130 = arith.constant 1 : index
    %c0_131 = arith.constant 0 : index
    %c0_132 = arith.constant 0 : index
    %317 = vector.load %arg6[%c1_130, %c0_131, %c0_132] : memref<3x128x512xf32, #tpu.memory_space<vmem>>, vector<1x128x512xf32>
    %318 = vector.shape_cast %317 : vector<1x128x512xf32> to vector<128x512xf32>
    %cst_133 = arith.constant dense<0.000000e+00> : vector<8x512xf32>
    %319 = tpu.matmul %307, %318, %cst_133 {dimension_numbers = #tpu.dot_dimension_numbers<[1], [0], [0], [1], [0, 0, 1, 1], [], []>} : vector<8x128xf32>, vector<128x512xf32>, vector<8x512xf32> -> vector<8x512xf32>
    %320 = arith.addf %316, %319 : vector<8x512xf32>
    %321 = vector.extract_strided_slice %320 {offsets = [0, 0], sizes = [8, 384], strides = [1, 1]} : vector<8x512xf32> to vector<8x384xf32>
    %322 = arith.negf %321 : vector<8x384xf32>
    %323 = math.exp %322 : vector<8x384xf32>
    %cst_134 = arith.constant 1.000000e+00 : f32
    %324 = vector.broadcast %cst_134 : f32 to vector<8x384xf32>
    %325 = arith.addf %324, %323 : vector<8x384xf32>
    %326 = arith.divf %324, %325 : vector<8x384xf32>
    %327 = vector.extract_strided_slice %320 {offsets = [0, 384], sizes = [8, 128], strides = [1, 1]} : vector<8x512xf32> to vector<8x128xf32>
    %328 = math.tanh %327 : vector<8x128xf32>
    %329 = vector.extract_strided_slice %326 {offsets = [0, 0], sizes = [8, 128], strides = [1, 1]} : vector<8x384xf32> to vector<8x128xf32>
    %330 = vector.extract_strided_slice %326 {offsets = [0, 128], sizes = [8, 128], strides = [1, 1]} : vector<8x384xf32> to vector<8x128xf32>
    %331 = vector.extract_strided_slice %326 {offsets = [0, 256], sizes = [8, 128], strides = [1, 1]} : vector<8x384xf32> to vector<8x128xf32>
    %332 = arith.mulf %330, %305 : vector<8x128xf32>
    %333 = arith.mulf %329, %328 : vector<8x128xf32>
    %334 = arith.addf %332, %333 : vector<8x128xf32>
    %335 = math.tanh %334 : vector<8x128xf32>
    %336 = arith.mulf %331, %335 : vector<8x128xf32>
    %c0_i32_135 = arith.constant 0 : i32
    %337 = arith.addi %c2_i32_127, %c0_i32_135 : i32
    %c8_i32_136 = arith.constant 8 : i32
    %338 = arith.muli %337, %c8_i32_136 : i32
    %339 = tpu.assume_multiple %338, 8 : i32
    %340 = arith.index_cast %339 : i32 to index
    %c0_137 = arith.constant 0 : index
    %341 = vector.load %arg12[%340, %c0_137] : memref<64x128xf32, #tpu.memory_space<vmem>>, vector<8x128xf32>
    tpu.vector_store %arg12[%340, %c0_137], %336 {strides = array<i32>} : memref<64x128xf32, #tpu.memory_space<vmem>>, vector<8x128xf32>,
    %c3_i32_138 = arith.constant 3 : i32
    %c8_i32_139 = arith.constant 8 : i32
    %342 = arith.muli %c3_i32_138, %c8_i32_139 : i32
    %343 = tpu.assume_multiple %342, 8 : i32
    %344 = arith.index_cast %343 : i32 to index
    %c0_140 = arith.constant 0 : index
    %345 = vector.load %arg11[%344, %c0_140] : memref<64x512xf32, #tpu.memory_space<vmem>>, vector<8x512xf32>
    %c1_141 = arith.constant 1 : index
    %c0_142 = arith.constant 0 : index
    %c0_143 = arith.constant 0 : index
    %346 = vector.load %arg6[%c1_141, %c0_142, %c0_143] : memref<3x128x512xf32, #tpu.memory_space<vmem>>, vector<1x128x512xf32>
    %347 = vector.shape_cast %346 : vector<1x128x512xf32> to vector<128x512xf32>
    %cst_144 = arith.constant dense<0.000000e+00> : vector<8x512xf32>
    %348 = tpu.matmul %336, %347, %cst_144 {dimension_numbers = #tpu.dot_dimension_numbers<[1], [0], [0], [1], [0, 0, 1, 1], [], []>} : vector<8x128xf32>, vector<128x512xf32>, vector<8x512xf32> -> vector<8x512xf32>
    %349 = arith.addf %345, %348 : vector<8x512xf32>
    %350 = vector.extract_strided_slice %349 {offsets = [0, 0], sizes = [8, 384], strides = [1, 1]} : vector<8x512xf32> to vector<8x384xf32>
    %351 = arith.negf %350 : vector<8x384xf32>
    %352 = math.exp %351 : vector<8x384xf32>
    %cst_145 = arith.constant 1.000000e+00 : f32
    %353 = vector.broadcast %cst_145 : f32 to vector<8x384xf32>
    %354 = arith.addf %353, %352 : vector<8x384xf32>
    %355 = arith.divf %353, %354 : vector<8x384xf32>
    %356 = vector.extract_strided_slice %349 {offsets = [0, 384], sizes = [8, 128], strides = [1, 1]} : vector<8x512xf32> to vector<8x128xf32>
    %357 = math.tanh %356 : vector<8x128xf32>
    %358 = vector.extract_strided_slice %355 {offsets = [0, 0], sizes = [8, 128], strides = [1, 1]} : vector<8x384xf32> to vector<8x128xf32>
    %359 = vector.extract_strided_slice %355 {offsets = [0, 128], sizes = [8, 128], strides = [1, 1]} : vector<8x384xf32> to vector<8x128xf32>
    %360 = vector.extract_strided_slice %355 {offsets = [0, 256], sizes = [8, 128], strides = [1, 1]} : vector<8x384xf32> to vector<8x128xf32>
    %361 = arith.mulf %359, %334 : vector<8x128xf32>
    %362 = arith.mulf %358, %357 : vector<8x128xf32>
    %363 = arith.addf %361, %362 : vector<8x128xf32>
    %364 = math.tanh %363 : vector<8x128xf32>
    %365 = arith.mulf %360, %364 : vector<8x128xf32>
    %c0_i32_146 = arith.constant 0 : i32
    %366 = arith.addi %c3_i32_138, %c0_i32_146 : i32
    %c8_i32_147 = arith.constant 8 : i32
    %367 = arith.muli %366, %c8_i32_147 : i32
    %368 = tpu.assume_multiple %367, 8 : i32
    %369 = arith.index_cast %368 : i32 to index
    %c0_148 = arith.constant 0 : index
    %370 = vector.load %arg12[%369, %c0_148] : memref<64x128xf32, #tpu.memory_space<vmem>>, vector<8x128xf32>
    tpu.vector_store %arg12[%369, %c0_148], %365 {strides = array<i32>} : memref<64x128xf32, #tpu.memory_space<vmem>>, vector<8x128xf32>,
    %c4_i32_149 = arith.constant 4 : i32
    %c8_i32_150 = arith.constant 8 : i32
    %371 = arith.muli %c4_i32_149, %c8_i32_150 : i32
    %372 = tpu.assume_multiple %371, 8 : i32
    %373 = arith.index_cast %372 : i32 to index
    %c0_151 = arith.constant 0 : index
    %374 = vector.load %arg11[%373, %c0_151] : memref<64x512xf32, #tpu.memory_space<vmem>>, vector<8x512xf32>
    %c1_152 = arith.constant 1 : index
    %c0_153 = arith.constant 0 : index
    %c0_154 = arith.constant 0 : index
    %375 = vector.load %arg6[%c1_152, %c0_153, %c0_154] : memref<3x128x512xf32, #tpu.memory_space<vmem>>, vector<1x128x512xf32>
    %376 = vector.shape_cast %375 : vector<1x128x512xf32> to vector<128x512xf32>
    %cst_155 = arith.constant dense<0.000000e+00> : vector<8x512xf32>
    %377 = tpu.matmul %365, %376, %cst_155 {dimension_numbers = #tpu.dot_dimension_numbers<[1], [0], [0], [1], [0, 0, 1, 1], [], []>} : vector<8x128xf32>, vector<128x512xf32>, vector<8x512xf32> -> vector<8x512xf32>
    %378 = arith.addf %374, %377 : vector<8x512xf32>
    %379 = vector.extract_strided_slice %378 {offsets = [0, 0], sizes = [8, 384], strides = [1, 1]} : vector<8x512xf32> to vector<8x384xf32>
    %380 = arith.negf %379 : vector<8x384xf32>
    %381 = math.exp %380 : vector<8x384xf32>
    %cst_156 = arith.constant 1.000000e+00 : f32
    %382 = vector.broadcast %cst_156 : f32 to vector<8x384xf32>
    %383 = arith.addf %382, %381 : vector<8x384xf32>
    %384 = arith.divf %382, %383 : vector<8x384xf32>
    %385 = vector.extract_strided_slice %378 {offsets = [0, 384], sizes = [8, 128], strides = [1, 1]} : vector<8x512xf32> to vector<8x128xf32>
    %386 = math.tanh %385 : vector<8x128xf32>
    %387 = vector.extract_strided_slice %384 {offsets = [0, 0], sizes = [8, 128], strides = [1, 1]} : vector<8x384xf32> to vector<8x128xf32>
    %388 = vector.extract_strided_slice %384 {offsets = [0, 128], sizes = [8, 128], strides = [1, 1]} : vector<8x384xf32> to vector<8x128xf32>
    %389 = vector.extract_strided_slice %384 {offsets = [0, 256], sizes = [8, 128], strides = [1, 1]} : vector<8x384xf32> to vector<8x128xf32>
    %390 = arith.mulf %388, %363 : vector<8x128xf32>
    %391 = arith.mulf %387, %386 : vector<8x128xf32>
    %392 = arith.addf %390, %391 : vector<8x128xf32>
    %393 = math.tanh %392 : vector<8x128xf32>
    %394 = arith.mulf %389, %393 : vector<8x128xf32>
    %c0_i32_157 = arith.constant 0 : i32
    %395 = arith.addi %c4_i32_149, %c0_i32_157 : i32
    %c8_i32_158 = arith.constant 8 : i32
    %396 = arith.muli %395, %c8_i32_158 : i32
    %397 = tpu.assume_multiple %396, 8 : i32
    %398 = arith.index_cast %397 : i32 to index
    %c0_159 = arith.constant 0 : index
    %399 = vector.load %arg12[%398, %c0_159] : memref<64x128xf32, #tpu.memory_space<vmem>>, vector<8x128xf32>
    tpu.vector_store %arg12[%398, %c0_159], %394 {strides = array<i32>} : memref<64x128xf32, #tpu.memory_space<vmem>>, vector<8x128xf32>,
    %c5_i32_160 = arith.constant 5 : i32
    %c8_i32_161 = arith.constant 8 : i32
    %400 = arith.muli %c5_i32_160, %c8_i32_161 : i32
    %401 = tpu.assume_multiple %400, 8 : i32
    %402 = arith.index_cast %401 : i32 to index
    %c0_162 = arith.constant 0 : index
    %403 = vector.load %arg11[%402, %c0_162] : memref<64x512xf32, #tpu.memory_space<vmem>>, vector<8x512xf32>
    %c1_163 = arith.constant 1 : index
    %c0_164 = arith.constant 0 : index
    %c0_165 = arith.constant 0 : index
    %404 = vector.load %arg6[%c1_163, %c0_164, %c0_165] : memref<3x128x512xf32, #tpu.memory_space<vmem>>, vector<1x128x512xf32>
    %405 = vector.shape_cast %404 : vector<1x128x512xf32> to vector<128x512xf32>
    %cst_166 = arith.constant dense<0.000000e+00> : vector<8x512xf32>
    %406 = tpu.matmul %394, %405, %cst_166 {dimension_numbers = #tpu.dot_dimension_numbers<[1], [0], [0], [1], [0, 0, 1, 1], [], []>} : vector<8x128xf32>, vector<128x512xf32>, vector<8x512xf32> -> vector<8x512xf32>
    %407 = arith.addf %403, %406 : vector<8x512xf32>
    %408 = vector.extract_strided_slice %407 {offsets = [0, 0], sizes = [8, 384], strides = [1, 1]} : vector<8x512xf32> to vector<8x384xf32>
    %409 = arith.negf %408 : vector<8x384xf32>
    %410 = math.exp %409 : vector<8x384xf32>
    %cst_167 = arith.constant 1.000000e+00 : f32
    %411 = vector.broadcast %cst_167 : f32 to vector<8x384xf32>
    %412 = arith.addf %411, %410 : vector<8x384xf32>
    %413 = arith.divf %411, %412 : vector<8x384xf32>
    %414 = vector.extract_strided_slice %407 {offsets = [0, 384], sizes = [8, 128], strides = [1, 1]} : vector<8x512xf32> to vector<8x128xf32>
    %415 = math.tanh %414 : vector<8x128xf32>
    %416 = vector.extract_strided_slice %413 {offsets = [0, 0], sizes = [8, 128], strides = [1, 1]} : vector<8x384xf32> to vector<8x128xf32>
    %417 = vector.extract_strided_slice %413 {offsets = [0, 128], sizes = [8, 128], strides = [1, 1]} : vector<8x384xf32> to vector<8x128xf32>
    %418 = vector.extract_strided_slice %413 {offsets = [0, 256], sizes = [8, 128], strides = [1, 1]} : vector<8x384xf32> to vector<8x128xf32>
    %419 = arith.mulf %417, %392 : vector<8x128xf32>
    %420 = arith.mulf %416, %415 : vector<8x128xf32>
    %421 = arith.addf %419, %420 : vector<8x128xf32>
    %422 = math.tanh %421 : vector<8x128xf32>
    %423 = arith.mulf %418, %422 : vector<8x128xf32>
    %c0_i32_168 = arith.constant 0 : i32
    %424 = arith.addi %c5_i32_160, %c0_i32_168 : i32
    %c8_i32_169 = arith.constant 8 : i32
    %425 = arith.muli %424, %c8_i32_169 : i32
    %426 = tpu.assume_multiple %425, 8 : i32
    %427 = arith.index_cast %426 : i32 to index
    %c0_170 = arith.constant 0 : index
    %428 = vector.load %arg12[%427, %c0_170] : memref<64x128xf32, #tpu.memory_space<vmem>>, vector<8x128xf32>
    tpu.vector_store %arg12[%427, %c0_170], %423 {strides = array<i32>} : memref<64x128xf32, #tpu.memory_space<vmem>>, vector<8x128xf32>,
    %c6_i32_171 = arith.constant 6 : i32
    %c8_i32_172 = arith.constant 8 : i32
    %429 = arith.muli %c6_i32_171, %c8_i32_172 : i32
    %430 = tpu.assume_multiple %429, 8 : i32
    %431 = arith.index_cast %430 : i32 to index
    %c0_173 = arith.constant 0 : index
    %432 = vector.load %arg11[%431, %c0_173] : memref<64x512xf32, #tpu.memory_space<vmem>>, vector<8x512xf32>
    %c1_174 = arith.constant 1 : index
    %c0_175 = arith.constant 0 : index
    %c0_176 = arith.constant 0 : index
    %433 = vector.load %arg6[%c1_174, %c0_175, %c0_176] : memref<3x128x512xf32, #tpu.memory_space<vmem>>, vector<1x128x512xf32>
    %434 = vector.shape_cast %433 : vector<1x128x512xf32> to vector<128x512xf32>
    %cst_177 = arith.constant dense<0.000000e+00> : vector<8x512xf32>
    %435 = tpu.matmul %423, %434, %cst_177 {dimension_numbers = #tpu.dot_dimension_numbers<[1], [0], [0], [1], [0, 0, 1, 1], [], []>} : vector<8x128xf32>, vector<128x512xf32>, vector<8x512xf32> -> vector<8x512xf32>
    %436 = arith.addf %432, %435 : vector<8x512xf32>
    %437 = vector.extract_strided_slice %436 {offsets = [0, 0], sizes = [8, 384], strides = [1, 1]} : vector<8x512xf32> to vector<8x384xf32>
    %438 = arith.negf %437 : vector<8x384xf32>
    %439 = math.exp %438 : vector<8x384xf32>
    %cst_178 = arith.constant 1.000000e+00 : f32
    %440 = vector.broadcast %cst_178 : f32 to vector<8x384xf32>
    %441 = arith.addf %440, %439 : vector<8x384xf32>
    %442 = arith.divf %440, %441 : vector<8x384xf32>
    %443 = vector.extract_strided_slice %436 {offsets = [0, 384], sizes = [8, 128], strides = [1, 1]} : vector<8x512xf32> to vector<8x128xf32>
    %444 = math.tanh %443 : vector<8x128xf32>
    %445 = vector.extract_strided_slice %442 {offsets = [0, 0], sizes = [8, 128], strides = [1, 1]} : vector<8x384xf32> to vector<8x128xf32>
    %446 = vector.extract_strided_slice %442 {offsets = [0, 128], sizes = [8, 128], strides = [1, 1]} : vector<8x384xf32> to vector<8x128xf32>
    %447 = vector.extract_strided_slice %442 {offsets = [0, 256], sizes = [8, 128], strides = [1, 1]} : vector<8x384xf32> to vector<8x128xf32>
    %448 = arith.mulf %446, %421 : vector<8x128xf32>
    %449 = arith.mulf %445, %444 : vector<8x128xf32>
    %450 = arith.addf %448, %449 : vector<8x128xf32>
    %451 = math.tanh %450 : vector<8x128xf32>
    %452 = arith.mulf %447, %451 : vector<8x128xf32>
    %c0_i32_179 = arith.constant 0 : i32
    %453 = arith.addi %c6_i32_171, %c0_i32_179 : i32
    %c8_i32_180 = arith.constant 8 : i32
    %454 = arith.muli %453, %c8_i32_180 : i32
    %455 = tpu.assume_multiple %454, 8 : i32
    %456 = arith.index_cast %455 : i32 to index
    %c0_181 = arith.constant 0 : index
    %457 = vector.load %arg12[%456, %c0_181] : memref<64x128xf32, #tpu.memory_space<vmem>>, vector<8x128xf32>
    tpu.vector_store %arg12[%456, %c0_181], %452 {strides = array<i32>} : memref<64x128xf32, #tpu.memory_space<vmem>>, vector<8x128xf32>,
    %c7_i32_182 = arith.constant 7 : i32
    %c8_i32_183 = arith.constant 8 : i32
    %458 = arith.muli %c7_i32_182, %c8_i32_183 : i32
    %459 = tpu.assume_multiple %458, 8 : i32
    %460 = arith.index_cast %459 : i32 to index
    %c0_184 = arith.constant 0 : index
    %461 = vector.load %arg11[%460, %c0_184] : memref<64x512xf32, #tpu.memory_space<vmem>>, vector<8x512xf32>
    %c1_185 = arith.constant 1 : index
    %c0_186 = arith.constant 0 : index
    %c0_187 = arith.constant 0 : index
    %462 = vector.load %arg6[%c1_185, %c0_186, %c0_187] : memref<3x128x512xf32, #tpu.memory_space<vmem>>, vector<1x128x512xf32>
    %463 = vector.shape_cast %462 : vector<1x128x512xf32> to vector<128x512xf32>
    %cst_188 = arith.constant dense<0.000000e+00> : vector<8x512xf32>
    %464 = tpu.matmul %452, %463, %cst_188 {dimension_numbers = #tpu.dot_dimension_numbers<[1], [0], [0], [1], [0, 0, 1, 1], [], []>} : vector<8x128xf32>, vector<128x512xf32>, vector<8x512xf32> -> vector<8x512xf32>
    %465 = arith.addf %461, %464 : vector<8x512xf32>
    %466 = vector.extract_strided_slice %465 {offsets = [0, 0], sizes = [8, 384], strides = [1, 1]} : vector<8x512xf32> to vector<8x384xf32>
    %467 = arith.negf %466 : vector<8x384xf32>
    %468 = math.exp %467 : vector<8x384xf32>
    %cst_189 = arith.constant 1.000000e+00 : f32
    %469 = vector.broadcast %cst_189 : f32 to vector<8x384xf32>
    %470 = arith.addf %469, %468 : vector<8x384xf32>
    %471 = arith.divf %469, %470 : vector<8x384xf32>
    %472 = vector.extract_strided_slice %465 {offsets = [0, 384], sizes = [8, 128], strides = [1, 1]} : vector<8x512xf32> to vector<8x128xf32>
    %473 = math.tanh %472 : vector<8x128xf32>
    %474 = vector.extract_strided_slice %471 {offsets = [0, 0], sizes = [8, 128], strides = [1, 1]} : vector<8x384xf32> to vector<8x128xf32>
    %475 = vector.extract_strided_slice %471 {offsets = [0, 128], sizes = [8, 128], strides = [1, 1]} : vector<8x384xf32> to vector<8x128xf32>
    %476 = vector.extract_strided_slice %471 {offsets = [0, 256], sizes = [8, 128], strides = [1, 1]} : vector<8x384xf32> to vector<8x128xf32>
    %477 = arith.mulf %475, %450 : vector<8x128xf32>
    %478 = arith.mulf %474, %473 : vector<8x128xf32>
    %479 = arith.addf %477, %478 : vector<8x128xf32>
    %480 = math.tanh %479 : vector<8x128xf32>
    %481 = arith.mulf %476, %480 : vector<8x128xf32>
    %c0_i32_190 = arith.constant 0 : i32
    %482 = arith.addi %c7_i32_182, %c0_i32_190 : i32
    %c8_i32_191 = arith.constant 8 : i32
    %483 = arith.muli %482, %c8_i32_191 : i32
    %484 = tpu.assume_multiple %483, 8 : i32
    %485 = arith.index_cast %484 : i32 to index
    %c0_192 = arith.constant 0 : index
    %486 = vector.load %arg12[%485, %c0_192] : memref<64x128xf32, #tpu.memory_space<vmem>>, vector<8x128xf32>
    tpu.vector_store %arg12[%485, %c0_192], %481 {strides = array<i32>} : memref<64x128xf32, #tpu.memory_space<vmem>>, vector<8x128xf32>,
    %c8_i32_193 = arith.constant 8 : i32
    %c2 = arith.constant 2 : index
    %c0_194 = arith.constant 0 : index
    %c0_195 = arith.constant 0 : index
    %487 = vector.load %arg7[%c2, %c0_194, %c0_195] : memref<3x1x512xf32, #tpu.memory_space<vmem>>, vector<1x1x512xf32>
    %488 = vector.shape_cast %487 : vector<1x1x512xf32> to vector<1x512xf32>
    %cst_196 = arith.constant 0.000000e+00 : f32
    %489 = vector.broadcast %cst_196 : f32 to vector<8x128xf32>
    %cst_197 = arith.constant 0.000000e+00 : f32
    %490 = vector.broadcast %cst_197 : f32 to vector<8x128xf32>
    %c0_198 = arith.constant 0 : index
    %c0_199 = arith.constant 0 : index
    %491 = vector.load %arg12[%c0_198, %c0_199] : memref<64x128xf32, #tpu.memory_space<vmem>>, vector<64x128xf32>
    %c0_200 = arith.constant 0 : index
    %c0_201 = arith.constant 0 : index
    %492 = vector.load %arg5[%c0_200, %c0_201] : memref<128x512xf32, #tpu.memory_space<vmem>>, vector<128x512xf32>
    %cst_202 = arith.constant dense<0.000000e+00> : vector<64x512xf32>
    %493 = tpu.matmul %491, %492, %cst_202 {dimension_numbers = #tpu.dot_dimension_numbers<[1], [0], [0], [1], [0, 0, 1, 1], [], []>} : vector<64x128xf32>, vector<128x512xf32>, vector<64x512xf32> -> vector<64x512xf32>
    %494 = vector.broadcast %488 : vector<1x512xf32> to vector<64x512xf32>
    %495 = arith.addf %493, %494 : vector<64x512xf32>
    %c0_203 = arith.constant 0 : index
    %c0_204 = arith.constant 0 : index
    %496 = vector.load %arg11[%c0_203, %c0_204] : memref<64x512xf32, #tpu.memory_space<vmem>>, vector<64x512xf32>
    tpu.vector_store %arg11[%c0_203, %c0_204], %495 {strides = array<i32>} : memref<64x512xf32, #tpu.memory_space<vmem>>, vector<64x512xf32>,
    %c0_i32_205 = arith.constant 0 : i32
    %c8_i32_206 = arith.constant 8 : i32
    %497 = arith.muli %c0_i32_205, %c8_i32_206 : i32
    %498 = tpu.assume_multiple %497, 8 : i32
    %499 = arith.index_cast %498 : i32 to index
    %c0_207 = arith.constant 0 : index
    %500 = vector.load %arg11[%499, %c0_207] : memref<64x512xf32, #tpu.memory_space<vmem>>, vector<8x512xf32>
    %c2_208 = arith.constant 2 : index
    %c0_209 = arith.constant 0 : index
    %c0_210 = arith.constant 0 : index
    %501 = vector.load %arg6[%c2_208, %c0_209, %c0_210] : memref<3x128x512xf32, #tpu.memory_space<vmem>>, vector<1x128x512xf32>
    %502 = vector.shape_cast %501 : vector<1x128x512xf32> to vector<128x512xf32>
    %cst_211 = arith.constant dense<0.000000e+00> : vector<8x512xf32>
    %503 = tpu.matmul %489, %502, %cst_211 {dimension_numbers = #tpu.dot_dimension_numbers<[1], [0], [0], [1], [0, 0, 1, 1], [], []>} : vector<8x128xf32>, vector<128x512xf32>, vector<8x512xf32> -> vector<8x512xf32>
    %504 = arith.addf %500, %503 : vector<8x512xf32>
    %505 = vector.extract_strided_slice %504 {offsets = [0, 0], sizes = [8, 384], strides = [1, 1]} : vector<8x512xf32> to vector<8x384xf32>
    %506 = arith.negf %505 : vector<8x384xf32>
    %507 = math.exp %506 : vector<8x384xf32>
    %cst_212 = arith.constant 1.000000e+00 : f32
    %508 = vector.broadcast %cst_212 : f32 to vector<8x384xf32>
    %509 = arith.addf %508, %507 : vector<8x384xf32>
    %510 = arith.divf %508, %509 : vector<8x384xf32>
    %511 = vector.extract_strided_slice %504 {offsets = [0, 384], sizes = [8, 128], strides = [1, 1]} : vector<8x512xf32> to vector<8x128xf32>
    %512 = math.tanh %511 : vector<8x128xf32>
    %513 = vector.extract_strided_slice %510 {offsets = [0, 0], sizes = [8, 128], strides = [1, 1]} : vector<8x384xf32> to vector<8x128xf32>
    %514 = vector.extract_strided_slice %510 {offsets = [0, 128], sizes = [8, 128], strides = [1, 1]} : vector<8x384xf32> to vector<8x128xf32>
    %515 = vector.extract_strided_slice %510 {offsets = [0, 256], sizes = [8, 128], strides = [1, 1]} : vector<8x384xf32> to vector<8x128xf32>
    %516 = arith.mulf %514, %490 : vector<8x128xf32>
    %517 = arith.mulf %513, %512 : vector<8x128xf32>
    %518 = arith.addf %516, %517 : vector<8x128xf32>
    %519 = math.tanh %518 : vector<8x128xf32>
    %520 = arith.mulf %515, %519 : vector<8x128xf32>
    %c0_i32_213 = arith.constant 0 : i32
    %521 = arith.addi %c0_i32_205, %c0_i32_213 : i32
    %c1_i32_214 = arith.constant 1 : i32
    %522 = arith.addi %521, %c1_i32_214 : i32
    %523 = vector.broadcast %522 : i32 to vector<8x1xi32>
    %524 = arith.cmpi eq, %0, %523 : vector<8x1xi32>
    %525 = vector.shape_cast %524 : vector<8x1xi1> to vector<8x1xi1>
    %526 = vector.broadcast %525 : vector<8x1xi1> to vector<8x128xi1>
    %527 = arith.select %526, %520, %1 : vector<8x128xi1>, vector<8x128xf32>
    %c1_i32_215 = arith.constant 1 : i32
    %c8_i32_216 = arith.constant 8 : i32
    %528 = arith.muli %c1_i32_215, %c8_i32_216 : i32
    %529 = tpu.assume_multiple %528, 8 : i32
    %530 = arith.index_cast %529 : i32 to index
    %c0_217 = arith.constant 0 : index
    %531 = vector.load %arg11[%530, %c0_217] : memref<64x512xf32, #tpu.memory_space<vmem>>, vector<8x512xf32>
    %c2_218 = arith.constant 2 : index
    %c0_219 = arith.constant 0 : index
    %c0_220 = arith.constant 0 : index
    %532 = vector.load %arg6[%c2_218, %c0_219, %c0_220] : memref<3x128x512xf32, #tpu.memory_space<vmem>>, vector<1x128x512xf32>
    %533 = vector.shape_cast %532 : vector<1x128x512xf32> to vector<128x512xf32>
    %cst_221 = arith.constant dense<0.000000e+00> : vector<8x512xf32>
    %534 = tpu.matmul %520, %533, %cst_221 {dimension_numbers = #tpu.dot_dimension_numbers<[1], [0], [0], [1], [0, 0, 1, 1], [], []>} : vector<8x128xf32>, vector<128x512xf32>, vector<8x512xf32> -> vector<8x512xf32>
    %535 = arith.addf %531, %534 : vector<8x512xf32>
    %536 = vector.extract_strided_slice %535 {offsets = [0, 0], sizes = [8, 384], strides = [1, 1]} : vector<8x512xf32> to vector<8x384xf32>
    %537 = arith.negf %536 : vector<8x384xf32>
    %538 = math.exp %537 : vector<8x384xf32>
    %cst_222 = arith.constant 1.000000e+00 : f32
    %539 = vector.broadcast %cst_222 : f32 to vector<8x384xf32>
    %540 = arith.addf %539, %538 : vector<8x384xf32>
    %541 = arith.divf %539, %540 : vector<8x384xf32>
    %542 = vector.extract_strided_slice %535 {offsets = [0, 384], sizes = [8, 128], strides = [1, 1]} : vector<8x512xf32> to vector<8x128xf32>
    %543 = math.tanh %542 : vector<8x128xf32>
    %544 = vector.extract_strided_slice %541 {offsets = [0, 0], sizes = [8, 128], strides = [1, 1]} : vector<8x384xf32> to vector<8x128xf32>
    %545 = vector.extract_strided_slice %541 {offsets = [0, 128], sizes = [8, 128], strides = [1, 1]} : vector<8x384xf32> to vector<8x128xf32>
    %546 = vector.extract_strided_slice %541 {offsets = [0, 256], sizes = [8, 128], strides = [1, 1]} : vector<8x384xf32> to vector<8x128xf32>
    %547 = arith.mulf %545, %518 : vector<8x128xf32>
    %548 = arith.mulf %544, %543 : vector<8x128xf32>
    %549 = arith.addf %547, %548 : vector<8x128xf32>
    %550 = math.tanh %549 : vector<8x128xf32>
    %551 = arith.mulf %546, %550 : vector<8x128xf32>
    %c0_i32_223 = arith.constant 0 : i32
    %552 = arith.addi %c1_i32_215, %c0_i32_223 : i32
    %c1_i32_224 = arith.constant 1 : i32
    %553 = arith.addi %552, %c1_i32_224 : i32
    %554 = vector.broadcast %553 : i32 to vector<8x1xi32>
    %555 = arith.cmpi eq, %0, %554 : vector<8x1xi32>
    %556 = vector.shape_cast %555 : vector<8x1xi1> to vector<8x1xi1>
    %557 = vector.broadcast %556 : vector<8x1xi1> to vector<8x128xi1>
    %558 = arith.select %557, %551, %527 : vector<8x128xi1>, vector<8x128xf32>
    %c2_i32_225 = arith.constant 2 : i32
    %c8_i32_226 = arith.constant 8 : i32
    %559 = arith.muli %c2_i32_225, %c8_i32_226 : i32
    %560 = tpu.assume_multiple %559, 8 : i32
    %561 = arith.index_cast %560 : i32 to index
    %c0_227 = arith.constant 0 : index
    %562 = vector.load %arg11[%561, %c0_227] : memref<64x512xf32, #tpu.memory_space<vmem>>, vector<8x512xf32>
    %c2_228 = arith.constant 2 : index
    %c0_229 = arith.constant 0 : index
    %c0_230 = arith.constant 0 : index
    %563 = vector.load %arg6[%c2_228, %c0_229, %c0_230] : memref<3x128x512xf32, #tpu.memory_space<vmem>>, vector<1x128x512xf32>
    %564 = vector.shape_cast %563 : vector<1x128x512xf32> to vector<128x512xf32>
    %cst_231 = arith.constant dense<0.000000e+00> : vector<8x512xf32>
    %565 = tpu.matmul %551, %564, %cst_231 {dimension_numbers = #tpu.dot_dimension_numbers<[1], [0], [0], [1], [0, 0, 1, 1], [], []>} : vector<8x128xf32>, vector<128x512xf32>, vector<8x512xf32> -> vector<8x512xf32>
    %566 = arith.addf %562, %565 : vector<8x512xf32>
    %567 = vector.extract_strided_slice %566 {offsets = [0, 0], sizes = [8, 384], strides = [1, 1]} : vector<8x512xf32> to vector<8x384xf32>
    %568 = arith.negf %567 : vector<8x384xf32>
    %569 = math.exp %568 : vector<8x384xf32>
    %cst_232 = arith.constant 1.000000e+00 : f32
    %570 = vector.broadcast %cst_232 : f32 to vector<8x384xf32>
    %571 = arith.addf %570, %569 : vector<8x384xf32>
    %572 = arith.divf %570, %571 : vector<8x384xf32>
    %573 = vector.extract_strided_slice %566 {offsets = [0, 384], sizes = [8, 128], strides = [1, 1]} : vector<8x512xf32> to vector<8x128xf32>
    %574 = math.tanh %573 : vector<8x128xf32>
    %575 = vector.extract_strided_slice %572 {offsets = [0, 0], sizes = [8, 128], strides = [1, 1]} : vector<8x384xf32> to vector<8x128xf32>
    %576 = vector.extract_strided_slice %572 {offsets = [0, 128], sizes = [8, 128], strides = [1, 1]} : vector<8x384xf32> to vector<8x128xf32>
    %577 = vector.extract_strided_slice %572 {offsets = [0, 256], sizes = [8, 128], strides = [1, 1]} : vector<8x384xf32> to vector<8x128xf32>
    %578 = arith.mulf %576, %549 : vector<8x128xf32>
    %579 = arith.mulf %575, %574 : vector<8x128xf32>
    %580 = arith.addf %578, %579 : vector<8x128xf32>
    %581 = math.tanh %580 : vector<8x128xf32>
    %582 = arith.mulf %577, %581 : vector<8x128xf32>
    %c0_i32_233 = arith.constant 0 : i32
    %583 = arith.addi %c2_i32_225, %c0_i32_233 : i32
    %c1_i32_234 = arith.constant 1 : i32
    %584 = arith.addi %583, %c1_i32_234 : i32
    %585 = vector.broadcast %584 : i32 to vector<8x1xi32>
    %586 = arith.cmpi eq, %0, %585 : vector<8x1xi32>
    %587 = vector.shape_cast %586 : vector<8x1xi1> to vector<8x1xi1>
    %588 = vector.broadcast %587 : vector<8x1xi1> to vector<8x128xi1>
    %589 = arith.select %588, %582, %558 : vector<8x128xi1>, vector<8x128xf32>
    %c3_i32_235 = arith.constant 3 : i32
    %c8_i32_236 = arith.constant 8 : i32
    %590 = arith.muli %c3_i32_235, %c8_i32_236 : i32
    %591 = tpu.assume_multiple %590, 8 : i32
    %592 = arith.index_cast %591 : i32 to index
    %c0_237 = arith.constant 0 : index
    %593 = vector.load %arg11[%592, %c0_237] : memref<64x512xf32, #tpu.memory_space<vmem>>, vector<8x512xf32>
    %c2_238 = arith.constant 2 : index
    %c0_239 = arith.constant 0 : index
    %c0_240 = arith.constant 0 : index
    %594 = vector.load %arg6[%c2_238, %c0_239, %c0_240] : memref<3x128x512xf32, #tpu.memory_space<vmem>>, vector<1x128x512xf32>
    %595 = vector.shape_cast %594 : vector<1x128x512xf32> to vector<128x512xf32>
    %cst_241 = arith.constant dense<0.000000e+00> : vector<8x512xf32>
    %596 = tpu.matmul %582, %595, %cst_241 {dimension_numbers = #tpu.dot_dimension_numbers<[1], [0], [0], [1], [0, 0, 1, 1], [], []>} : vector<8x128xf32>, vector<128x512xf32>, vector<8x512xf32> -> vector<8x512xf32>
    %597 = arith.addf %593, %596 : vector<8x512xf32>
    %598 = vector.extract_strided_slice %597 {offsets = [0, 0], sizes = [8, 384], strides = [1, 1]} : vector<8x512xf32> to vector<8x384xf32>
    %599 = arith.negf %598 : vector<8x384xf32>
    %600 = math.exp %599 : vector<8x384xf32>
    %cst_242 = arith.constant 1.000000e+00 : f32
    %601 = vector.broadcast %cst_242 : f32 to vector<8x384xf32>
    %602 = arith.addf %601, %600 : vector<8x384xf32>
    %603 = arith.divf %601, %602 : vector<8x384xf32>
    %604 = vector.extract_strided_slice %597 {offsets = [0, 384], sizes = [8, 128], strides = [1, 1]} : vector<8x512xf32> to vector<8x128xf32>
    %605 = math.tanh %604 : vector<8x128xf32>
    %606 = vector.extract_strided_slice %603 {offsets = [0, 0], sizes = [8, 128], strides = [1, 1]} : vector<8x384xf32> to vector<8x128xf32>
    %607 = vector.extract_strided_slice %603 {offsets = [0, 128], sizes = [8, 128], strides = [1, 1]} : vector<8x384xf32> to vector<8x128xf32>
    %608 = vector.extract_strided_slice %603 {offsets = [0, 256], sizes = [8, 128], strides = [1, 1]} : vector<8x384xf32> to vector<8x128xf32>
    %609 = arith.mulf %607, %580 : vector<8x128xf32>
    %610 = arith.mulf %606, %605 : vector<8x128xf32>
    %611 = arith.addf %609, %610 : vector<8x128xf32>
    %612 = math.tanh %611 : vector<8x128xf32>
    %613 = arith.mulf %608, %612 : vector<8x128xf32>
    %c0_i32_243 = arith.constant 0 : i32
    %614 = arith.addi %c3_i32_235, %c0_i32_243 : i32
    %c1_i32_244 = arith.constant 1 : i32
    %615 = arith.addi %614, %c1_i32_244 : i32
    %616 = vector.broadcast %615 : i32 to vector<8x1xi32>
    %617 = arith.cmpi eq, %0, %616 : vector<8x1xi32>
    %618 = vector.shape_cast %617 : vector<8x1xi1> to vector<8x1xi1>
    %619 = vector.broadcast %618 : vector<8x1xi1> to vector<8x128xi1>
    %620 = arith.select %619, %613, %589 : vector<8x128xi1>, vector<8x128xf32>
    %c4_i32_245 = arith.constant 4 : i32
    %c8_i32_246 = arith.constant 8 : i32
    %621 = arith.muli %c4_i32_245, %c8_i32_246 : i32
    %622 = tpu.assume_multiple %621, 8 : i32
    %623 = arith.index_cast %622 : i32 to index
    %c0_247 = arith.constant 0 : index
    %624 = vector.load %arg11[%623, %c0_247] : memref<64x512xf32, #tpu.memory_space<vmem>>, vector<8x512xf32>
    %c2_248 = arith.constant 2 : index
    %c0_249 = arith.constant 0 : index
    %c0_250 = arith.constant 0 : index
    %625 = vector.load %arg6[%c2_248, %c0_249, %c0_250] : memref<3x128x512xf32, #tpu.memory_space<vmem>>, vector<1x128x512xf32>
    %626 = vector.shape_cast %625 : vector<1x128x512xf32> to vector<128x512xf32>
    %cst_251 = arith.constant dense<0.000000e+00> : vector<8x512xf32>
    %627 = tpu.matmul %613, %626, %cst_251 {dimension_numbers = #tpu.dot_dimension_numbers<[1], [0], [0], [1], [0, 0, 1, 1], [], []>} : vector<8x128xf32>, vector<128x512xf32>, vector<8x512xf32> -> vector<8x512xf32>
    %628 = arith.addf %624, %627 : vector<8x512xf32>
    %629 = vector.extract_strided_slice %628 {offsets = [0, 0], sizes = [8, 384], strides = [1, 1]} : vector<8x512xf32> to vector<8x384xf32>
    %630 = arith.negf %629 : vector<8x384xf32>
    %631 = math.exp %630 : vector<8x384xf32>
    %cst_252 = arith.constant 1.000000e+00 : f32
    %632 = vector.broadcast %cst_252 : f32 to vector<8x384xf32>
    %633 = arith.addf %632, %631 : vector<8x384xf32>
    %634 = arith.divf %632, %633 : vector<8x384xf32>
    %635 = vector.extract_strided_slice %628 {offsets = [0, 384], sizes = [8, 128], strides = [1, 1]} : vector<8x512xf32> to vector<8x128xf32>
    %636 = math.tanh %635 : vector<8x128xf32>
    %637 = vector.extract_strided_slice %634 {offsets = [0, 0], sizes = [8, 128], strides = [1, 1]} : vector<8x384xf32> to vector<8x128xf32>
    %638 = vector.extract_strided_slice %634 {offsets = [0, 128], sizes = [8, 128], strides = [1, 1]} : vector<8x384xf32> to vector<8x128xf32>
    %639 = vector.extract_strided_slice %634 {offsets = [0, 256], sizes = [8, 128], strides = [1, 1]} : vector<8x384xf32> to vector<8x128xf32>
    %640 = arith.mulf %638, %611 : vector<8x128xf32>
    %641 = arith.mulf %637, %636 : vector<8x128xf32>
    %642 = arith.addf %640, %641 : vector<8x128xf32>
    %643 = math.tanh %642 : vector<8x128xf32>
    %644 = arith.mulf %639, %643 : vector<8x128xf32>
    %c0_i32_253 = arith.constant 0 : i32
    %645 = arith.addi %c4_i32_245, %c0_i32_253 : i32
    %c1_i32_254 = arith.constant 1 : i32
    %646 = arith.addi %645, %c1_i32_254 : i32
    %647 = vector.broadcast %646 : i32 to vector<8x1xi32>
    %648 = arith.cmpi eq, %0, %647 : vector<8x1xi32>
    %649 = vector.shape_cast %648 : vector<8x1xi1> to vector<8x1xi1>
    %650 = vector.broadcast %649 : vector<8x1xi1> to vector<8x128xi1>
    %651 = arith.select %650, %644, %620 : vector<8x128xi1>, vector<8x128xf32>
    %c5_i32_255 = arith.constant 5 : i32
    %c8_i32_256 = arith.constant 8 : i32
    %652 = arith.muli %c5_i32_255, %c8_i32_256 : i32
    %653 = tpu.assume_multiple %652, 8 : i32
    %654 = arith.index_cast %653 : i32 to index
    %c0_257 = arith.constant 0 : index
    %655 = vector.load %arg11[%654, %c0_257] : memref<64x512xf32, #tpu.memory_space<vmem>>, vector<8x512xf32>
    %c2_258 = arith.constant 2 : index
    %c0_259 = arith.constant 0 : index
    %c0_260 = arith.constant 0 : index
    %656 = vector.load %arg6[%c2_258, %c0_259, %c0_260] : memref<3x128x512xf32, #tpu.memory_space<vmem>>, vector<1x128x512xf32>
    %657 = vector.shape_cast %656 : vector<1x128x512xf32> to vector<128x512xf32>
    %cst_261 = arith.constant dense<0.000000e+00> : vector<8x512xf32>
    %658 = tpu.matmul %644, %657, %cst_261 {dimension_numbers = #tpu.dot_dimension_numbers<[1], [0], [0], [1], [0, 0, 1, 1], [], []>} : vector<8x128xf32>, vector<128x512xf32>, vector<8x512xf32> -> vector<8x512xf32>
    %659 = arith.addf %655, %658 : vector<8x512xf32>
    %660 = vector.extract_strided_slice %659 {offsets = [0, 0], sizes = [8, 384], strides = [1, 1]} : vector<8x512xf32> to vector<8x384xf32>
    %661 = arith.negf %660 : vector<8x384xf32>
    %662 = math.exp %661 : vector<8x384xf32>
    %cst_262 = arith.constant 1.000000e+00 : f32
    %663 = vector.broadcast %cst_262 : f32 to vector<8x384xf32>
    %664 = arith.addf %663, %662 : vector<8x384xf32>
    %665 = arith.divf %663, %664 : vector<8x384xf32>
    %666 = vector.extract_strided_slice %659 {offsets = [0, 384], sizes = [8, 128], strides = [1, 1]} : vector<8x512xf32> to vector<8x128xf32>
    %667 = math.tanh %666 : vector<8x128xf32>
    %668 = vector.extract_strided_slice %665 {offsets = [0, 0], sizes = [8, 128], strides = [1, 1]} : vector<8x384xf32> to vector<8x128xf32>
    %669 = vector.extract_strided_slice %665 {offsets = [0, 128], sizes = [8, 128], strides = [1, 1]} : vector<8x384xf32> to vector<8x128xf32>
    %670 = vector.extract_strided_slice %665 {offsets = [0, 256], sizes = [8, 128], strides = [1, 1]} : vector<8x384xf32> to vector<8x128xf32>
    %671 = arith.mulf %669, %642 : vector<8x128xf32>
    %672 = arith.mulf %668, %667 : vector<8x128xf32>
    %673 = arith.addf %671, %672 : vector<8x128xf32>
    %674 = math.tanh %673 : vector<8x128xf32>
    %675 = arith.mulf %670, %674 : vector<8x128xf32>
    %c0_i32_263 = arith.constant 0 : i32
    %676 = arith.addi %c5_i32_255, %c0_i32_263 : i32
    %c1_i32_264 = arith.constant 1 : i32
    %677 = arith.addi %676, %c1_i32_264 : i32
    %678 = vector.broadcast %677 : i32 to vector<8x1xi32>
    %679 = arith.cmpi eq, %0, %678 : vector<8x1xi32>
    %680 = vector.shape_cast %679 : vector<8x1xi1> to vector<8x1xi1>
    %681 = vector.broadcast %680 : vector<8x1xi1> to vector<8x128xi1>
    %682 = arith.select %681, %675, %651 : vector<8x128xi1>, vector<8x128xf32>
    %c6_i32_265 = arith.constant 6 : i32
    %c8_i32_266 = arith.constant 8 : i32
    %683 = arith.muli %c6_i32_265, %c8_i32_266 : i32
    %684 = tpu.assume_multiple %683, 8 : i32
    %685 = arith.index_cast %684 : i32 to index
    %c0_267 = arith.constant 0 : index
    %686 = vector.load %arg11[%685, %c0_267] : memref<64x512xf32, #tpu.memory_space<vmem>>, vector<8x512xf32>
    %c2_268 = arith.constant 2 : index
    %c0_269 = arith.constant 0 : index
    %c0_270 = arith.constant 0 : index
    %687 = vector.load %arg6[%c2_268, %c0_269, %c0_270] : memref<3x128x512xf32, #tpu.memory_space<vmem>>, vector<1x128x512xf32>
    %688 = vector.shape_cast %687 : vector<1x128x512xf32> to vector<128x512xf32>
    %cst_271 = arith.constant dense<0.000000e+00> : vector<8x512xf32>
    %689 = tpu.matmul %675, %688, %cst_271 {dimension_numbers = #tpu.dot_dimension_numbers<[1], [0], [0], [1], [0, 0, 1, 1], [], []>} : vector<8x128xf32>, vector<128x512xf32>, vector<8x512xf32> -> vector<8x512xf32>
    %690 = arith.addf %686, %689 : vector<8x512xf32>
    %691 = vector.extract_strided_slice %690 {offsets = [0, 0], sizes = [8, 384], strides = [1, 1]} : vector<8x512xf32> to vector<8x384xf32>
    %692 = arith.negf %691 : vector<8x384xf32>
    %693 = math.exp %692 : vector<8x384xf32>
    %cst_272 = arith.constant 1.000000e+00 : f32
    %694 = vector.broadcast %cst_272 : f32 to vector<8x384xf32>
    %695 = arith.addf %694, %693 : vector<8x384xf32>
    %696 = arith.divf %694, %695 : vector<8x384xf32>
    %697 = vector.extract_strided_slice %690 {offsets = [0, 384], sizes = [8, 128], strides = [1, 1]} : vector<8x512xf32> to vector<8x128xf32>
    %698 = math.tanh %697 : vector<8x128xf32>
    %699 = vector.extract_strided_slice %696 {offsets = [0, 0], sizes = [8, 128], strides = [1, 1]} : vector<8x384xf32> to vector<8x128xf32>
    %700 = vector.extract_strided_slice %696 {offsets = [0, 128], sizes = [8, 128], strides = [1, 1]} : vector<8x384xf32> to vector<8x128xf32>
    %701 = vector.extract_strided_slice %696 {offsets = [0, 256], sizes = [8, 128], strides = [1, 1]} : vector<8x384xf32> to vector<8x128xf32>
    %702 = arith.mulf %700, %673 : vector<8x128xf32>
    %703 = arith.mulf %699, %698 : vector<8x128xf32>
    %704 = arith.addf %702, %703 : vector<8x128xf32>
    %705 = math.tanh %704 : vector<8x128xf32>
    %706 = arith.mulf %701, %705 : vector<8x128xf32>
    %c0_i32_273 = arith.constant 0 : i32
    %707 = arith.addi %c6_i32_265, %c0_i32_273 : i32
    %c1_i32_274 = arith.constant 1 : i32
    %708 = arith.addi %707, %c1_i32_274 : i32
    %709 = vector.broadcast %708 : i32 to vector<8x1xi32>
    %710 = arith.cmpi eq, %0, %709 : vector<8x1xi32>
    %711 = vector.shape_cast %710 : vector<8x1xi1> to vector<8x1xi1>
    %712 = vector.broadcast %711 : vector<8x1xi1> to vector<8x128xi1>
    %713 = arith.select %712, %706, %682 : vector<8x128xi1>, vector<8x128xf32>
    %c7_i32_275 = arith.constant 7 : i32
    %c8_i32_276 = arith.constant 8 : i32
    %714 = arith.muli %c7_i32_275, %c8_i32_276 : i32
    %715 = tpu.assume_multiple %714, 8 : i32
    %716 = arith.index_cast %715 : i32 to index
    %c0_277 = arith.constant 0 : index
    %717 = vector.load %arg11[%716, %c0_277] : memref<64x512xf32, #tpu.memory_space<vmem>>, vector<8x512xf32>
    %c2_278 = arith.constant 2 : index
    %c0_279 = arith.constant 0 : index
    %c0_280 = arith.constant 0 : index
    %718 = vector.load %arg6[%c2_278, %c0_279, %c0_280] : memref<3x128x512xf32, #tpu.memory_space<vmem>>, vector<1x128x512xf32>
    %719 = vector.shape_cast %718 : vector<1x128x512xf32> to vector<128x512xf32>
    %cst_281 = arith.constant dense<0.000000e+00> : vector<8x512xf32>
    %720 = tpu.matmul %706, %719, %cst_281 {dimension_numbers = #tpu.dot_dimension_numbers<[1], [0], [0], [1], [0, 0, 1, 1], [], []>} : vector<8x128xf32>, vector<128x512xf32>, vector<8x512xf32> -> vector<8x512xf32>
    %721 = arith.addf %717, %720 : vector<8x512xf32>
    %722 = vector.extract_strided_slice %721 {offsets = [0, 0], sizes = [8, 384], strides = [1, 1]} : vector<8x512xf32> to vector<8x384xf32>
    %723 = arith.negf %722 : vector<8x384xf32>
    %724 = math.exp %723 : vector<8x384xf32>
    %cst_282 = arith.constant 1.000000e+00 : f32
    %725 = vector.broadcast %cst_282 : f32 to vector<8x384xf32>
    %726 = arith.addf %725, %724 : vector<8x384xf32>
    %727 = arith.divf %725, %726 : vector<8x384xf32>
    %728 = vector.extract_strided_slice %721 {offsets = [0, 384], sizes = [8, 128], strides = [1, 1]} : vector<8x512xf32> to vector<8x128xf32>
    %729 = math.tanh %728 : vector<8x128xf32>
    %730 = vector.extract_strided_slice %727 {offsets = [0, 0], sizes = [8, 128], strides = [1, 1]} : vector<8x384xf32> to vector<8x128xf32>
    %731 = vector.extract_strided_slice %727 {offsets = [0, 128], sizes = [8, 128], strides = [1, 1]} : vector<8x384xf32> to vector<8x128xf32>
    %732 = vector.extract_strided_slice %727 {offsets = [0, 256], sizes = [8, 128], strides = [1, 1]} : vector<8x384xf32> to vector<8x128xf32>
    %733 = arith.mulf %731, %704 : vector<8x128xf32>
    %734 = arith.mulf %730, %729 : vector<8x128xf32>
    %735 = arith.addf %733, %734 : vector<8x128xf32>
    %736 = math.tanh %735 : vector<8x128xf32>
    %737 = arith.mulf %732, %736 : vector<8x128xf32>
    %c0_i32_283 = arith.constant 0 : i32
    %738 = arith.addi %c7_i32_275, %c0_i32_283 : i32
    %c1_i32_284 = arith.constant 1 : i32
    %739 = arith.addi %738, %c1_i32_284 : i32
    %740 = vector.broadcast %739 : i32 to vector<8x1xi32>
    %741 = arith.cmpi eq, %0, %740 : vector<8x1xi32>
    %742 = vector.shape_cast %741 : vector<8x1xi1> to vector<8x1xi1>
    %743 = vector.broadcast %742 : vector<8x1xi1> to vector<8x128xi1>
    %744 = arith.select %743, %737, %713 : vector<8x128xi1>, vector<8x128xf32>
    %c8_i32_285 = arith.constant 8 : i32
    %c0_286 = arith.constant 0 : index
    %c0_287 = arith.constant 0 : index
    %745 = vector.load %arg8[%c0_286, %c0_287] : memref<128x128xf32, #tpu.memory_space<vmem>>, vector<128x128xf32>
    %cst_288 = arith.constant dense<0.000000e+00> : vector<8x128xf32>
    %746 = tpu.matmul %744, %745, %cst_288 {dimension_numbers = #tpu.dot_dimension_numbers<[1], [0], [0], [1], [0, 0, 1, 1], [], []>} : vector<8x128xf32>, vector<128x128xf32>, vector<8x128xf32> -> vector<8x128xf32>
    %c0_289 = arith.constant 0 : index
    %c0_290 = arith.constant 0 : index
    %747 = vector.load %arg9[%c0_289, %c0_290] : memref<1x128xf32, #tpu.memory_space<vmem>>, vector<1x128xf32>
    %748 = vector.broadcast %747 : vector<1x128xf32> to vector<8x128xf32>
    %749 = arith.addf %746, %748 : vector<8x128xf32>
    %c0_291 = arith.constant 0 : index
    %c0_292 = arith.constant 0 : index
    %750 = vector.load %arg10[%c0_291, %c0_292] : memref<8x128xf32, #tpu.memory_space<vmem>>, vector<8x128xf32>
    tpu.vector_store %arg10[%c0_291, %c0_292], %749 {strides = array<i32>} : memref<8x128xf32, #tpu.memory_space<vmem>>, vector<8x128xf32>,
    return
  }
  func.func @transform_0(%arg0: i32) -> (i32, i32, i32) {
    %c0_i32 = arith.constant 0 : i32
    %c0_i32_0 = arith.constant 0 : i32
    %c0_i32_1 = arith.constant 0 : i32
    return %arg0, %c0_i32, %c0_i32_0 : i32, i32, i32
  }
  func.func @transform_1(%arg0: i32) -> (i32, i32) {
    %c0_i32 = arith.constant 0 : i32
    %c0_i32_0 = arith.constant 0 : i32
    return %arg0, %c0_i32 : i32, i32
  }
  func.func @transform_2(%arg0: i32) -> (i32, i32) {
    %c0_i32 = arith.constant 0 : i32
    %c0_i32_0 = arith.constant 0 : i32
    %c0_i32_1 = arith.constant 0 : i32
    return %c0_i32, %c0_i32_0 : i32, i32
  }
  func.func @transform_3(%arg0: i32) -> (i32, i32) {
    %c0_i32 = arith.constant 0 : i32
    %c0_i32_0 = arith.constant 0 : i32
    %c0_i32_1 = arith.constant 0 : i32
    return %c0_i32, %c0_i32_0 : i32, i32
  }
  func.func @transform_4(%arg0: i32) -> (i32, i32) {
    %c0_i32 = arith.constant 0 : i32
    %c0_i32_0 = arith.constant 0 : i32
    %c0_i32_1 = arith.constant 0 : i32
    return %c0_i32, %c0_i32_0 : i32, i32
  }
  func.func @transform_5(%arg0: i32) -> (i32, i32, i32) {
    %c0_i32 = arith.constant 0 : i32
    %c0_i32_0 = arith.constant 0 : i32
    %c0_i32_1 = arith.constant 0 : i32
    %c0_i32_2 = arith.constant 0 : i32
    return %c0_i32, %c0_i32_0, %c0_i32_1 : i32, i32, i32
  }
  func.func @transform_6(%arg0: i32) -> (i32, i32, i32) {
    %c0_i32 = arith.constant 0 : i32
    %c0_i32_0 = arith.constant 0 : i32
    %c0_i32_1 = arith.constant 0 : i32
    %c0_i32_2 = arith.constant 0 : i32
    return %c0_i32, %c0_i32_0, %c0_i32_1 : i32, i32, i32
  }
  func.func @transform_7(%arg0: i32) -> (i32, i32) {
    %c0_i32 = arith.constant 0 : i32
    %c0_i32_0 = arith.constant 0 : i32
    %c0_i32_1 = arith.constant 0 : i32
    return %c0_i32, %c0_i32_0 : i32, i32
  }
  func.func @transform_8(%arg0: i32) -> (i32, i32) {
    %c0_i32 = arith.constant 0 : i32
    %c0_i32_0 = arith.constant 0 : i32
    %c0_i32_1 = arith.constant 0 : i32
    return %c0_i32, %c0_i32_0 : i32, i32
  }
  func.func @transform_9(%arg0: i32) -> (i32, i32) {
    %c0_i32 = arith.constant 0 : i32
    %c0_i32_0 = arith.constant 0 : i32
    return %arg0, %c0_i32 : i32, i32
  }
}

</mosaic_0001>

<llo_original>
// kernel: tpu_custom_call.1
$region0: #{tpu_custom_call.1}
  #allocation0 [shape = 'u32[]', space=smem, size = 0x4, offset = 0x4, fixed_abs, tag = 'smem constant byte address 0x4 - core index']
  #allocation1 [shape = 'u32[72,128]{1,0:T(1,128)}', space=vmem, size = 0x9000, scoped, tag = 'internal scratch']
  #allocation2 [shape = 'f32[64,512]{1,0:T(8,128)}', space=vmem, size = 0x20000, scoped, tag = 'scratch operand']
  #allocation3 [shape = 'f32[64,128]{1,0:T(8,128)}', space=vmem, size = 0x8000, scoped, tag = 'scratch operand']
  %s0 = inlined_call_operand.hbm [shape: f32[1,64,64], index: 0, kind: input, shape index: {}]
  %s1 = inlined_call_operand.vmem [shape: s32[8,1], index: 1, kind: input, shape index: {}]
  %s2 = inlined_call_operand.hbm [shape: f32[64,512], index: 2, kind: input, shape index: {}]
  %s3 = inlined_call_operand.hbm [shape: f32[128,512], index: 3, kind: input, shape index: {}]
  %s4 = inlined_call_operand.hbm [shape: f32[128,512], index: 4, kind: input, shape index: {}]
  %s5 = inlined_call_operand.hbm [shape: f32[3,128,512], index: 5, kind: input, shape index: {}]
  %s6 = inlined_call_operand.vmem [shape: f32[3,1,512], index: 6, kind: input, shape index: {}]
  %s7 = inlined_call_operand.hbm [shape: f32[128,128], index: 7, kind: input, shape index: {}]
  %s8 = inlined_call_operand.vmem [shape: f32[1,128], index: 8, kind: input, shape index: {}]
  %s9 = inlined_call_operand.hbm [shape: f32[8,128], index: 9, kind: output, shape index: {}]
  %s10 = sld [smem:[#allocation0]]
  $region70: #{tpu_custom_call.1} parent=0
    _
  %s12 = ssub.s32 1, %s10
  %s13 = scalar_select 0, %s12, %s10
  $region1: #{tpu_custom_call.1} parent=0
    #allocation4 [shape = 'u8[32768]{0}', space=vmem, size = 0x8000, scoped, tag = 'input window, operand 0, single buffered']
    #allocation5 [shape = 's32[1]{0}', space=sflag, size = 0x4, scoped, tag = 'scoped memory for tpu_custom_call.1']
    #allocation6 [shape = 's32[1]{0}', space=sflag, size = 0x4, scoped, tag = 'scoped memory for tpu_custom_call.1']
    #allocation7 [shape = 'u8[131072]{0}', space=vmem, size = 0x20000, scoped, tag = 'input window, operand 2, single buffered']
    #allocation8 [shape = 's32[1]{0}', space=sflag, size = 0x4, scoped, tag = 'scoped memory for tpu_custom_call.1']
    #allocation9 [shape = 'u8[262144]{0}', space=vmem, size = 0x40000, scoped, tag = 'input window, operand 3, single buffered']
    #allocation10 [shape = 'u8[262144]{0}', space=vmem, size = 0x40000, scoped, tag = 'input window, operand 4, single buffered']
    #allocation11 [shape = 's32[1]{0}', space=sflag, size = 0x4, scoped, tag = 'scoped memory for tpu_custom_call.1']
    #allocation12 [shape = 'u8[786432]{0}', space=vmem, size = 0xc0000, scoped, tag = 'input window, operand 5, single buffered']
    #allocation13 [shape = 'u8[65536]{0}', space=vmem, size = 0x10000, scoped, tag = 'input window, operand 7, single buffered']
    #allocation14 [shape = 's32[1]{0}', space=sflag, size = 0x4, scoped, tag = 'scoped memory for tpu_custom_call.1']
    #allocation15 [shape = 'u8[4096]{0}', space=vmem, size = 0x1000, scoped, tag = 'output window, operand 0, single buffered']
    %14 = vsyncpa [#allocation5], 0
    %15 = vsyncpa [#allocation8], 0
    %16 = vsyncpa [#allocation11], 0
    %17 = vsyncpa [#allocation14], 0
    %18 = vsyncpa [#allocation6], 0
    // Predicated region
    $region2: #{tpu_custom_call.1} parent=1 // pred_check
      _
    $region3: #{tpu_custom_call.1} parent=1 // pred_check_branch
      %20 = sbr.rel (0) target = $region5
    $region4: #{tpu_custom_call.1} parent=1 // pred_region
      %22 = vsyncadd [#allocation5], 0
      %s23 = sshll.u32 %s0, 4
      %s24 = int_to_ptr.hbm [resolvable:$true] %s23
      %s25 = sshll.u32 [#allocation4], 4
      %s26 = int_to_ptr.vmem [resolvable:$true] %s25
      %31 = dma.hbm_to_vmem [thread:$0]  %s24, 1024, %s26, [#allocation5], 128, 128, 8
    $region5: #{tpu_custom_call.1} parent=1 // pred_fallthru
      _
    // Predicated region
    $region6: #{tpu_custom_call.1} parent=1 // pred_check
      _
    $region7: #{tpu_custom_call.1} parent=1 // pred_check_branch
      %33 = sbr.rel (0) target = $region9
    $region8: #{tpu_custom_call.1} parent=1 // pred_region
      _
    $region9: #{tpu_custom_call.1} parent=1 // pred_fallthru
      _
    // Predicated region
    $region10: #{tpu_custom_call.1} parent=1 // pred_check
      _
    $region11: #{tpu_custom_call.1} parent=1 // pred_check_branch
      %35 = sbr.rel (0) target = $region13
    $region12: #{tpu_custom_call.1} parent=1 // pred_region
      %37 = vsyncadd [#allocation8], 0
      %s38 = sshll.u32 %s2, 4
      %s39 = int_to_ptr.hbm [resolvable:$true] %s38
      %s40 = sshll.u32 [#allocation7], 4
      %s41 = int_to_ptr.vmem [resolvable:$true] %s40
      %46 = dma.hbm_to_vmem [thread:$0]  %s39, 4096, %s41, [#allocation8], 512, 512, 32
    $region13: #{tpu_custom_call.1} parent=1 // pred_fallthru
      _
    // Predicated region
    $region14: #{tpu_custom_call.1} parent=1 // pred_check
      _
    $region15: #{tpu_custom_call.1} parent=1 // pred_check_branch
      %48 = sbr.rel (0) target = $region17
    $region16: #{tpu_custom_call.1} parent=1 // pred_region
      %50 = vsyncadd [#allocation8], 0
      %s51 = sshll.u32 %s3, 4
      %s52 = int_to_ptr.hbm [resolvable:$true] %s51
      %s53 = sshll.u32 [#allocation9], 4
      %s54 = int_to_ptr.vmem [resolvable:$true] %s53
      %59 = dma.hbm_to_vmem [thread:$0]  %s52, 8192, %s54, [#allocation8], 512, 512, 32
    $region17: #{tpu_custom_call.1} parent=1 // pred_fallthru
      _
    // Predicated region
    $region18: #{tpu_custom_call.1} parent=1 // pred_check
      _
    $region19: #{tpu_custom_call.1} parent=1 // pred_check_branch
      %61 = sbr.rel (0) target = $region21
    $region20: #{tpu_custom_call.1} parent=1 // pred_region
      %63 = vsyncadd [#allocation11], 0
      %s64 = sshll.u32 %s4, 4
      %s65 = int_to_ptr.hbm [resolvable:$true] %s64
      %s66 = sshll.u32 [#allocation10], 4
      %s67 = int_to_ptr.vmem [resolvable:$true] %s66
      %72 = dma.hbm_to_vmem [thread:$0]  %s65, 8192, %s67, [#allocation11], 512, 512, 32
    $region21: #{tpu_custom_call.1} parent=1 // pred_fallthru
      _
    // Predicated region
    $region22: #{tpu_custom_call.1} parent=1 // pred_check
      _
    $region23: #{tpu_custom_call.1} parent=1 // pred_check_branch
      %74 = sbr.rel (0) target = $region25
    $region24: #{tpu_custom_call.1} parent=1 // pred_region
      %76 = vsyncadd [#allocation11], 0
      %s77 = sshll.u32 %s5, 4
      %s78 = int_to_ptr.hbm [resolvable:$true] %s77
      %s79 = sshll.u32 [#allocation12], 4
      %s80 = int_to_ptr.vmem [resolvable:$true] %s79
      %85 = dma.hbm_to_vmem [thread:$0]  %s78, 24576, %s80, [#allocation11], 512, 512, 32
    $region25: #{tpu_custom_call.1} parent=1 // pred_fallthru
      _
    // Predicated region
    $region26: #{tpu_custom_call.1} parent=1 // pred_check
      _
    $region27: #{tpu_custom_call.1} parent=1 // pred_check_branch
      %87 = sbr.rel (0) target = $region29
    $region28: #{tpu_custom_call.1} parent=1 // pred_region
      _
    $region29: #{tpu_custom_call.1} parent=1 // pred_fallthru
      _
    // Predicated region
    $region30: #{tpu_custom_call.1} parent=1 // pred_check
      _
    $region31: #{tpu_custom_call.1} parent=1 // pred_check_branch
      %89 = sbr.rel (0) target = $region33
    $region32: #{tpu_custom_call.1} parent=1 // pred_region
      %91 = vsyncadd [#allocation14], 0
      %s92 = sshll.u32 %s7, 4
      %s93 = int_to_ptr.hbm [resolvable:$true] %s92
      %s94 = sshll.u32 [#allocation13], 4
      %s95 = int_to_ptr.vmem [resolvable:$true] %s94
      %100 = dma.hbm_to_vmem [thread:$0]  %s93, 2048, %s95, [#allocation14], 128, 128, 8
    $region33: #{tpu_custom_call.1} parent=1 // pred_fallthru
      _
    // Predicated region
    $region34: #{tpu_custom_call.1} parent=1 // pred_check
      _
    $region35: #{tpu_custom_call.1} parent=1 // pred_check_branch
      %102 = sbr.rel (0) target = $region37
    $region36: #{tpu_custom_call.1} parent=1 // pred_region
      _
    $region37: #{tpu_custom_call.1} parent=1 // pred_fallthru
      _
    // Predicated region
    $region38: #{tpu_custom_call.1} parent=1 // pred_check
      _
    $region39: #{tpu_custom_call.1} parent=1 // pred_check_branch
      %104 = sbr.rel (0) target = $region41
    $region40: #{tpu_custom_call.1} parent=1 // pred_region
      %106 = dma.done [#allocation5], 1024
    $region41: #{tpu_custom_call.1} parent=1 // pred_fallthru
      _
    // Predicated region
    $region42: #{tpu_custom_call.1} parent=1 // pred_check
      _
    $region43: #{tpu_custom_call.1} parent=1 // pred_check_branch
      %108 = sbr.rel (0) target = $region45
    $region44: #{tpu_custom_call.1} parent=1 // pred_region
      %110 = dma.done [#allocation8], 4096
    $region45: #{tpu_custom_call.1} parent=1 // pred_fallthru
      _
    // Predicated region
    $region46: #{tpu_custom_call.1} parent=1 // pred_check
      _
    $region47: #{tpu_custom_call.1} parent=1 // pred_check_branch
      %112 = sbr.rel (0) target = $region49
    $region48: #{tpu_custom_call.1} parent=1 // pred_region
      %114 = dma.done [#allocation8], 8192
    $region49: #{tpu_custom_call.1} parent=1 // pred_fallthru
      _
    // Predicated region
    $region50: #{tpu_custom_call.1} parent=1 // pred_check
      _
    $region51: #{tpu_custom_call.1} parent=1 // pred_check_branch
      %116 = sbr.rel (0) target = $region53
    $region52: #{tpu_custom_call.1} parent=1 // pred_region
      %118 = dma.done [#allocation11], 8192
    $region53: #{tpu_custom_call.1} parent=1 // pred_fallthru
      _
    // Predicated region
    $region54: #{tpu_custom_call.1} parent=1 // pred_check
      _
    $region55: #{tpu_custom_call.1} parent=1 // pred_check_branch
      %120 = sbr.rel (0) target = $region57
    $region56: #{tpu_custom_call.1} parent=1 // pred_region
      %122 = dma.done [#allocation11], 24576
    $region57: #{tpu_custom_call.1} parent=1 // pred_fallthru
      _
    // Predicated region
    $region58: #{tpu_custom_call.1} parent=1 // pred_check
      _
    $region59: #{tpu_custom_call.1} parent=1 // pred_check_branch
      %124 = sbr.rel (0) target = $region61
    $region60: #{tpu_custom_call.1} parent=1 // pred_region
      %126 = dma.done [#allocation14], 2048
    $region61: #{tpu_custom_call.1} parent=1 // pred_fallthru
      _
    %v127 = vld [vmem:[%s1] sm:$0xff]
    %v128 = vld [vmem:[%s6] sm:$0xf]
    %v129 = vld [vmem:[#allocation4] sm:$0xff]
    %v130 = vld [vmem:[#allocation4 + $0x8] sm:$0xff]
    %v131 = vld [vmem:[#allocation4 + $0x10] sm:$0xff]
    %v132 = vld [vmem:[#allocation4 + $0x18] sm:$0xff]
    %v133 = vld [vmem:[#allocation4 + $0x20] sm:$0xff]
    %v134 = vld [vmem:[#allocation4 + $0x28] sm:$0xff]
    %v135 = vld [vmem:[#allocation4 + $0x30] sm:$0xff]
    %v136 = vld [vmem:[#allocation4 + $0x38] sm:$0xff]
    %v137 = vld [vmem:[#allocation7] sm:$0xff]
    %v138 = vld [vmem:[#allocation7 + $0x8] sm:$0xff]
    %v139 = vld [vmem:[#allocation7 + $0x10] sm:$0xff]
    %v140 = vld [vmem:[#allocation7 + $0x18] sm:$0xff]
    %v141 = vld [vmem:[#allocation7 + $0x20] sm:$0xff]
    %v142 = vld [vmem:[#allocation7 + $0x28] sm:$0xff]
    %v143 = vld [vmem:[#allocation7 + $0x30] sm:$0xff]
    %v144 = vld [vmem:[#allocation7 + $0x38] sm:$0xff]
    %v145 = vld [vmem:[#allocation7 + $0x40] sm:$0xff]
    %v146 = vld [vmem:[#allocation7 + $0x48] sm:$0xff]
    %v147 = vld [vmem:[#allocation7 + $0x50] sm:$0xff]
    %v148 = vld [vmem:[#allocation7 + $0x58] sm:$0xff]
    %v149 = vld [vmem:[#allocation7 + $0x60] sm:$0xff]
    %v150 = vld [vmem:[#allocation7 + $0x68] sm:$0xff]
    %v151 = vld [vmem:[#allocation7 + $0x70] sm:$0xff]
    %v152 = vld [vmem:[#allocation7 + $0x78] sm:$0xff]
    %v153 = vld [vmem:[#allocation7 + $0x80] sm:$0xff]
    %v154 = vld [vmem:[#allocation7 + $0x88] sm:$0xff]
    %v155 = vld [vmem:[#allocation7 + $0x90] sm:$0xff]
    %v156 = vld [vmem:[#allocation7 + $0x98] sm:$0xff]
    %v157 = vld [vmem:[#allocation7 + $0xa0] sm:$0xff]
    %v158 = vld [vmem:[#allocation7 + $0xa8] sm:$0xff]
    %v159 = vld [vmem:[#allocation7 + $0xb0] sm:$0xff]
    %v160 = vld [vmem:[#allocation7 + $0xb8] sm:$0xff]
    %v161 = vld [vmem:[#allocation7 + $0xc0] sm:$0xff]
    %v162 = vld [vmem:[#allocation7 + $0xc8] sm:$0xff]
    %v163 = vld [vmem:[#allocation7 + $0xd0] sm:$0xff]
    %v164 = vld [vmem:[#allocation7 + $0xd8] sm:$0xff]
    %v165 = vld [vmem:[#allocation7 + $0xe0] sm:$0xff]
    %v166 = vld [vmem:[#allocation7 + $0xe8] sm:$0xff]
    %v167 = vld [vmem:[#allocation7 + $0xf0] sm:$0xff]
    %v168 = vld [vmem:[#allocation7 + $0xf8] sm:$0xff]
    %v170 = vperm.slane %v128, 0
    %v171 = vperm.slane %v128, 1
    %v172 = vperm.slane %v128, 2
    %v173 = vperm.slane %v128, 3
    %vm178 = vcmask 523264
    %v180 = vsel %vm178, %v129, 0
    %v183 = vsel %vm178, %v130, 0
    %v186 = vsel %vm178, %v131, 0
    %v189 = vsel %vm178, %v132, 0
    %v192 = vsel %vm178, %v133, 0
    %v195 = vsel %vm178, %v134, 0
    %v198 = vsel %vm178, %v135, 0
    %v201 = vsel %vm178, %v136, 0
    %203 = vmatpush.msra.mxu0 0.0
    %204 = vmatpush.msra.mxu0 0.0
    %205 = vmatpush.msra.mxu0 0.0
    %206 = vmatpush.msra.mxu0 0.0
    %207 = vmatpush.msra.mxu0 0.0
    %208 = vmatpush.msra.mxu0 0.0
    %209 = vmatpush.msra.mxu0 0.0
    %210 = vmatpush.msra.mxu0 0.0
    %211 = vmatpush.msra.mxu0 %v165
    %212 = vmatpush.msra.mxu0 %v161
    %213 = vmatpush.msra.mxu0 %v157
    %214 = vmatpush.msra.mxu0 %v153
    %215 = vmatpush.msra.mxu0 %v149
    %216 = vmatpush.msra.mxu0 %v145
    %217 = vmatpush.msra.mxu0 %v141
    %218 = vmatpush.msra.mxu0 %v137
    %219 = vmatmul.f32.gmra.mxu0 %v180
    %v220 = vpop.f32.mrf.mxu0
    %v221 = vadd.f32 %v170, %v220
    %222 = vmatmul.f32.gmra.mxu0 %v183
    %v223 = vpop.f32.mrf.mxu0
    %v224 = vadd.f32 %v170, %v223
    %225 = vmatmul.f32.gmra.mxu0 %v186
    %v226 = vpop.f32.mrf.mxu0
    %v227 = vadd.f32 %v170, %v226
    %228 = vmatmul.f32.gmra.mxu0 %v189
    %v229 = vpop.f32.mrf.mxu0
    %v230 = vadd.f32 %v170, %v229
    %231 = vmatmul.f32.gmra.mxu0 %v192
    %v232 = vpop.f32.mrf.mxu0
    %v233 = vadd.f32 %v170, %v232
    %234 = vmatmul.f32.gmra.mxu0 %v195
    %v235 = vpop.f32.mrf.mxu0
    %v236 = vadd.f32 %v170, %v235
    %237 = vmatmul.f32.gmra.mxu0 %v198
    %v238 = vpop.f32.mrf.mxu0
    %v239 = vadd.f32 %v170, %v238
    %240 = vmatmul.f32.gmra.mxu0 %v201
    %v241 = vpop.f32.mrf.mxu0
    %v242 = vadd.f32 %v170, %v241
    %243 = vdwg.mxu0
    %244 = vmatpush.msra.mxu0 0.0
    %245 = vmatpush.msra.mxu0 0.0
    %246 = vmatpush.msra.mxu0 0.0
    %247 = vmatpush.msra.mxu0 0.0
    %248 = vmatpush.msra.mxu0 0.0
    %249 = vmatpush.msra.mxu0 0.0
    %250 = vmatpush.msra.mxu0 0.0
    %251 = vmatpush.msra.mxu0 0.0
    %252 = vmatpush.msra.mxu0 %v166
    %253 = vmatpush.msra.mxu0 %v162
    %254 = vmatpush.msra.mxu0 %v158
    %255 = vmatpush.msra.mxu0 %v154
    %256 = vmatpush.msra.mxu0 %v150
    %257 = vmatpush.msra.mxu0 %v146
    %258 = vmatpush.msra.mxu0 %v142
    %259 = vmatpush.msra.mxu0 %v138
    %260 = vmatmul.f32.gmra.mxu0 %v180
    %v261 = vpop.f32.mrf.mxu0
    %v262 = vadd.f32 %v171, %v261
    %263 = vmatmul.f32.gmra.mxu0 %v183
    %v264 = vpop.f32.mrf.mxu0
    %v265 = vadd.f32 %v171, %v264
    %266 = vmatmul.f32.gmra.mxu0 %v186
    %v267 = vpop.f32.mrf.mxu0
    %v268 = vadd.f32 %v171, %v267
    %269 = vmatmul.f32.gmra.mxu0 %v189
    %v270 = vpop.f32.mrf.mxu0
    %v271 = vadd.f32 %v171, %v270
    %272 = vmatmul.f32.gmra.mxu0 %v192
    %v273 = vpop.f32.mrf.mxu0
    %v274 = vadd.f32 %v171, %v273
    %275 = vmatmul.f32.gmra.mxu0 %v195
    %v276 = vpop.f32.mrf.mxu0
    %v277 = vadd.f32 %v171, %v276
    %278 = vmatmul.f32.gmra.mxu0 %v198
    %v279 = vpop.f32.mrf.mxu0
    %v280 = vadd.f32 %v171, %v279
    %281 = vmatmul.f32.gmra.mxu0 %v201
    %v282 = vpop.f32.mrf.mxu0
    %v283 = vadd.f32 %v171, %v282
    %284 = vdwg.mxu0
    %285 = vmatpush.msra.mxu0 0.0
    %286 = vmatpush.msra.mxu0 0.0
    %287 = vmatpush.msra.mxu0 0.0
    %288 = vmatpush.msra.mxu0 0.0
    %289 = vmatpush.msra.mxu0 0.0
    %290 = vmatpush.msra.mxu0 0.0
    %291 = vmatpush.msra.mxu0 0.0
    %292 = vmatpush.msra.mxu0 0.0
    %293 = vmatpush.msra.mxu0 %v167
    %294 = vmatpush.msra.mxu0 %v163
    %295 = vmatpush.msra.mxu0 %v159
    %296 = vmatpush.msra.mxu0 %v155
    %297 = vmatpush.msra.mxu0 %v151
    %298 = vmatpush.msra.mxu0 %v147
    %299 = vmatpush.msra.mxu0 %v143
    %300 = vmatpush.msra.mxu0 %v139
    %301 = vmatmul.f32.gmra.mxu0 %v180
    %v302 = vpop.f32.mrf.mxu0
    %v303 = vadd.f32 %v172, %v302
    %304 = vmatmul.f32.gmra.mxu0 %v183
    %v305 = vpop.f32.mrf.mxu0
    %v306 = vadd.f32 %v172, %v305
    %307 = vmatmul.f32.gmra.mxu0 %v186
    %v308 = vpop.f32.mrf.mxu0
    %v309 = vadd.f32 %v172, %v308
    %310 = vmatmul.f32.gmra.mxu0 %v189
    %v311 = vpop.f32.mrf.mxu0
    %v312 = vadd.f32 %v172, %v311
    %313 = vmatmul.f32.gmra.mxu0 %v192
    %v314 = vpop.f32.mrf.mxu0
    %v315 = vadd.f32 %v172, %v314
    %316 = vmatmul.f32.gmra.mxu0 %v195
    %v317 = vpop.f32.mrf.mxu0
    %v318 = vadd.f32 %v172, %v317
    %319 = vmatmul.f32.gmra.mxu0 %v198
    %v320 = vpop.f32.mrf.mxu0
    %v321 = vadd.f32 %v172, %v320
    %322 = vmatmul.f32.gmra.mxu0 %v201
    %v323 = vpop.f32.mrf.mxu0
    %v324 = vadd.f32 %v172, %v323
    %325 = vdwg.mxu0
    %326 = vmatpush.msra.mxu0 0.0
    %327 = vmatpush.msra.mxu0 0.0
    %328 = vmatpush.msra.mxu0 0.0
    %329 = vmatpush.msra.mxu0 0.0
    %330 = vmatpush.msra.mxu0 0.0
    %331 = vmatpush.msra.mxu0 0.0
    %332 = vmatpush.msra.mxu0 0.0
    %333 = vmatpush.msra.mxu0 0.0
    %334 = vmatpush.msra.mxu0 %v168
    %335 = vmatpush.msra.mxu0 %v164
    %336 = vmatpush.msra.mxu0 %v160
    %337 = vmatpush.msra.mxu0 %v156
    %338 = vmatpush.msra.mxu0 %v152
    %339 = vmatpush.msra.mxu0 %v148
    %340 = vmatpush.msra.mxu0 %v144
    %341 = vmatpush.msra.mxu0 %v140
    %342 = vmatmul.f32.gmra.mxu0 %v180
    %v343 = vpop.f32.mrf.mxu0
    %v344 = vadd.f32 %v173, %v343
    %345 = vmatmul.f32.gmra.mxu0 %v183
    %v346 = vpop.f32.mrf.mxu0
    %v347 = vadd.f32 %v173, %v346
    %348 = vmatmul.f32.gmra.mxu0 %v186
    %v349 = vpop.f32.mrf.mxu0
    %v350 = vadd.f32 %v173, %v349
    %351 = vmatmul.f32.gmra.mxu0 %v189
    %v352 = vpop.f32.mrf.mxu0
    %v353 = vadd.f32 %v173, %v352
    %354 = vmatmul.f32.gmra.mxu0 %v192
    %v355 = vpop.f32.mrf.mxu0
    %v356 = vadd.f32 %v173, %v355
    %357 = vmatmul.f32.gmra.mxu0 %v195
    %v358 = vpop.f32.mrf.mxu0
    %v359 = vadd.f32 %v173, %v358
    %360 = vmatmul.f32.gmra.mxu0 %v198
    %v361 = vpop.f32.mrf.mxu0
    %v362 = vadd.f32 %v173, %v361
    %363 = vmatmul.f32.gmra.mxu0 %v201
    %v364 = vpop.f32.mrf.mxu0
    %v365 = vadd.f32 %v173, %v364
    %366 = vdwg.mxu0
    %367 = vst [vmem:[#allocation2] sm:$0xff] %v221
    %368 = vst [vmem:[#allocation2 + $0x8] sm:$0xff] %v262
    %369 = vst [vmem:[#allocation2 + $0x10] sm:$0xff] %v303
    %370 = vst [vmem:[#allocation2 + $0x18] sm:$0xff] %v344
    %371 = vst [vmem:[#allocation2 + $0x20] sm:$0xff] %v224
    %372 = vst [vmem:[#allocation2 + $0x28] sm:$0xff] %v265
    %373 = vst [vmem:[#allocation2 + $0x30] sm:$0xff] %v306
    %374 = vst [vmem:[#allocation2 + $0x38] sm:$0xff] %v347
    %375 = vst [vmem:[#allocation2 + $0x40] sm:$0xff] %v227
    %376 = vst [vmem:[#allocation2 + $0x48] sm:$0xff] %v268
    %377 = vst [vmem:[#allocation2 + $0x50] sm:$0xff] %v309
    %378 = vst [vmem:[#allocation2 + $0x58] sm:$0xff] %v350
    %379 = vst [vmem:[#allocation2 + $0x60] sm:$0xff] %v230
    %380 = vst [vmem:[#allocation2 + $0x68] sm:$0xff] %v271
    %381 = vst [vmem:[#allocation2 + $0x70] sm:$0xff] %v312
    %382 = vst [vmem:[#allocation2 + $0x78] sm:$0xff] %v353
    %383 = vst [vmem:[#allocation2 + $0x80] sm:$0xff] %v233
    %384 = vst [vmem:[#allocation2 + $0x88] sm:$0xff] %v274
    %385 = vst [vmem:[#allocation2 + $0x90] sm:$0xff] %v315
    %386 = vst [vmem:[#allocation2 + $0x98] sm:$0xff] %v356
    %387 = vst [vmem:[#allocation2 + $0xa0] sm:$0xff] %v236
    %388 = vst [vmem:[#allocation2 + $0xa8] sm:$0xff] %v277
    %389 = vst [vmem:[#allocation2 + $0xb0] sm:$0xff] %v318
    %390 = vst [vmem:[#allocation2 + $0xb8] sm:$0xff] %v359
    %391 = vst [vmem:[#allocation2 + $0xc0] sm:$0xff] %v239
    %392 = vst [vmem:[#allocation2 + $0xc8] sm:$0xff] %v280
    %393 = vst [vmem:[#allocation2 + $0xd0] sm:$0xff] %v321
    %394 = vst [vmem:[#allocation2 + $0xd8] sm:$0xff] %v362
    %395 = vst [vmem:[#allocation2 + $0xe0] sm:$0xff] %v242
    %396 = vst [vmem:[#allocation2 + $0xe8] sm:$0xff] %v283
    %397 = vst [vmem:[#allocation2 + $0xf0] sm:$0xff] %v324
    %398 = vst [vmem:[#allocation2 + $0xf8] sm:$0xff] %v365
    %s399 = smul.u32 0, 4
    %s400 = smul.addr %s399, 8
    %s401 = scalar_lea.vmem [#allocation2], %s400
    %v402 = vld [vmem:[%s401] sm:$0xff]
    %v403 = vld [vmem:[%s401 + $0x8] sm:$0xff]
    %v404 = vld [vmem:[%s401 + $0x10] sm:$0xff]
    %v405 = vld [vmem:[%s401 + $0x18] sm:$0xff]
    %v406 = vld [vmem:[#allocation12] sm:$0xff]
    %v407 = vld [vmem:[#allocation12 + $0x8] sm:$0xff]
    %v408 = vld [vmem:[#allocation12 + $0x10] sm:$0xff]
    %v409 = vld [vmem:[#allocation12 + $0x18] sm:$0xff]
    %v410 = vld [vmem:[#allocation12 + $0x20] sm:$0xff]
    %v411 = vld [vmem:[#allocation12 + $0x28] sm:$0xff]
    %v412 = vld [vmem:[#allocation12 + $0x30] sm:$0xff]
    %v413 = vld [vmem:[#allocation12 + $0x38] sm:$0xff]
    %v414 = vld [vmem:[#allocation12 + $0x40] sm:$0xff]
    %v415 = vld [vmem:[#allocation12 + $0x48] sm:$0xff]
    %v416 = vld [vmem:[#allocation12 + $0x50] sm:$0xff]
    %v417 = vld [vmem:[#allocation12 + $0x58] sm:$0xff]
    %v418 = vld [vmem:[#allocation12 + $0x60] sm:$0xff]
    %v419 = vld [vmem:[#allocation12 + $0x68] sm:$0xff]
    %v420 = vld [vmem:[#allocation12 + $0x70] sm:$0xff]
    %v421 = vld [vmem:[#allocation12 + $0x78] sm:$0xff]
    %v422 = vld [vmem:[#allocation12 + $0x80] sm:$0xff]
    %v423 = vld [vmem:[#allocation12 + $0x88] sm:$0xff]
    %v424 = vld [vmem:[#allocation12 + $0x90] sm:$0xff]
    %v425 = vld [vmem:[#allocation12 + $0x98] sm:$0xff]
    %v426 = vld [vmem:[#allocation12 + $0xa0] sm:$0xff]
    %v427 = vld [vmem:[#allocation12 + $0xa8] sm:$0xff]
    %v428 = vld [vmem:[#allocation12 + $0xb0] sm:$0xff]
    %v429 = vld [vmem:[#allocation12 + $0xb8] sm:$0xff]
    %v430 = vld [vmem:[#allocation12 + $0xc0] sm:$0xff]
    %v431 = vld [vmem:[#allocation12 + $0xc8] sm:$0xff]
    %v432 = vld [vmem:[#allocation12 + $0xd0] sm:$0xff]
    %v433 = vld [vmem:[#allocation12 + $0xd8] sm:$0xff]
    %v434 = vld [vmem:[#allocation12 + $0xe0] sm:$0xff]
    %v435 = vld [vmem:[#allocation12 + $0xe8] sm:$0xff]
    %v436 = vld [vmem:[#allocation12 + $0xf0] sm:$0xff]
    %v437 = vld [vmem:[#allocation12 + $0xf8] sm:$0xff]
    %v438 = vld [vmem:[#allocation12 + $0x100] sm:$0xff]
    %v439 = vld [vmem:[#allocation12 + $0x108] sm:$0xff]
    %v440 = vld [vmem:[#allocation12 + $0x110] sm:$0xff]
    %v441 = vld [vmem:[#allocation12 + $0x118] sm:$0xff]
    %v442 = vld [vmem:[#allocation12 + $0x120] sm:$0xff]
    %v443 = vld [vmem:[#allocation12 + $0x128] sm:$0xff]
    %v444 = vld [vmem:[#allocation12 + $0x130] sm:$0xff]
    %v445 = vld [vmem:[#allocation12 + $0x138] sm:$0xff]
    %v446 = vld [vmem:[#allocation12 + $0x140] sm:$0xff]
    %v447 = vld [vmem:[#allocation12 + $0x148] sm:$0xff]
    %v448 = vld [vmem:[#allocation12 + $0x150] sm:$0xff]
    %v449 = vld [vmem:[#allocation12 + $0x158] sm:$0xff]
    %v450 = vld [vmem:[#allocation12 + $0x160] sm:$0xff]
    %v451 = vld [vmem:[#allocation12 + $0x168] sm:$0xff]
    %v452 = vld [vmem:[#allocation12 + $0x170] sm:$0xff]
    %v453 = vld [vmem:[#allocation12 + $0x178] sm:$0xff]
    %v454 = vld [vmem:[#allocation12 + $0x180] sm:$0xff]
    %v455 = vld [vmem:[#allocation12 + $0x188] sm:$0xff]
    %v456 = vld [vmem:[#allocation12 + $0x190] sm:$0xff]
    %v457 = vld [vmem:[#allocation12 + $0x198] sm:$0xff]
    %v458 = vld [vmem:[#allocation12 + $0x1a0] sm:$0xff]
    %v459 = vld [vmem:[#allocation12 + $0x1a8] sm:$0xff]
    %v460 = vld [vmem:[#allocation12 + $0x1b0] sm:$0xff]
    %v461 = vld [vmem:[#allocation12 + $0x1b8] sm:$0xff]
    %v462 = vld [vmem:[#allocation12 + $0x1c0] sm:$0xff]
    %v463 = vld [vmem:[#allocation12 + $0x1c8] sm:$0xff]
    %v464 = vld [vmem:[#allocation12 + $0x1d0] sm:$0xff]
    %v465 = vld [vmem:[#allocation12 + $0x1d8] sm:$0xff]
    %v466 = vld [vmem:[#allocation12 + $0x1e0] sm:$0xff]
    %v467 = vld [vmem:[#allocation12 + $0x1e8] sm:$0xff]
    %v468 = vld [vmem:[#allocation12 + $0x1f0] sm:$0xff]
    %v469 = vld [vmem:[#allocation12 + $0x1f8] sm:$0xff]
    %470 = vmatpush.msra.mxu0 %v466
    %471 = vmatpush.msra.mxu0 %v462
    %472 = vmatpush.msra.mxu0 %v458
    %473 = vmatpush.msra.mxu0 %v454
    %474 = vmatpush.msra.mxu0 %v450
    %475 = vmatpush.msra.mxu0 %v446
    %476 = vmatpush.msra.mxu0 %v442
    %477 = vmatpush.msra.mxu0 %v438
    %478 = vmatpush.msra.mxu0 %v434
    %479 = vmatpush.msra.mxu0 %v430
    %480 = vmatpush.msra.mxu0 %v426
    %481 = vmatpush.msra.mxu0 %v422
    %482 = vmatpush.msra.mxu0 %v418
    %483 = vmatpush.msra.mxu0 %v414
    %484 = vmatpush.msra.mxu0 %v410
    %485 = vmatpush.msra.mxu0 %v406
    %486 = vmatmul.f32.gmra.mxu0 0.0
    %v487 = vpop.f32.mrf.mxu0
    %v488 = vadd.f32 0.0, %v487
    %489 = vdwg.mxu0
    %490 = vmatpush.msra.mxu0 %v467
    %491 = vmatpush.msra.mxu0 %v463
    %492 = vmatpush.msra.mxu0 %v459
    %493 = vmatpush.msra.mxu0 %v455
    %494 = vmatpush.msra.mxu0 %v451
    %495 = vmatpush.msra.mxu0 %v447
    %496 = vmatpush.msra.mxu0 %v443
    %497 = vmatpush.msra.mxu0 %v439
    %498 = vmatpush.msra.mxu0 %v435
    %499 = vmatpush.msra.mxu0 %v431
    %500 = vmatpush.msra.mxu0 %v427
    %501 = vmatpush.msra.mxu0 %v423
    %502 = vmatpush.msra.mxu0 %v419
    %503 = vmatpush.msra.mxu0 %v415
    %504 = vmatpush.msra.mxu0 %v411
    %505 = vmatpush.msra.mxu0 %v407
    %506 = vmatmul.f32.gmra.mxu0 0.0
    %v507 = vpop.f32.mrf.mxu0
    %v508 = vadd.f32 0.0, %v507
    %509 = vdwg.mxu0
    %510 = vmatpush.msra.mxu0 %v468
    %511 = vmatpush.msra.mxu0 %v464
    %512 = vmatpush.msra.mxu0 %v460
    %513 = vmatpush.msra.mxu0 %v456
    %514 = vmatpush.msra.mxu0 %v452
    %515 = vmatpush.msra.mxu0 %v448
    %516 = vmatpush.msra.mxu0 %v444
    %517 = vmatpush.msra.mxu0 %v440
    %518 = vmatpush.msra.mxu0 %v436
    %519 = vmatpush.msra.mxu0 %v432
    %520 = vmatpush.msra.mxu0 %v428
    %521 = vmatpush.msra.mxu0 %v424
    %522 = vmatpush.msra.mxu0 %v420
    %523 = vmatpush.msra.mxu0 %v416
    %524 = vmatpush.msra.mxu0 %v412
    %525 = vmatpush.msra.mxu0 %v408
    %526 = vmatmul.f32.gmra.mxu0 0.0
    %v527 = vpop.f32.mrf.mxu0
    %v528 = vadd.f32 0.0, %v527
    %529 = vdwg.mxu0
    %530 = vmatpush.msra.mxu0 %v469
    %531 = vmatpush.msra.mxu0 %v465
    %532 = vmatpush.msra.mxu0 %v461
    %533 = vmatpush.msra.mxu0 %v457
    %534 = vmatpush.msra.mxu0 %v453
    %535 = vmatpush.msra.mxu0 %v449
    %536 = vmatpush.msra.mxu0 %v445
    %537 = vmatpush.msra.mxu0 %v441
    %538 = vmatpush.msra.mxu0 %v437
    %539 = vmatpush.msra.mxu0 %v433
    %540 = vmatpush.msra.mxu0 %v429
    %541 = vmatpush.msra.mxu0 %v425
    %542 = vmatpush.msra.mxu0 %v421
    %543 = vmatpush.msra.mxu0 %v417
    %544 = vmatpush.msra.mxu0 %v413
    %545 = vmatpush.msra.mxu0 %v409
    %546 = vmatmul.f32.gmra.mxu0 0.0
    %v547 = vpop.f32.mrf.mxu0
    %v548 = vadd.f32 0.0, %v547
    %549 = vdwg.mxu0
    %v550 = vadd.f32 %v402, %v488
    %v551 = vadd.f32 %v403, %v508
    %v552 = vadd.f32 %v404, %v528
    %v553 = vadd.f32 %v405, %v548
    %v554 = vxor.u32 %v550, 2147483648
    %v555 = vxor.u32 %v551, 2147483648
    %v556 = vxor.u32 %v552, 2147483648
    %v557 = vmul.f32 %v554, 1.442695
    %v558 = vpow.pop %v557
    %v559 = vmul.f32 %v555, 1.442695
    %v560 = vpow.pop %v559
    %v561 = vmul.f32 %v556, 1.442695
    %v562 = vpow.pop %v561
    %v563 = vadd.f32 %v558, 1.0
    %v564 = vadd.f32 %v560, 1.0
    %v565 = vadd.f32 %v562, 1.0
    %v566 = vrcp.pop %v563
    %v567 = vmul.f32 %v563, %v566
    %v568 = vsub.f32 1.0, %v567
    %v569 = vmul.f32 %v566, %v568
    %v570 = vadd.f32 %v566, %v569
    %vm571 = vweird.f32 %v563
    %vm572 = vweird.f32 %v566
    %vm573 = vmor %vm571, %vm572
    %v574 = vsel %vm573, %v566, %v570
    %v575 = vand.u32 2147483647, %v563
    %vm576 = vcmp.eq.f32.partialorder %v575, 8.507059e+37
    %v577 = vand.u32 %v563, 2147483648
    %v578 = vor.u32 1.1754944e-38, %v577
    %v579 = vsel %vm576, %v578, %v574
    %v580 = vmul.f32 1.0, %v579
    %v581 = vrcp.pop %v564
    %v582 = vmul.f32 %v564, %v581
    %v583 = vsub.f32 1.0, %v582
    %v584 = vmul.f32 %v581, %v583
    %v585 = vadd.f32 %v581, %v584
    %vm586 = vweird.f32 %v564
    %vm587 = vweird.f32 %v581
    %vm588 = vmor %vm586, %vm587
    %v589 = vsel %vm588, %v581, %v585
    %v590 = vand.u32 2147483647, %v564
    %vm591 = vcmp.eq.f32.partialorder %v590, 8.507059e+37
    %v592 = vand.u32 %v564, 2147483648
    %v593 = vor.u32 1.1754944e-38, %v592
    %v594 = vsel %vm591, %v593, %v589
    %v595 = vmul.f32 1.0, %v594
    %v596 = vrcp.pop %v565
    %v597 = vmul.f32 %v565, %v596
    %v598 = vsub.f32 1.0, %v597
    %v599 = vmul.f32 %v596, %v598
    %v600 = vadd.f32 %v596, %v599
    %vm601 = vweird.f32 %v565
    %vm602 = vweird.f32 %v596
    %vm603 = vmor %vm601, %vm602
    %v604 = vsel %vm603, %v596, %v600
    %v605 = vand.u32 2147483647, %v565
    %vm606 = vcmp.eq.f32.partialorder %v605, 8.507059e+37
    %v607 = vand.u32 %v565, 2147483648
    %v608 = vor.u32 1.1754944e-38, %v607
    %v609 = vsel %vm606, %v608, %v604
    %v610 = vmul.f32 1.0, %v609
    %v611 = vtanh.pop %v553
    %v612 = vmul.f32 %v595, 0.0
    %v613 = vmul.f32 %v580, %v611
    %v614 = vadd.f32 %v612, %v613
    %v615 = vtanh.pop %v614
    %v616 = vmul.f32 %v610, %v615
    %617 = vst [vmem:[#allocation3] sm:$0xff] %v616
    %s618 = smul.u32 1, 4
    %s619 = smul.addr %s618, 8
    %s620 = scalar_lea.vmem [#allocation2], %s619
    %v621 = vld [vmem:[%s620] sm:$0xff]
    %v622 = vld [vmem:[%s620 + $0x8] sm:$0xff]
    %v623 = vld [vmem:[%s620 + $0x10] sm:$0xff]
    %v624 = vld [vmem:[%s620 + $0x18] sm:$0xff]
    %v625 = vld [vmem:[#allocation12] sm:$0xff]
    %v626 = vld [vmem:[#allocation12 + $0x8] sm:$0xff]
    %v627 = vld [vmem:[#allocation12 + $0x10] sm:$0xff]
    %v628 = vld [vmem:[#allocation12 + $0x18] sm:$0xff]
    %v629 = vld [vmem:[#allocation12 + $0x20] sm:$0xff]
    %v630 = vld [vmem:[#allocation12 + $0x28] sm:$0xff]
    %v631 = vld [vmem:[#allocation12 + $0x30] sm:$0xff]
    %v632 = vld [vmem:[#allocation12 + $0x38] sm:$0xff]
    %v633 = vld [vmem:[#allocation12 + $0x40] sm:$0xff]
    %v634 = vld [vmem:[#allocation12 + $0x48] sm:$0xff]
    %v635 = vld [vmem:[#allocation12 + $0x50] sm:$0xff]
    %v636 = vld [vmem:[#allocation12 + $0x58] sm:$0xff]
    %v637 = vld [vmem:[#allocation12 + $0x60] sm:$0xff]
    %v638 = vld [vmem:[#allocation12 + $0x68] sm:$0xff]
    %v639 = vld [vmem:[#allocation12 + $0x70] sm:$0xff]
    %v640 = vld [vmem:[#allocation12 + $0x78] sm:$0xff]
    %v641 = vld [vmem:[#allocation12 + $0x80] sm:$0xff]
    %v642 = vld [vmem:[#allocation12 + $0x88] sm:$0xff]
    %v643 = vld [vmem:[#allocation12 + $0x90] sm:$0xff]
    %v644 = vld [vmem:[#allocation12 + $0x98] sm:$0xff]
    %v645 = vld [vmem:[#allocation12 + $0xa0] sm:$0xff]
    %v646 = vld [vmem:[#allocation12 + $0xa8] sm:$0xff]
    %v647 = vld [vmem:[#allocation12 + $0xb0] sm:$0xff]
    %v648 = vld [vmem:[#allocation12 + $0xb8] sm:$0xff]
    %v649 = vld [vmem:[#allocation12 + $0xc0] sm:$0xff]
    %v650 = vld [vmem:[#allocation12 + $0xc8] sm:$0xff]
    %v651 = vld [vmem:[#allocation12 + $0xd0] sm:$0xff]
    %v652 = vld [vmem:[#allocation12 + $0xd8] sm:$0xff]
    %v653 = vld [vmem:[#allocation12 + $0xe0] sm:$0xff]
    %v654 = vld [vmem:[#allocation12 + $0xe8] sm:$0xff]
    %v655 = vld [vmem:[#allocation12 + $0xf0] sm:$0xff]
    %v656 = vld [vmem:[#allocation12 + $0xf8] sm:$0xff]
    %v657 = vld [vmem:[#allocation12 + $0x100] sm:$0xff]
    %v658 = vld [vmem:[#allocation12 + $0x108] sm:$0xff]
    %v659 = vld [vmem:[#allocation12 + $0x110] sm:$0xff]
    %v660 = vld [vmem:[#allocation12 + $0x118] sm:$0xff]
    %v661 = vld [vmem:[#allocation12 + $0x120] sm:$0xff]
    %v662 = vld [vmem:[#allocation12 + $0x128] sm:$0xff]
    %v663 = vld [vmem:[#allocation12 + $0x130] sm:$0xff]
    %v664 = vld [vmem:[#allocation12 + $0x138] sm:$0xff]
    %v665 = vld [vmem:[#allocation12 + $0x140] sm:$0xff]
    %v666 = vld [vmem:[#allocation12 + $0x148] sm:$0xff]
    %v667 = vld [vmem:[#allocation12 + $0x150] sm:$0xff]
    %v668 = vld [vmem:[#allocation12 + $0x158] sm:$0xff]
    %v669 = vld [vmem:[#allocation12 + $0x160] sm:$0xff]
    %v670 = vld [vmem:[#allocation12 + $0x168] sm:$0xff]
    %v671 = vld [vmem:[#allocation12 + $0x170] sm:$0xff]
    %v672 = vld [vmem:[#allocation12 + $0x178] sm:$0xff]
    %v673 = vld [vmem:[#allocation12 + $0x180] sm:$0xff]
    %v674 = vld [vmem:[#allocation12 + $0x188] sm:$0xff]
    %v675 = vld [vmem:[#allocation12 + $0x190] sm:$0xff]
    %v676 = vld [vmem:[#allocation12 + $0x198] sm:$0xff]
    %v677 = vld [vmem:[#allocation12 + $0x1a0] sm:$0xff]
    %v678 = vld [vmem:[#allocation12 + $0x1a8] sm:$0xff]
    %v679 = vld [vmem:[#allocation12 + $0x1b0] sm:$0xff]
    %v680 = vld [vmem:[#allocation12 + $0x1b8] sm:$0xff]
    %v681 = vld [vmem:[#allocation12 + $0x1c0] sm:$0xff]
    %v682 = vld [vmem:[#allocation12 + $0x1c8] sm:$0xff]
    %v683 = vld [vmem:[#allocation12 + $0x1d0] sm:$0xff]
    %v684 = vld [vmem:[#allocation12 + $0x1d8] sm:$0xff]
    %v685 = vld [vmem:[#allocation12 + $0x1e0] sm:$0xff]
    %v686 = vld [vmem:[#allocation12 + $0x1e8] sm:$0xff]
    %v687 = vld [vmem:[#allocation12 + $0x1f0] sm:$0xff]
    %v688 = vld [vmem:[#allocation12 + $0x1f8] sm:$0xff]
    %689 = vmatpush.msra.mxu0 %v685
    %690 = vmatpush.msra.mxu0 %v681
    %691 = vmatpush.msra.mxu0 %v677
    %692 = vmatpush.msra.mxu0 %v673
    %693 = vmatpush.msra.mxu0 %v669
    %694 = vmatpush.msra.mxu0 %v665
    %695 = vmatpush.msra.mxu0 %v661
    %696 = vmatpush.msra.mxu0 %v657
    %697 = vmatpush.msra.mxu0 %v653
    %698 = vmatpush.msra.mxu0 %v649
    %699 = vmatpush.msra.mxu0 %v645
    %700 = vmatpush.msra.mxu0 %v641
    %701 = vmatpush.msra.mxu0 %v637
    %702 = vmatpush.msra.mxu0 %v633
    %703 = vmatpush.msra.mxu0 %v629
    %704 = vmatpush.msra.mxu0 %v625
    %705 = vmatmul.f32.gmra.mxu0 %v616
    %v706 = vpop.f32.mrf.mxu0
    %v707 = vadd.f32 0.0, %v706
    %708 = vdwg.mxu0
    %709 = vmatpush.msra.mxu0 %v686
    %710 = vmatpush.msra.mxu0 %v682
    %711 = vmatpush.msra.mxu0 %v678
    %712 = vmatpush.msra.mxu0 %v674
    %713 = vmatpush.msra.mxu0 %v670
    %714 = vmatpush.msra.mxu0 %v666
    %715 = vmatpush.msra.mxu0 %v662
    %716 = vmatpush.msra.mxu0 %v658
    %717 = vmatpush.msra.mxu0 %v654
    %718 = vmatpush.msra.mxu0 %v650
    %719 = vmatpush.msra.mxu0 %v646
    %720 = vmatpush.msra.mxu0 %v642
    %721 = vmatpush.msra.mxu0 %v638
    %722 = vmatpush.msra.mxu0 %v634
    %723 = vmatpush.msra.mxu0 %v630
    %724 = vmatpush.msra.mxu0 %v626
    %725 = vmatmul.f32.gmra.mxu0 %v616
    %v726 = vpop.f32.mrf.mxu0
    %v727 = vadd.f32 0.0, %v726
    %728 = vdwg.mxu0
    %729 = vmatpush.msra.mxu0 %v687
    %730 = vmatpush.msra.mxu0 %v683
    %731 = vmatpush.msra.mxu0 %v679
    %732 = vmatpush.msra.mxu0 %v675
    %733 = vmatpush.msra.mxu0 %v671
    %734 = vmatpush.msra.mxu0 %v667
    %735 = vmatpush.msra.mxu0 %v663
    %736 = vmatpush.msra.mxu0 %v659
    %737 = vmatpush.msra.mxu0 %v655
    %738 = vmatpush.msra.mxu0 %v651
    %739 = vmatpush.msra.mxu0 %v647
    %740 = vmatpush.msra.mxu0 %v643
    %741 = vmatpush.msra.mxu0 %v639
    %742 = vmatpush.msra.mxu0 %v635
    %743 = vmatpush.msra.mxu0 %v631
    %744 = vmatpush.msra.mxu0 %v627
    %745 = vmatmul.f32.gmra.mxu0 %v616
    %v746 = vpop.f32.mrf.mxu0
    %v747 = vadd.f32 0.0, %v746
    %748 = vdwg.mxu0
    %749 = vmatpush.msra.mxu0 %v688
    %750 = vmatpush.msra.mxu0 %v684
    %751 = vmatpush.msra.mxu0 %v680
    %752 = vmatpush.msra.mxu0 %v676
    %753 = vmatpush.msra.mxu0 %v672
    %754 = vmatpush.msra.mxu0 %v668
    %755 = vmatpush.msra.mxu0 %v664
    %756 = vmatpush.msra.mxu0 %v660
    %757 = vmatpush.msra.mxu0 %v656
    %758 = vmatpush.msra.mxu0 %v652
    %759 = vmatpush.msra.mxu0 %v648
    %760 = vmatpush.msra.mxu0 %v644
    %761 = vmatpush.msra.mxu0 %v640
    %762 = vmatpush.msra.mxu0 %v636
    %763 = vmatpush.msra.mxu0 %v632
    %764 = vmatpush.msra.mxu0 %v628
    %765 = vmatmul.f32.gmra.mxu0 %v616
    %v766 = vpop.f32.mrf.mxu0
    %v767 = vadd.f32 0.0, %v766
    %768 = vdwg.mxu0
    %v769 = vadd.f32 %v621, %v707
    %v770 = vadd.f32 %v622, %v727
    %v771 = vadd.f32 %v623, %v747
    %v772 = vadd.f32 %v624, %v767
    %v773 = vxor.u32 %v769, 2147483648
    %v774 = vxor.u32 %v770, 2147483648
    %v775 = vxor.u32 %v771, 2147483648
    %v776 = vmul.f32 %v773, 1.442695
    %v777 = vpow.pop %v776
    %v778 = vmul.f32 %v774, 1.442695
    %v779 = vpow.pop %v778
    %v780 = vmul.f32 %v775, 1.442695
    %v781 = vpow.pop %v780
    %v782 = vadd.f32 %v777, 1.0
    %v783 = vadd.f32 %v779, 1.0
    %v784 = vadd.f32 %v781, 1.0
    %v785 = vrcp.pop %v782
    %v786 = vmul.f32 %v782, %v785
    %v787 = vsub.f32 1.0, %v786
    %v788 = vmul.f32 %v785, %v787
    %v789 = vadd.f32 %v785, %v788
    %vm790 = vweird.f32 %v782
    %vm791 = vweird.f32 %v785
    %vm792 = vmor %vm790, %vm791
    %v793 = vsel %vm792, %v785, %v789
    %v794 = vand.u32 2147483647, %v782
    %vm795 = vcmp.eq.f32.partialorder %v794, 8.507059e+37
    %v796 = vand.u32 %v782, 2147483648
    %v797 = vor.u32 1.1754944e-38, %v796
    %v798 = vsel %vm795, %v797, %v793
    %v799 = vmul.f32 1.0, %v798
    %v800 = vrcp.pop %v783
    %v801 = vmul.f32 %v783, %v800
    %v802 = vsub.f32 1.0, %v801
    %v803 = vmul.f32 %v800, %v802
    %v804 = vadd.f32 %v800, %v803
    %vm805 = vweird.f32 %v783
    %vm806 = vweird.f32 %v800
    %vm807 = vmor %vm805, %vm806
    %v808 = vsel %vm807, %v800, %v804
    %v809 = vand.u32 2147483647, %v783
    %vm810 = vcmp.eq.f32.partialorder %v809, 8.507059e+37
    %v811 = vand.u32 %v783, 2147483648
    %v812 = vor.u32 1.1754944e-38, %v811
    %v813 = vsel %vm810, %v812, %v808
    %v814 = vmul.f32 1.0, %v813
    %v815 = vrcp.pop %v784
    %v816 = vmul.f32 %v784, %v815
    %v817 = vsub.f32 1.0, %v816
    %v818 = vmul.f32 %v815, %v817
    %v819 = vadd.f32 %v815, %v818
    %vm820 = vweird.f32 %v784
    %vm821 = vweird.f32 %v815
    %vm822 = vmor %vm820, %vm821
    %v823 = vsel %vm822, %v815, %v819
    %v824 = vand.u32 2147483647, %v784
    %vm825 = vcmp.eq.f32.partialorder %v824, 8.507059e+37
    %v826 = vand.u32 %v784, 2147483648
    %v827 = vor.u32 1.1754944e-38, %v826
    %v828 = vsel %vm825, %v827, %v823
    %v829 = vmul.f32 1.0, %v828
    %v830 = vtanh.pop %v772
    %v831 = vmul.f32 %v814, %v614
    %v832 = vmul.f32 %v799, %v830
    %v833 = vadd.f32 %v831, %v832
    %v834 = vtanh.pop %v833
    %v835 = vmul.f32 %v829, %v834
    %s836 = scalar_lea.vmem [#allocation3], 8
    %837 = vst [vmem:[%s836] sm:$0xff] %v835
    %s838 = smul.u32 2, 4
    %s839 = smul.addr %s838, 8
    %s840 = scalar_lea.vmem [#allocation2], %s839
    %v841 = vld [vmem:[%s840] sm:$0xff]
    %v842 = vld [vmem:[%s840 + $0x8] sm:$0xff]
    %v843 = vld [vmem:[%s840 + $0x10] sm:$0xff]
    %v844 = vld [vmem:[%s840 + $0x18] sm:$0xff]
    %v845 = vld [vmem:[#allocation12] sm:$0xff]
    %v846 = vld [vmem:[#allocation12 + $0x8] sm:$0xff]
    %v847 = vld [vmem:[#allocation12 + $0x10] sm:$0xff]
    %v848 = vld [vmem:[#allocation12 + $0x18] sm:$0xff]
    %v849 = vld [vmem:[#allocation12 + $0x20] sm:$0xff]
    %v850 = vld [vmem:[#allocation12 + $0x28] sm:$0xff]
    %v851 = vld [vmem:[#allocation12 + $0x30] sm:$0xff]
    %v852 = vld [vmem:[#allocation12 + $0x38] sm:$0xff]
    %v853 = vld [vmem:[#allocation12 + $0x40] sm:$0xff]
    %v854 = vld [vmem:[#allocation12 + $0x48] sm:$0xff]
    %v855 = vld [vmem:[#allocation12 + $0x50] sm:$0xff]
    %v856 = vld [vmem:[#allocation12 + $0x58] sm:$0xff]
    %v857 = vld [vmem:[#allocation12 + $0x60] sm:$0xff]
    %v858 = vld [vmem:[#allocation12 + $0x68] sm:$0xff]
    %v859 = vld [vmem:[#allocation12 + $0x70] sm:$0xff]
    %v860 = vld [vmem:[#allocation12 + $0x78] sm:$0xff]
    %v861 = vld [vmem:[#allocation12 + $0x80] sm:$0xff]
    %v862 = vld [vmem:[#allocation12 + $0x88] sm:$0xff]
    %v863 = vld [vmem:[#allocation12 + $0x90] sm:$0xff]
    %v864 = vld [vmem:[#allocation12 + $0x98] sm:$0xff]
    %v865 = vld [vmem:[#allocation12 + $0xa0] sm:$0xff]
    %v866 = vld [vmem:[#allocation12 + $0xa8] sm:$0xff]
    %v867 = vld [vmem:[#allocation12 + $0xb0] sm:$0xff]
    %v868 = vld [vmem:[#allocation12 + $0xb8] sm:$0xff]
    %v869 = vld [vmem:[#allocation12 + $0xc0] sm:$0xff]
    %v870 = vld [vmem:[#allocation12 + $0xc8] sm:$0xff]
    %v871 = vld [vmem:[#allocation12 + $0xd0] sm:$0xff]
    %v872 = vld [vmem:[#allocation12 + $0xd8] sm:$0xff]
    %v873 = vld [vmem:[#allocation12 + $0xe0] sm:$0xff]
    %v874 = vld [vmem:[#allocation12 + $0xe8] sm:$0xff]
    %v875 = vld [vmem:[#allocation12 + $0xf0] sm:$0xff]
    %v876 = vld [vmem:[#allocation12 + $0xf8] sm:$0xff]
    %v877 = vld [vmem:[#allocation12 + $0x100] sm:$0xff]
    %v878 = vld [vmem:[#allocation12 + $0x108] sm:$0xff]
    %v879 = vld [vmem:[#allocation12 + $0x110] sm:$0xff]
    %v880 = vld [vmem:[#allocation12 + $0x118] sm:$0xff]
    %v881 = vld [vmem:[#allocation12 + $0x120] sm:$0xff]
    %v882 = vld [vmem:[#allocation12 + $0x128] sm:$0xff]
    %v883 = vld [vmem:[#allocation12 + $0x130] sm:$0xff]
    %v884 = vld [vmem:[#allocation12 + $0x138] sm:$0xff]
    %v885 = vld [vmem:[#allocation12 + $0x140] sm:$0xff]
    %v886 = vld [vmem:[#allocation12 + $0x148] sm:$0xff]
    %v887 = vld [vmem:[#allocation12 + $0x150] sm:$0xff]
    %v888 = vld [vmem:[#allocation12 + $0x158] sm:$0xff]
    %v889 = vld [vmem:[#allocation12 + $0x160] sm:$0xff]
    %v890 = vld [vmem:[#allocation12 + $0x168] sm:$0xff]
    %v891 = vld [vmem:[#allocation12 + $0x170] sm:$0xff]
    %v892 = vld [vmem:[#allocation12 + $0x178] sm:$0xff]
    %v893 = vld [vmem:[#allocation12 + $0x180] sm:$0xff]
    %v894 = vld [vmem:[#allocation12 + $0x188] sm:$0xff]
    %v895 = vld [vmem:[#allocation12 + $0x190] sm:$0xff]
    %v896 = vld [vmem:[#allocation12 + $0x198] sm:$0xff]
    %v897 = vld [vmem:[#allocation12 + $0x1a0] sm:$0xff]
    %v898 = vld [vmem:[#allocation12 + $0x1a8] sm:$0xff]
    %v899 = vld [vmem:[#allocation12 + $0x1b0] sm:$0xff]
    %v900 = vld [vmem:[#allocation12 + $0x1b8] sm:$0xff]
    %v901 = vld [vmem:[#allocation12 + $0x1c0] sm:$0xff]
    %v902 = vld [vmem:[#allocation12 + $0x1c8] sm:$0xff]
    %v903 = vld [vmem:[#allocation12 + $0x1d0] sm:$0xff]
    %v904 = vld [vmem:[#allocation12 + $0x1d8] sm:$0xff]
    %v905 = vld [vmem:[#allocation12 + $0x1e0] sm:$0xff]
    %v906 = vld [vmem:[#allocation12 + $0x1e8] sm:$0xff]
    %v907 = vld [vmem:[#allocation12 + $0x1f0] sm:$0xff]
    %v908 = vld [vmem:[#allocation12 + $0x1f8] sm:$0xff]
    %909 = vmatpush.msra.mxu0 %v905
    %910 = vmatpush.msra.mxu0 %v901
    %911 = vmatpush.msra.mxu0 %v897
    %912 = vmatpush.msra.mxu0 %v893
    %913 = vmatpush.msra.mxu0 %v889
    %914 = vmatpush.msra.mxu0 %v885
    %915 = vmatpush.msra.mxu0 %v881
    %916 = vmatpush.msra.mxu0 %v877
    %917 = vmatpush.msra.mxu0 %v873
    %918 = vmatpush.msra.mxu0 %v869
    %919 = vmatpush.msra.mxu0 %v865
    %920 = vmatpush.msra.mxu0 %v861
    %921 = vmatpush.msra.mxu0 %v857
    %922 = vmatpush.msra.mxu0 %v853
    %923 = vmatpush.msra.mxu0 %v849
    %924 = vmatpush.msra.mxu0 %v845
    %925 = vmatmul.f32.gmra.mxu0 %v835
    %v926 = vpop.f32.mrf.mxu0
    %v927 = vadd.f32 0.0, %v926
    %928 = vdwg.mxu0
    %929 = vmatpush.msra.mxu0 %v906
    %930 = vmatpush.msra.mxu0 %v902
    %931 = vmatpush.msra.mxu0 %v898
    %932 = vmatpush.msra.mxu0 %v894
    %933 = vmatpush.msra.mxu0 %v890
    %934 = vmatpush.msra.mxu0 %v886
    %935 = vmatpush.msra.mxu0 %v882
    %936 = vmatpush.msra.mxu0 %v878
    %937 = vmatpush.msra.mxu0 %v874
    %938 = vmatpush.msra.mxu0 %v870
    %939 = vmatpush.msra.mxu0 %v866
    %940 = vmatpush.msra.mxu0 %v862
    %941 = vmatpush.msra.mxu0 %v858
    %942 = vmatpush.msra.mxu0 %v854
    %943 = vmatpush.msra.mxu0 %v850
    %944 = vmatpush.msra.mxu0 %v846
    %945 = vmatmul.f32.gmra.mxu0 %v835
    %v946 = vpop.f32.mrf.mxu0
    %v947 = vadd.f32 0.0, %v946
    %948 = vdwg.mxu0
    %949 = vmatpush.msra.mxu0 %v907
    %950 = vmatpush.msra.mxu0 %v903
    %951 = vmatpush.msra.mxu0 %v899
    %952 = vmatpush.msra.mxu0 %v895
    %953 = vmatpush.msra.mxu0 %v891
    %954 = vmatpush.msra.mxu0 %v887
    %955 = vmatpush.msra.mxu0 %v883
    %956 = vmatpush.msra.mxu0 %v879
    %957 = vmatpush.msra.mxu0 %v875
    %958 = vmatpush.msra.mxu0 %v871
    %959 = vmatpush.msra.mxu0 %v867
    %960 = vmatpush.msra.mxu0 %v863
    %961 = vmatpush.msra.mxu0 %v859
    %962 = vmatpush.msra.mxu0 %v855
    %963 = vmatpush.msra.mxu0 %v851
    %964 = vmatpush.msra.mxu0 %v847
    %965 = vmatmul.f32.gmra.mxu0 %v835
    %v966 = vpop.f32.mrf.mxu0
    %v967 = vadd.f32 0.0, %v966
    %968 = vdwg.mxu0
    %969 = vmatpush.msra.mxu0 %v908
    %970 = vmatpush.msra.mxu0 %v904
    %971 = vmatpush.msra.mxu0 %v900
    %972 = vmatpush.msra.mxu0 %v896
    %973 = vmatpush.msra.mxu0 %v892
    %974 = vmatpush.msra.mxu0 %v888
    %975 = vmatpush.msra.mxu0 %v884
    %976 = vmatpush.msra.mxu0 %v880
    %977 = vmatpush.msra.mxu0 %v876
    %978 = vmatpush.msra.mxu0 %v872
    %979 = vmatpush.msra.mxu0 %v868
    %980 = vmatpush.msra.mxu0 %v864
    %981 = vmatpush.msra.mxu0 %v860
    %982 = vmatpush.msra.mxu0 %v856
    %983 = vmatpush.msra.mxu0 %v852
    %984 = vmatpush.msra.mxu0 %v848
    %985 = vmatmul.f32.gmra.mxu0 %v835
    %v986 = vpop.f32.mrf.mxu0
    %v987 = vadd.f32 0.0, %v986
    %988 = vdwg.mxu0
    %v989 = vadd.f32 %v841, %v927
    %v990 = vadd.f32 %v842, %v947
    %v991 = vadd.f32 %v843, %v967
    %v992 = vadd.f32 %v844, %v987
    %v993 = vxor.u32 %v989, 2147483648
    %v994 = vxor.u32 %v990, 2147483648
    %v995 = vxor.u32 %v991, 2147483648
    %v996 = vmul.f32 %v993, 1.442695
    %v997 = vpow.pop %v996
    %v998 = vmul.f32 %v994, 1.442695
    %v999 = vpow.pop %v998
    %v1000 = vmul.f32 %v995, 1.442695
    %v1001 = vpow.pop %v1000
    %v1002 = vadd.f32 %v997, 1.0
    %v1003 = vadd.f32 %v999, 1.0
    %v1004 = vadd.f32 %v1001, 1.0
    %v1005 = vrcp.pop %v1002
    %v1006 = vmul.f32 %v1002, %v1005
    %v1007 = vsub.f32 1.0, %v1006
    %v1008 = vmul.f32 %v1005, %v1007
    %v1009 = vadd.f32 %v1005, %v1008
    %vm1010 = vweird.f32 %v1002
    %vm1011 = vweird.f32 %v1005
    %vm1012 = vmor %vm1010, %vm1011
    %v1013 = vsel %vm1012, %v1005, %v1009
    %v1014 = vand.u32 2147483647, %v1002
    %vm1015 = vcmp.eq.f32.partialorder %v1014, 8.507059e+37
    %v1016 = vand.u32 %v1002, 2147483648
    %v1017 = vor.u32 1.1754944e-38, %v1016
    %v1018 = vsel %vm1015, %v1017, %v1013
    %v1019 = vmul.f32 1.0, %v1018
    %v1020 = vrcp.pop %v1003
    %v1021 = vmul.f32 %v1003, %v1020
    %v1022 = vsub.f32 1.0, %v1021
    %v1023 = vmul.f32 %v1020, %v1022
    %v1024 = vadd.f32 %v1020, %v1023
    %vm1025 = vweird.f32 %v1003
    %vm1026 = vweird.f32 %v1020
    %vm1027 = vmor %vm1025, %vm1026
    %v1028 = vsel %vm1027, %v1020, %v1024
    %v1029 = vand.u32 2147483647, %v1003
    %vm1030 = vcmp.eq.f32.partialorder %v1029, 8.507059e+37
    %v1031 = vand.u32 %v1003, 2147483648
    %v1032 = vor.u32 1.1754944e-38, %v1031
    %v1033 = vsel %vm1030, %v1032, %v1028
    %v1034 = vmul.f32 1.0, %v1033
    %v1035 = vrcp.pop %v1004
    %v1036 = vmul.f32 %v1004, %v1035
    %v1037 = vsub.f32 1.0, %v1036
    %v1038 = vmul.f32 %v1035, %v1037
    %v1039 = vadd.f32 %v1035, %v1038
    %vm1040 = vweird.f32 %v1004
    %vm1041 = vweird.f32 %v1035
    %vm1042 = vmor %vm1040, %vm1041
    %v1043 = vsel %vm1042, %v1035, %v1039
    %v1044 = vand.u32 2147483647, %v1004
    %vm1045 = vcmp.eq.f32.partialorder %v1044, 8.507059e+37
    %v1046 = vand.u32 %v1004, 2147483648
    %v1047 = vor.u32 1.1754944e-38, %v1046
    %v1048 = vsel %vm1045, %v1047, %v1043
    %v1049 = vmul.f32 1.0, %v1048
    %v1050 = vtanh.pop %v992
    %v1051 = vmul.f32 %v1034, %v833
    %v1052 = vmul.f32 %v1019, %v1050
    %v1053 = vadd.f32 %v1051, %v1052
    %v1054 = vtanh.pop %v1053
    %v1055 = vmul.f32 %v1049, %v1054
    %s1056 = scalar_lea.vmem [#allocation3], 16
    %1057 = vst [vmem:[%s1056] sm:$0xff] %v1055
    %s1058 = smul.u32 3, 4
    %s1059 = smul.addr %s1058, 8
    %s1060 = scalar_lea.vmem [#allocation2], %s1059
    %v1061 = vld [vmem:[%s1060] sm:$0xff]
    %v1062 = vld [vmem:[%s1060 + $0x8] sm:$0xff]
    %v1063 = vld [vmem:[%s1060 + $0x10] sm:$0xff]
    %v1064 = vld [vmem:[%s1060 + $0x18] sm:$0xff]
    %v1065 = vld [vmem:[#allocation12] sm:$0xff]
    %v1066 = vld [vmem:[#allocation12 + $0x8] sm:$0xff]
    %v1067 = vld [vmem:[#allocation12 + $0x10] sm:$0xff]
    %v1068 = vld [vmem:[#allocation12 + $0x18] sm:$0xff]
    %v1069 = vld [vmem:[#allocation12 + $0x20] sm:$0xff]
    %v1070 = vld [vmem:[#allocation12 + $0x28] sm:$0xff]
    %v1071 = vld [vmem:[#allocation12 + $0x30] sm:$0xff]
    %v1072 = vld [vmem:[#allocation12 + $0x38] sm:$0xff]
    %v1073 = vld [vmem:[#allocation12 + $0x40] sm:$0xff]
    %v1074 = vld [vmem:[#allocation12 + $0x48] sm:$0xff]
    %v1075 = vld [vmem:[#allocation12 + $0x50] sm:$0xff]
    %v1076 = vld [vmem:[#allocation12 + $0x58] sm:$0xff]
    %v1077 = vld [vmem:[#allocation12 + $0x60] sm:$0xff]
    %v1078 = vld [vmem:[#allocation12 + $0x68] sm:$0xff]
    %v1079 = vld [vmem:[#allocation12 + $0x70] sm:$0xff]
    %v1080 = vld [vmem:[#allocation12 + $0x78] sm:$0xff]
    %v1081 = vld [vmem:[#allocation12 + $0x80] sm:$0xff]
    %v1082 = vld [vmem:[#allocation12 + $0x88] sm:$0xff]
    %v1083 = vld [vmem:[#allocation12 + $0x90] sm:$0xff]
    %v1084 = vld [vmem:[#allocation12 + $0x98] sm:$0xff]
    %v1085 = vld [vmem:[#allocation12 + $0xa0] sm:$0xff]
    %v1086 = vld [vmem:[#allocation12 + $0xa8] sm:$0xff]
    %v1087 = vld [vmem:[#allocation12 + $0xb0] sm:$0xff]
    %v1088 = vld [vmem:[#allocation12 + $0xb8] sm:$0xff]
    %v1089 = vld [vmem:[#allocation12 + $0xc0] sm:$0xff]
    %v1090 = vld [vmem:[#allocation12 + $0xc8] sm:$0xff]
    %v1091 = vld [vmem:[#allocation12 + $0xd0] sm:$0xff]
    %v1092 = vld [vmem:[#allocation12 + $0xd8] sm:$0xff]
    %v1093 = vld [vmem:[#allocation12 + $0xe0] sm:$0xff]
    %v1094 = vld [vmem:[#allocation12 + $0xe8] sm:$0xff]
    %v1095 = vld [vmem:[#allocation12 + $0xf0] sm:$0xff]
    %v1096 = vld [vmem:[#allocation12 + $0xf8] sm:$0xff]
    %v1097 = vld [vmem:[#allocation12 + $0x100] sm:$0xff]
    %v1098 = vld [vmem:[#allocation12 + $0x108] sm:$0xff]
    %v1099 = vld [vmem:[#allocation12 + $0x110] sm:$0xff]
    %v1100 = vld [vmem:[#allocation12 + $0x118] sm:$0xff]
    %v1101 = vld [vmem:[#allocation12 + $0x120] sm:$0xff]
    %v1102 = vld [vmem:[#allocation12 + $0x128] sm:$0xff]
    %v1103 = vld [vmem:[#allocation12 + $0x130] sm:$0xff]
    %v1104 = vld [vmem:[#allocation12 + $0x138] sm:$0xff]
    %v1105 = vld [vmem:[#allocation12 + $0x140] sm:$0xff]
    %v1106 = vld [vmem:[#allocation12 + $0x148] sm:$0xff]
    %v1107 = vld [vmem:[#allocation12 + $0x150] sm:$0xff]
    %v1108 = vld [vmem:[#allocation12 + $0x158] sm:$0xff]
    %v1109 = vld [vmem:[#allocation12 + $0x160] sm:$0xff]
    %v1110 = vld [vmem:[#allocation12 + $0x168] sm:$0xff]
    %v1111 = vld [vmem:[#allocation12 + $0x170] sm:$0xff]
    %v1112 = vld [vmem:[#allocation12 + $0x178] sm:$0xff]
    %v1113 = vld [vmem:[#allocation12 + $0x180] sm:$0xff]
    %v1114 = vld [vmem:[#allocation12 + $0x188] sm:$0xff]
    %v1115 = vld [vmem:[#allocation12 + $0x190] sm:$0xff]
    %v1116 = vld [vmem:[#allocation12 + $0x198] sm:$0xff]
    %v1117 = vld [vmem:[#allocation12 + $0x1a0] sm:$0xff]
    %v1118 = vld [vmem:[#allocation12 + $0x1a8] sm:$0xff]
    %v1119 = vld [vmem:[#allocation12 + $0x1b0] sm:$0xff]
    %v1120 = vld [vmem:[#allocation12 + $0x1b8] sm:$0xff]
    %v1121 = vld [vmem:[#allocation12 + $0x1c0] sm:$0xff]
    %v1122 = vld [vmem:[#allocation12 + $0x1c8] sm:$0xff]
    %v1123 = vld [vmem:[#allocation12 + $0x1d0] sm:$0xff]
    %v1124 = vld [vmem:[#allocation12 + $0x1d8] sm:$0xff]
    %v1125 = vld [vmem:[#allocation12 + $0x1e0] sm:$0xff]
    %v1126 = vld [vmem:[#allocation12 + $0x1e8] sm:$0xff]
    %v1127 = vld [vmem:[#allocation12 + $0x1f0] sm:$0xff]
    %v1128 = vld [vmem:[#allocation12 + $0x1f8] sm:$0xff]
    %1129 = vmatpush.msra.mxu0 %v1125
    %1130 = vmatpush.msra.mxu0 %v1121
    %1131 = vmatpush.msra.mxu0 %v1117
    %1132 = vmatpush.msra.mxu0 %v1113
    %1133 = vmatpush.msra.mxu0 %v1109
    %1134 = vmatpush.msra.mxu0 %v1105
    %1135 = vmatpush.msra.mxu0 %v1101
    %1136 = vmatpush.msra.mxu0 %v1097
    %1137 = vmatpush.msra.mxu0 %v1093
    %1138 = vmatpush.msra.mxu0 %v1089
    %1139 = vmatpush.msra.mxu0 %v1085
    %1140 = vmatpush.msra.mxu0 %v1081
    %1141 = vmatpush.msra.mxu0 %v1077
    %1142 = vmatpush.msra.mxu0 %v1073
    %1143 = vmatpush.msra.mxu0 %v1069
    %1144 = vmatpush.msra.mxu0 %v1065
    %1145 = vmatmul.f32.gmra.mxu0 %v1055
    %v1146 = vpop.f32.mrf.mxu0
    %v1147 = vadd.f32 0.0, %v1146
    %1148 = vdwg.mxu0
    %1149 = vmatpush.msra.mxu0 %v1126
    %1150 = vmatpush.msra.mxu0 %v1122
    %1151 = vmatpush.msra.mxu0 %v1118
    %1152 = vmatpush.msra.mxu0 %v1114
    %1153 = vmatpush.msra.mxu0 %v1110
    %1154 = vmatpush.msra.mxu0 %v1106
    %1155 = vmatpush.msra.mxu0 %v1102
    %1156 = vmatpush.msra.mxu0 %v1098
    %1157 = vmatpush.msra.mxu0 %v1094
    %1158 = vmatpush.msra.mxu0 %v1090
    %1159 = vmatpush.msra.mxu0 %v1086
    %1160 = vmatpush.msra.mxu0 %v1082
    %1161 = vmatpush.msra.mxu0 %v1078
    %1162 = vmatpush.msra.mxu0 %v1074
    %1163 = vmatpush.msra.mxu0 %v1070
    %1164 = vmatpush.msra.mxu0 %v1066
    %1165 = vmatmul.f32.gmra.mxu0 %v1055
    %v1166 = vpop.f32.mrf.mxu0
    %v1167 = vadd.f32 0.0, %v1166
    %1168 = vdwg.mxu0
    %1169 = vmatpush.msra.mxu0 %v1127
    %1170 = vmatpush.msra.mxu0 %v1123
    %1171 = vmatpush.msra.mxu0 %v1119
    %1172 = vmatpush.msra.mxu0 %v1115
    %1173 = vmatpush.msra.mxu0 %v1111
    %1174 = vmatpush.msra.mxu0 %v1107
    %1175 = vmatpush.msra.mxu0 %v1103
    %1176 = vmatpush.msra.mxu0 %v1099
    %1177 = vmatpush.msra.mxu0 %v1095
    %1178 = vmatpush.msra.mxu0 %v1091
    %1179 = vmatpush.msra.mxu0 %v1087
    %1180 = vmatpush.msra.mxu0 %v1083
    %1181 = vmatpush.msra.mxu0 %v1079
    %1182 = vmatpush.msra.mxu0 %v1075
    %1183 = vmatpush.msra.mxu0 %v1071
    %1184 = vmatpush.msra.mxu0 %v1067
    %1185 = vmatmul.f32.gmra.mxu0 %v1055
    %v1186 = vpop.f32.mrf.mxu0
    %v1187 = vadd.f32 0.0, %v1186
    %1188 = vdwg.mxu0
    %1189 = vmatpush.msra.mxu0 %v1128
    %1190 = vmatpush.msra.mxu0 %v1124
    %1191 = vmatpush.msra.mxu0 %v1120
    %1192 = vmatpush.msra.mxu0 %v1116
    %1193 = vmatpush.msra.mxu0 %v1112
    %1194 = vmatpush.msra.mxu0 %v1108
    %1195 = vmatpush.msra.mxu0 %v1104
    %1196 = vmatpush.msra.mxu0 %v1100
    %1197 = vmatpush.msra.mxu0 %v1096
    %1198 = vmatpush.msra.mxu0 %v1092
    %1199 = vmatpush.msra.mxu0 %v1088
    %1200 = vmatpush.msra.mxu0 %v1084
    %1201 = vmatpush.msra.mxu0 %v1080
    %1202 = vmatpush.msra.mxu0 %v1076
    %1203 = vmatpush.msra.mxu0 %v1072
    %1204 = vmatpush.msra.mxu0 %v1068
    %1205 = vmatmul.f32.gmra.mxu0 %v1055
    %v1206 = vpop.f32.mrf.mxu0
    %v1207 = vadd.f32 0.0, %v1206
    %1208 = vdwg.mxu0
    %v1209 = vadd.f32 %v1061, %v1147
    %v1210 = vadd.f32 %v1062, %v1167
    %v1211 = vadd.f32 %v1063, %v1187
    %v1212 = vadd.f32 %v1064, %v1207
    %v1213 = vxor.u32 %v1209, 2147483648
    %v1214 = vxor.u32 %v1210, 2147483648
    %v1215 = vxor.u32 %v1211, 2147483648
    %v1216 = vmul.f32 %v1213, 1.442695
    %v1217 = vpow.pop %v1216
    %v1218 = vmul.f32 %v1214, 1.442695
    %v1219 = vpow.pop %v1218
    %v1220 = vmul.f32 %v1215, 1.442695
    %v1221 = vpow.pop %v1220
    %v1222 = vadd.f32 %v1217, 1.0
    %v1223 = vadd.f32 %v1219, 1.0
    %v1224 = vadd.f32 %v1221, 1.0
    %v1225 = vrcp.pop %v1222
    %v1226 = vmul.f32 %v1222, %v1225
    %v1227 = vsub.f32 1.0, %v1226
    %v1228 = vmul.f32 %v1225, %v1227
    %v1229 = vadd.f32 %v1225, %v1228
    %vm1230 = vweird.f32 %v1222
    %vm1231 = vweird.f32 %v1225
    %vm1232 = vmor %vm1230, %vm1231
    %v1233 = vsel %vm1232, %v1225, %v1229
    %v1234 = vand.u32 2147483647, %v1222
    %vm1235 = vcmp.eq.f32.partialorder %v1234, 8.507059e+37
    %v1236 = vand.u32 %v1222, 2147483648
    %v1237 = vor.u32 1.1754944e-38, %v1236
    %v1238 = vsel %vm1235, %v1237, %v1233
    %v1239 = vmul.f32 1.0, %v1238
    %v1240 = vrcp.pop %v1223
    %v1241 = vmul.f32 %v1223, %v1240
    %v1242 = vsub.f32 1.0, %v1241
    %v1243 = vmul.f32 %v1240, %v1242
    %v1244 = vadd.f32 %v1240, %v1243
    %vm1245 = vweird.f32 %v1223
    %vm1246 = vweird.f32 %v1240
    %vm1247 = vmor %vm1245, %vm1246
    %v1248 = vsel %vm1247, %v1240, %v1244
    %v1249 = vand.u32 2147483647, %v1223
    %vm1250 = vcmp.eq.f32.partialorder %v1249, 8.507059e+37
    %v1251 = vand.u32 %v1223, 2147483648
    %v1252 = vor.u32 1.1754944e-38, %v1251
    %v1253 = vsel %vm1250, %v1252, %v1248
    %v1254 = vmul.f32 1.0, %v1253
    %v1255 = vrcp.pop %v1224
    %v1256 = vmul.f32 %v1224, %v1255
    %v1257 = vsub.f32 1.0, %v1256
    %v1258 = vmul.f32 %v1255, %v1257
    %v1259 = vadd.f32 %v1255, %v1258
    %vm1260 = vweird.f32 %v1224
    %vm1261 = vweird.f32 %v1255
    %vm1262 = vmor %vm1260, %vm1261
    %v1263 = vsel %vm1262, %v1255, %v1259
    %v1264 = vand.u32 2147483647, %v1224
    %vm1265 = vcmp.eq.f32.partialorder %v1264, 8.507059e+37
    %v1266 = vand.u32 %v1224, 2147483648
    %v1267 = vor.u32 1.1754944e-38, %v1266
    %v1268 = vsel %vm1265, %v1267, %v1263
    %v1269 = vmul.f32 1.0, %v1268
    %v1270 = vtanh.pop %v1212
    %v1271 = vmul.f32 %v1254, %v1053
    %v1272 = vmul.f32 %v1239, %v1270
    %v1273 = vadd.f32 %v1271, %v1272
    %v1274 = vtanh.pop %v1273
    %v1275 = vmul.f32 %v1269, %v1274
    %s1276 = scalar_lea.vmem [#allocation3], 24
    %1277 = vst [vmem:[%s1276] sm:$0xff] %v1275
    %s1278 = smul.u32 4, 4
    %s1279 = smul.addr %s1278, 8
    %s1280 = scalar_lea.vmem [#allocation2], %s1279
    %v1281 = vld [vmem:[%s1280] sm:$0xff]
    %v1282 = vld [vmem:[%s1280 + $0x8] sm:$0xff]
    %v1283 = vld [vmem:[%s1280 + $0x10] sm:$0xff]
    %v1284 = vld [vmem:[%s1280 + $0x18] sm:$0xff]
    %v1285 = vld [vmem:[#allocation12] sm:$0xff]
    %v1286 = vld [vmem:[#allocation12 + $0x8] sm:$0xff]
    %v1287 = vld [vmem:[#allocation12 + $0x10] sm:$0xff]
    %v1288 = vld [vmem:[#allocation12 + $0x18] sm:$0xff]
    %v1289 = vld [vmem:[#allocation12 + $0x20] sm:$0xff]
    %v1290 = vld [vmem:[#allocation12 + $0x28] sm:$0xff]
    %v1291 = vld [vmem:[#allocation12 + $0x30] sm:$0xff]
    %v1292 = vld [vmem:[#allocation12 + $0x38] sm:$0xff]
    %v1293 = vld [vmem:[#allocation12 + $0x40] sm:$0xff]
    %v1294 = vld [vmem:[#allocation12 + $0x48] sm:$0xff]
    %v1295 = vld [vmem:[#allocation12 + $0x50] sm:$0xff]
    %v1296 = vld [vmem:[#allocation12 + $0x58] sm:$0xff]
    %v1297 = vld [vmem:[#allocation12 + $0x60] sm:$0xff]
    %v1298 = vld [vmem:[#allocation12 + $0x68] sm:$0xff]
    %v1299 = vld [vmem:[#allocation12 + $0x70] sm:$0xff]
    %v1300 = vld [vmem:[#allocation12 + $0x78] sm:$0xff]
    %v1301 = vld [vmem:[#allocation12 + $0x80] sm:$0xff]
    %v1302 = vld [vmem:[#allocation12 + $0x88] sm:$0xff]
    %v1303 = vld [vmem:[#allocation12 + $0x90] sm:$0xff]
    %v1304 = vld [vmem:[#allocation12 + $0x98] sm:$0xff]
    %v1305 = vld [vmem:[#allocation12 + $0xa0] sm:$0xff]
    %v1306 = vld [vmem:[#allocation12 + $0xa8] sm:$0xff]
    %v1307 = vld [vmem:[#allocation12 + $0xb0] sm:$0xff]
    %v1308 = vld [vmem:[#allocation12 + $0xb8] sm:$0xff]
    %v1309 = vld [vmem:[#allocation12 + $0xc0] sm:$0xff]
    %v1310 = vld [vmem:[#allocation12 + $0xc8] sm:$0xff]
    %v1311 = vld [vmem:[#allocation12 + $0xd0] sm:$0xff]
    %v1312 = vld [vmem:[#allocation12 + $0xd8] sm:$0xff]
    %v1313 = vld [vmem:[#allocation12 + $0xe0] sm:$0xff]
    %v1314 = vld [vmem:[#allocation12 + $0xe8] sm:$0xff]
    %v1315 = vld [vmem:[#allocation12 + $0xf0] sm:$0xff]
    %v1316 = vld [vmem:[#allocation12 + $0xf8] sm:$0xff]
    %v1317 = vld [vmem:[#allocation12 + $0x100] sm:$0xff]
    %v1318 = vld [vmem:[#allocation12 + $0x108] sm:$0xff]
    %v1319 = vld [vmem:[#allocation12 + $0x110] sm:$0xff]
    %v1320 = vld [vmem:[#allocation12 + $0x118] sm:$0xff]
    %v1321 = vld [vmem:[#allocation12 + $0x120] sm:$0xff]
    %v1322 = vld [vmem:[#allocation12 + $0x128] sm:$0xff]
    %v1323 = vld [vmem:[#allocation12 + $0x130] sm:$0xff]
    %v1324 = vld [vmem:[#allocation12 + $0x138] sm:$0xff]
    %v1325 = vld [vmem:[#allocation12 + $0x140] sm:$0xff]
    %v1326 = vld [vmem:[#allocation12 + $0x148] sm:$0xff]
    %v1327 = vld [vmem:[#allocation12 + $0x150] sm:$0xff]
    %v1328 = vld [vmem:[#allocation12 + $0x158] sm:$0xff]
    %v1329 = vld [vmem:[#allocation12 + $0x160] sm:$0xff]
    %v1330 = vld [vmem:[#allocation12 + $0x168] sm:$0xff]
    %v1331 = vld [vmem:[#allocation12 + $0x170] sm:$0xff]
    %v1332 = vld [vmem:[#allocation12 + $0x178] sm:$0xff]
    %v1333 = vld [vmem:[#allocation12 + $0x180] sm:$0xff]
    %v1334 = vld [vmem:[#allocation12 + $0x188] sm:$0xff]
    %v1335 = vld [vmem:[#allocation12 + $0x190] sm:$0xff]
    %v1336 = vld [vmem:[#allocation12 + $0x198] sm:$0xff]
    %v1337 = vld [vmem:[#allocation12 + $0x1a0] sm:$0xff]
    %v1338 = vld [vmem:[#allocation12 + $0x1a8] sm:$0xff]
    %v1339 = vld [vmem:[#allocation12 + $0x1b0] sm:$0xff]
    %v1340 = vld [vmem:[#allocation12 + $0x1b8] sm:$0xff]
    %v1341 = vld [vmem:[#allocation12 + $0x1c0] sm:$0xff]
    %v1342 = vld [vmem:[#allocation12 + $0x1c8] sm:$0xff]
    %v1343 = vld [vmem:[#allocation12 + $0x1d0] sm:$0xff]
    %v1344 = vld [vmem:[#allocation12 + $0x1d8] sm:$0xff]
    %v1345 = vld [vmem:[#allocation12 + $0x1e0] sm:$0xff]
    %v1346 = vld [vmem:[#allocation12 + $0x1e8] sm:$0xff]
    %v1347 = vld [vmem:[#allocation12 + $0x1f0] sm:$0xff]
    %v1348 = vld [vmem:[#allocation12 + $0x1f8] sm:$0xff]
    %1349 = vmatpush.msra.mxu0 %v1345
    %1350 = vmatpush.msra.mxu0 %v1341
    %1351 = vmatpush.msra.mxu0 %v1337
    %1352 = vmatpush.msra.mxu0 %v1333
    %1353 = vmatpush.msra.mxu0 %v1329
    %1354 = vmatpush.msra.mxu0 %v1325
    %1355 = vmatpush.msra.mxu0 %v1321
    %1356 = vmatpush.msra.mxu0 %v1317
    %1357 = vmatpush.msra.mxu0 %v1313
    %1358 = vmatpush.msra.mxu0 %v1309
    %1359 = vmatpush.msra.mxu0 %v1305
    %1360 = vmatpush.msra.mxu0 %v1301
    %1361 = vmatpush.msra.mxu0 %v1297
    %1362 = vmatpush.msra.mxu0 %v1293
    %1363 = vmatpush.msra.mxu0 %v1289
    %1364 = vmatpush.msra.mxu0 %v1285
    %1365 = vmatmul.f32.gmra.mxu0 %v1275
    %v1366 = vpop.f32.mrf.mxu0
    %v1367 = vadd.f32 0.0, %v1366
    %1368 = vdwg.mxu0
    %1369 = vmatpush.msra.mxu0 %v1346
    %1370 = vmatpush.msra.mxu0 %v1342
    %1371 = vmatpush.msra.mxu0 %v1338
    %1372 = vmatpush.msra.mxu0 %v1334
    %1373 = vmatpush.msra.mxu0 %v1330
    %1374 = vmatpush.msra.mxu0 %v1326
    %1375 = vmatpush.msra.mxu0 %v1322
    %1376 = vmatpush.msra.mxu0 %v1318
    %1377 = vmatpush.msra.mxu0 %v1314
    %1378 = vmatpush.msra.mxu0 %v1310
    %1379 = vmatpush.msra.mxu0 %v1306
    %1380 = vmatpush.msra.mxu0 %v1302
    %1381 = vmatpush.msra.mxu0 %v1298
    %1382 = vmatpush.msra.mxu0 %v1294
    %1383 = vmatpush.msra.mxu0 %v1290
    %1384 = vmatpush.msra.mxu0 %v1286
    %1385 = vmatmul.f32.gmra.mxu0 %v1275
    %v1386 = vpop.f32.mrf.mxu0
    %v1387 = vadd.f32 0.0, %v1386
    %1388 = vdwg.mxu0
    %1389 = vmatpush.msra.mxu0 %v1347
    %1390 = vmatpush.msra.mxu0 %v1343
    %1391 = vmatpush.msra.mxu0 %v1339
    %1392 = vmatpush.msra.mxu0 %v1335
    %1393 = vmatpush.msra.mxu0 %v1331
    %1394 = vmatpush.msra.mxu0 %v1327
    %1395 = vmatpush.msra.mxu0 %v1323
    %1396 = vmatpush.msra.mxu0 %v1319
    %1397 = vmatpush.msra.mxu0 %v1315
    %1398 = vmatpush.msra.mxu0 %v1311
    %1399 = vmatpush.msra.mxu0 %v1307
    %1400 = vmatpush.msra.mxu0 %v1303
    %1401 = vmatpush.msra.mxu0 %v1299
    %1402 = vmatpush.msra.mxu0 %v1295
    %1403 = vmatpush.msra.mxu0 %v1291
    %1404 = vmatpush.msra.mxu0 %v1287
    %1405 = vmatmul.f32.gmra.mxu0 %v1275
    %v1406 = vpop.f32.mrf.mxu0
    %v1407 = vadd.f32 0.0, %v1406
    %1408 = vdwg.mxu0
    %1409 = vmatpush.msra.mxu0 %v1348
    %1410 = vmatpush.msra.mxu0 %v1344
    %1411 = vmatpush.msra.mxu0 %v1340
    %1412 = vmatpush.msra.mxu0 %v1336
    %1413 = vmatpush.msra.mxu0 %v1332
    %1414 = vmatpush.msra.mxu0 %v1328
    %1415 = vmatpush.msra.mxu0 %v1324
    %1416 = vmatpush.msra.mxu0 %v1320
    %1417 = vmatpush.msra.mxu0 %v1316
    %1418 = vmatpush.msra.mxu0 %v1312
    %1419 = vmatpush.msra.mxu0 %v1308
    %1420 = vmatpush.msra.mxu0 %v1304
    %1421 = vmatpush.msra.mxu0 %v1300
    %1422 = vmatpush.msra.mxu0 %v1296
    %1423 = vmatpush.msra.mxu0 %v1292
    %1424 = vmatpush.msra.mxu0 %v1288
    %1425 = vmatmul.f32.gmra.mxu0 %v1275
    %v1426 = vpop.f32.mrf.mxu0
    %v1427 = vadd.f32 0.0, %v1426
    %1428 = vdwg.mxu0
    %v1429 = vadd.f32 %v1281, %v1367
    %v1430 = vadd.f32 %v1282, %v1387
    %v1431 = vadd.f32 %v1283, %v1407
    %v1432 = vadd.f32 %v1284, %v1427
    %v1433 = vxor.u32 %v1429, 2147483648
    %v1434 = vxor.u32 %v1430, 2147483648
    %v1435 = vxor.u32 %v1431, 2147483648
    %v1436 = vmul.f32 %v1433, 1.442695
    %v1437 = vpow.pop %v1436
    %v1438 = vmul.f32 %v1434, 1.442695
    %v1439 = vpow.pop %v1438
    %v1440 = vmul.f32 %v1435, 1.442695
    %v1441 = vpow.pop %v1440
    %v1442 = vadd.f32 %v1437, 1.0
    %v1443 = vadd.f32 %v1439, 1.0
    %v1444 = vadd.f32 %v1441, 1.0
    %v1445 = vrcp.pop %v1442
    %v1446 = vmul.f32 %v1442, %v1445
    %v1447 = vsub.f32 1.0, %v1446
    %v1448 = vmul.f32 %v1445, %v1447
    %v1449 = vadd.f32 %v1445, %v1448
    %vm1450 = vweird.f32 %v1442
    %vm1451 = vweird.f32 %v1445
    %vm1452 = vmor %vm1450, %vm1451
    %v1453 = vsel %vm1452, %v1445, %v1449
    %v1454 = vand.u32 2147483647, %v1442
    %vm1455 = vcmp.eq.f32.partialorder %v1454, 8.507059e+37
    %v1456 = vand.u32 %v1442, 2147483648
    %v1457 = vor.u32 1.1754944e-38, %v1456
    %v1458 = vsel %vm1455, %v1457, %v1453
    %v1459 = vmul.f32 1.0, %v1458
    %v1460 = vrcp.pop %v1443
    %v1461 = vmul.f32 %v1443, %v1460
    %v1462 = vsub.f32 1.0, %v1461
    %v1463 = vmul.f32 %v1460, %v1462
    %v1464 = vadd.f32 %v1460, %v1463
    %vm1465 = vweird.f32 %v1443
    %vm1466 = vweird.f32 %v1460
    %vm1467 = vmor %vm1465, %vm1466
    %v1468 = vsel %vm1467, %v1460, %v1464
    %v1469 = vand.u32 2147483647, %v1443
    %vm1470 = vcmp.eq.f32.partialorder %v1469, 8.507059e+37
    %v1471 = vand.u32 %v1443, 2147483648
    %v1472 = vor.u32 1.1754944e-38, %v1471
    %v1473 = vsel %vm1470, %v1472, %v1468
    %v1474 = vmul.f32 1.0, %v1473
    %v1475 = vrcp.pop %v1444
    %v1476 = vmul.f32 %v1444, %v1475
    %v1477 = vsub.f32 1.0, %v1476
    %v1478 = vmul.f32 %v1475, %v1477
    %v1479 = vadd.f32 %v1475, %v1478
    %vm1480 = vweird.f32 %v1444
    %vm1481 = vweird.f32 %v1475
    %vm1482 = vmor %vm1480, %vm1481
    %v1483 = vsel %vm1482, %v1475, %v1479
    %v1484 = vand.u32 2147483647, %v1444
    %vm1485 = vcmp.eq.f32.partialorder %v1484, 8.507059e+37
    %v1486 = vand.u32 %v1444, 2147483648
    %v1487 = vor.u32 1.1754944e-38, %v1486
    %v1488 = vsel %vm1485, %v1487, %v1483
    %v1489 = vmul.f32 1.0, %v1488
    %v1490 = vtanh.pop %v1432
    %v1491 = vmul.f32 %v1474, %v1273
    %v1492 = vmul.f32 %v1459, %v1490
    %v1493 = vadd.f32 %v1491, %v1492
    %v1494 = vtanh.pop %v1493
    %v1495 = vmul.f32 %v1489, %v1494
    %s1496 = scalar_lea.vmem [#allocation3], 32
    %1497 = vst [vmem:[%s1496] sm:$0xff] %v1495
    %s1498 = smul.u32 5, 4
    %s1499 = smul.addr %s1498, 8
    %s1500 = scalar_lea.vmem [#allocation2], %s1499
    %v1501 = vld [vmem:[%s1500] sm:$0xff]
    %v1502 = vld [vmem:[%s1500 + $0x8] sm:$0xff]
    %v1503 = vld [vmem:[%s1500 + $0x10] sm:$0xff]
    %v1504 = vld [vmem:[%s1500 + $0x18] sm:$0xff]
    %v1505 = vld [vmem:[#allocation12] sm:$0xff]
    %v1506 = vld [vmem:[#allocation12 + $0x8] sm:$0xff]
    %v1507 = vld [vmem:[#allocation12 + $0x10] sm:$0xff]
    %v1508 = vld [vmem:[#allocation12 + $0x18] sm:$0xff]
    %v1509 = vld [vmem:[#allocation12 + $0x20] sm:$0xff]
    %v1510 = vld [vmem:[#allocation12 + $0x28] sm:$0xff]
    %v1511 = vld [vmem:[#allocation12 + $0x30] sm:$0xff]
    %v1512 = vld [vmem:[#allocation12 + $0x38] sm:$0xff]
    %v1513 = vld [vmem:[#allocation12 + $0x40] sm:$0xff]
    %v1514 = vld [vmem:[#allocation12 + $0x48] sm:$0xff]
    %v1515 = vld [vmem:[#allocation12 + $0x50] sm:$0xff]
    %v1516 = vld [vmem:[#allocation12 + $0x58] sm:$0xff]
    %v1517 = vld [vmem:[#allocation12 + $0x60] sm:$0xff]
    %v1518 = vld [vmem:[#allocation12 + $0x68] sm:$0xff]
    %v1519 = vld [vmem:[#allocation12 + $0x70] sm:$0xff]
    %v1520 = vld [vmem:[#allocation12 + $0x78] sm:$0xff]
    %v1521 = vld [vmem:[#allocation12 + $0x80] sm:$0xff]
    %v1522 = vld [vmem:[#allocation12 + $0x88] sm:$0xff]
    %v1523 = vld [vmem:[#allocation12 + $0x90] sm:$0xff]
    %v1524 = vld [vmem:[#allocation12 + $0x98] sm:$0xff]
    %v1525 = vld [vmem:[#allocation12 + $0xa0] sm:$0xff]
    %v1526 = vld [vmem:[#allocation12 + $0xa8] sm:$0xff]
    %v1527 = vld [vmem:[#allocation12 + $0xb0] sm:$0xff]
    %v1528 = vld [vmem:[#allocation12 + $0xb8] sm:$0xff]
    %v1529 = vld [vmem:[#allocation12 + $0xc0] sm:$0xff]
    %v1530 = vld [vmem:[#allocation12 + $0xc8] sm:$0xff]
    %v1531 = vld [vmem:[#allocation12 + $0xd0] sm:$0xff]
    %v1532 = vld [vmem:[#allocation12 + $0xd8] sm:$0xff]
    %v1533 = vld [vmem:[#allocation12 + $0xe0] sm:$0xff]
    %v1534 = vld [vmem:[#allocation12 + $0xe8] sm:$0xff]
    %v1535 = vld [vmem:[#allocation12 + $0xf0] sm:$0xff]
    %v1536 = vld [vmem:[#allocation12 + $0xf8] sm:$0xff]
    %v1537 = vld [vmem:[#allocation12 + $0x100] sm:$0xff]
    %v1538 = vld [vmem:[#allocation12 + $0x108] sm:$0xff]
    %v1539 = vld [vmem:[#allocation12 + $0x110] sm:$0xff]
    %v1540 = vld [vmem:[#allocation12 + $0x118] sm:$0xff]
    %v1541 = vld [vmem:[#allocation12 + $0x120] sm:$0xff]
    %v1542 = vld [vmem:[#allocation12 + $0x128] sm:$0xff]
    %v1543 = vld [vmem:[#allocation12 + $0x130] sm:$0xff]
    %v1544 = vld [vmem:[#allocation12 + $0x138] sm:$0xff]
    %v1545 = vld [vmem:[#allocation12 + $0x140] sm:$0xff]
    %v1546 = vld [vmem:[#allocation12 + $0x148] sm:$0xff]
    %v1547 = vld [vmem:[#allocation12 + $0x150] sm:$0xff]
    %v1548 = vld [vmem:[#allocation12 + $0x158] sm:$0xff]
    %v1549 = vld [vmem:[#allocation12 + $0x160] sm:$0xff]
    %v1550 = vld [vmem:[#allocation12 + $0x168] sm:$0xff]
    %v1551 = vld [vmem:[#allocation12 + $0x170] sm:$0xff]
    %v1552 = vld [vmem:[#allocation12 + $0x178] sm:$0xff]
    %v1553 = vld [vmem:[#allocation12 + $0x180] sm:$0xff]
    %v1554 = vld [vmem:[#allocation12 + $0x188] sm:$0xff]
    %v1555 = vld [vmem:[#allocation12 + $0x190] sm:$0xff]
    %v1556 = vld [vmem:[#allocation12 + $0x198] sm:$0xff]
    %v1557 = vld [vmem:[#allocation12 + $0x1a0] sm:$0xff]
    %v1558 = vld [vmem:[#allocation12 + $0x1a8] sm:$0xff]
    %v1559 = vld [vmem:[#allocation12 + $0x1b0] sm:$0xff]
    %v1560 = vld [vmem:[#allocation12 + $0x1b8] sm:$0xff]
    %v1561 = vld [vmem:[#allocation12 + $0x1c0] sm:$0xff]
    %v1562 = vld [vmem:[#allocation12 + $0x1c8] sm:$0xff]
    %v1563 = vld [vmem:[#allocation12 + $0x1d0] sm:$0xff]
    %v1564 = vld [vmem:[#allocation12 + $0x1d8] sm:$0xff]
    %v1565 = vld [vmem:[#allocation12 + $0x1e0] sm:$0xff]
    %v1566 = vld [vmem:[#allocation12 + $0x1e8] sm:$0xff]
    %v1567 = vld [vmem:[#allocation12 + $0x1f0] sm:$0xff]
    %v1568 = vld [vmem:[#allocation12 + $0x1f8] sm:$0xff]
    %1569 = vmatpush.msra.mxu0 %v1565
    %1570 = vmatpush.msra.mxu0 %v1561
    %1571 = vmatpush.msra.mxu0 %v1557
    %1572 = vmatpush.msra.mxu0 %v1553
    %1573 = vmatpush.msra.mxu0 %v1549
    %1574 = vmatpush.msra.mxu0 %v1545
    %1575 = vmatpush.msra.mxu0 %v1541
    %1576 = vmatpush.msra.mxu0 %v1537
    %1577 = vmatpush.msra.mxu0 %v1533
    %1578 = vmatpush.msra.mxu0 %v1529
    %1579 = vmatpush.msra.mxu0 %v1525
    %1580 = vmatpush.msra.mxu0 %v1521
    %1581 = vmatpush.msra.mxu0 %v1517
    %1582 = vmatpush.msra.mxu0 %v1513
    %1583 = vmatpush.msra.mxu0 %v1509
    %1584 = vmatpush.msra.mxu0 %v1505
    %1585 = vmatmul.f32.gmra.mxu0 %v1495
    %v1586 = vpop.f32.mrf.mxu0
    %v1587 = vadd.f32 0.0, %v1586
    %1588 = vdwg.mxu0
    %1589 = vmatpush.msra.mxu0 %v1566
    %1590 = vmatpush.msra.mxu0 %v1562
    %1591 = vmatpush.msra.mxu0 %v1558
    %1592 = vmatpush.msra.mxu0 %v1554
    %1593 = vmatpush.msra.mxu0 %v1550
    %1594 = vmatpush.msra.mxu0 %v1546
    %1595 = vmatpush.msra.mxu0 %v1542
    %1596 = vmatpush.msra.mxu0 %v1538
    %1597 = vmatpush.msra.mxu0 %v1534
    %1598 = vmatpush.msra.mxu0 %v1530
    %1599 = vmatpush.msra.mxu0 %v1526
    %1600 = vmatpush.msra.mxu0 %v1522
    %1601 = vmatpush.msra.mxu0 %v1518
    %1602 = vmatpush.msra.mxu0 %v1514
    %1603 = vmatpush.msra.mxu0 %v1510
    %1604 = vmatpush.msra.mxu0 %v1506
    %1605 = vmatmul.f32.gmra.mxu0 %v1495
    %v1606 = vpop.f32.mrf.mxu0
    %v1607 = vadd.f32 0.0, %v1606
    %1608 = vdwg.mxu0
    %1609 = vmatpush.msra.mxu0 %v1567
    %1610 = vmatpush.msra.mxu0 %v1563
    %1611 = vmatpush.msra.mxu0 %v1559
    %1612 = vmatpush.msra.mxu0 %v1555
    %1613 = vmatpush.msra.mxu0 %v1551
    %1614 = vmatpush.msra.mxu0 %v1547
    %1615 = vmatpush.msra.mxu0 %v1543
    %1616 = vmatpush.msra.mxu0 %v1539
    %1617 = vmatpush.msra.mxu0 %v1535
    %1618 = vmatpush.msra.mxu0 %v1531
    %1619 = vmatpush.msra.mxu0 %v1527
    %1620 = vmatpush.msra.mxu0 %v1523
    %1621 = vmatpush.msra.mxu0 %v1519
    %1622 = vmatpush.msra.mxu0 %v1515
    %1623 = vmatpush.msra.mxu0 %v1511
    %1624 = vmatpush.msra.mxu0 %v1507
    %1625 = vmatmul.f32.gmra.mxu0 %v1495
    %v1626 = vpop.f32.mrf.mxu0
    %v1627 = vadd.f32 0.0, %v1626
    %1628 = vdwg.mxu0
    %1629 = vmatpush.msra.mxu0 %v1568
    %1630 = vmatpush.msra.mxu0 %v1564
    %1631 = vmatpush.msra.mxu0 %v1560
    %1632 = vmatpush.msra.mxu0 %v1556
    %1633 = vmatpush.msra.mxu0 %v1552
    %1634 = vmatpush.msra.mxu0 %v1548
    %1635 = vmatpush.msra.mxu0 %v1544
    %1636 = vmatpush.msra.mxu0 %v1540
    %1637 = vmatpush.msra.mxu0 %v1536
    %1638 = vmatpush.msra.mxu0 %v1532
    %1639 = vmatpush.msra.mxu0 %v1528
    %1640 = vmatpush.msra.mxu0 %v1524
    %1641 = vmatpush.msra.mxu0 %v1520
    %1642 = vmatpush.msra.mxu0 %v1516
    %1643 = vmatpush.msra.mxu0 %v1512
    %1644 = vmatpush.msra.mxu0 %v1508
    %1645 = vmatmul.f32.gmra.mxu0 %v1495
    %v1646 = vpop.f32.mrf.mxu0
    %v1647 = vadd.f32 0.0, %v1646
    %1648 = vdwg.mxu0
    %v1649 = vadd.f32 %v1501, %v1587
    %v1650 = vadd.f32 %v1502, %v1607
    %v1651 = vadd.f32 %v1503, %v1627
    %v1652 = vadd.f32 %v1504, %v1647
    %v1653 = vxor.u32 %v1649, 2147483648
    %v1654 = vxor.u32 %v1650, 2147483648
    %v1655 = vxor.u32 %v1651, 2147483648
    %v1656 = vmul.f32 %v1653, 1.442695
    %v1657 = vpow.pop %v1656
    %v1658 = vmul.f32 %v1654, 1.442695
    %v1659 = vpow.pop %v1658
    %v1660 = vmul.f32 %v1655, 1.442695
    %v1661 = vpow.pop %v1660
    %v1662 = vadd.f32 %v1657, 1.0
    %v1663 = vadd.f32 %v1659, 1.0
    %v1664 = vadd.f32 %v1661, 1.0
    %v1665 = vrcp.pop %v1662
    %v1666 = vmul.f32 %v1662, %v1665
    %v1667 = vsub.f32 1.0, %v1666
    %v1668 = vmul.f32 %v1665, %v1667
    %v1669 = vadd.f32 %v1665, %v1668
    %vm1670 = vweird.f32 %v1662
    %vm1671 = vweird.f32 %v1665
    %vm1672 = vmor %vm1670, %vm1671
    %v1673 = vsel %vm1672, %v1665, %v1669
    %v1674 = vand.u32 2147483647, %v1662
    %vm1675 = vcmp.eq.f32.partialorder %v1674, 8.507059e+37
    %v1676 = vand.u32 %v1662, 2147483648
    %v1677 = vor.u32 1.1754944e-38, %v1676
    %v1678 = vsel %vm1675, %v1677, %v1673
    %v1679 = vmul.f32 1.0, %v1678
    %v1680 = vrcp.pop %v1663
    %v1681 = vmul.f32 %v1663, %v1680
    %v1682 = vsub.f32 1.0, %v1681
    %v1683 = vmul.f32 %v1680, %v1682
    %v1684 = vadd.f32 %v1680, %v1683
    %vm1685 = vweird.f32 %v1663
    %vm1686 = vweird.f32 %v1680
    %vm1687 = vmor %vm1685, %vm1686
    %v1688 = vsel %vm1687, %v1680, %v1684
    %v1689 = vand.u32 2147483647, %v1663
    %vm1690 = vcmp.eq.f32.partialorder %v1689, 8.507059e+37
    %v1691 = vand.u32 %v1663, 2147483648
    %v1692 = vor.u32 1.1754944e-38, %v1691
    %v1693 = vsel %vm1690, %v1692, %v1688
    %v1694 = vmul.f32 1.0, %v1693
    %v1695 = vrcp.pop %v1664
    %v1696 = vmul.f32 %v1664, %v1695
    %v1697 = vsub.f32 1.0, %v1696
    %v1698 = vmul.f32 %v1695, %v1697
    %v1699 = vadd.f32 %v1695, %v1698
    %vm1700 = vweird.f32 %v1664
    %vm1701 = vweird.f32 %v1695
    %vm1702 = vmor %vm1700, %vm1701
    %v1703 = vsel %vm1702, %v1695, %v1699
    %v1704 = vand.u32 2147483647, %v1664
    %vm1705 = vcmp.eq.f32.partialorder %v1704, 8.507059e+37
    %v1706 = vand.u32 %v1664, 2147483648
    %v1707 = vor.u32 1.1754944e-38, %v1706
    %v1708 = vsel %vm1705, %v1707, %v1703
    %v1709 = vmul.f32 1.0, %v1708
    %v1710 = vtanh.pop %v1652
    %v1711 = vmul.f32 %v1694, %v1493
    %v1712 = vmul.f32 %v1679, %v1710
    %v1713 = vadd.f32 %v1711, %v1712
    %v1714 = vtanh.pop %v1713
    %v1715 = vmul.f32 %v1709, %v1714
    %s1716 = scalar_lea.vmem [#allocation3], 40
    %1717 = vst [vmem:[%s1716] sm:$0xff] %v1715
    %s1718 = smul.u32 6, 4
    %s1719 = smul.addr %s1718, 8
    %s1720 = scalar_lea.vmem [#allocation2], %s1719
    %v1721 = vld [vmem:[%s1720] sm:$0xff]
    %v1722 = vld [vmem:[%s1720 + $0x8] sm:$0xff]
    %v1723 = vld [vmem:[%s1720 + $0x10] sm:$0xff]
    %v1724 = vld [vmem:[%s1720 + $0x18] sm:$0xff]
    %v1725 = vld [vmem:[#allocation12] sm:$0xff]
    %v1726 = vld [vmem:[#allocation12 + $0x8] sm:$0xff]
    %v1727 = vld [vmem:[#allocation12 + $0x10] sm:$0xff]
    %v1728 = vld [vmem:[#allocation12 + $0x18] sm:$0xff]
    %v1729 = vld [vmem:[#allocation12 + $0x20] sm:$0xff]
    %v1730 = vld [vmem:[#allocation12 + $0x28] sm:$0xff]
    %v1731 = vld [vmem:[#allocation12 + $0x30] sm:$0xff]
    %v1732 = vld [vmem:[#allocation12 + $0x38] sm:$0xff]
    %v1733 = vld [vmem:[#allocation12 + $0x40] sm:$0xff]
    %v1734 = vld [vmem:[#allocation12 + $0x48] sm:$0xff]
    %v1735 = vld [vmem:[#allocation12 + $0x50] sm:$0xff]
    %v1736 = vld [vmem:[#allocation12 + $0x58] sm:$0xff]
    %v1737 = vld [vmem:[#allocation12 + $0x60] sm:$0xff]
    %v1738 = vld [vmem:[#allocation12 + $0x68] sm:$0xff]
    %v1739 = vld [vmem:[#allocation12 + $0x70] sm:$0xff]
    %v1740 = vld [vmem:[#allocation12 + $0x78] sm:$0xff]
    %v1741 = vld [vmem:[#allocation12 + $0x80] sm:$0xff]
    %v1742 = vld [vmem:[#allocation12 + $0x88] sm:$0xff]
    %v1743 = vld [vmem:[#allocation12 + $0x90] sm:$0xff]
    %v1744 = vld [vmem:[#allocation12 + $0x98] sm:$0xff]
    %v1745 = vld [vmem:[#allocation12 + $0xa0] sm:$0xff]
    %v1746 = vld [vmem:[#allocation12 + $0xa8] sm:$0xff]
    %v1747 = vld [vmem:[#allocation12 + $0xb0] sm:$0xff]
    %v1748 = vld [vmem:[#allocation12 + $0xb8] sm:$0xff]
    %v1749 = vld [vmem:[#allocation12 + $0xc0] sm:$0xff]
    %v1750 = vld [vmem:[#allocation12 + $0xc8] sm:$0xff]
    %v1751 = vld [vmem:[#allocation12 + $0xd0] sm:$0xff]
    %v1752 = vld [vmem:[#allocation12 + $0xd8] sm:$0xff]
    %v1753 = vld [vmem:[#allocation12 + $0xe0] sm:$0xff]
    %v1754 = vld [vmem:[#allocation12 + $0xe8] sm:$0xff]
    %v1755 = vld [vmem:[#allocation12 + $0xf0] sm:$0xff]
    %v1756 = vld [vmem:[#allocation12 + $0xf8] sm:$0xff]
    %v1757 = vld [vmem:[#allocation12 + $0x100] sm:$0xff]
    %v1758 = vld [vmem:[#allocation12 + $0x108] sm:$0xff]
    %v1759 = vld [vmem:[#allocation12 + $0x110] sm:$0xff]
    %v1760 = vld [vmem:[#allocation12 + $0x118] sm:$0xff]
    %v1761 = vld [vmem:[#allocation12 + $0x120] sm:$0xff]
    %v1762 = vld [vmem:[#allocation12 + $0x128] sm:$0xff]
    %v1763 = vld [vmem:[#allocation12 + $0x130] sm:$0xff]
    %v1764 = vld [vmem:[#allocation12 + $0x138] sm:$0xff]
    %v1765 = vld [vmem:[#allocation12 + $0x140] sm:$0xff]
    %v1766 = vld [vmem:[#allocation12 + $0x148] sm:$0xff]
    %v1767 = vld [vmem:[#allocation12 + $0x150] sm:$0xff]
    %v1768 = vld [vmem:[#allocation12 + $0x158] sm:$0xff]
    %v1769 = vld [vmem:[#allocation12 + $0x160] sm:$0xff]
    %v1770 = vld [vmem:[#allocation12 + $0x168] sm:$0xff]
    %v1771 = vld [vmem:[#allocation12 + $0x170] sm:$0xff]
    %v1772 = vld [vmem:[#allocation12 + $0x178] sm:$0xff]
    %v1773 = vld [vmem:[#allocation12 + $0x180] sm:$0xff]
    %v1774 = vld [vmem:[#allocation12 + $0x188] sm:$0xff]
    %v1775 = vld [vmem:[#allocation12 + $0x190] sm:$0xff]
    %v1776 = vld [vmem:[#allocation12 + $0x198] sm:$0xff]
    %v1777 = vld [vmem:[#allocation12 + $0x1a0] sm:$0xff]
    %v1778 = vld [vmem:[#allocation12 + $0x1a8] sm:$0xff]
    %v1779 = vld [vmem:[#allocation12 + $0x1b0] sm:$0xff]
    %v1780 = vld [vmem:[#allocation12 + $0x1b8] sm:$0xff]
    %v1781 = vld [vmem:[#allocation12 + $0x1c0] sm:$0xff]
    %v1782 = vld [vmem:[#allocation12 + $0x1c8] sm:$0xff]
    %v1783 = vld [vmem:[#allocation12 + $0x1d0] sm:$0xff]
    %v1784 = vld [vmem:[#allocation12 + $0x1d8] sm:$0xff]
    %v1785 = vld [vmem:[#allocation12 + $0x1e0] sm:$0xff]
    %v1786 = vld [vmem:[#allocation12 + $0x1e8] sm:$0xff]
    %v1787 = vld [vmem:[#allocation12 + $0x1f0] sm:$0xff]
    %v1788 = vld [vmem:[#allocation12 + $0x1f8] sm:$0xff]
    %1789 = vmatpush.msra.mxu0 %v1785
    %1790 = vmatpush.msra.mxu0 %v1781
    %1791 = vmatpush.msra.mxu0 %v1777
    %1792 = vmatpush.msra.mxu0 %v1773
    %1793 = vmatpush.msra.mxu0 %v1769
    %1794 = vmatpush.msra.mxu0 %v1765
    %1795 = vmatpush.msra.mxu0 %v1761
    %1796 = vmatpush.msra.mxu0 %v1757
    %1797 = vmatpush.msra.mxu0 %v1753
    %1798 = vmatpush.msra.mxu0 %v1749
    %1799 = vmatpush.msra.mxu0 %v1745
    %1800 = vmatpush.msra.mxu0 %v1741
    %1801 = vmatpush.msra.mxu0 %v1737
    %1802 = vmatpush.msra.mxu0 %v1733
    %1803 = vmatpush.msra.mxu0 %v1729
    %1804 = vmatpush.msra.mxu0 %v1725
    %1805 = vmatmul.f32.gmra.mxu0 %v1715
    %v1806 = vpop.f32.mrf.mxu0
    %v1807 = vadd.f32 0.0, %v1806
    %1808 = vdwg.mxu0
    %1809 = vmatpush.msra.mxu0 %v1786
    %1810 = vmatpush.msra.mxu0 %v1782
    %1811 = vmatpush.msra.mxu0 %v1778
    %1812 = vmatpush.msra.mxu0 %v1774
    %1813 = vmatpush.msra.mxu0 %v1770
    %1814 = vmatpush.msra.mxu0 %v1766
    %1815 = vmatpush.msra.mxu0 %v1762
    %1816 = vmatpush.msra.mxu0 %v1758
    %1817 = vmatpush.msra.mxu0 %v1754
    %1818 = vmatpush.msra.mxu0 %v1750
    %1819 = vmatpush.msra.mxu0 %v1746
    %1820 = vmatpush.msra.mxu0 %v1742
    %1821 = vmatpush.msra.mxu0 %v1738
    %1822 = vmatpush.msra.mxu0 %v1734
    %1823 = vmatpush.msra.mxu0 %v1730
    %1824 = vmatpush.msra.mxu0 %v1726
    %1825 = vmatmul.f32.gmra.mxu0 %v1715
    %v1826 = vpop.f32.mrf.mxu0
    %v1827 = vadd.f32 0.0, %v1826
    %1828 = vdwg.mxu0
    %1829 = vmatpush.msra.mxu0 %v1787
    %1830 = vmatpush.msra.mxu0 %v1783
    %1831 = vmatpush.msra.mxu0 %v1779
    %1832 = vmatpush.msra.mxu0 %v1775
    %1833 = vmatpush.msra.mxu0 %v1771
    %1834 = vmatpush.msra.mxu0 %v1767
    %1835 = vmatpush.msra.mxu0 %v1763
    %1836 = vmatpush.msra.mxu0 %v1759
    %1837 = vmatpush.msra.mxu0 %v1755
    %1838 = vmatpush.msra.mxu0 %v1751
    %1839 = vmatpush.msra.mxu0 %v1747
    %1840 = vmatpush.msra.mxu0 %v1743
    %1841 = vmatpush.msra.mxu0 %v1739
    %1842 = vmatpush.msra.mxu0 %v1735
    %1843 = vmatpush.msra.mxu0 %v1731
    %1844 = vmatpush.msra.mxu0 %v1727
    %1845 = vmatmul.f32.gmra.mxu0 %v1715
    %v1846 = vpop.f32.mrf.mxu0
    %v1847 = vadd.f32 0.0, %v1846
    %1848 = vdwg.mxu0
    %1849 = vmatpush.msra.mxu0 %v1788
    %1850 = vmatpush.msra.mxu0 %v1784
    %1851 = vmatpush.msra.mxu0 %v1780
    %1852 = vmatpush.msra.mxu0 %v1776
    %1853 = vmatpush.msra.mxu0 %v1772
    %1854 = vmatpush.msra.mxu0 %v1768
    %1855 = vmatpush.msra.mxu0 %v1764
    %1856 = vmatpush.msra.mxu0 %v1760
    %1857 = vmatpush.msra.mxu0 %v1756
    %1858 = vmatpush.msra.mxu0 %v1752
    %1859 = vmatpush.msra.mxu0 %v1748
    %1860 = vmatpush.msra.mxu0 %v1744
    %1861 = vmatpush.msra.mxu0 %v1740
    %1862 = vmatpush.msra.mxu0 %v1736
    %1863 = vmatpush.msra.mxu0 %v1732
    %1864 = vmatpush.msra.mxu0 %v1728
    %1865 = vmatmul.f32.gmra.mxu0 %v1715
    %v1866 = vpop.f32.mrf.mxu0
    %v1867 = vadd.f32 0.0, %v1866
    %1868 = vdwg.mxu0
    %v1869 = vadd.f32 %v1721, %v1807
    %v1870 = vadd.f32 %v1722, %v1827
    %v1871 = vadd.f32 %v1723, %v1847
    %v1872 = vadd.f32 %v1724, %v1867
    %v1873 = vxor.u32 %v1869, 2147483648
    %v1874 = vxor.u32 %v1870, 2147483648
    %v1875 = vxor.u32 %v1871, 2147483648
    %v1876 = vmul.f32 %v1873, 1.442695
    %v1877 = vpow.pop %v1876
    %v1878 = vmul.f32 %v1874, 1.442695
    %v1879 = vpow.pop %v1878
    %v1880 = vmul.f32 %v1875, 1.442695
    %v1881 = vpow.pop %v1880
    %v1882 = vadd.f32 %v1877, 1.0
    %v1883 = vadd.f32 %v1879, 1.0
    %v1884 = vadd.f32 %v1881, 1.0
    %v1885 = vrcp.pop %v1882
    %v1886 = vmul.f32 %v1882, %v1885
    %v1887 = vsub.f32 1.0, %v1886
    %v1888 = vmul.f32 %v1885, %v1887
    %v1889 = vadd.f32 %v1885, %v1888
    %vm1890 = vweird.f32 %v1882
    %vm1891 = vweird.f32 %v1885
    %vm1892 = vmor %vm1890, %vm1891
    %v1893 = vsel %vm1892, %v1885, %v1889
    %v1894 = vand.u32 2147483647, %v1882
    %vm1895 = vcmp.eq.f32.partialorder %v1894, 8.507059e+37
    %v1896 = vand.u32 %v1882, 2147483648
    %v1897 = vor.u32 1.1754944e-38, %v1896
    %v1898 = vsel %vm1895, %v1897, %v1893
    %v1899 = vmul.f32 1.0, %v1898
    %v1900 = vrcp.pop %v1883
    %v1901 = vmul.f32 %v1883, %v1900
    %v1902 = vsub.f32 1.0, %v1901
    %v1903 = vmul.f32 %v1900, %v1902
    %v1904 = vadd.f32 %v1900, %v1903
    %vm1905 = vweird.f32 %v1883
    %vm1906 = vweird.f32 %v1900
    %vm1907 = vmor %vm1905, %vm1906
    %v1908 = vsel %vm1907, %v1900, %v1904
    %v1909 = vand.u32 2147483647, %v1883
    %vm1910 = vcmp.eq.f32.partialorder %v1909, 8.507059e+37
    %v1911 = vand.u32 %v1883, 2147483648
    %v1912 = vor.u32 1.1754944e-38, %v1911
    %v1913 = vsel %vm1910, %v1912, %v1908
    %v1914 = vmul.f32 1.0, %v1913
    %v1915 = vrcp.pop %v1884
    %v1916 = vmul.f32 %v1884, %v1915
    %v1917 = vsub.f32 1.0, %v1916
    %v1918 = vmul.f32 %v1915, %v1917
    %v1919 = vadd.f32 %v1915, %v1918
    %vm1920 = vweird.f32 %v1884
    %vm1921 = vweird.f32 %v1915
    %vm1922 = vmor %vm1920, %vm1921
    %v1923 = vsel %vm1922, %v1915, %v1919
    %v1924 = vand.u32 2147483647, %v1884
    %vm1925 = vcmp.eq.f32.partialorder %v1924, 8.507059e+37
    %v1926 = vand.u32 %v1884, 2147483648
    %v1927 = vor.u32 1.1754944e-38, %v1926
    %v1928 = vsel %vm1925, %v1927, %v1923
    %v1929 = vmul.f32 1.0, %v1928
    %v1930 = vtanh.pop %v1872
    %v1931 = vmul.f32 %v1914, %v1713
    %v1932 = vmul.f32 %v1899, %v1930
    %v1933 = vadd.f32 %v1931, %v1932
    %v1934 = vtanh.pop %v1933
    %v1935 = vmul.f32 %v1929, %v1934
    %s1936 = scalar_lea.vmem [#allocation3], 48
    %1937 = vst [vmem:[%s1936] sm:$0xff] %v1935
    %s1938 = smul.u32 7, 4
    %s1939 = smul.addr %s1938, 8
    %s1940 = scalar_lea.vmem [#allocation2], %s1939
    %v1941 = vld [vmem:[%s1940] sm:$0xff]
    %v1942 = vld [vmem:[%s1940 + $0x8] sm:$0xff]
    %v1943 = vld [vmem:[%s1940 + $0x10] sm:$0xff]
    %v1944 = vld [vmem:[%s1940 + $0x18] sm:$0xff]
    %v1945 = vld [vmem:[#allocation12] sm:$0xff]
    %v1946 = vld [vmem:[#allocation12 + $0x8] sm:$0xff]
    %v1947 = vld [vmem:[#allocation12 + $0x10] sm:$0xff]
    %v1948 = vld [vmem:[#allocation12 + $0x18] sm:$0xff]
    %v1949 = vld [vmem:[#allocation12 + $0x20] sm:$0xff]
    %v1950 = vld [vmem:[#allocation12 + $0x28] sm:$0xff]
    %v1951 = vld [vmem:[#allocation12 + $0x30] sm:$0xff]
    %v1952 = vld [vmem:[#allocation12 + $0x38] sm:$0xff]
    %v1953 = vld [vmem:[#allocation12 + $0x40] sm:$0xff]
    %v1954 = vld [vmem:[#allocation12 + $0x48] sm:$0xff]
    %v1955 = vld [vmem:[#allocation12 + $0x50] sm:$0xff]
    %v1956 = vld [vmem:[#allocation12 + $0x58] sm:$0xff]
    %v1957 = vld [vmem:[#allocation12 + $0x60] sm:$0xff]
    %v1958 = vld [vmem:[#allocation12 + $0x68] sm:$0xff]
    %v1959 = vld [vmem:[#allocation12 + $0x70] sm:$0xff]
    %v1960 = vld [vmem:[#allocation12 + $0x78] sm:$0xff]
    %v1961 = vld [vmem:[#allocation12 + $0x80] sm:$0xff]
    %v1962 = vld [vmem:[#allocation12 + $0x88] sm:$0xff]
    %v1963 = vld [vmem:[#allocation12 + $0x90] sm:$0xff]
    %v1964 = vld [vmem:[#allocation12 + $0x98] sm:$0xff]
    %v1965 = vld [vmem:[#allocation12 + $0xa0] sm:$0xff]
    %v1966 = vld [vmem:[#allocation12 + $0xa8] sm:$0xff]
    %v1967 = vld [vmem:[#allocation12 + $0xb0] sm:$0xff]
    %v1968 = vld [vmem:[#allocation12 + $0xb8] sm:$0xff]
    %v1969 = vld [vmem:[#allocation12 + $0xc0] sm:$0xff]
    %v1970 = vld [vmem:[#allocation12 + $0xc8] sm:$0xff]
    %v1971 = vld [vmem:[#allocation12 + $0xd0] sm:$0xff]
    %v1972 = vld [vmem:[#allocation12 + $0xd8] sm:$0xff]
    %v1973 = vld [vmem:[#allocation12 + $0xe0] sm:$0xff]
    %v1974 = vld [vmem:[#allocation12 + $0xe8] sm:$0xff]
    %v1975 = vld [vmem:[#allocation12 + $0xf0] sm:$0xff]
    %v1976 = vld [vmem:[#allocation12 + $0xf8] sm:$0xff]
    %v1977 = vld [vmem:[#allocation12 + $0x100] sm:$0xff]
    %v1978 = vld [vmem:[#allocation12 + $0x108] sm:$0xff]
    %v1979 = vld [vmem:[#allocation12 + $0x110] sm:$0xff]
    %v1980 = vld [vmem:[#allocation12 + $0x118] sm:$0xff]
    %v1981 = vld [vmem:[#allocation12 + $0x120] sm:$0xff]
    %v1982 = vld [vmem:[#allocation12 + $0x128] sm:$0xff]
    %v1983 = vld [vmem:[#allocation12 + $0x130] sm:$0xff]
    %v1984 = vld [vmem:[#allocation12 + $0x138] sm:$0xff]
    %v1985 = vld [vmem:[#allocation12 + $0x140] sm:$0xff]
    %v1986 = vld [vmem:[#allocation12 + $0x148] sm:$0xff]
    %v1987 = vld [vmem:[#allocation12 + $0x150] sm:$0xff]
    %v1988 = vld [vmem:[#allocation12 + $0x158] sm:$0xff]
    %v1989 = vld [vmem:[#allocation12 + $0x160] sm:$0xff]
    %v1990 = vld [vmem:[#allocation12 + $0x168] sm:$0xff]
    %v1991 = vld [vmem:[#allocation12 + $0x170] sm:$0xff]
    %v1992 = vld [vmem:[#allocation12 + $0x178] sm:$0xff]
    %v1993 = vld [vmem:[#allocation12 + $0x180] sm:$0xff]
    %v1994 = vld [vmem:[#allocation12 + $0x188] sm:$0xff]
    %v1995 = vld [vmem:[#allocation12 + $0x190] sm:$0xff]
    %v1996 = vld [vmem:[#allocation12 + $0x198] sm:$0xff]
    %v1997 = vld [vmem:[#allocation12 + $0x1a0] sm:$0xff]
    %v1998 = vld [vmem:[#allocation12 + $0x1a8] sm:$0xff]
    %v1999 = vld [vmem:[#allocation12 + $0x1b0] sm:$0xff]
    %v2000 = vld [vmem:[#allocation12 + $0x1b8] sm:$0xff]
    %v2001 = vld [vmem:[#allocation12 + $0x1c0] sm:$0xff]
    %v2002 = vld [vmem:[#allocation12 + $0x1c8] sm:$0xff]
    %v2003 = vld [vmem:[#allocation12 + $0x1d0] sm:$0xff]
    %v2004 = vld [vmem:[#allocation12 + $0x1d8] sm:$0xff]
    %v2005 = vld [vmem:[#allocation12 + $0x1e0] sm:$0xff]
    %v2006 = vld [vmem:[#allocation12 + $0x1e8] sm:$0xff]
    %v2007 = vld [vmem:[#allocation12 + $0x1f0] sm:$0xff]
    %v2008 = vld [vmem:[#allocation12 + $0x1f8] sm:$0xff]
    %2009 = vmatpush.msra.mxu0 %v2005
    %2010 = vmatpush.msra.mxu0 %v2001
    %2011 = vmatpush.msra.mxu0 %v1997
    %2012 = vmatpush.msra.mxu0 %v1993
    %2013 = vmatpush.msra.mxu0 %v1989
    %2014 = vmatpush.msra.mxu0 %v1985
    %2015 = vmatpush.msra.mxu0 %v1981
    %2016 = vmatpush.msra.mxu0 %v1977
    %2017 = vmatpush.msra.mxu0 %v1973
    %2018 = vmatpush.msra.mxu0 %v1969
    %2019 = vmatpush.msra.mxu0 %v1965
    %2020 = vmatpush.msra.mxu0 %v1961
    %2021 = vmatpush.msra.mxu0 %v1957
    %2022 = vmatpush.msra.mxu0 %v1953
    %2023 = vmatpush.msra.mxu0 %v1949
    %2024 = vmatpush.msra.mxu0 %v1945
    %2025 = vmatmul.f32.gmra.mxu0 %v1935
    %v2026 = vpop.f32.mrf.mxu0
    %v2027 = vadd.f32 0.0, %v2026
    %2028 = vdwg.mxu0
    %2029 = vmatpush.msra.mxu0 %v2006
    %2030 = vmatpush.msra.mxu0 %v2002
    %2031 = vmatpush.msra.mxu0 %v1998
    %2032 = vmatpush.msra.mxu0 %v1994
    %2033 = vmatpush.msra.mxu0 %v1990
    %2034 = vmatpush.msra.mxu0 %v1986
    %2035 = vmatpush.msra.mxu0 %v1982
    %2036 = vmatpush.msra.mxu0 %v1978
    %2037 = vmatpush.msra.mxu0 %v1974
    %2038 = vmatpush.msra.mxu0 %v1970
    %2039 = vmatpush.msra.mxu0 %v1966
    %2040 = vmatpush.msra.mxu0 %v1962
    %2041 = vmatpush.msra.mxu0 %v1958
    %2042 = vmatpush.msra.mxu0 %v1954
    %2043 = vmatpush.msra.mxu0 %v1950
    %2044 = vmatpush.msra.mxu0 %v1946
    %2045 = vmatmul.f32.gmra.mxu0 %v1935
    %v2046 = vpop.f32.mrf.mxu0
    %v2047 = vadd.f32 0.0, %v2046
    %2048 = vdwg.mxu0
    %2049 = vmatpush.msra.mxu0 %v2007
    %2050 = vmatpush.msra.mxu0 %v2003
    %2051 = vmatpush.msra.mxu0 %v1999
    %2052 = vmatpush.msra.mxu0 %v1995
    %2053 = vmatpush.msra.mxu0 %v1991
    %2054 = vmatpush.msra.mxu0 %v1987
    %2055 = vmatpush.msra.mxu0 %v1983
    %2056 = vmatpush.msra.mxu0 %v1979
    %2057 = vmatpush.msra.mxu0 %v1975
    %2058 = vmatpush.msra.mxu0 %v1971
    %2059 = vmatpush.msra.mxu0 %v1967
    %2060 = vmatpush.msra.mxu0 %v1963
    %2061 = vmatpush.msra.mxu0 %v1959
    %2062 = vmatpush.msra.mxu0 %v1955
    %2063 = vmatpush.msra.mxu0 %v1951
    %2064 = vmatpush.msra.mxu0 %v1947
    %2065 = vmatmul.f32.gmra.mxu0 %v1935
    %v2066 = vpop.f32.mrf.mxu0
    %v2067 = vadd.f32 0.0, %v2066
    %2068 = vdwg.mxu0
    %2069 = vmatpush.msra.mxu0 %v2008
    %2070 = vmatpush.msra.mxu0 %v2004
    %2071 = vmatpush.msra.mxu0 %v2000
    %2072 = vmatpush.msra.mxu0 %v1996
    %2073 = vmatpush.msra.mxu0 %v1992
    %2074 = vmatpush.msra.mxu0 %v1988
    %2075 = vmatpush.msra.mxu0 %v1984
    %2076 = vmatpush.msra.mxu0 %v1980
    %2077 = vmatpush.msra.mxu0 %v1976
    %2078 = vmatpush.msra.mxu0 %v1972
    %2079 = vmatpush.msra.mxu0 %v1968
    %2080 = vmatpush.msra.mxu0 %v1964
    %2081 = vmatpush.msra.mxu0 %v1960
    %2082 = vmatpush.msra.mxu0 %v1956
    %2083 = vmatpush.msra.mxu0 %v1952
    %2084 = vmatpush.msra.mxu0 %v1948
    %2085 = vmatmul.f32.gmra.mxu0 %v1935
    %v2086 = vpop.f32.mrf.mxu0
    %v2087 = vadd.f32 0.0, %v2086
    %2088 = vdwg.mxu0
    %v2089 = vadd.f32 %v1941, %v2027
    %v2090 = vadd.f32 %v1942, %v2047
    %v2091 = vadd.f32 %v1943, %v2067
    %v2092 = vadd.f32 %v1944, %v2087
    %v2093 = vxor.u32 %v2089, 2147483648
    %v2094 = vxor.u32 %v2090, 2147483648
    %v2095 = vxor.u32 %v2091, 2147483648
    %v2096 = vmul.f32 %v2093, 1.442695
    %v2097 = vpow.pop %v2096
    %v2098 = vmul.f32 %v2094, 1.442695
    %v2099 = vpow.pop %v2098
    %v2100 = vmul.f32 %v2095, 1.442695
    %v2101 = vpow.pop %v2100
    %v2102 = vadd.f32 %v2097, 1.0
    %v2103 = vadd.f32 %v2099, 1.0
    %v2104 = vadd.f32 %v2101, 1.0
    %v2105 = vrcp.pop %v2102
    %v2106 = vmul.f32 %v2102, %v2105
    %v2107 = vsub.f32 1.0, %v2106
    %v2108 = vmul.f32 %v2105, %v2107
    %v2109 = vadd.f32 %v2105, %v2108
    %vm2110 = vweird.f32 %v2102
    %vm2111 = vweird.f32 %v2105
    %vm2112 = vmor %vm2110, %vm2111
    %v2113 = vsel %vm2112, %v2105, %v2109
    %v2114 = vand.u32 2147483647, %v2102
    %vm2115 = vcmp.eq.f32.partialorder %v2114, 8.507059e+37
    %v2116 = vand.u32 %v2102, 2147483648
    %v2117 = vor.u32 1.1754944e-38, %v2116
    %v2118 = vsel %vm2115, %v2117, %v2113
    %v2119 = vmul.f32 1.0, %v2118
    %v2120 = vrcp.pop %v2103
    %v2121 = vmul.f32 %v2103, %v2120
    %v2122 = vsub.f32 1.0, %v2121
    %v2123 = vmul.f32 %v2120, %v2122
    %v2124 = vadd.f32 %v2120, %v2123
    %vm2125 = vweird.f32 %v2103
    %vm2126 = vweird.f32 %v2120
    %vm2127 = vmor %vm2125, %vm2126
    %v2128 = vsel %vm2127, %v2120, %v2124
    %v2129 = vand.u32 2147483647, %v2103
    %vm2130 = vcmp.eq.f32.partialorder %v2129, 8.507059e+37
    %v2131 = vand.u32 %v2103, 2147483648
    %v2132 = vor.u32 1.1754944e-38, %v2131
    %v2133 = vsel %vm2130, %v2132, %v2128
    %v2134 = vmul.f32 1.0, %v2133
    %v2135 = vrcp.pop %v2104
    %v2136 = vmul.f32 %v2104, %v2135
    %v2137 = vsub.f32 1.0, %v2136
    %v2138 = vmul.f32 %v2135, %v2137
    %v2139 = vadd.f32 %v2135, %v2138
    %vm2140 = vweird.f32 %v2104
    %vm2141 = vweird.f32 %v2135
    %vm2142 = vmor %vm2140, %vm2141
    %v2143 = vsel %vm2142, %v2135, %v2139
    %v2144 = vand.u32 2147483647, %v2104
    %vm2145 = vcmp.eq.f32.partialorder %v2144, 8.507059e+37
    %v2146 = vand.u32 %v2104, 2147483648
    %v2147 = vor.u32 1.1754944e-38, %v2146
    %v2148 = vsel %vm2145, %v2147, %v2143
    %v2149 = vmul.f32 1.0, %v2148
    %v2150 = vtanh.pop %v2092
    %v2151 = vmul.f32 %v2134, %v1933
    %v2152 = vmul.f32 %v2119, %v2150
    %v2153 = vadd.f32 %v2151, %v2152
    %v2154 = vtanh.pop %v2153
    %v2155 = vmul.f32 %v2149, %v2154
    %s2156 = scalar_lea.vmem [#allocation3], 56
    %2157 = vst [vmem:[%s2156] sm:$0xff] %v2155
    %s2158 = scalar_lea.vmem %s6, 4
    %v2159 = vld [vmem:[%s2158] sm:$0xf]
    %v2160 = vld [vmem:[#allocation3] sm:$0xff]
    %v2161 = vld [vmem:[#allocation3 + $0x8] sm:$0xff]
    %v2162 = vld [vmem:[#allocation3 + $0x10] sm:$0xff]
    %v2163 = vld [vmem:[#allocation3 + $0x18] sm:$0xff]
    %v2164 = vld [vmem:[#allocation3 + $0x20] sm:$0xff]
    %v2165 = vld [vmem:[#allocation3 + $0x28] sm:$0xff]
    %v2166 = vld [vmem:[#allocation3 + $0x30] sm:$0xff]
    %v2167 = vld [vmem:[#allocation3 + $0x38] sm:$0xff]
    %v2168 = vld [vmem:[#allocation9] sm:$0xff]
    %v2169 = vld [vmem:[#allocation9 + $0x8] sm:$0xff]
    %v2170 = vld [vmem:[#allocation9 + $0x10] sm:$0xff]
    %v2171 = vld [vmem:[#allocation9 + $0x18] sm:$0xff]
    %v2172 = vld [vmem:[#allocation9 + $0x20] sm:$0xff]
    %v2173 = vld [vmem:[#allocation9 + $0x28] sm:$0xff]
    %v2174 = vld [vmem:[#allocation9 + $0x30] sm:$0xff]
    %v2175 = vld [vmem:[#allocation9 + $0x38] sm:$0xff]
    %v2176 = vld [vmem:[#allocation9 + $0x40] sm:$0xff]
    %v2177 = vld [vmem:[#allocation9 + $0x48] sm:$0xff]
    %v2178 = vld [vmem:[#allocation9 + $0x50] sm:$0xff]
    %v2179 = vld [vmem:[#allocation9 + $0x58] sm:$0xff]
    %v2180 = vld [vmem:[#allocation9 + $0x60] sm:$0xff]
    %v2181 = vld [vmem:[#allocation9 + $0x68] sm:$0xff]
    %v2182 = vld [vmem:[#allocation9 + $0x70] sm:$0xff]
    %v2183 = vld [vmem:[#allocation9 + $0x78] sm:$0xff]
    %v2184 = vld [vmem:[#allocation9 + $0x80] sm:$0xff]
    %v2185 = vld [vmem:[#allocation9 + $0x88] sm:$0xff]
    %v2186 = vld [vmem:[#allocation9 + $0x90] sm:$0xff]
    %v2187 = vld [vmem:[#allocation9 + $0x98] sm:$0xff]
    %v2188 = vld [vmem:[#allocation9 + $0xa0] sm:$0xff]
    %v2189 = vld [vmem:[#allocation9 + $0xa8] sm:$0xff]
    %v2190 = vld [vmem:[#allocation9 + $0xb0] sm:$0xff]
    %v2191 = vld [vmem:[#allocation9 + $0xb8] sm:$0xff]
    %v2192 = vld [vmem:[#allocation9 + $0xc0] sm:$0xff]
    %v2193 = vld [vmem:[#allocation9 + $0xc8] sm:$0xff]
    %v2194 = vld [vmem:[#allocation9 + $0xd0] sm:$0xff]
    %v2195 = vld [vmem:[#allocation9 + $0xd8] sm:$0xff]
    %v2196 = vld [vmem:[#allocation9 + $0xe0] sm:$0xff]
    %v2197 = vld [vmem:[#allocation9 + $0xe8] sm:$0xff]
    %v2198 = vld [vmem:[#allocation9 + $0xf0] sm:$0xff]
    %v2199 = vld [vmem:[#allocation9 + $0xf8] sm:$0xff]
    %v2200 = vld [vmem:[#allocation9 + $0x100] sm:$0xff]
    %v2201 = vld [vmem:[#allocation9 + $0x108] sm:$0xff]
    %v2202 = vld [vmem:[#allocation9 + $0x110] sm:$0xff]
    %v2203 = vld [vmem:[#allocation9 + $0x118] sm:$0xff]
    %v2204 = vld [vmem:[#allocation9 + $0x120] sm:$0xff]
    %v2205 = vld [vmem:[#allocation9 + $0x128] sm:$0xff]
    %v2206 = vld [vmem:[#allocation9 + $0x130] sm:$0xff]
    %v2207 = vld [vmem:[#allocation9 + $0x138] sm:$0xff]
    %v2208 = vld [vmem:[#allocation9 + $0x140] sm:$0xff]
    %v2209 = vld [vmem:[#allocation9 + $0x148] sm:$0xff]
    %v2210 = vld [vmem:[#allocation9 + $0x150] sm:$0xff]
    %v2211 = vld [vmem:[#allocation9 + $0x158] sm:$0xff]
    %v2212 = vld [vmem:[#allocation9 + $0x160] sm:$0xff]
    %v2213 = vld [vmem:[#allocation9 + $0x168] sm:$0xff]
    %v2214 = vld [vmem:[#allocation9 + $0x170] sm:$0xff]
    %v2215 = vld [vmem:[#allocation9 + $0x178] sm:$0xff]
    %v2216 = vld [vmem:[#allocation9 + $0x180] sm:$0xff]
    %v2217 = vld [vmem:[#allocation9 + $0x188] sm:$0xff]
    %v2218 = vld [vmem:[#allocation9 + $0x190] sm:$0xff]
    %v2219 = vld [vmem:[#allocation9 + $0x198] sm:$0xff]
    %v2220 = vld [vmem:[#allocation9 + $0x1a0] sm:$0xff]
    %v2221 = vld [vmem:[#allocation9 + $0x1a8] sm:$0xff]
    %v2222 = vld [vmem:[#allocation9 + $0x1b0] sm:$0xff]
    %v2223 = vld [vmem:[#allocation9 + $0x1b8] sm:$0xff]
    %v2224 = vld [vmem:[#allocation9 + $0x1c0] sm:$0xff]
    %v2225 = vld [vmem:[#allocation9 + $0x1c8] sm:$0xff]
    %v2226 = vld [vmem:[#allocation9 + $0x1d0] sm:$0xff]
    %v2227 = vld [vmem:[#allocation9 + $0x1d8] sm:$0xff]
    %v2228 = vld [vmem:[#allocation9 + $0x1e0] sm:$0xff]
    %v2229 = vld [vmem:[#allocation9 + $0x1e8] sm:$0xff]
    %v2230 = vld [vmem:[#allocation9 + $0x1f0] sm:$0xff]
    %v2231 = vld [vmem:[#allocation9 + $0x1f8] sm:$0xff]
    %v2233 = vperm.slane %v2159, 0
    %v2234 = vperm.slane %v2159, 1
    %v2235 = vperm.slane %v2159, 2
    %v2236 = vperm.slane %v2159, 3
    %2241 = vmatpush.msra.mxu0 %v2228
    %2242 = vmatpush.msra.mxu0 %v2224
    %2243 = vmatpush.msra.mxu0 %v2220
    %2244 = vmatpush.msra.mxu0 %v2216
    %2245 = vmatpush.msra.mxu0 %v2212
    %2246 = vmatpush.msra.mxu0 %v2208
    %2247 = vmatpush.msra.mxu0 %v2204
    %2248 = vmatpush.msra.mxu0 %v2200
    %2249 = vmatpush.msra.mxu0 %v2196
    %2250 = vmatpush.msra.mxu0 %v2192
    %2251 = vmatpush.msra.mxu0 %v2188
    %2252 = vmatpush.msra.mxu0 %v2184
    %2253 = vmatpush.msra.mxu0 %v2180
    %2254 = vmatpush.msra.mxu0 %v2176
    %2255 = vmatpush.msra.mxu0 %v2172
    %2256 = vmatpush.msra.mxu0 %v2168
    %2257 = vmatmul.f32.gmra.mxu0 %v2160
    %v2258 = vpop.f32.mrf.mxu0
    %v2259 = vadd.f32 %v2233, %v2258
    %2260 = vmatmul.f32.gmra.mxu0 %v2161
    %v2261 = vpop.f32.mrf.mxu0
    %v2262 = vadd.f32 %v2233, %v2261
    %2263 = vmatmul.f32.gmra.mxu0 %v2162
    %v2264 = vpop.f32.mrf.mxu0
    %v2265 = vadd.f32 %v2233, %v2264
    %2266 = vmatmul.f32.gmra.mxu0 %v2163
    %v2267 = vpop.f32.mrf.mxu0
    %v2268 = vadd.f32 %v2233, %v2267
    %2269 = vmatmul.f32.gmra.mxu0 %v2164
    %v2270 = vpop.f32.mrf.mxu0
    %v2271 = vadd.f32 %v2233, %v2270
    %2272 = vmatmul.f32.gmra.mxu0 %v2165
    %v2273 = vpop.f32.mrf.mxu0
    %v2274 = vadd.f32 %v2233, %v2273
    %2275 = vmatmul.f32.gmra.mxu0 %v2166
    %v2276 = vpop.f32.mrf.mxu0
    %v2277 = vadd.f32 %v2233, %v2276
    %2278 = vmatmul.f32.gmra.mxu0 %v2167
    %v2279 = vpop.f32.mrf.mxu0
    %v2280 = vadd.f32 %v2233, %v2279
    %2281 = vdwg.mxu0
    %2282 = vmatpush.msra.mxu0 %v2229
    %2283 = vmatpush.msra.mxu0 %v2225
    %2284 = vmatpush.msra.mxu0 %v2221
    %2285 = vmatpush.msra.mxu0 %v2217
    %2286 = vmatpush.msra.mxu0 %v2213
    %2287 = vmatpush.msra.mxu0 %v2209
    %2288 = vmatpush.msra.mxu0 %v2205
    %2289 = vmatpush.msra.mxu0 %v2201
    %2290 = vmatpush.msra.mxu0 %v2197
    %2291 = vmatpush.msra.mxu0 %v2193
    %2292 = vmatpush.msra.mxu0 %v2189
    %2293 = vmatpush.msra.mxu0 %v2185
    %2294 = vmatpush.msra.mxu0 %v2181
    %2295 = vmatpush.msra.mxu0 %v2177
    %2296 = vmatpush.msra.mxu0 %v2173
    %2297 = vmatpush.msra.mxu0 %v2169
    %2298 = vmatmul.f32.gmra.mxu0 %v2160
    %v2299 = vpop.f32.mrf.mxu0
    %v2300 = vadd.f32 %v2234, %v2299
    %2301 = vmatmul.f32.gmra.mxu0 %v2161
    %v2302 = vpop.f32.mrf.mxu0
    %v2303 = vadd.f32 %v2234, %v2302
    %2304 = vmatmul.f32.gmra.mxu0 %v2162
    %v2305 = vpop.f32.mrf.mxu0
    %v2306 = vadd.f32 %v2234, %v2305
    %2307 = vmatmul.f32.gmra.mxu0 %v2163
    %v2308 = vpop.f32.mrf.mxu0
    %v2309 = vadd.f32 %v2234, %v2308
    %2310 = vmatmul.f32.gmra.mxu0 %v2164
    %v2311 = vpop.f32.mrf.mxu0
    %v2312 = vadd.f32 %v2234, %v2311
    %2313 = vmatmul.f32.gmra.mxu0 %v2165
    %v2314 = vpop.f32.mrf.mxu0
    %v2315 = vadd.f32 %v2234, %v2314
    %2316 = vmatmul.f32.gmra.mxu0 %v2166
    %v2317 = vpop.f32.mrf.mxu0
    %v2318 = vadd.f32 %v2234, %v2317
    %2319 = vmatmul.f32.gmra.mxu0 %v2167
    %v2320 = vpop.f32.mrf.mxu0
    %v2321 = vadd.f32 %v2234, %v2320
    %2322 = vdwg.mxu0
    %2323 = vmatpush.msra.mxu0 %v2230
    %2324 = vmatpush.msra.mxu0 %v2226
    %2325 = vmatpush.msra.mxu0 %v2222
    %2326 = vmatpush.msra.mxu0 %v2218
    %2327 = vmatpush.msra.mxu0 %v2214
    %2328 = vmatpush.msra.mxu0 %v2210
    %2329 = vmatpush.msra.mxu0 %v2206
    %2330 = vmatpush.msra.mxu0 %v2202
    %2331 = vmatpush.msra.mxu0 %v2198
    %2332 = vmatpush.msra.mxu0 %v2194
    %2333 = vmatpush.msra.mxu0 %v2190
    %2334 = vmatpush.msra.mxu0 %v2186
    %2335 = vmatpush.msra.mxu0 %v2182
    %2336 = vmatpush.msra.mxu0 %v2178
    %2337 = vmatpush.msra.mxu0 %v2174
    %2338 = vmatpush.msra.mxu0 %v2170
    %2339 = vmatmul.f32.gmra.mxu0 %v2160
    %v2340 = vpop.f32.mrf.mxu0
    %v2341 = vadd.f32 %v2235, %v2340
    %2342 = vmatmul.f32.gmra.mxu0 %v2161
    %v2343 = vpop.f32.mrf.mxu0
    %v2344 = vadd.f32 %v2235, %v2343
    %2345 = vmatmul.f32.gmra.mxu0 %v2162
    %v2346 = vpop.f32.mrf.mxu0
    %v2347 = vadd.f32 %v2235, %v2346
    %2348 = vmatmul.f32.gmra.mxu0 %v2163
    %v2349 = vpop.f32.mrf.mxu0
    %v2350 = vadd.f32 %v2235, %v2349
    %2351 = vmatmul.f32.gmra.mxu0 %v2164
    %v2352 = vpop.f32.mrf.mxu0
    %v2353 = vadd.f32 %v2235, %v2352
    %2354 = vmatmul.f32.gmra.mxu0 %v2165
    %v2355 = vpop.f32.mrf.mxu0
    %v2356 = vadd.f32 %v2235, %v2355
    %2357 = vmatmul.f32.gmra.mxu0 %v2166
    %v2358 = vpop.f32.mrf.mxu0
    %v2359 = vadd.f32 %v2235, %v2358
    %2360 = vmatmul.f32.gmra.mxu0 %v2167
    %v2361 = vpop.f32.mrf.mxu0
    %v2362 = vadd.f32 %v2235, %v2361
    %2363 = vdwg.mxu0
    %2364 = vmatpush.msra.mxu0 %v2231
    %2365 = vmatpush.msra.mxu0 %v2227
    %2366 = vmatpush.msra.mxu0 %v2223
    %2367 = vmatpush.msra.mxu0 %v2219
    %2368 = vmatpush.msra.mxu0 %v2215
    %2369 = vmatpush.msra.mxu0 %v2211
    %2370 = vmatpush.msra.mxu0 %v2207
    %2371 = vmatpush.msra.mxu0 %v2203
    %2372 = vmatpush.msra.mxu0 %v2199
    %2373 = vmatpush.msra.mxu0 %v2195
    %2374 = vmatpush.msra.mxu0 %v2191
    %2375 = vmatpush.msra.mxu0 %v2187
    %2376 = vmatpush.msra.mxu0 %v2183
    %2377 = vmatpush.msra.mxu0 %v2179
    %2378 = vmatpush.msra.mxu0 %v2175
    %2379 = vmatpush.msra.mxu0 %v2171
    %2380 = vmatmul.f32.gmra.mxu0 %v2160
    %v2381 = vpop.f32.mrf.mxu0
    %v2382 = vadd.f32 %v2236, %v2381
    %2383 = vmatmul.f32.gmra.mxu0 %v2161
    %v2384 = vpop.f32.mrf.mxu0
    %v2385 = vadd.f32 %v2236, %v2384
    %2386 = vmatmul.f32.gmra.mxu0 %v2162
    %v2387 = vpop.f32.mrf.mxu0
    %v2388 = vadd.f32 %v2236, %v2387
    %2389 = vmatmul.f32.gmra.mxu0 %v2163
    %v2390 = vpop.f32.mrf.mxu0
    %v2391 = vadd.f32 %v2236, %v2390
    %2392 = vmatmul.f32.gmra.mxu0 %v2164
    %v2393 = vpop.f32.mrf.mxu0
    %v2394 = vadd.f32 %v2236, %v2393
    %2395 = vmatmul.f32.gmra.mxu0 %v2165
    %v2396 = vpop.f32.mrf.mxu0
    %v2397 = vadd.f32 %v2236, %v2396
    %2398 = vmatmul.f32.gmra.mxu0 %v2166
    %v2399 = vpop.f32.mrf.mxu0
    %v2400 = vadd.f32 %v2236, %v2399
    %2401 = vmatmul.f32.gmra.mxu0 %v2167
    %v2402 = vpop.f32.mrf.mxu0
    %v2403 = vadd.f32 %v2236, %v2402
    %2404 = vdwg.mxu0
    %2405 = vst [vmem:[#allocation2] sm:$0xff] %v2259
    %2406 = vst [vmem:[#allocation2 + $0x8] sm:$0xff] %v2300
    %2407 = vst [vmem:[#allocation2 + $0x10] sm:$0xff] %v2341
    %2408 = vst [vmem:[#allocation2 + $0x18] sm:$0xff] %v2382
    %2409 = vst [vmem:[#allocation2 + $0x20] sm:$0xff] %v2262
    %2410 = vst [vmem:[#allocation2 + $0x28] sm:$0xff] %v2303
    %2411 = vst [vmem:[#allocation2 + $0x30] sm:$0xff] %v2344
    %2412 = vst [vmem:[#allocation2 + $0x38] sm:$0xff] %v2385
    %2413 = vst [vmem:[#allocation2 + $0x40] sm:$0xff] %v2265
    %2414 = vst [vmem:[#allocation2 + $0x48] sm:$0xff] %v2306
    %2415 = vst [vmem:[#allocation2 + $0x50] sm:$0xff] %v2347
    %2416 = vst [vmem:[#allocation2 + $0x58] sm:$0xff] %v2388
    %2417 = vst [vmem:[#allocation2 + $0x60] sm:$0xff] %v2268
    %2418 = vst [vmem:[#allocation2 + $0x68] sm:$0xff] %v2309
    %2419 = vst [vmem:[#allocation2 + $0x70] sm:$0xff] %v2350
    %2420 = vst [vmem:[#allocation2 + $0x78] sm:$0xff] %v2391
    %2421 = vst [vmem:[#allocation2 + $0x80] sm:$0xff] %v2271
    %2422 = vst [vmem:[#allocation2 + $0x88] sm:$0xff] %v2312
    %2423 = vst [vmem:[#allocation2 + $0x90] sm:$0xff] %v2353
    %2424 = vst [vmem:[#allocation2 + $0x98] sm:$0xff] %v2394
    %2425 = vst [vmem:[#allocation2 + $0xa0] sm:$0xff] %v2274
    %2426 = vst [vmem:[#allocation2 + $0xa8] sm:$0xff] %v2315
    %2427 = vst [vmem:[#allocation2 + $0xb0] sm:$0xff] %v2356
    %2428 = vst [vmem:[#allocation2 + $0xb8] sm:$0xff] %v2397
    %2429 = vst [vmem:[#allocation2 + $0xc0] sm:$0xff] %v2277
    %2430 = vst [vmem:[#allocation2 + $0xc8] sm:$0xff] %v2318
    %2431 = vst [vmem:[#allocation2 + $0xd0] sm:$0xff] %v2359
    %2432 = vst [vmem:[#allocation2 + $0xd8] sm:$0xff] %v2400
    %2433 = vst [vmem:[#allocation2 + $0xe0] sm:$0xff] %v2280
    %2434 = vst [vmem:[#allocation2 + $0xe8] sm:$0xff] %v2321
    %2435 = vst [vmem:[#allocation2 + $0xf0] sm:$0xff] %v2362
    %2436 = vst [vmem:[#allocation2 + $0xf8] sm:$0xff] %v2403
    %v2437 = vld [vmem:[%s401] sm:$0xff]
    %v2438 = vld [vmem:[%s401 + $0x8] sm:$0xff]
    %v2439 = vld [vmem:[%s401 + $0x10] sm:$0xff]
    %v2440 = vld [vmem:[%s401 + $0x18] sm:$0xff]
    %s2441 = scalar_lea.vmem [#allocation12], 512
    %v2442 = vld [vmem:[%s2441] sm:$0xff]
    %v2443 = vld [vmem:[%s2441 + $0x8] sm:$0xff]
    %v2444 = vld [vmem:[%s2441 + $0x10] sm:$0xff]
    %v2445 = vld [vmem:[%s2441 + $0x18] sm:$0xff]
    %v2446 = vld [vmem:[%s2441 + $0x20] sm:$0xff]
    %v2447 = vld [vmem:[%s2441 + $0x28] sm:$0xff]
    %v2448 = vld [vmem:[%s2441 + $0x30] sm:$0xff]
    %v2449 = vld [vmem:[%s2441 + $0x38] sm:$0xff]
    %v2450 = vld [vmem:[%s2441 + $0x40] sm:$0xff]
    %v2451 = vld [vmem:[%s2441 + $0x48] sm:$0xff]
    %v2452 = vld [vmem:[%s2441 + $0x50] sm:$0xff]
    %v2453 = vld [vmem:[%s2441 + $0x58] sm:$0xff]
    %v2454 = vld [vmem:[%s2441 + $0x60] sm:$0xff]
    %v2455 = vld [vmem:[%s2441 + $0x68] sm:$0xff]
    %v2456 = vld [vmem:[%s2441 + $0x70] sm:$0xff]
    %v2457 = vld [vmem:[%s2441 + $0x78] sm:$0xff]
    %v2458 = vld [vmem:[%s2441 + $0x80] sm:$0xff]
    %v2459 = vld [vmem:[%s2441 + $0x88] sm:$0xff]
    %v2460 = vld [vmem:[%s2441 + $0x90] sm:$0xff]
    %v2461 = vld [vmem:[%s2441 + $0x98] sm:$0xff]
    %v2462 = vld [vmem:[%s2441 + $0xa0] sm:$0xff]
    %v2463 = vld [vmem:[%s2441 + $0xa8] sm:$0xff]
    %v2464 = vld [vmem:[%s2441 + $0xb0] sm:$0xff]
    %v2465 = vld [vmem:[%s2441 + $0xb8] sm:$0xff]
    %v2466 = vld [vmem:[%s2441 + $0xc0] sm:$0xff]
    %v2467 = vld [vmem:[%s2441 + $0xc8] sm:$0xff]
    %v2468 = vld [vmem:[%s2441 + $0xd0] sm:$0xff]
    %v2469 = vld [vmem:[%s2441 + $0xd8] sm:$0xff]
    %v2470 = vld [vmem:[%s2441 + $0xe0] sm:$0xff]
    %v2471 = vld [vmem:[%s2441 + $0xe8] sm:$0xff]
    %v2472 = vld [vmem:[%s2441 + $0xf0] sm:$0xff]
    %v2473 = vld [vmem:[%s2441 + $0xf8] sm:$0xff]
    %v2474 = vld [vmem:[%s2441 + $0x100] sm:$0xff]
    %v2475 = vld [vmem:[%s2441 + $0x108] sm:$0xff]
    %v2476 = vld [vmem:[%s2441 + $0x110] sm:$0xff]
    %v2477 = vld [vmem:[%s2441 + $0x118] sm:$0xff]
    %v2478 = vld [vmem:[%s2441 + $0x120] sm:$0xff]
    %v2479 = vld [vmem:[%s2441 + $0x128] sm:$0xff]
    %v2480 = vld [vmem:[%s2441 + $0x130] sm:$0xff]
    %v2481 = vld [vmem:[%s2441 + $0x138] sm:$0xff]
    %v2482 = vld [vmem:[%s2441 + $0x140] sm:$0xff]
    %v2483 = vld [vmem:[%s2441 + $0x148] sm:$0xff]
    %v2484 = vld [vmem:[%s2441 + $0x150] sm:$0xff]
    %v2485 = vld [vmem:[%s2441 + $0x158] sm:$0xff]
    %v2486 = vld [vmem:[%s2441 + $0x160] sm:$0xff]
    %v2487 = vld [vmem:[%s2441 + $0x168] sm:$0xff]
    %v2488 = vld [vmem:[%s2441 + $0x170] sm:$0xff]
    %v2489 = vld [vmem:[%s2441 + $0x178] sm:$0xff]
    %v2490 = vld [vmem:[%s2441 + $0x180] sm:$0xff]
    %v2491 = vld [vmem:[%s2441 + $0x188] sm:$0xff]
    %v2492 = vld [vmem:[%s2441 + $0x190] sm:$0xff]
    %v2493 = vld [vmem:[%s2441 + $0x198] sm:$0xff]
    %v2494 = vld [vmem:[%s2441 + $0x1a0] sm:$0xff]
    %v2495 = vld [vmem:[%s2441 + $0x1a8] sm:$0xff]
    %v2496 = vld [vmem:[%s2441 + $0x1b0] sm:$0xff]
    %v2497 = vld [vmem:[%s2441 + $0x1b8] sm:$0xff]
    %v2498 = vld [vmem:[%s2441 + $0x1c0] sm:$0xff]
    %v2499 = vld [vmem:[%s2441 + $0x1c8] sm:$0xff]
    %v2500 = vld [vmem:[%s2441 + $0x1d0] sm:$0xff]
    %v2501 = vld [vmem:[%s2441 + $0x1d8] sm:$0xff]
    %v2502 = vld [vmem:[%s2441 + $0x1e0] sm:$0xff]
    %v2503 = vld [vmem:[%s2441 + $0x1e8] sm:$0xff]
    %v2504 = vld [vmem:[%s2441 + $0x1f0] sm:$0xff]
    %v2505 = vld [vmem:[%s2441 + $0x1f8] sm:$0xff]
    %2506 = vmatpush.msra.mxu0 %v2502
    %2507 = vmatpush.msra.mxu0 %v2498
    %2508 = vmatpush.msra.mxu0 %v2494
    %2509 = vmatpush.msra.mxu0 %v2490
    %2510 = vmatpush.msra.mxu0 %v2486
    %2511 = vmatpush.msra.mxu0 %v2482
    %2512 = vmatpush.msra.mxu0 %v2478
    %2513 = vmatpush.msra.mxu0 %v2474
    %2514 = vmatpush.msra.mxu0 %v2470
    %2515 = vmatpush.msra.mxu0 %v2466
    %2516 = vmatpush.msra.mxu0 %v2462
    %2517 = vmatpush.msra.mxu0 %v2458
    %2518 = vmatpush.msra.mxu0 %v2454
    %2519 = vmatpush.msra.mxu0 %v2450
    %2520 = vmatpush.msra.mxu0 %v2446
    %2521 = vmatpush.msra.mxu0 %v2442
    %2522 = vmatmul.f32.gmra.mxu0 0.0
    %v2523 = vpop.f32.mrf.mxu0
    %v2524 = vadd.f32 0.0, %v2523
    %2525 = vdwg.mxu0
    %2526 = vmatpush.msra.mxu0 %v2503
    %2527 = vmatpush.msra.mxu0 %v2499
    %2528 = vmatpush.msra.mxu0 %v2495
    %2529 = vmatpush.msra.mxu0 %v2491
    %2530 = vmatpush.msra.mxu0 %v2487
    %2531 = vmatpush.msra.mxu0 %v2483
    %2532 = vmatpush.msra.mxu0 %v2479
    %2533 = vmatpush.msra.mxu0 %v2475
    %2534 = vmatpush.msra.mxu0 %v2471
    %2535 = vmatpush.msra.mxu0 %v2467
    %2536 = vmatpush.msra.mxu0 %v2463
    %2537 = vmatpush.msra.mxu0 %v2459
    %2538 = vmatpush.msra.mxu0 %v2455
    %2539 = vmatpush.msra.mxu0 %v2451
    %2540 = vmatpush.msra.mxu0 %v2447
    %2541 = vmatpush.msra.mxu0 %v2443
    %2542 = vmatmul.f32.gmra.mxu0 0.0
    %v2543 = vpop.f32.mrf.mxu0
    %v2544 = vadd.f32 0.0, %v2543
    %2545 = vdwg.mxu0
    %2546 = vmatpush.msra.mxu0 %v2504
    %2547 = vmatpush.msra.mxu0 %v2500
    %2548 = vmatpush.msra.mxu0 %v2496
    %2549 = vmatpush.msra.mxu0 %v2492
    %2550 = vmatpush.msra.mxu0 %v2488
    %2551 = vmatpush.msra.mxu0 %v2484
    %2552 = vmatpush.msra.mxu0 %v2480
    %2553 = vmatpush.msra.mxu0 %v2476
    %2554 = vmatpush.msra.mxu0 %v2472
    %2555 = vmatpush.msra.mxu0 %v2468
    %2556 = vmatpush.msra.mxu0 %v2464
    %2557 = vmatpush.msra.mxu0 %v2460
    %2558 = vmatpush.msra.mxu0 %v2456
    %2559 = vmatpush.msra.mxu0 %v2452
    %2560 = vmatpush.msra.mxu0 %v2448
    %2561 = vmatpush.msra.mxu0 %v2444
    %2562 = vmatmul.f32.gmra.mxu0 0.0
    %v2563 = vpop.f32.mrf.mxu0
    %v2564 = vadd.f32 0.0, %v2563
    %2565 = vdwg.mxu0
    %2566 = vmatpush.msra.mxu0 %v2505
    %2567 = vmatpush.msra.mxu0 %v2501
    %2568 = vmatpush.msra.mxu0 %v2497
    %2569 = vmatpush.msra.mxu0 %v2493
    %2570 = vmatpush.msra.mxu0 %v2489
    %2571 = vmatpush.msra.mxu0 %v2485
    %2572 = vmatpush.msra.mxu0 %v2481
    %2573 = vmatpush.msra.mxu0 %v2477
    %2574 = vmatpush.msra.mxu0 %v2473
    %2575 = vmatpush.msra.mxu0 %v2469
    %2576 = vmatpush.msra.mxu0 %v2465
    %2577 = vmatpush.msra.mxu0 %v2461
    %2578 = vmatpush.msra.mxu0 %v2457
    %2579 = vmatpush.msra.mxu0 %v2453
    %2580 = vmatpush.msra.mxu0 %v2449
    %2581 = vmatpush.msra.mxu0 %v2445
    %2582 = vmatmul.f32.gmra.mxu0 0.0
    %v2583 = vpop.f32.mrf.mxu0
    %v2584 = vadd.f32 0.0, %v2583
    %2585 = vdwg.mxu0
    %v2586 = vadd.f32 %v2437, %v2524
    %v2587 = vadd.f32 %v2438, %v2544
    %v2588 = vadd.f32 %v2439, %v2564
    %v2589 = vadd.f32 %v2440, %v2584
    %v2590 = vxor.u32 %v2586, 2147483648
    %v2591 = vxor.u32 %v2587, 2147483648
    %v2592 = vxor.u32 %v2588, 2147483648
    %v2593 = vmul.f32 %v2590, 1.442695
    %v2594 = vpow.pop %v2593
    %v2595 = vmul.f32 %v2591, 1.442695
    %v2596 = vpow.pop %v2595
    %v2597 = vmul.f32 %v2592, 1.442695
    %v2598 = vpow.pop %v2597
    %v2599 = vadd.f32 %v2594, 1.0
    %v2600 = vadd.f32 %v2596, 1.0
    %v2601 = vadd.f32 %v2598, 1.0
    %v2602 = vrcp.pop %v2599
    %v2603 = vmul.f32 %v2599, %v2602
    %v2604 = vsub.f32 1.0, %v2603
    %v2605 = vmul.f32 %v2602, %v2604
    %v2606 = vadd.f32 %v2602, %v2605
    %vm2607 = vweird.f32 %v2599
    %vm2608 = vweird.f32 %v2602
    %vm2609 = vmor %vm2607, %vm2608
    %v2610 = vsel %vm2609, %v2602, %v2606
    %v2611 = vand.u32 2147483647, %v2599
    %vm2612 = vcmp.eq.f32.partialorder %v2611, 8.507059e+37
    %v2613 = vand.u32 %v2599, 2147483648
    %v2614 = vor.u32 1.1754944e-38, %v2613
    %v2615 = vsel %vm2612, %v2614, %v2610
    %v2616 = vmul.f32 1.0, %v2615
    %v2617 = vrcp.pop %v2600
    %v2618 = vmul.f32 %v2600, %v2617
    %v2619 = vsub.f32 1.0, %v2618
    %v2620 = vmul.f32 %v2617, %v2619
    %v2621 = vadd.f32 %v2617, %v2620
    %vm2622 = vweird.f32 %v2600
    %vm2623 = vweird.f32 %v2617
    %vm2624 = vmor %vm2622, %vm2623
    %v2625 = vsel %vm2624, %v2617, %v2621
    %v2626 = vand.u32 2147483647, %v2600
    %vm2627 = vcmp.eq.f32.partialorder %v2626, 8.507059e+37
    %v2628 = vand.u32 %v2600, 2147483648
    %v2629 = vor.u32 1.1754944e-38, %v2628
    %v2630 = vsel %vm2627, %v2629, %v2625
    %v2631 = vmul.f32 1.0, %v2630
    %v2632 = vrcp.pop %v2601
    %v2633 = vmul.f32 %v2601, %v2632
    %v2634 = vsub.f32 1.0, %v2633
    %v2635 = vmul.f32 %v2632, %v2634
    %v2636 = vadd.f32 %v2632, %v2635
    %vm2637 = vweird.f32 %v2601
    %vm2638 = vweird.f32 %v2632
    %vm2639 = vmor %vm2637, %vm2638
    %v2640 = vsel %vm2639, %v2632, %v2636
    %v2641 = vand.u32 2147483647, %v2601
    %vm2642 = vcmp.eq.f32.partialorder %v2641, 8.507059e+37
    %v2643 = vand.u32 %v2601, 2147483648
    %v2644 = vor.u32 1.1754944e-38, %v2643
    %v2645 = vsel %vm2642, %v2644, %v2640
    %v2646 = vmul.f32 1.0, %v2645
    %v2647 = vtanh.pop %v2589
    %v2648 = vmul.f32 %v2631, 0.0
    %v2649 = vmul.f32 %v2616, %v2647
    %v2650 = vadd.f32 %v2648, %v2649
    %v2651 = vtanh.pop %v2650
    %v2652 = vmul.f32 %v2646, %v2651
    %2653 = vst [vmem:[#allocation3] sm:$0xff] %v2652
    %v2654 = vld [vmem:[%s620] sm:$0xff]
    %v2655 = vld [vmem:[%s620 + $0x8] sm:$0xff]
    %v2656 = vld [vmem:[%s620 + $0x10] sm:$0xff]
    %v2657 = vld [vmem:[%s620 + $0x18] sm:$0xff]
    %v2658 = vld [vmem:[%s2441] sm:$0xff]
    %v2659 = vld [vmem:[%s2441 + $0x8] sm:$0xff]
    %v2660 = vld [vmem:[%s2441 + $0x10] sm:$0xff]
    %v2661 = vld [vmem:[%s2441 + $0x18] sm:$0xff]
    %v2662 = vld [vmem:[%s2441 + $0x20] sm:$0xff]
    %v2663 = vld [vmem:[%s2441 + $0x28] sm:$0xff]
    %v2664 = vld [vmem:[%s2441 + $0x30] sm:$0xff]
    %v2665 = vld [vmem:[%s2441 + $0x38] sm:$0xff]
    %v2666 = vld [vmem:[%s2441 + $0x40] sm:$0xff]
    %v2667 = vld [vmem:[%s2441 + $0x48] sm:$0xff]
    %v2668 = vld [vmem:[%s2441 + $0x50] sm:$0xff]
    %v2669 = vld [vmem:[%s2441 + $0x58] sm:$0xff]
    %v2670 = vld [vmem:[%s2441 + $0x60] sm:$0xff]
    %v2671 = vld [vmem:[%s2441 + $0x68] sm:$0xff]
    %v2672 = vld [vmem:[%s2441 + $0x70] sm:$0xff]
    %v2673 = vld [vmem:[%s2441 + $0x78] sm:$0xff]
    %v2674 = vld [vmem:[%s2441 + $0x80] sm:$0xff]
    %v2675 = vld [vmem:[%s2441 + $0x88] sm:$0xff]
    %v2676 = vld [vmem:[%s2441 + $0x90] sm:$0xff]
    %v2677 = vld [vmem:[%s2441 + $0x98] sm:$0xff]
    %v2678 = vld [vmem:[%s2441 + $0xa0] sm:$0xff]
    %v2679 = vld [vmem:[%s2441 + $0xa8] sm:$0xff]
    %v2680 = vld [vmem:[%s2441 + $0xb0] sm:$0xff]
    %v2681 = vld [vmem:[%s2441 + $0xb8] sm:$0xff]
    %v2682 = vld [vmem:[%s2441 + $0xc0] sm:$0xff]
    %v2683 = vld [vmem:[%s2441 + $0xc8] sm:$0xff]
    %v2684 = vld [vmem:[%s2441 + $0xd0] sm:$0xff]
    %v2685 = vld [vmem:[%s2441 + $0xd8] sm:$0xff]
    %v2686 = vld [vmem:[%s2441 + $0xe0] sm:$0xff]
    %v2687 = vld [vmem:[%s2441 + $0xe8] sm:$0xff]
    %v2688 = vld [vmem:[%s2441 + $0xf0] sm:$0xff]
    %v2689 = vld [vmem:[%s2441 + $0xf8] sm:$0xff]
    %v2690 = vld [vmem:[%s2441 + $0x100] sm:$0xff]
    %v2691 = vld [vmem:[%s2441 + $0x108] sm:$0xff]
    %v2692 = vld [vmem:[%s2441 + $0x110] sm:$0xff]
    %v2693 = vld [vmem:[%s2441 + $0x118] sm:$0xff]
    %v2694 = vld [vmem:[%s2441 + $0x120] sm:$0xff]
    %v2695 = vld [vmem:[%s2441 + $0x128] sm:$0xff]
    %v2696 = vld [vmem:[%s2441 + $0x130] sm:$0xff]
    %v2697 = vld [vmem:[%s2441 + $0x138] sm:$0xff]
    %v2698 = vld [vmem:[%s2441 + $0x140] sm:$0xff]
    %v2699 = vld [vmem:[%s2441 + $0x148] sm:$0xff]
    %v2700 = vld [vmem:[%s2441 + $0x150] sm:$0xff]
    %v2701 = vld [vmem:[%s2441 + $0x158] sm:$0xff]
    %v2702 = vld [vmem:[%s2441 + $0x160] sm:$0xff]
    %v2703 = vld [vmem:[%s2441 + $0x168] sm:$0xff]
    %v2704 = vld [vmem:[%s2441 + $0x170] sm:$0xff]
    %v2705 = vld [vmem:[%s2441 + $0x178] sm:$0xff]
    %v2706 = vld [vmem:[%s2441 + $0x180] sm:$0xff]
    %v2707 = vld [vmem:[%s2441 + $0x188] sm:$0xff]
    %v2708 = vld [vmem:[%s2441 + $0x190] sm:$0xff]
    %v2709 = vld [vmem:[%s2441 + $0x198] sm:$0xff]
    %v2710 = vld [vmem:[%s2441 + $0x1a0] sm:$0xff]
    %v2711 = vld [vmem:[%s2441 + $0x1a8] sm:$0xff]
    %v2712 = vld [vmem:[%s2441 + $0x1b0] sm:$0xff]
    %v2713 = vld [vmem:[%s2441 + $0x1b8] sm:$0xff]
    %v2714 = vld [vmem:[%s2441 + $0x1c0] sm:$0xff]
    %v2715 = vld [vmem:[%s2441 + $0x1c8] sm:$0xff]
    %v2716 = vld [vmem:[%s2441 + $0x1d0] sm:$0xff]
    %v2717 = vld [vmem:[%s2441 + $0x1d8] sm:$0xff]
    %v2718 = vld [vmem:[%s2441 + $0x1e0] sm:$0xff]
    %v2719 = vld [vmem:[%s2441 + $0x1e8] sm:$0xff]
    %v2720 = vld [vmem:[%s2441 + $0x1f0] sm:$0xff]
    %v2721 = vld [vmem:[%s2441 + $0x1f8] sm:$0xff]
    %2722 = vmatpush.msra.mxu0 %v2718
    %2723 = vmatpush.msra.mxu0 %v2714
    %2724 = vmatpush.msra.mxu0 %v2710
    %2725 = vmatpush.msra.mxu0 %v2706
    %2726 = vmatpush.msra.mxu0 %v2702
    %2727 = vmatpush.msra.mxu0 %v2698
    %2728 = vmatpush.msra.mxu0 %v2694
    %2729 = vmatpush.msra.mxu0 %v2690
    %2730 = vmatpush.msra.mxu0 %v2686
    %2731 = vmatpush.msra.mxu0 %v2682
    %2732 = vmatpush.msra.mxu0 %v2678
    %2733 = vmatpush.msra.mxu0 %v2674
    %2734 = vmatpush.msra.mxu0 %v2670
    %2735 = vmatpush.msra.mxu0 %v2666
    %2736 = vmatpush.msra.mxu0 %v2662
    %2737 = vmatpush.msra.mxu0 %v2658
    %2738 = vmatmul.f32.gmra.mxu0 %v2652
    %v2739 = vpop.f32.mrf.mxu0
    %v2740 = vadd.f32 0.0, %v2739
    %2741 = vdwg.mxu0
    %2742 = vmatpush.msra.mxu0 %v2719
    %2743 = vmatpush.msra.mxu0 %v2715
    %2744 = vmatpush.msra.mxu0 %v2711
    %2745 = vmatpush.msra.mxu0 %v2707
    %2746 = vmatpush.msra.mxu0 %v2703
    %2747 = vmatpush.msra.mxu0 %v2699
    %2748 = vmatpush.msra.mxu0 %v2695
    %2749 = vmatpush.msra.mxu0 %v2691
    %2750 = vmatpush.msra.mxu0 %v2687
    %2751 = vmatpush.msra.mxu0 %v2683
    %2752 = vmatpush.msra.mxu0 %v2679
    %2753 = vmatpush.msra.mxu0 %v2675
    %2754 = vmatpush.msra.mxu0 %v2671
    %2755 = vmatpush.msra.mxu0 %v2667
    %2756 = vmatpush.msra.mxu0 %v2663
    %2757 = vmatpush.msra.mxu0 %v2659
    %2758 = vmatmul.f32.gmra.mxu0 %v2652
    %v2759 = vpop.f32.mrf.mxu0
    %v2760 = vadd.f32 0.0, %v2759
    %2761 = vdwg.mxu0
    %2762 = vmatpush.msra.mxu0 %v2720
    %2763 = vmatpush.msra.mxu0 %v2716
    %2764 = vmatpush.msra.mxu0 %v2712
    %2765 = vmatpush.msra.mxu0 %v2708
    %2766 = vmatpush.msra.mxu0 %v2704
    %2767 = vmatpush.msra.mxu0 %v2700
    %2768 = vmatpush.msra.mxu0 %v2696
    %2769 = vmatpush.msra.mxu0 %v2692
    %2770 = vmatpush.msra.mxu0 %v2688
    %2771 = vmatpush.msra.mxu0 %v2684
    %2772 = vmatpush.msra.mxu0 %v2680
    %2773 = vmatpush.msra.mxu0 %v2676
    %2774 = vmatpush.msra.mxu0 %v2672
    %2775 = vmatpush.msra.mxu0 %v2668
    %2776 = vmatpush.msra.mxu0 %v2664
    %2777 = vmatpush.msra.mxu0 %v2660
    %2778 = vmatmul.f32.gmra.mxu0 %v2652
    %v2779 = vpop.f32.mrf.mxu0
    %v2780 = vadd.f32 0.0, %v2779
    %2781 = vdwg.mxu0
    %2782 = vmatpush.msra.mxu0 %v2721
    %2783 = vmatpush.msra.mxu0 %v2717
    %2784 = vmatpush.msra.mxu0 %v2713
    %2785 = vmatpush.msra.mxu0 %v2709
    %2786 = vmatpush.msra.mxu0 %v2705
    %2787 = vmatpush.msra.mxu0 %v2701
    %2788 = vmatpush.msra.mxu0 %v2697
    %2789 = vmatpush.msra.mxu0 %v2693
    %2790 = vmatpush.msra.mxu0 %v2689
    %2791 = vmatpush.msra.mxu0 %v2685
    %2792 = vmatpush.msra.mxu0 %v2681
    %2793 = vmatpush.msra.mxu0 %v2677
    %2794 = vmatpush.msra.mxu0 %v2673
    %2795 = vmatpush.msra.mxu0 %v2669
    %2796 = vmatpush.msra.mxu0 %v2665
    %2797 = vmatpush.msra.mxu0 %v2661
    %2798 = vmatmul.f32.gmra.mxu0 %v2652
    %v2799 = vpop.f32.mrf.mxu0
    %v2800 = vadd.f32 0.0, %v2799
    %2801 = vdwg.mxu0
    %v2802 = vadd.f32 %v2654, %v2740
    %v2803 = vadd.f32 %v2655, %v2760
    %v2804 = vadd.f32 %v2656, %v2780
    %v2805 = vadd.f32 %v2657, %v2800
    %v2806 = vxor.u32 %v2802, 2147483648
    %v2807 = vxor.u32 %v2803, 2147483648
    %v2808 = vxor.u32 %v2804, 2147483648
    %v2809 = vmul.f32 %v2806, 1.442695
    %v2810 = vpow.pop %v2809
    %v2811 = vmul.f32 %v2807, 1.442695
    %v2812 = vpow.pop %v2811
    %v2813 = vmul.f32 %v2808, 1.442695
    %v2814 = vpow.pop %v2813
    %v2815 = vadd.f32 %v2810, 1.0
    %v2816 = vadd.f32 %v2812, 1.0
    %v2817 = vadd.f32 %v2814, 1.0
    %v2818 = vrcp.pop %v2815
    %v2819 = vmul.f32 %v2815, %v2818
    %v2820 = vsub.f32 1.0, %v2819
    %v2821 = vmul.f32 %v2818, %v2820
    %v2822 = vadd.f32 %v2818, %v2821
    %vm2823 = vweird.f32 %v2815
    %vm2824 = vweird.f32 %v2818
    %vm2825 = vmor %vm2823, %vm2824
    %v2826 = vsel %vm2825, %v2818, %v2822
    %v2827 = vand.u32 2147483647, %v2815
    %vm2828 = vcmp.eq.f32.partialorder %v2827, 8.507059e+37
    %v2829 = vand.u32 %v2815, 2147483648
    %v2830 = vor.u32 1.1754944e-38, %v2829
    %v2831 = vsel %vm2828, %v2830, %v2826
    %v2832 = vmul.f32 1.0, %v2831
    %v2833 = vrcp.pop %v2816
    %v2834 = vmul.f32 %v2816, %v2833
    %v2835 = vsub.f32 1.0, %v2834
    %v2836 = vmul.f32 %v2833, %v2835
    %v2837 = vadd.f32 %v2833, %v2836
    %vm2838 = vweird.f32 %v2816
    %vm2839 = vweird.f32 %v2833
    %vm2840 = vmor %vm2838, %vm2839
    %v2841 = vsel %vm2840, %v2833, %v2837
    %v2842 = vand.u32 2147483647, %v2816
    %vm2843 = vcmp.eq.f32.partialorder %v2842, 8.507059e+37
    %v2844 = vand.u32 %v2816, 2147483648
    %v2845 = vor.u32 1.1754944e-38, %v2844
    %v2846 = vsel %vm2843, %v2845, %v2841
    %v2847 = vmul.f32 1.0, %v2846
    %v2848 = vrcp.pop %v2817
    %v2849 = vmul.f32 %v2817, %v2848
    %v2850 = vsub.f32 1.0, %v2849
    %v2851 = vmul.f32 %v2848, %v2850
    %v2852 = vadd.f32 %v2848, %v2851
    %vm2853 = vweird.f32 %v2817
    %vm2854 = vweird.f32 %v2848
    %vm2855 = vmor %vm2853, %vm2854
    %v2856 = vsel %vm2855, %v2848, %v2852
    %v2857 = vand.u32 2147483647, %v2817
    %vm2858 = vcmp.eq.f32.partialorder %v2857, 8.507059e+37
    %v2859 = vand.u32 %v2817, 2147483648
    %v2860 = vor.u32 1.1754944e-38, %v2859
    %v2861 = vsel %vm2858, %v2860, %v2856
    %v2862 = vmul.f32 1.0, %v2861
    %v2863 = vtanh.pop %v2805
    %v2864 = vmul.f32 %v2847, %v2650
    %v2865 = vmul.f32 %v2832, %v2863
    %v2866 = vadd.f32 %v2864, %v2865
    %v2867 = vtanh.pop %v2866
    %v2868 = vmul.f32 %v2862, %v2867
    %2869 = vst [vmem:[%s836] sm:$0xff] %v2868
    %v2870 = vld [vmem:[%s840] sm:$0xff]
    %v2871 = vld [vmem:[%s840 + $0x8] sm:$0xff]
    %v2872 = vld [vmem:[%s840 + $0x10] sm:$0xff]
    %v2873 = vld [vmem:[%s840 + $0x18] sm:$0xff]
    %v2874 = vld [vmem:[%s2441] sm:$0xff]
    %v2875 = vld [vmem:[%s2441 + $0x8] sm:$0xff]
    %v2876 = vld [vmem:[%s2441 + $0x10] sm:$0xff]
    %v2877 = vld [vmem:[%s2441 + $0x18] sm:$0xff]
    %v2878 = vld [vmem:[%s2441 + $0x20] sm:$0xff]
    %v2879 = vld [vmem:[%s2441 + $0x28] sm:$0xff]
    %v2880 = vld [vmem:[%s2441 + $0x30] sm:$0xff]
    %v2881 = vld [vmem:[%s2441 + $0x38] sm:$0xff]
    %v2882 = vld [vmem:[%s2441 + $0x40] sm:$0xff]
    %v2883 = vld [vmem:[%s2441 + $0x48] sm:$0xff]
    %v2884 = vld [vmem:[%s2441 + $0x50] sm:$0xff]
    %v2885 = vld [vmem:[%s2441 + $0x58] sm:$0xff]
    %v2886 = vld [vmem:[%s2441 + $0x60] sm:$0xff]
    %v2887 = vld [vmem:[%s2441 + $0x68] sm:$0xff]
    %v2888 = vld [vmem:[%s2441 + $0x70] sm:$0xff]
    %v2889 = vld [vmem:[%s2441 + $0x78] sm:$0xff]
    %v2890 = vld [vmem:[%s2441 + $0x80] sm:$0xff]
    %v2891 = vld [vmem:[%s2441 + $0x88] sm:$0xff]
    %v2892 = vld [vmem:[%s2441 + $0x90] sm:$0xff]
    %v2893 = vld [vmem:[%s2441 + $0x98] sm:$0xff]
    %v2894 = vld [vmem:[%s2441 + $0xa0] sm:$0xff]
    %v2895 = vld [vmem:[%s2441 + $0xa8] sm:$0xff]
    %v2896 = vld [vmem:[%s2441 + $0xb0] sm:$0xff]
    %v2897 = vld [vmem:[%s2441 + $0xb8] sm:$0xff]
    %v2898 = vld [vmem:[%s2441 + $0xc0] sm:$0xff]
    %v2899 = vld [vmem:[%s2441 + $0xc8] sm:$0xff]
    %v2900 = vld [vmem:[%s2441 + $0xd0] sm:$0xff]
    %v2901 = vld [vmem:[%s2441 + $0xd8] sm:$0xff]
    %v2902 = vld [vmem:[%s2441 + $0xe0] sm:$0xff]
    %v2903 = vld [vmem:[%s2441 + $0xe8] sm:$0xff]
    %v2904 = vld [vmem:[%s2441 + $0xf0] sm:$0xff]
    %v2905 = vld [vmem:[%s2441 + $0xf8] sm:$0xff]
    %v2906 = vld [vmem:[%s2441 + $0x100] sm:$0xff]
    %v2907 = vld [vmem:[%s2441 + $0x108] sm:$0xff]
    %v2908 = vld [vmem:[%s2441 + $0x110] sm:$0xff]
    %v2909 = vld [vmem:[%s2441 + $0x118] sm:$0xff]
    %v2910 = vld [vmem:[%s2441 + $0x120] sm:$0xff]
    %v2911 = vld [vmem:[%s2441 + $0x128] sm:$0xff]
    %v2912 = vld [vmem:[%s2441 + $0x130] sm:$0xff]
    %v2913 = vld [vmem:[%s2441 + $0x138] sm:$0xff]
    %v2914 = vld [vmem:[%s2441 + $0x140] sm:$0xff]
    %v2915 = vld [vmem:[%s2441 + $0x148] sm:$0xff]
    %v2916 = vld [vmem:[%s2441 + $0x150] sm:$0xff]
    %v2917 = vld [vmem:[%s2441 + $0x158] sm:$0xff]
    %v2918 = vld [vmem:[%s2441 + $0x160] sm:$0xff]
    %v2919 = vld [vmem:[%s2441 + $0x168] sm:$0xff]
    %v2920 = vld [vmem:[%s2441 + $0x170] sm:$0xff]
    %v2921 = vld [vmem:[%s2441 + $0x178] sm:$0xff]
    %v2922 = vld [vmem:[%s2441 + $0x180] sm:$0xff]
    %v2923 = vld [vmem:[%s2441 + $0x188] sm:$0xff]
    %v2924 = vld [vmem:[%s2441 + $0x190] sm:$0xff]
    %v2925 = vld [vmem:[%s2441 + $0x198] sm:$0xff]
    %v2926 = vld [vmem:[%s2441 + $0x1a0] sm:$0xff]
    %v2927 = vld [vmem:[%s2441 + $0x1a8] sm:$0xff]
    %v2928 = vld [vmem:[%s2441 + $0x1b0] sm:$0xff]
    %v2929 = vld [vmem:[%s2441 + $0x1b8] sm:$0xff]
    %v2930 = vld [vmem:[%s2441 + $0x1c0] sm:$0xff]
    %v2931 = vld [vmem:[%s2441 + $0x1c8] sm:$0xff]
    %v2932 = vld [vmem:[%s2441 + $0x1d0] sm:$0xff]
    %v2933 = vld [vmem:[%s2441 + $0x1d8] sm:$0xff]
    %v2934 = vld [vmem:[%s2441 + $0x1e0] sm:$0xff]
    %v2935 = vld [vmem:[%s2441 + $0x1e8] sm:$0xff]
    %v2936 = vld [vmem:[%s2441 + $0x1f0] sm:$0xff]
    %v2937 = vld [vmem:[%s2441 + $0x1f8] sm:$0xff]
    %2938 = vmatpush.msra.mxu0 %v2934
    %2939 = vmatpush.msra.mxu0 %v2930
    %2940 = vmatpush.msra.mxu0 %v2926
    %2941 = vmatpush.msra.mxu0 %v2922
    %2942 = vmatpush.msra.mxu0 %v2918
    %2943 = vmatpush.msra.mxu0 %v2914
    %2944 = vmatpush.msra.mxu0 %v2910
    %2945 = vmatpush.msra.mxu0 %v2906
    %2946 = vmatpush.msra.mxu0 %v2902
    %2947 = vmatpush.msra.mxu0 %v2898
    %2948 = vmatpush.msra.mxu0 %v2894
    %2949 = vmatpush.msra.mxu0 %v2890
    %2950 = vmatpush.msra.mxu0 %v2886
    %2951 = vmatpush.msra.mxu0 %v2882
    %2952 = vmatpush.msra.mxu0 %v2878
    %2953 = vmatpush.msra.mxu0 %v2874
    %2954 = vmatmul.f32.gmra.mxu0 %v2868
    %v2955 = vpop.f32.mrf.mxu0
    %v2956 = vadd.f32 0.0, %v2955
    %2957 = vdwg.mxu0
    %2958 = vmatpush.msra.mxu0 %v2935
    %2959 = vmatpush.msra.mxu0 %v2931
    %2960 = vmatpush.msra.mxu0 %v2927
    %2961 = vmatpush.msra.mxu0 %v2923
    %2962 = vmatpush.msra.mxu0 %v2919
    %2963 = vmatpush.msra.mxu0 %v2915
    %2964 = vmatpush.msra.mxu0 %v2911
    %2965 = vmatpush.msra.mxu0 %v2907
    %2966 = vmatpush.msra.mxu0 %v2903
    %2967 = vmatpush.msra.mxu0 %v2899
    %2968 = vmatpush.msra.mxu0 %v2895
    %2969 = vmatpush.msra.mxu0 %v2891
    %2970 = vmatpush.msra.mxu0 %v2887
    %2971 = vmatpush.msra.mxu0 %v2883
    %2972 = vmatpush.msra.mxu0 %v2879
    %2973 = vmatpush.msra.mxu0 %v2875
    %2974 = vmatmul.f32.gmra.mxu0 %v2868
    %v2975 = vpop.f32.mrf.mxu0
    %v2976 = vadd.f32 0.0, %v2975
    %2977 = vdwg.mxu0
    %2978 = vmatpush.msra.mxu0 %v2936
    %2979 = vmatpush.msra.mxu0 %v2932
    %2980 = vmatpush.msra.mxu0 %v2928
    %2981 = vmatpush.msra.mxu0 %v2924
    %2982 = vmatpush.msra.mxu0 %v2920
    %2983 = vmatpush.msra.mxu0 %v2916
    %2984 = vmatpush.msra.mxu0 %v2912
    %2985 = vmatpush.msra.mxu0 %v2908
    %2986 = vmatpush.msra.mxu0 %v2904
    %2987 = vmatpush.msra.mxu0 %v2900
    %2988 = vmatpush.msra.mxu0 %v2896
    %2989 = vmatpush.msra.mxu0 %v2892
    %2990 = vmatpush.msra.mxu0 %v2888
    %2991 = vmatpush.msra.mxu0 %v2884
    %2992 = vmatpush.msra.mxu0 %v2880
    %2993 = vmatpush.msra.mxu0 %v2876
    %2994 = vmatmul.f32.gmra.mxu0 %v2868
    %v2995 = vpop.f32.mrf.mxu0
    %v2996 = vadd.f32 0.0, %v2995
    %2997 = vdwg.mxu0
    %2998 = vmatpush.msra.mxu0 %v2937
    %2999 = vmatpush.msra.mxu0 %v2933
    %3000 = vmatpush.msra.mxu0 %v2929
    %3001 = vmatpush.msra.mxu0 %v2925
    %3002 = vmatpush.msra.mxu0 %v2921
    %3003 = vmatpush.msra.mxu0 %v2917
    %3004 = vmatpush.msra.mxu0 %v2913
    %3005 = vmatpush.msra.mxu0 %v2909
    %3006 = vmatpush.msra.mxu0 %v2905
    %3007 = vmatpush.msra.mxu0 %v2901
    %3008 = vmatpush.msra.mxu0 %v2897
    %3009 = vmatpush.msra.mxu0 %v2893
    %3010 = vmatpush.msra.mxu0 %v2889
    %3011 = vmatpush.msra.mxu0 %v2885
    %3012 = vmatpush.msra.mxu0 %v2881
    %3013 = vmatpush.msra.mxu0 %v2877
    %3014 = vmatmul.f32.gmra.mxu0 %v2868
    %v3015 = vpop.f32.mrf.mxu0
    %v3016 = vadd.f32 0.0, %v3015
    %3017 = vdwg.mxu0
    %v3018 = vadd.f32 %v2870, %v2956
    %v3019 = vadd.f32 %v2871, %v2976
    %v3020 = vadd.f32 %v2872, %v2996
    %v3021 = vadd.f32 %v2873, %v3016
    %v3022 = vxor.u32 %v3018, 2147483648
    %v3023 = vxor.u32 %v3019, 2147483648
    %v3024 = vxor.u32 %v3020, 2147483648
    %v3025 = vmul.f32 %v3022, 1.442695
    %v3026 = vpow.pop %v3025
    %v3027 = vmul.f32 %v3023, 1.442695
    %v3028 = vpow.pop %v3027
    %v3029 = vmul.f32 %v3024, 1.442695
    %v3030 = vpow.pop %v3029
    %v3031 = vadd.f32 %v3026, 1.0
    %v3032 = vadd.f32 %v3028, 1.0
    %v3033 = vadd.f32 %v3030, 1.0
    %v3034 = vrcp.pop %v3031
    %v3035 = vmul.f32 %v3031, %v3034
    %v3036 = vsub.f32 1.0, %v3035
    %v3037 = vmul.f32 %v3034, %v3036
    %v3038 = vadd.f32 %v3034, %v3037
    %vm3039 = vweird.f32 %v3031
    %vm3040 = vweird.f32 %v3034
    %vm3041 = vmor %vm3039, %vm3040
    %v3042 = vsel %vm3041, %v3034, %v3038
    %v3043 = vand.u32 2147483647, %v3031
    %vm3044 = vcmp.eq.f32.partialorder %v3043, 8.507059e+37
    %v3045 = vand.u32 %v3031, 2147483648
    %v3046 = vor.u32 1.1754944e-38, %v3045
    %v3047 = vsel %vm3044, %v3046, %v3042
    %v3048 = vmul.f32 1.0, %v3047
    %v3049 = vrcp.pop %v3032
    %v3050 = vmul.f32 %v3032, %v3049
    %v3051 = vsub.f32 1.0, %v3050
    %v3052 = vmul.f32 %v3049, %v3051
    %v3053 = vadd.f32 %v3049, %v3052
    %vm3054 = vweird.f32 %v3032
    %vm3055 = vweird.f32 %v3049
    %vm3056 = vmor %vm3054, %vm3055
    %v3057 = vsel %vm3056, %v3049, %v3053
    %v3058 = vand.u32 2147483647, %v3032
    %vm3059 = vcmp.eq.f32.partialorder %v3058, 8.507059e+37
    %v3060 = vand.u32 %v3032, 2147483648
    %v3061 = vor.u32 1.1754944e-38, %v3060
    %v3062 = vsel %vm3059, %v3061, %v3057
    %v3063 = vmul.f32 1.0, %v3062
    %v3064 = vrcp.pop %v3033
    %v3065 = vmul.f32 %v3033, %v3064
    %v3066 = vsub.f32 1.0, %v3065
    %v3067 = vmul.f32 %v3064, %v3066
    %v3068 = vadd.f32 %v3064, %v3067
    %vm3069 = vweird.f32 %v3033
    %vm3070 = vweird.f32 %v3064
    %vm3071 = vmor %vm3069, %vm3070
    %v3072 = vsel %vm3071, %v3064, %v3068
    %v3073 = vand.u32 2147483647, %v3033
    %vm3074 = vcmp.eq.f32.partialorder %v3073, 8.507059e+37
    %v3075 = vand.u32 %v3033, 2147483648
    %v3076 = vor.u32 1.1754944e-38, %v3075
    %v3077 = vsel %vm3074, %v3076, %v3072
    %v3078 = vmul.f32 1.0, %v3077
    %v3079 = vtanh.pop %v3021
    %v3080 = vmul.f32 %v3063, %v2866
    %v3081 = vmul.f32 %v3048, %v3079
    %v3082 = vadd.f32 %v3080, %v3081
    %v3083 = vtanh.pop %v3082
    %v3084 = vmul.f32 %v3078, %v3083
    %3085 = vst [vmem:[%s1056] sm:$0xff] %v3084
    %v3086 = vld [vmem:[%s1060] sm:$0xff]
    %v3087 = vld [vmem:[%s1060 + $0x8] sm:$0xff]
    %v3088 = vld [vmem:[%s1060 + $0x10] sm:$0xff]
    %v3089 = vld [vmem:[%s1060 + $0x18] sm:$0xff]
    %v3090 = vld [vmem:[%s2441] sm:$0xff]
    %v3091 = vld [vmem:[%s2441 + $0x8] sm:$0xff]
    %v3092 = vld [vmem:[%s2441 + $0x10] sm:$0xff]
    %v3093 = vld [vmem:[%s2441 + $0x18] sm:$0xff]
    %v3094 = vld [vmem:[%s2441 + $0x20] sm:$0xff]
    %v3095 = vld [vmem:[%s2441 + $0x28] sm:$0xff]
    %v3096 = vld [vmem:[%s2441 + $0x30] sm:$0xff]
    %v3097 = vld [vmem:[%s2441 + $0x38] sm:$0xff]
    %v3098 = vld [vmem:[%s2441 + $0x40] sm:$0xff]
    %v3099 = vld [vmem:[%s2441 + $0x48] sm:$0xff]
    %v3100 = vld [vmem:[%s2441 + $0x50] sm:$0xff]
    %v3101 = vld [vmem:[%s2441 + $0x58] sm:$0xff]
    %v3102 = vld [vmem:[%s2441 + $0x60] sm:$0xff]
    %v3103 = vld [vmem:[%s2441 + $0x68] sm:$0xff]
    %v3104 = vld [vmem:[%s2441 + $0x70] sm:$0xff]
    %v3105 = vld [vmem:[%s2441 + $0x78] sm:$0xff]
    %v3106 = vld [vmem:[%s2441 + $0x80] sm:$0xff]
    %v3107 = vld [vmem:[%s2441 + $0x88] sm:$0xff]
    %v3108 = vld [vmem:[%s2441 + $0x90] sm:$0xff]
    %v3109 = vld [vmem:[%s2441 + $0x98] sm:$0xff]
    %v3110 = vld [vmem:[%s2441 + $0xa0] sm:$0xff]
    %v3111 = vld [vmem:[%s2441 + $0xa8] sm:$0xff]
    %v3112 = vld [vmem:[%s2441 + $0xb0] sm:$0xff]
    %v3113 = vld [vmem:[%s2441 + $0xb8] sm:$0xff]
    %v3114 = vld [vmem:[%s2441 + $0xc0] sm:$0xff]
    %v3115 = vld [vmem:[%s2441 + $0xc8] sm:$0xff]
    %v3116 = vld [vmem:[%s2441 + $0xd0] sm:$0xff]
    %v3117 = vld [vmem:[%s2441 + $0xd8] sm:$0xff]
    %v3118 = vld [vmem:[%s2441 + $0xe0] sm:$0xff]
    %v3119 = vld [vmem:[%s2441 + $0xe8] sm:$0xff]
    %v3120 = vld [vmem:[%s2441 + $0xf0] sm:$0xff]
    %v3121 = vld [vmem:[%s2441 + $0xf8] sm:$0xff]
    %v3122 = vld [vmem:[%s2441 + $0x100] sm:$0xff]
    %v3123 = vld [vmem:[%s2441 + $0x108] sm:$0xff]
    %v3124 = vld [vmem:[%s2441 + $0x110] sm:$0xff]
    %v3125 = vld [vmem:[%s2441 + $0x118] sm:$0xff]
    %v3126 = vld [vmem:[%s2441 + $0x120] sm:$0xff]
    %v3127 = vld [vmem:[%s2441 + $0x128] sm:$0xff]
    %v3128 = vld [vmem:[%s2441 + $0x130] sm:$0xff]
    %v3129 = vld [vmem:[%s2441 + $0x138] sm:$0xff]
    %v3130 = vld [vmem:[%s2441 + $0x140] sm:$0xff]
    %v3131 = vld [vmem:[%s2441 + $0x148] sm:$0xff]
    %v3132 = vld [vmem:[%s2441 + $0x150] sm:$0xff]
    %v3133 = vld [vmem:[%s2441 + $0x158] sm:$0xff]
    %v3134 = vld [vmem:[%s2441 + $0x160] sm:$0xff]
    %v3135 = vld [vmem:[%s2441 + $0x168] sm:$0xff]
    %v3136 = vld [vmem:[%s2441 + $0x170] sm:$0xff]
    %v3137 = vld [vmem:[%s2441 + $0x178] sm:$0xff]
    %v3138 = vld [vmem:[%s2441 + $0x180] sm:$0xff]
    %v3139 = vld [vmem:[%s2441 + $0x188] sm:$0xff]
    %v3140 = vld [vmem:[%s2441 + $0x190] sm:$0xff]
    %v3141 = vld [vmem:[%s2441 + $0x198] sm:$0xff]
    %v3142 = vld [vmem:[%s2441 + $0x1a0] sm:$0xff]
    %v3143 = vld [vmem:[%s2441 + $0x1a8] sm:$0xff]
    %v3144 = vld [vmem:[%s2441 + $0x1b0] sm:$0xff]
    %v3145 = vld [vmem:[%s2441 + $0x1b8] sm:$0xff]
    %v3146 = vld [vmem:[%s2441 + $0x1c0] sm:$0xff]
    %v3147 = vld [vmem:[%s2441 + $0x1c8] sm:$0xff]
    %v3148 = vld [vmem:[%s2441 + $0x1d0] sm:$0xff]
    %v3149 = vld [vmem:[%s2441 + $0x1d8] sm:$0xff]
    %v3150 = vld [vmem:[%s2441 + $0x1e0] sm:$0xff]
    %v3151 = vld [vmem:[%s2441 + $0x1e8] sm:$0xff]
    %v3152 = vld [vmem:[%s2441 + $0x1f0] sm:$0xff]
    %v3153 = vld [vmem:[%s2441 + $0x1f8] sm:$0xff]
    %3154 = vmatpush.msra.mxu0 %v3150
    %3155 = vmatpush.msra.mxu0 %v3146
    %3156 = vmatpush.msra.mxu0 %v3142
    %3157 = vmatpush.msra.mxu0 %v3138
    %3158 = vmatpush.msra.mxu0 %v3134
    %3159 = vmatpush.msra.mxu0 %v3130
    %3160 = vmatpush.msra.mxu0 %v3126
    %3161 = vmatpush.msra.mxu0 %v3122
    %3162 = vmatpush.msra.mxu0 %v3118
    %3163 = vmatpush.msra.mxu0 %v3114
    %3164 = vmatpush.msra.mxu0 %v3110
    %3165 = vmatpush.msra.mxu0 %v3106
    %3166 = vmatpush.msra.mxu0 %v3102
    %3167 = vmatpush.msra.mxu0 %v3098
    %3168 = vmatpush.msra.mxu0 %v3094
    %3169 = vmatpush.msra.mxu0 %v3090
    %3170 = vmatmul.f32.gmra.mxu0 %v3084
    %v3171 = vpop.f32.mrf.mxu0
    %v3172 = vadd.f32 0.0, %v3171
    %3173 = vdwg.mxu0
    %3174 = vmatpush.msra.mxu0 %v3151
    %3175 = vmatpush.msra.mxu0 %v3147
    %3176 = vmatpush.msra.mxu0 %v3143
    %3177 = vmatpush.msra.mxu0 %v3139
    %3178 = vmatpush.msra.mxu0 %v3135
    %3179 = vmatpush.msra.mxu0 %v3131
    %3180 = vmatpush.msra.mxu0 %v3127
    %3181 = vmatpush.msra.mxu0 %v3123
    %3182 = vmatpush.msra.mxu0 %v3119
    %3183 = vmatpush.msra.mxu0 %v3115
    %3184 = vmatpush.msra.mxu0 %v3111
    %3185 = vmatpush.msra.mxu0 %v3107
    %3186 = vmatpush.msra.mxu0 %v3103
    %3187 = vmatpush.msra.mxu0 %v3099
    %3188 = vmatpush.msra.mxu0 %v3095
    %3189 = vmatpush.msra.mxu0 %v3091
    %3190 = vmatmul.f32.gmra.mxu0 %v3084
    %v3191 = vpop.f32.mrf.mxu0
    %v3192 = vadd.f32 0.0, %v3191
    %3193 = vdwg.mxu0
    %3194 = vmatpush.msra.mxu0 %v3152
    %3195 = vmatpush.msra.mxu0 %v3148
    %3196 = vmatpush.msra.mxu0 %v3144
    %3197 = vmatpush.msra.mxu0 %v3140
    %3198 = vmatpush.msra.mxu0 %v3136
    %3199 = vmatpush.msra.mxu0 %v3132
    %3200 = vmatpush.msra.mxu0 %v3128
    %3201 = vmatpush.msra.mxu0 %v3124
    %3202 = vmatpush.msra.mxu0 %v3120
    %3203 = vmatpush.msra.mxu0 %v3116
    %3204 = vmatpush.msra.mxu0 %v3112
    %3205 = vmatpush.msra.mxu0 %v3108
    %3206 = vmatpush.msra.mxu0 %v3104
    %3207 = vmatpush.msra.mxu0 %v3100
    %3208 = vmatpush.msra.mxu0 %v3096
    %3209 = vmatpush.msra.mxu0 %v3092
    %3210 = vmatmul.f32.gmra.mxu0 %v3084
    %v3211 = vpop.f32.mrf.mxu0
    %v3212 = vadd.f32 0.0, %v3211
    %3213 = vdwg.mxu0
    %3214 = vmatpush.msra.mxu0 %v3153
    %3215 = vmatpush.msra.mxu0 %v3149
    %3216 = vmatpush.msra.mxu0 %v3145
    %3217 = vmatpush.msra.mxu0 %v3141
    %3218 = vmatpush.msra.mxu0 %v3137
    %3219 = vmatpush.msra.mxu0 %v3133
    %3220 = vmatpush.msra.mxu0 %v3129
    %3221 = vmatpush.msra.mxu0 %v3125
    %3222 = vmatpush.msra.mxu0 %v3121
    %3223 = vmatpush.msra.mxu0 %v3117
    %3224 = vmatpush.msra.mxu0 %v3113
    %3225 = vmatpush.msra.mxu0 %v3109
    %3226 = vmatpush.msra.mxu0 %v3105
    %3227 = vmatpush.msra.mxu0 %v3101
    %3228 = vmatpush.msra.mxu0 %v3097
    %3229 = vmatpush.msra.mxu0 %v3093
    %3230 = vmatmul.f32.gmra.mxu0 %v3084
    %v3231 = vpop.f32.mrf.mxu0
    %v3232 = vadd.f32 0.0, %v3231
    %3233 = vdwg.mxu0
    %v3234 = vadd.f32 %v3086, %v3172
    %v3235 = vadd.f32 %v3087, %v3192
    %v3236 = vadd.f32 %v3088, %v3212
    %v3237 = vadd.f32 %v3089, %v3232
    %v3238 = vxor.u32 %v3234, 2147483648
    %v3239 = vxor.u32 %v3235, 2147483648
    %v3240 = vxor.u32 %v3236, 2147483648
    %v3241 = vmul.f32 %v3238, 1.442695
    %v3242 = vpow.pop %v3241
    %v3243 = vmul.f32 %v3239, 1.442695
    %v3244 = vpow.pop %v3243
    %v3245 = vmul.f32 %v3240, 1.442695
    %v3246 = vpow.pop %v3245
    %v3247 = vadd.f32 %v3242, 1.0
    %v3248 = vadd.f32 %v3244, 1.0
    %v3249 = vadd.f32 %v3246, 1.0
    %v3250 = vrcp.pop %v3247
    %v3251 = vmul.f32 %v3247, %v3250
    %v3252 = vsub.f32 1.0, %v3251
    %v3253 = vmul.f32 %v3250, %v3252
    %v3254 = vadd.f32 %v3250, %v3253
    %vm3255 = vweird.f32 %v3247
    %vm3256 = vweird.f32 %v3250
    %vm3257 = vmor %vm3255, %vm3256
    %v3258 = vsel %vm3257, %v3250, %v3254
    %v3259 = vand.u32 2147483647, %v3247
    %vm3260 = vcmp.eq.f32.partialorder %v3259, 8.507059e+37
    %v3261 = vand.u32 %v3247, 2147483648
    %v3262 = vor.u32 1.1754944e-38, %v3261
    %v3263 = vsel %vm3260, %v3262, %v3258
    %v3264 = vmul.f32 1.0, %v3263
    %v3265 = vrcp.pop %v3248
    %v3266 = vmul.f32 %v3248, %v3265
    %v3267 = vsub.f32 1.0, %v3266
    %v3268 = vmul.f32 %v3265, %v3267
    %v3269 = vadd.f32 %v3265, %v3268
    %vm3270 = vweird.f32 %v3248
    %vm3271 = vweird.f32 %v3265
    %vm3272 = vmor %vm3270, %vm3271
    %v3273 = vsel %vm3272, %v3265, %v3269
    %v3274 = vand.u32 2147483647, %v3248
    %vm3275 = vcmp.eq.f32.partialorder %v3274, 8.507059e+37
    %v3276 = vand.u32 %v3248, 2147483648
    %v3277 = vor.u32 1.1754944e-38, %v3276
    %v3278 = vsel %vm3275, %v3277, %v3273
    %v3279 = vmul.f32 1.0, %v3278
    %v3280 = vrcp.pop %v3249
    %v3281 = vmul.f32 %v3249, %v3280
    %v3282 = vsub.f32 1.0, %v3281
    %v3283 = vmul.f32 %v3280, %v3282
    %v3284 = vadd.f32 %v3280, %v3283
    %vm3285 = vweird.f32 %v3249
    %vm3286 = vweird.f32 %v3280
    %vm3287 = vmor %vm3285, %vm3286
    %v3288 = vsel %vm3287, %v3280, %v3284
    %v3289 = vand.u32 2147483647, %v3249
    %vm3290 = vcmp.eq.f32.partialorder %v3289, 8.507059e+37
    %v3291 = vand.u32 %v3249, 2147483648
    %v3292 = vor.u32 1.1754944e-38, %v3291
    %v3293 = vsel %vm3290, %v3292, %v3288
    %v3294 = vmul.f32 1.0, %v3293
    %v3295 = vtanh.pop %v3237
    %v3296 = vmul.f32 %v3279, %v3082
    %v3297 = vmul.f32 %v3264, %v3295
    %v3298 = vadd.f32 %v3296, %v3297
    %v3299 = vtanh.pop %v3298
    %v3300 = vmul.f32 %v3294, %v3299
    %3301 = vst [vmem:[%s1276] sm:$0xff] %v3300
    %v3302 = vld [vmem:[%s1280] sm:$0xff]
    %v3303 = vld [vmem:[%s1280 + $0x8] sm:$0xff]
    %v3304 = vld [vmem:[%s1280 + $0x10] sm:$0xff]
    %v3305 = vld [vmem:[%s1280 + $0x18] sm:$0xff]
    %v3306 = vld [vmem:[%s2441] sm:$0xff]
    %v3307 = vld [vmem:[%s2441 + $0x8] sm:$0xff]
    %v3308 = vld [vmem:[%s2441 + $0x10] sm:$0xff]
    %v3309 = vld [vmem:[%s2441 + $0x18] sm:$0xff]
    %v3310 = vld [vmem:[%s2441 + $0x20] sm:$0xff]
    %v3311 = vld [vmem:[%s2441 + $0x28] sm:$0xff]
    %v3312 = vld [vmem:[%s2441 + $0x30] sm:$0xff]
    %v3313 = vld [vmem:[%s2441 + $0x38] sm:$0xff]
    %v3314 = vld [vmem:[%s2441 + $0x40] sm:$0xff]
    %v3315 = vld [vmem:[%s2441 + $0x48] sm:$0xff]
    %v3316 = vld [vmem:[%s2441 + $0x50] sm:$0xff]
    %v3317 = vld [vmem:[%s2441 + $0x58] sm:$0xff]
    %v3318 = vld [vmem:[%s2441 + $0x60] sm:$0xff]
    %v3319 = vld [vmem:[%s2441 + $0x68] sm:$0xff]
    %v3320 = vld [vmem:[%s2441 + $0x70] sm:$0xff]
    %v3321 = vld [vmem:[%s2441 + $0x78] sm:$0xff]
    %v3322 = vld [vmem:[%s2441 + $0x80] sm:$0xff]
    %v3323 = vld [vmem:[%s2441 + $0x88] sm:$0xff]
    %v3324 = vld [vmem:[%s2441 + $0x90] sm:$0xff]
    %v3325 = vld [vmem:[%s2441 + $0x98] sm:$0xff]
    %v3326 = vld [vmem:[%s2441 + $0xa0] sm:$0xff]
    %v3327 = vld [vmem:[%s2441 + $0xa8] sm:$0xff]
    %v3328 = vld [vmem:[%s2441 + $0xb0] sm:$0xff]
    %v3329 = vld [vmem:[%s2441 + $0xb8] sm:$0xff]
    %v3330 = vld [vmem:[%s2441 + $0xc0] sm:$0xff]
    %v3331 = vld [vmem:[%s2441 + $0xc8] sm:$0xff]
    %v3332 = vld [vmem:[%s2441 + $0xd0] sm:$0xff]
    %v3333 = vld [vmem:[%s2441 + $0xd8] sm:$0xff]
    %v3334 = vld [vmem:[%s2441 + $0xe0] sm:$0xff]
    %v3335 = vld [vmem:[%s2441 + $0xe8] sm:$0xff]
    %v3336 = vld [vmem:[%s2441 + $0xf0] sm:$0xff]
    %v3337 = vld [vmem:[%s2441 + $0xf8] sm:$0xff]
    %v3338 = vld [vmem:[%s2441 + $0x100] sm:$0xff]
    %v3339 = vld [vmem:[%s2441 + $0x108] sm:$0xff]
    %v3340 = vld [vmem:[%s2441 + $0x110] sm:$0xff]
    %v3341 = vld [vmem:[%s2441 + $0x118] sm:$0xff]
    %v3342 = vld [vmem:[%s2441 + $0x120] sm:$0xff]
    %v3343 = vld [vmem:[%s2441 + $0x128] sm:$0xff]
    %v3344 = vld [vmem:[%s2441 + $0x130] sm:$0xff]
    %v3345 = vld [vmem:[%s2441 + $0x138] sm:$0xff]
    %v3346 = vld [vmem:[%s2441 + $0x140] sm:$0xff]
    %v3347 = vld [vmem:[%s2441 + $0x148] sm:$0xff]
    %v3348 = vld [vmem:[%s2441 + $0x150] sm:$0xff]
    %v3349 = vld [vmem:[%s2441 + $0x158] sm:$0xff]
    %v3350 = vld [vmem:[%s2441 + $0x160] sm:$0xff]
    %v3351 = vld [vmem:[%s2441 + $0x168] sm:$0xff]
    %v3352 = vld [vmem:[%s2441 + $0x170] sm:$0xff]
    %v3353 = vld [vmem:[%s2441 + $0x178] sm:$0xff]
    %v3354 = vld [vmem:[%s2441 + $0x180] sm:$0xff]
    %v3355 = vld [vmem:[%s2441 + $0x188] sm:$0xff]
    %v3356 = vld [vmem:[%s2441 + $0x190] sm:$0xff]
    %v3357 = vld [vmem:[%s2441 + $0x198] sm:$0xff]
    %v3358 = vld [vmem:[%s2441 + $0x1a0] sm:$0xff]
    %v3359 = vld [vmem:[%s2441 + $0x1a8] sm:$0xff]
    %v3360 = vld [vmem:[%s2441 + $0x1b0] sm:$0xff]
    %v3361 = vld [vmem:[%s2441 + $0x1b8] sm:$0xff]
    %v3362 = vld [vmem:[%s2441 + $0x1c0] sm:$0xff]
    %v3363 = vld [vmem:[%s2441 + $0x1c8] sm:$0xff]
    %v3364 = vld [vmem:[%s2441 + $0x1d0] sm:$0xff]
    %v3365 = vld [vmem:[%s2441 + $0x1d8] sm:$0xff]
    %v3366 = vld [vmem:[%s2441 + $0x1e0] sm:$0xff]
    %v3367 = vld [vmem:[%s2441 + $0x1e8] sm:$0xff]
    %v3368 = vld [vmem:[%s2441 + $0x1f0] sm:$0xff]
    %v3369 = vld [vmem:[%s2441 + $0x1f8] sm:$0xff]
    %3370 = vmatpush.msra.mxu0 %v3366
    %3371 = vmatpush.msra.mxu0 %v3362
    %3372 = vmatpush.msra.mxu0 %v3358
    %3373 = vmatpush.msra.mxu0 %v3354
    %3374 = vmatpush.msra.mxu0 %v3350
    %3375 = vmatpush.msra.mxu0 %v3346
    %3376 = vmatpush.msra.mxu0 %v3342
    %3377 = vmatpush.msra.mxu0 %v3338
    %3378 = vmatpush.msra.mxu0 %v3334
    %3379 = vmatpush.msra.mxu0 %v3330
    %3380 = vmatpush.msra.mxu0 %v3326
    %3381 = vmatpush.msra.mxu0 %v3322
    %3382 = vmatpush.msra.mxu0 %v3318
    %3383 = vmatpush.msra.mxu0 %v3314
    %3384 = vmatpush.msra.mxu0 %v3310
    %3385 = vmatpush.msra.mxu0 %v3306
    %3386 = vmatmul.f32.gmra.mxu0 %v3300
    %v3387 = vpop.f32.mrf.mxu0
    %v3388 = vadd.f32 0.0, %v3387
    %3389 = vdwg.mxu0
    %3390 = vmatpush.msra.mxu0 %v3367
    %3391 = vmatpush.msra.mxu0 %v3363
    %3392 = vmatpush.msra.mxu0 %v3359
    %3393 = vmatpush.msra.mxu0 %v3355
    %3394 = vmatpush.msra.mxu0 %v3351
    %3395 = vmatpush.msra.mxu0 %v3347
    %3396 = vmatpush.msra.mxu0 %v3343
    %3397 = vmatpush.msra.mxu0 %v3339
    %3398 = vmatpush.msra.mxu0 %v3335
    %3399 = vmatpush.msra.mxu0 %v3331
    %3400 = vmatpush.msra.mxu0 %v3327
    %3401 = vmatpush.msra.mxu0 %v3323
    %3402 = vmatpush.msra.mxu0 %v3319
    %3403 = vmatpush.msra.mxu0 %v3315
    %3404 = vmatpush.msra.mxu0 %v3311
    %3405 = vmatpush.msra.mxu0 %v3307
    %3406 = vmatmul.f32.gmra.mxu0 %v3300
    %v3407 = vpop.f32.mrf.mxu0
    %v3408 = vadd.f32 0.0, %v3407
    %3409 = vdwg.mxu0
    %3410 = vmatpush.msra.mxu0 %v3368
    %3411 = vmatpush.msra.mxu0 %v3364
    %3412 = vmatpush.msra.mxu0 %v3360
    %3413 = vmatpush.msra.mxu0 %v3356
    %3414 = vmatpush.msra.mxu0 %v3352
    %3415 = vmatpush.msra.mxu0 %v3348
    %3416 = vmatpush.msra.mxu0 %v3344
    %3417 = vmatpush.msra.mxu0 %v3340
    %3418 = vmatpush.msra.mxu0 %v3336
    %3419 = vmatpush.msra.mxu0 %v3332
    %3420 = vmatpush.msra.mxu0 %v3328
    %3421 = vmatpush.msra.mxu0 %v3324
    %3422 = vmatpush.msra.mxu0 %v3320
    %3423 = vmatpush.msra.mxu0 %v3316
    %3424 = vmatpush.msra.mxu0 %v3312
    %3425 = vmatpush.msra.mxu0 %v3308
    %3426 = vmatmul.f32.gmra.mxu0 %v3300
    %v3427 = vpop.f32.mrf.mxu0
    %v3428 = vadd.f32 0.0, %v3427
    %3429 = vdwg.mxu0
    %3430 = vmatpush.msra.mxu0 %v3369
    %3431 = vmatpush.msra.mxu0 %v3365
    %3432 = vmatpush.msra.mxu0 %v3361
    %3433 = vmatpush.msra.mxu0 %v3357
    %3434 = vmatpush.msra.mxu0 %v3353
    %3435 = vmatpush.msra.mxu0 %v3349
    %3436 = vmatpush.msra.mxu0 %v3345
    %3437 = vmatpush.msra.mxu0 %v3341
    %3438 = vmatpush.msra.mxu0 %v3337
    %3439 = vmatpush.msra.mxu0 %v3333
    %3440 = vmatpush.msra.mxu0 %v3329
    %3441 = vmatpush.msra.mxu0 %v3325
    %3442 = vmatpush.msra.mxu0 %v3321
    %3443 = vmatpush.msra.mxu0 %v3317
    %3444 = vmatpush.msra.mxu0 %v3313
    %3445 = vmatpush.msra.mxu0 %v3309
    %3446 = vmatmul.f32.gmra.mxu0 %v3300
    %v3447 = vpop.f32.mrf.mxu0
    %v3448 = vadd.f32 0.0, %v3447
    %3449 = vdwg.mxu0
    %v3450 = vadd.f32 %v3302, %v3388
    %v3451 = vadd.f32 %v3303, %v3408
    %v3452 = vadd.f32 %v3304, %v3428
    %v3453 = vadd.f32 %v3305, %v3448
    %v3454 = vxor.u32 %v3450, 2147483648
    %v3455 = vxor.u32 %v3451, 2147483648
    %v3456 = vxor.u32 %v3452, 2147483648
    %v3457 = vmul.f32 %v3454, 1.442695
    %v3458 = vpow.pop %v3457
    %v3459 = vmul.f32 %v3455, 1.442695
    %v3460 = vpow.pop %v3459
    %v3461 = vmul.f32 %v3456, 1.442695
    %v3462 = vpow.pop %v3461
    %v3463 = vadd.f32 %v3458, 1.0
    %v3464 = vadd.f32 %v3460, 1.0
    %v3465 = vadd.f32 %v3462, 1.0
    %v3466 = vrcp.pop %v3463
    %v3467 = vmul.f32 %v3463, %v3466
    %v3468 = vsub.f32 1.0, %v3467
    %v3469 = vmul.f32 %v3466, %v3468
    %v3470 = vadd.f32 %v3466, %v3469
    %vm3471 = vweird.f32 %v3463
    %vm3472 = vweird.f32 %v3466
    %vm3473 = vmor %vm3471, %vm3472
    %v3474 = vsel %vm3473, %v3466, %v3470
    %v3475 = vand.u32 2147483647, %v3463
    %vm3476 = vcmp.eq.f32.partialorder %v3475, 8.507059e+37
    %v3477 = vand.u32 %v3463, 2147483648
    %v3478 = vor.u32 1.1754944e-38, %v3477
    %v3479 = vsel %vm3476, %v3478, %v3474
    %v3480 = vmul.f32 1.0, %v3479
    %v3481 = vrcp.pop %v3464
    %v3482 = vmul.f32 %v3464, %v3481
    %v3483 = vsub.f32 1.0, %v3482
    %v3484 = vmul.f32 %v3481, %v3483
    %v3485 = vadd.f32 %v3481, %v3484
    %vm3486 = vweird.f32 %v3464
    %vm3487 = vweird.f32 %v3481
    %vm3488 = vmor %vm3486, %vm3487
    %v3489 = vsel %vm3488, %v3481, %v3485
    %v3490 = vand.u32 2147483647, %v3464
    %vm3491 = vcmp.eq.f32.partialorder %v3490, 8.507059e+37
    %v3492 = vand.u32 %v3464, 2147483648
    %v3493 = vor.u32 1.1754944e-38, %v3492
    %v3494 = vsel %vm3491, %v3493, %v3489
    %v3495 = vmul.f32 1.0, %v3494
    %v3496 = vrcp.pop %v3465
    %v3497 = vmul.f32 %v3465, %v3496
    %v3498 = vsub.f32 1.0, %v3497
    %v3499 = vmul.f32 %v3496, %v3498
    %v3500 = vadd.f32 %v3496, %v3499
    %vm3501 = vweird.f32 %v3465
    %vm3502 = vweird.f32 %v3496
    %vm3503 = vmor %vm3501, %vm3502
    %v3504 = vsel %vm3503, %v3496, %v3500
    %v3505 = vand.u32 2147483647, %v3465
    %vm3506 = vcmp.eq.f32.partialorder %v3505, 8.507059e+37
    %v3507 = vand.u32 %v3465, 2147483648
    %v3508 = vor.u32 1.1754944e-38, %v3507
    %v3509 = vsel %vm3506, %v3508, %v3504
    %v3510 = vmul.f32 1.0, %v3509
    %v3511 = vtanh.pop %v3453
    %v3512 = vmul.f32 %v3495, %v3298
    %v3513 = vmul.f32 %v3480, %v3511
    %v3514 = vadd.f32 %v3512, %v3513
    %v3515 = vtanh.pop %v3514
    %v3516 = vmul.f32 %v3510, %v3515
    %3517 = vst [vmem:[%s1496] sm:$0xff] %v3516
    %v3518 = vld [vmem:[%s1500] sm:$0xff]
    %v3519 = vld [vmem:[%s1500 + $0x8] sm:$0xff]
    %v3520 = vld [vmem:[%s1500 + $0x10] sm:$0xff]
    %v3521 = vld [vmem:[%s1500 + $0x18] sm:$0xff]
    %v3522 = vld [vmem:[%s2441] sm:$0xff]
    %v3523 = vld [vmem:[%s2441 + $0x8] sm:$0xff]
    %v3524 = vld [vmem:[%s2441 + $0x10] sm:$0xff]
    %v3525 = vld [vmem:[%s2441 + $0x18] sm:$0xff]
    %v3526 = vld [vmem:[%s2441 + $0x20] sm:$0xff]
    %v3527 = vld [vmem:[%s2441 + $0x28] sm:$0xff]
    %v3528 = vld [vmem:[%s2441 + $0x30] sm:$0xff]
    %v3529 = vld [vmem:[%s2441 + $0x38] sm:$0xff]
    %v3530 = vld [vmem:[%s2441 + $0x40] sm:$0xff]
    %v3531 = vld [vmem:[%s2441 + $0x48] sm:$0xff]
    %v3532 = vld [vmem:[%s2441 + $0x50] sm:$0xff]
    %v3533 = vld [vmem:[%s2441 + $0x58] sm:$0xff]
    %v3534 = vld [vmem:[%s2441 + $0x60] sm:$0xff]
    %v3535 = vld [vmem:[%s2441 + $0x68] sm:$0xff]
    %v3536 = vld [vmem:[%s2441 + $0x70] sm:$0xff]
    %v3537 = vld [vmem:[%s2441 + $0x78] sm:$0xff]
    %v3538 = vld [vmem:[%s2441 + $0x80] sm:$0xff]
    %v3539 = vld [vmem:[%s2441 + $0x88] sm:$0xff]
    %v3540 = vld [vmem:[%s2441 + $0x90] sm:$0xff]
    %v3541 = vld [vmem:[%s2441 + $0x98] sm:$0xff]
    %v3542 = vld [vmem:[%s2441 + $0xa0] sm:$0xff]
    %v3543 = vld [vmem:[%s2441 + $0xa8] sm:$0xff]
    %v3544 = vld [vmem:[%s2441 + $0xb0] sm:$0xff]
    %v3545 = vld [vmem:[%s2441 + $0xb8] sm:$0xff]
    %v3546 = vld [vmem:[%s2441 + $0xc0] sm:$0xff]
    %v3547 = vld [vmem:[%s2441 + $0xc8] sm:$0xff]
    %v3548 = vld [vmem:[%s2441 + $0xd0] sm:$0xff]
    %v3549 = vld [vmem:[%s2441 + $0xd8] sm:$0xff]
    %v3550 = vld [vmem:[%s2441 + $0xe0] sm:$0xff]
    %v3551 = vld [vmem:[%s2441 + $0xe8] sm:$0xff]
    %v3552 = vld [vmem:[%s2441 + $0xf0] sm:$0xff]
    %v3553 = vld [vmem:[%s2441 + $0xf8] sm:$0xff]
    %v3554 = vld [vmem:[%s2441 + $0x100] sm:$0xff]
    %v3555 = vld [vmem:[%s2441 + $0x108] sm:$0xff]
    %v3556 = vld [vmem:[%s2441 + $0x110] sm:$0xff]
    %v3557 = vld [vmem:[%s2441 + $0x118] sm:$0xff]
    %v3558 = vld [vmem:[%s2441 + $0x120] sm:$0xff]
    %v3559 = vld [vmem:[%s2441 + $0x128] sm:$0xff]
    %v3560 = vld [vmem:[%s2441 + $0x130] sm:$0xff]
    %v3561 = vld [vmem:[%s2441 + $0x138] sm:$0xff]
    %v3562 = vld [vmem:[%s2441 + $0x140] sm:$0xff]
    %v3563 = vld [vmem:[%s2441 + $0x148] sm:$0xff]
    %v3564 = vld [vmem:[%s2441 + $0x150] sm:$0xff]
    %v3565 = vld [vmem:[%s2441 + $0x158] sm:$0xff]
    %v3566 = vld [vmem:[%s2441 + $0x160] sm:$0xff]
    %v3567 = vld [vmem:[%s2441 + $0x168] sm:$0xff]
    %v3568 = vld [vmem:[%s2441 + $0x170] sm:$0xff]
    %v3569 = vld [vmem:[%s2441 + $0x178] sm:$0xff]
    %v3570 = vld [vmem:[%s2441 + $0x180] sm:$0xff]
    %v3571 = vld [vmem:[%s2441 + $0x188] sm:$0xff]
    %v3572 = vld [vmem:[%s2441 + $0x190] sm:$0xff]
    %v3573 = vld [vmem:[%s2441 + $0x198] sm:$0xff]
    %v3574 = vld [vmem:[%s2441 + $0x1a0] sm:$0xff]
    %v3575 = vld [vmem:[%s2441 + $0x1a8] sm:$0xff]
    %v3576 = vld [vmem:[%s2441 + $0x1b0] sm:$0xff]
    %v3577 = vld [vmem:[%s2441 + $0x1b8] sm:$0xff]
    %v3578 = vld [vmem:[%s2441 + $0x1c0] sm:$0xff]
    %v3579 = vld [vmem:[%s2441 + $0x1c8] sm:$0xff]
    %v3580 = vld [vmem:[%s2441 + $0x1d0] sm:$0xff]
    %v3581 = vld [vmem:[%s2441 + $0x1d8] sm:$0xff]
    %v3582 = vld [vmem:[%s2441 + $0x1e0] sm:$0xff]
    %v3583 = vld [vmem:[%s2441 + $0x1e8] sm:$0xff]
    %v3584 = vld [vmem:[%s2441 + $0x1f0] sm:$0xff]
    %v3585 = vld [vmem:[%s2441 + $0x1f8] sm:$0xff]
    %3586 = vmatpush.msra.mxu0 %v3582
    %3587 = vmatpush.msra.mxu0 %v3578
    %3588 = vmatpush.msra.mxu0 %v3574
    %3589 = vmatpush.msra.mxu0 %v3570
    %3590 = vmatpush.msra.mxu0 %v3566
    %3591 = vmatpush.msra.mxu0 %v3562
    %3592 = vmatpush.msra.mxu0 %v3558
    %3593 = vmatpush.msra.mxu0 %v3554
    %3594 = vmatpush.msra.mxu0 %v3550
    %3595 = vmatpush.msra.mxu0 %v3546
    %3596 = vmatpush.msra.mxu0 %v3542
    %3597 = vmatpush.msra.mxu0 %v3538
    %3598 = vmatpush.msra.mxu0 %v3534
    %3599 = vmatpush.msra.mxu0 %v3530
    %3600 = vmatpush.msra.mxu0 %v3526
    %3601 = vmatpush.msra.mxu0 %v3522
    %3602 = vmatmul.f32.gmra.mxu0 %v3516
    %v3603 = vpop.f32.mrf.mxu0
    %v3604 = vadd.f32 0.0, %v3603
    %3605 = vdwg.mxu0
    %3606 = vmatpush.msra.mxu0 %v3583
    %3607 = vmatpush.msra.mxu0 %v3579
    %3608 = vmatpush.msra.mxu0 %v3575
    %3609 = vmatpush.msra.mxu0 %v3571
    %3610 = vmatpush.msra.mxu0 %v3567
    %3611 = vmatpush.msra.mxu0 %v3563
    %3612 = vmatpush.msra.mxu0 %v3559
    %3613 = vmatpush.msra.mxu0 %v3555
    %3614 = vmatpush.msra.mxu0 %v3551
    %3615 = vmatpush.msra.mxu0 %v3547
    %3616 = vmatpush.msra.mxu0 %v3543
    %3617 = vmatpush.msra.mxu0 %v3539
    %3618 = vmatpush.msra.mxu0 %v3535
    %3619 = vmatpush.msra.mxu0 %v3531
    %3620 = vmatpush.msra.mxu0 %v3527
    %3621 = vmatpush.msra.mxu0 %v3523
    %3622 = vmatmul.f32.gmra.mxu0 %v3516
    %v3623 = vpop.f32.mrf.mxu0
    %v3624 = vadd.f32 0.0, %v3623
    %3625 = vdwg.mxu0
    %3626 = vmatpush.msra.mxu0 %v3584
    %3627 = vmatpush.msra.mxu0 %v3580
    %3628 = vmatpush.msra.mxu0 %v3576
    %3629 = vmatpush.msra.mxu0 %v3572
    %3630 = vmatpush.msra.mxu0 %v3568
    %3631 = vmatpush.msra.mxu0 %v3564
    %3632 = vmatpush.msra.mxu0 %v3560
    %3633 = vmatpush.msra.mxu0 %v3556
    %3634 = vmatpush.msra.mxu0 %v3552
    %3635 = vmatpush.msra.mxu0 %v3548
    %3636 = vmatpush.msra.mxu0 %v3544
    %3637 = vmatpush.msra.mxu0 %v3540
    %3638 = vmatpush.msra.mxu0 %v3536
    %3639 = vmatpush.msra.mxu0 %v3532
    %3640 = vmatpush.msra.mxu0 %v3528
    %3641 = vmatpush.msra.mxu0 %v3524
    %3642 = vmatmul.f32.gmra.mxu0 %v3516
    %v3643 = vpop.f32.mrf.mxu0
    %v3644 = vadd.f32 0.0, %v3643
    %3645 = vdwg.mxu0
    %3646 = vmatpush.msra.mxu0 %v3585
    %3647 = vmatpush.msra.mxu0 %v3581
    %3648 = vmatpush.msra.mxu0 %v3577
    %3649 = vmatpush.msra.mxu0 %v3573
    %3650 = vmatpush.msra.mxu0 %v3569
    %3651 = vmatpush.msra.mxu0 %v3565
    %3652 = vmatpush.msra.mxu0 %v3561
    %3653 = vmatpush.msra.mxu0 %v3557
    %3654 = vmatpush.msra.mxu0 %v3553
    %3655 = vmatpush.msra.mxu0 %v3549
    %3656 = vmatpush.msra.mxu0 %v3545
    %3657 = vmatpush.msra.mxu0 %v3541
    %3658 = vmatpush.msra.mxu0 %v3537
    %3659 = vmatpush.msra.mxu0 %v3533
    %3660 = vmatpush.msra.mxu0 %v3529
    %3661 = vmatpush.msra.mxu0 %v3525
    %3662 = vmatmul.f32.gmra.mxu0 %v3516
    %v3663 = vpop.f32.mrf.mxu0
    %v3664 = vadd.f32 0.0, %v3663
    %3665 = vdwg.mxu0
    %v3666 = vadd.f32 %v3518, %v3604
    %v3667 = vadd.f32 %v3519, %v3624
    %v3668 = vadd.f32 %v3520, %v3644
    %v3669 = vadd.f32 %v3521, %v3664
    %v3670 = vxor.u32 %v3666, 2147483648
    %v3671 = vxor.u32 %v3667, 2147483648
    %v3672 = vxor.u32 %v3668, 2147483648
    %v3673 = vmul.f32 %v3670, 1.442695
    %v3674 = vpow.pop %v3673
    %v3675 = vmul.f32 %v3671, 1.442695
    %v3676 = vpow.pop %v3675
    %v3677 = vmul.f32 %v3672, 1.442695
    %v3678 = vpow.pop %v3677
    %v3679 = vadd.f32 %v3674, 1.0
    %v3680 = vadd.f32 %v3676, 1.0
    %v3681 = vadd.f32 %v3678, 1.0
    %v3682 = vrcp.pop %v3679
    %v3683 = vmul.f32 %v3679, %v3682
    %v3684 = vsub.f32 1.0, %v3683
    %v3685 = vmul.f32 %v3682, %v3684
    %v3686 = vadd.f32 %v3682, %v3685
    %vm3687 = vweird.f32 %v3679
    %vm3688 = vweird.f32 %v3682
    %vm3689 = vmor %vm3687, %vm3688
    %v3690 = vsel %vm3689, %v3682, %v3686
    %v3691 = vand.u32 2147483647, %v3679
    %vm3692 = vcmp.eq.f32.partialorder %v3691, 8.507059e+37
    %v3693 = vand.u32 %v3679, 2147483648
    %v3694 = vor.u32 1.1754944e-38, %v3693
    %v3695 = vsel %vm3692, %v3694, %v3690
    %v3696 = vmul.f32 1.0, %v3695
    %v3697 = vrcp.pop %v3680
    %v3698 = vmul.f32 %v3680, %v3697
    %v3699 = vsub.f32 1.0, %v3698
    %v3700 = vmul.f32 %v3697, %v3699
    %v3701 = vadd.f32 %v3697, %v3700
    %vm3702 = vweird.f32 %v3680
    %vm3703 = vweird.f32 %v3697
    %vm3704 = vmor %vm3702, %vm3703
    %v3705 = vsel %vm3704, %v3697, %v3701
    %v3706 = vand.u32 2147483647, %v3680
    %vm3707 = vcmp.eq.f32.partialorder %v3706, 8.507059e+37
    %v3708 = vand.u32 %v3680, 2147483648
    %v3709 = vor.u32 1.1754944e-38, %v3708
    %v3710 = vsel %vm3707, %v3709, %v3705
    %v3711 = vmul.f32 1.0, %v3710
    %v3712 = vrcp.pop %v3681
    %v3713 = vmul.f32 %v3681, %v3712
    %v3714 = vsub.f32 1.0, %v3713
    %v3715 = vmul.f32 %v3712, %v3714
    %v3716 = vadd.f32 %v3712, %v3715
    %vm3717 = vweird.f32 %v3681
    %vm3718 = vweird.f32 %v3712
    %vm3719 = vmor %vm3717, %vm3718
    %v3720 = vsel %vm3719, %v3712, %v3716
    %v3721 = vand.u32 2147483647, %v3681
    %vm3722 = vcmp.eq.f32.partialorder %v3721, 8.507059e+37
    %v3723 = vand.u32 %v3681, 2147483648
    %v3724 = vor.u32 1.1754944e-38, %v3723
    %v3725 = vsel %vm3722, %v3724, %v3720
    %v3726 = vmul.f32 1.0, %v3725
    %v3727 = vtanh.pop %v3669
    %v3728 = vmul.f32 %v3711, %v3514
    %v3729 = vmul.f32 %v3696, %v3727
    %v3730 = vadd.f32 %v3728, %v3729
    %v3731 = vtanh.pop %v3730
    %v3732 = vmul.f32 %v3726, %v3731
    %3733 = vst [vmem:[%s1716] sm:$0xff] %v3732
    %v3734 = vld [vmem:[%s1720] sm:$0xff]
    %v3735 = vld [vmem:[%s1720 + $0x8] sm:$0xff]
    %v3736 = vld [vmem:[%s1720 + $0x10] sm:$0xff]
    %v3737 = vld [vmem:[%s1720 + $0x18] sm:$0xff]
    %v3738 = vld [vmem:[%s2441] sm:$0xff]
    %v3739 = vld [vmem:[%s2441 + $0x8] sm:$0xff]
    %v3740 = vld [vmem:[%s2441 + $0x10] sm:$0xff]
    %v3741 = vld [vmem:[%s2441 + $0x18] sm:$0xff]
    %v3742 = vld [vmem:[%s2441 + $0x20] sm:$0xff]
    %v3743 = vld [vmem:[%s2441 + $0x28] sm:$0xff]
    %v3744 = vld [vmem:[%s2441 + $0x30] sm:$0xff]
    %v3745 = vld [vmem:[%s2441 + $0x38] sm:$0xff]
    %v3746 = vld [vmem:[%s2441 + $0x40] sm:$0xff]
    %v3747 = vld [vmem:[%s2441 + $0x48] sm:$0xff]
    %v3748 = vld [vmem:[%s2441 + $0x50] sm:$0xff]
    %v3749 = vld [vmem:[%s2441 + $0x58] sm:$0xff]
    %v3750 = vld [vmem:[%s2441 + $0x60] sm:$0xff]
    %v3751 = vld [vmem:[%s2441 + $0x68] sm:$0xff]
    %v3752 = vld [vmem:[%s2441 + $0x70] sm:$0xff]
    %v3753 = vld [vmem:[%s2441 + $0x78] sm:$0xff]
    %v3754 = vld [vmem:[%s2441 + $0x80] sm:$0xff]
    %v3755 = vld [vmem:[%s2441 + $0x88] sm:$0xff]
    %v3756 = vld [vmem:[%s2441 + $0x90] sm:$0xff]
    %v3757 = vld [vmem:[%s2441 + $0x98] sm:$0xff]
    %v3758 = vld [vmem:[%s2441 + $0xa0] sm:$0xff]
    %v3759 = vld [vmem:[%s2441 + $0xa8] sm:$0xff]
    %v3760 = vld [vmem:[%s2441 + $0xb0] sm:$0xff]
    %v3761 = vld [vmem:[%s2441 + $0xb8] sm:$0xff]
    %v3762 = vld [vmem:[%s2441 + $0xc0] sm:$0xff]
    %v3763 = vld [vmem:[%s2441 + $0xc8] sm:$0xff]
    %v3764 = vld [vmem:[%s2441 + $0xd0] sm:$0xff]
    %v3765 = vld [vmem:[%s2441 + $0xd8] sm:$0xff]
    %v3766 = vld [vmem:[%s2441 + $0xe0] sm:$0xff]
    %v3767 = vld [vmem:[%s2441 + $0xe8] sm:$0xff]
    %v3768 = vld [vmem:[%s2441 + $0xf0] sm:$0xff]
    %v3769 = vld [vmem:[%s2441 + $0xf8] sm:$0xff]
    %v3770 = vld [vmem:[%s2441 + $0x100] sm:$0xff]
    %v3771 = vld [vmem:[%s2441 + $0x108] sm:$0xff]
    %v3772 = vld [vmem:[%s2441 + $0x110] sm:$0xff]
    %v3773 = vld [vmem:[%s2441 + $0x118] sm:$0xff]
    %v3774 = vld [vmem:[%s2441 + $0x120] sm:$0xff]
    %v3775 = vld [vmem:[%s2441 + $0x128] sm:$0xff]
    %v3776 = vld [vmem:[%s2441 + $0x130] sm:$0xff]
    %v3777 = vld [vmem:[%s2441 + $0x138] sm:$0xff]
    %v3778 = vld [vmem:[%s2441 + $0x140] sm:$0xff]
    %v3779 = vld [vmem:[%s2441 + $0x148] sm:$0xff]
    %v3780 = vld [vmem:[%s2441 + $0x150] sm:$0xff]
    %v3781 = vld [vmem:[%s2441 + $0x158] sm:$0xff]
    %v3782 = vld [vmem:[%s2441 + $0x160] sm:$0xff]
    %v3783 = vld [vmem:[%s2441 + $0x168] sm:$0xff]
    %v3784 = vld [vmem:[%s2441 + $0x170] sm:$0xff]
    %v3785 = vld [vmem:[%s2441 + $0x178] sm:$0xff]
    %v3786 = vld [vmem:[%s2441 + $0x180] sm:$0xff]
    %v3787 = vld [vmem:[%s2441 + $0x188] sm:$0xff]
    %v3788 = vld [vmem:[%s2441 + $0x190] sm:$0xff]
    %v3789 = vld [vmem:[%s2441 + $0x198] sm:$0xff]
    %v3790 = vld [vmem:[%s2441 + $0x1a0] sm:$0xff]
    %v3791 = vld [vmem:[%s2441 + $0x1a8] sm:$0xff]
    %v3792 = vld [vmem:[%s2441 + $0x1b0] sm:$0xff]
    %v3793 = vld [vmem:[%s2441 + $0x1b8] sm:$0xff]
    %v3794 = vld [vmem:[%s2441 + $0x1c0] sm:$0xff]
    %v3795 = vld [vmem:[%s2441 + $0x1c8] sm:$0xff]
    %v3796 = vld [vmem:[%s2441 + $0x1d0] sm:$0xff]
    %v3797 = vld [vmem:[%s2441 + $0x1d8] sm:$0xff]
    %v3798 = vld [vmem:[%s2441 + $0x1e0] sm:$0xff]
    %v3799 = vld [vmem:[%s2441 + $0x1e8] sm:$0xff]
    %v3800 = vld [vmem:[%s2441 + $0x1f0] sm:$0xff]
    %v3801 = vld [vmem:[%s2441 + $0x1f8] sm:$0xff]
    %3802 = vmatpush.msra.mxu0 %v3798
    %3803 = vmatpush.msra.mxu0 %v3794
    %3804 = vmatpush.msra.mxu0 %v3790
    %3805 = vmatpush.msra.mxu0 %v3786
    %3806 = vmatpush.msra.mxu0 %v3782
    %3807 = vmatpush.msra.mxu0 %v3778
    %3808 = vmatpush.msra.mxu0 %v3774
    %3809 = vmatpush.msra.mxu0 %v3770
    %3810 = vmatpush.msra.mxu0 %v3766
    %3811 = vmatpush.msra.mxu0 %v3762
    %3812 = vmatpush.msra.mxu0 %v3758
    %3813 = vmatpush.msra.mxu0 %v3754
    %3814 = vmatpush.msra.mxu0 %v3750
    %3815 = vmatpush.msra.mxu0 %v3746
    %3816 = vmatpush.msra.mxu0 %v3742
    %3817 = vmatpush.msra.mxu0 %v3738
    %3818 = vmatmul.f32.gmra.mxu0 %v3732
    %v3819 = vpop.f32.mrf.mxu0
    %v3820 = vadd.f32 0.0, %v3819
    %3821 = vdwg.mxu0
    %3822 = vmatpush.msra.mxu0 %v3799
    %3823 = vmatpush.msra.mxu0 %v3795
    %3824 = vmatpush.msra.mxu0 %v3791
    %3825 = vmatpush.msra.mxu0 %v3787
    %3826 = vmatpush.msra.mxu0 %v3783
    %3827 = vmatpush.msra.mxu0 %v3779
    %3828 = vmatpush.msra.mxu0 %v3775
    %3829 = vmatpush.msra.mxu0 %v3771
    %3830 = vmatpush.msra.mxu0 %v3767
    %3831 = vmatpush.msra.mxu0 %v3763
    %3832 = vmatpush.msra.mxu0 %v3759
    %3833 = vmatpush.msra.mxu0 %v3755
    %3834 = vmatpush.msra.mxu0 %v3751
    %3835 = vmatpush.msra.mxu0 %v3747
    %3836 = vmatpush.msra.mxu0 %v3743
    %3837 = vmatpush.msra.mxu0 %v3739
    %3838 = vmatmul.f32.gmra.mxu0 %v3732
    %v3839 = vpop.f32.mrf.mxu0
    %v3840 = vadd.f32 0.0, %v3839
    %3841 = vdwg.mxu0
    %3842 = vmatpush.msra.mxu0 %v3800
    %3843 = vmatpush.msra.mxu0 %v3796
    %3844 = vmatpush.msra.mxu0 %v3792
    %3845 = vmatpush.msra.mxu0 %v3788
    %3846 = vmatpush.msra.mxu0 %v3784
    %3847 = vmatpush.msra.mxu0 %v3780
    %3848 = vmatpush.msra.mxu0 %v3776
    %3849 = vmatpush.msra.mxu0 %v3772
    %3850 = vmatpush.msra.mxu0 %v3768
    %3851 = vmatpush.msra.mxu0 %v3764
    %3852 = vmatpush.msra.mxu0 %v3760
    %3853 = vmatpush.msra.mxu0 %v3756
    %3854 = vmatpush.msra.mxu0 %v3752
    %3855 = vmatpush.msra.mxu0 %v3748
    %3856 = vmatpush.msra.mxu0 %v3744
    %3857 = vmatpush.msra.mxu0 %v3740
    %3858 = vmatmul.f32.gmra.mxu0 %v3732
    %v3859 = vpop.f32.mrf.mxu0
    %v3860 = vadd.f32 0.0, %v3859
    %3861 = vdwg.mxu0
    %3862 = vmatpush.msra.mxu0 %v3801
    %3863 = vmatpush.msra.mxu0 %v3797
    %3864 = vmatpush.msra.mxu0 %v3793
    %3865 = vmatpush.msra.mxu0 %v3789
    %3866 = vmatpush.msra.mxu0 %v3785
    %3867 = vmatpush.msra.mxu0 %v3781
    %3868 = vmatpush.msra.mxu0 %v3777
    %3869 = vmatpush.msra.mxu0 %v3773
    %3870 = vmatpush.msra.mxu0 %v3769
    %3871 = vmatpush.msra.mxu0 %v3765
    %3872 = vmatpush.msra.mxu0 %v3761
    %3873 = vmatpush.msra.mxu0 %v3757
    %3874 = vmatpush.msra.mxu0 %v3753
    %3875 = vmatpush.msra.mxu0 %v3749
    %3876 = vmatpush.msra.mxu0 %v3745
    %3877 = vmatpush.msra.mxu0 %v3741
    %3878 = vmatmul.f32.gmra.mxu0 %v3732
    %v3879 = vpop.f32.mrf.mxu0
    %v3880 = vadd.f32 0.0, %v3879
    %3881 = vdwg.mxu0
    %v3882 = vadd.f32 %v3734, %v3820
    %v3883 = vadd.f32 %v3735, %v3840
    %v3884 = vadd.f32 %v3736, %v3860
    %v3885 = vadd.f32 %v3737, %v3880
    %v3886 = vxor.u32 %v3882, 2147483648
    %v3887 = vxor.u32 %v3883, 2147483648
    %v3888 = vxor.u32 %v3884, 2147483648
    %v3889 = vmul.f32 %v3886, 1.442695
    %v3890 = vpow.pop %v3889
    %v3891 = vmul.f32 %v3887, 1.442695
    %v3892 = vpow.pop %v3891
    %v3893 = vmul.f32 %v3888, 1.442695
    %v3894 = vpow.pop %v3893
    %v3895 = vadd.f32 %v3890, 1.0
    %v3896 = vadd.f32 %v3892, 1.0
    %v3897 = vadd.f32 %v3894, 1.0
    %v3898 = vrcp.pop %v3895
    %v3899 = vmul.f32 %v3895, %v3898
    %v3900 = vsub.f32 1.0, %v3899
    %v3901 = vmul.f32 %v3898, %v3900
    %v3902 = vadd.f32 %v3898, %v3901
    %vm3903 = vweird.f32 %v3895
    %vm3904 = vweird.f32 %v3898
    %vm3905 = vmor %vm3903, %vm3904
    %v3906 = vsel %vm3905, %v3898, %v3902
    %v3907 = vand.u32 2147483647, %v3895
    %vm3908 = vcmp.eq.f32.partialorder %v3907, 8.507059e+37
    %v3909 = vand.u32 %v3895, 2147483648
    %v3910 = vor.u32 1.1754944e-38, %v3909
    %v3911 = vsel %vm3908, %v3910, %v3906
    %v3912 = vmul.f32 1.0, %v3911
    %v3913 = vrcp.pop %v3896
    %v3914 = vmul.f32 %v3896, %v3913
    %v3915 = vsub.f32 1.0, %v3914
    %v3916 = vmul.f32 %v3913, %v3915
    %v3917 = vadd.f32 %v3913, %v3916
    %vm3918 = vweird.f32 %v3896
    %vm3919 = vweird.f32 %v3913
    %vm3920 = vmor %vm3918, %vm3919
    %v3921 = vsel %vm3920, %v3913, %v3917
    %v3922 = vand.u32 2147483647, %v3896
    %vm3923 = vcmp.eq.f32.partialorder %v3922, 8.507059e+37
    %v3924 = vand.u32 %v3896, 2147483648
    %v3925 = vor.u32 1.1754944e-38, %v3924
    %v3926 = vsel %vm3923, %v3925, %v3921
    %v3927 = vmul.f32 1.0, %v3926
    %v3928 = vrcp.pop %v3897
    %v3929 = vmul.f32 %v3897, %v3928
    %v3930 = vsub.f32 1.0, %v3929
    %v3931 = vmul.f32 %v3928, %v3930
    %v3932 = vadd.f32 %v3928, %v3931
    %vm3933 = vweird.f32 %v3897
    %vm3934 = vweird.f32 %v3928
    %vm3935 = vmor %vm3933, %vm3934
    %v3936 = vsel %vm3935, %v3928, %v3932
    %v3937 = vand.u32 2147483647, %v3897
    %vm3938 = vcmp.eq.f32.partialorder %v3937, 8.507059e+37
    %v3939 = vand.u32 %v3897, 2147483648
    %v3940 = vor.u32 1.1754944e-38, %v3939
    %v3941 = vsel %vm3938, %v3940, %v3936
    %v3942 = vmul.f32 1.0, %v3941
    %v3943 = vtanh.pop %v3885
    %v3944 = vmul.f32 %v3927, %v3730
    %v3945 = vmul.f32 %v3912, %v3943
    %v3946 = vadd.f32 %v3944, %v3945
    %v3947 = vtanh.pop %v3946
    %v3948 = vmul.f32 %v3942, %v3947
    %3949 = vst [vmem:[%s1936] sm:$0xff] %v3948
    %v3950 = vld [vmem:[%s1940] sm:$0xff]
    %v3951 = vld [vmem:[%s1940 + $0x8] sm:$0xff]
    %v3952 = vld [vmem:[%s1940 + $0x10] sm:$0xff]
    %v3953 = vld [vmem:[%s1940 + $0x18] sm:$0xff]
    %v3954 = vld [vmem:[%s2441] sm:$0xff]
    %v3955 = vld [vmem:[%s2441 + $0x8] sm:$0xff]
    %v3956 = vld [vmem:[%s2441 + $0x10] sm:$0xff]
    %v3957 = vld [vmem:[%s2441 + $0x18] sm:$0xff]
    %v3958 = vld [vmem:[%s2441 + $0x20] sm:$0xff]
    %v3959 = vld [vmem:[%s2441 + $0x28] sm:$0xff]
    %v3960 = vld [vmem:[%s2441 + $0x30] sm:$0xff]
    %v3961 = vld [vmem:[%s2441 + $0x38] sm:$0xff]
    %v3962 = vld [vmem:[%s2441 + $0x40] sm:$0xff]
    %v3963 = vld [vmem:[%s2441 + $0x48] sm:$0xff]
    %v3964 = vld [vmem:[%s2441 + $0x50] sm:$0xff]
    %v3965 = vld [vmem:[%s2441 + $0x58] sm:$0xff]
    %v3966 = vld [vmem:[%s2441 + $0x60] sm:$0xff]
    %v3967 = vld [vmem:[%s2441 + $0x68] sm:$0xff]
    %v3968 = vld [vmem:[%s2441 + $0x70] sm:$0xff]
    %v3969 = vld [vmem:[%s2441 + $0x78] sm:$0xff]
    %v3970 = vld [vmem:[%s2441 + $0x80] sm:$0xff]
    %v3971 = vld [vmem:[%s2441 + $0x88] sm:$0xff]
    %v3972 = vld [vmem:[%s2441 + $0x90] sm:$0xff]
    %v3973 = vld [vmem:[%s2441 + $0x98] sm:$0xff]
    %v3974 = vld [vmem:[%s2441 + $0xa0] sm:$0xff]
    %v3975 = vld [vmem:[%s2441 + $0xa8] sm:$0xff]
    %v3976 = vld [vmem:[%s2441 + $0xb0] sm:$0xff]
    %v3977 = vld [vmem:[%s2441 + $0xb8] sm:$0xff]
    %v3978 = vld [vmem:[%s2441 + $0xc0] sm:$0xff]
    %v3979 = vld [vmem:[%s2441 + $0xc8] sm:$0xff]
    %v3980 = vld [vmem:[%s2441 + $0xd0] sm:$0xff]
    %v3981 = vld [vmem:[%s2441 + $0xd8] sm:$0xff]
    %v3982 = vld [vmem:[%s2441 + $0xe0] sm:$0xff]
    %v3983 = vld [vmem:[%s2441 + $0xe8] sm:$0xff]
    %v3984 = vld [vmem:[%s2441 + $0xf0] sm:$0xff]
    %v3985 = vld [vmem:[%s2441 + $0xf8] sm:$0xff]
    %v3986 = vld [vmem:[%s2441 + $0x100] sm:$0xff]
    %v3987 = vld [vmem:[%s2441 + $0x108] sm:$0xff]
    %v3988 = vld [vmem:[%s2441 + $0x110] sm:$0xff]
    %v3989 = vld [vmem:[%s2441 + $0x118] sm:$0xff]
    %v3990 = vld [vmem:[%s2441 + $0x120] sm:$0xff]
    %v3991 = vld [vmem:[%s2441 + $0x128] sm:$0xff]
    %v3992 = vld [vmem:[%s2441 + $0x130] sm:$0xff]
    %v3993 = vld [vmem:[%s2441 + $0x138] sm:$0xff]
    %v3994 = vld [vmem:[%s2441 + $0x140] sm:$0xff]
    %v3995 = vld [vmem:[%s2441 + $0x148] sm:$0xff]
    %v3996 = vld [vmem:[%s2441 + $0x150] sm:$0xff]
    %v3997 = vld [vmem:[%s2441 + $0x158] sm:$0xff]
    %v3998 = vld [vmem:[%s2441 + $0x160] sm:$0xff]
    %v3999 = vld [vmem:[%s2441 + $0x168] sm:$0xff]
    %v4000 = vld [vmem:[%s2441 + $0x170] sm:$0xff]
    %v4001 = vld [vmem:[%s2441 + $0x178] sm:$0xff]
    %v4002 = vld [vmem:[%s2441 + $0x180] sm:$0xff]
    %v4003 = vld [vmem:[%s2441 + $0x188] sm:$0xff]
    %v4004 = vld [vmem:[%s2441 + $0x190] sm:$0xff]
    %v4005 = vld [vmem:[%s2441 + $0x198] sm:$0xff]
    %v4006 = vld [vmem:[%s2441 + $0x1a0] sm:$0xff]
    %v4007 = vld [vmem:[%s2441 + $0x1a8] sm:$0xff]
    %v4008 = vld [vmem:[%s2441 + $0x1b0] sm:$0xff]
    %v4009 = vld [vmem:[%s2441 + $0x1b8] sm:$0xff]
    %v4010 = vld [vmem:[%s2441 + $0x1c0] sm:$0xff]
    %v4011 = vld [vmem:[%s2441 + $0x1c8] sm:$0xff]
    %v4012 = vld [vmem:[%s2441 + $0x1d0] sm:$0xff]
    %v4013 = vld [vmem:[%s2441 + $0x1d8] sm:$0xff]
    %v4014 = vld [vmem:[%s2441 + $0x1e0] sm:$0xff]
    %v4015 = vld [vmem:[%s2441 + $0x1e8] sm:$0xff]
    %v4016 = vld [vmem:[%s2441 + $0x1f0] sm:$0xff]
    %v4017 = vld [vmem:[%s2441 + $0x1f8] sm:$0xff]
    %4018 = vmatpush.msra.mxu0 %v4014
    %4019 = vmatpush.msra.mxu0 %v4010
    %4020 = vmatpush.msra.mxu0 %v4006
    %4021 = vmatpush.msra.mxu0 %v4002
    %4022 = vmatpush.msra.mxu0 %v3998
    %4023 = vmatpush.msra.mxu0 %v3994
    %4024 = vmatpush.msra.mxu0 %v3990
    %4025 = vmatpush.msra.mxu0 %v3986
    %4026 = vmatpush.msra.mxu0 %v3982
    %4027 = vmatpush.msra.mxu0 %v3978
    %4028 = vmatpush.msra.mxu0 %v3974
    %4029 = vmatpush.msra.mxu0 %v3970
    %4030 = vmatpush.msra.mxu0 %v3966
    %4031 = vmatpush.msra.mxu0 %v3962
    %4032 = vmatpush.msra.mxu0 %v3958
    %4033 = vmatpush.msra.mxu0 %v3954
    %4034 = vmatmul.f32.gmra.mxu0 %v3948
    %v4035 = vpop.f32.mrf.mxu0
    %v4036 = vadd.f32 0.0, %v4035
    %4037 = vdwg.mxu0
    %4038 = vmatpush.msra.mxu0 %v4015
    %4039 = vmatpush.msra.mxu0 %v4011
    %4040 = vmatpush.msra.mxu0 %v4007
    %4041 = vmatpush.msra.mxu0 %v4003
    %4042 = vmatpush.msra.mxu0 %v3999
    %4043 = vmatpush.msra.mxu0 %v3995
    %4044 = vmatpush.msra.mxu0 %v3991
    %4045 = vmatpush.msra.mxu0 %v3987
    %4046 = vmatpush.msra.mxu0 %v3983
    %4047 = vmatpush.msra.mxu0 %v3979
    %4048 = vmatpush.msra.mxu0 %v3975
    %4049 = vmatpush.msra.mxu0 %v3971
    %4050 = vmatpush.msra.mxu0 %v3967
    %4051 = vmatpush.msra.mxu0 %v3963
    %4052 = vmatpush.msra.mxu0 %v3959
    %4053 = vmatpush.msra.mxu0 %v3955
    %4054 = vmatmul.f32.gmra.mxu0 %v3948
    %v4055 = vpop.f32.mrf.mxu0
    %v4056 = vadd.f32 0.0, %v4055
    %4057 = vdwg.mxu0
    %4058 = vmatpush.msra.mxu0 %v4016
    %4059 = vmatpush.msra.mxu0 %v4012
    %4060 = vmatpush.msra.mxu0 %v4008
    %4061 = vmatpush.msra.mxu0 %v4004
    %4062 = vmatpush.msra.mxu0 %v4000
    %4063 = vmatpush.msra.mxu0 %v3996
    %4064 = vmatpush.msra.mxu0 %v3992
    %4065 = vmatpush.msra.mxu0 %v3988
    %4066 = vmatpush.msra.mxu0 %v3984
    %4067 = vmatpush.msra.mxu0 %v3980
    %4068 = vmatpush.msra.mxu0 %v3976
    %4069 = vmatpush.msra.mxu0 %v3972
    %4070 = vmatpush.msra.mxu0 %v3968
    %4071 = vmatpush.msra.mxu0 %v3964
    %4072 = vmatpush.msra.mxu0 %v3960
    %4073 = vmatpush.msra.mxu0 %v3956
    %4074 = vmatmul.f32.gmra.mxu0 %v3948
    %v4075 = vpop.f32.mrf.mxu0
    %v4076 = vadd.f32 0.0, %v4075
    %4077 = vdwg.mxu0
    %4078 = vmatpush.msra.mxu0 %v4017
    %4079 = vmatpush.msra.mxu0 %v4013
    %4080 = vmatpush.msra.mxu0 %v4009
    %4081 = vmatpush.msra.mxu0 %v4005
    %4082 = vmatpush.msra.mxu0 %v4001
    %4083 = vmatpush.msra.mxu0 %v3997
    %4084 = vmatpush.msra.mxu0 %v3993
    %4085 = vmatpush.msra.mxu0 %v3989
    %4086 = vmatpush.msra.mxu0 %v3985
    %4087 = vmatpush.msra.mxu0 %v3981
    %4088 = vmatpush.msra.mxu0 %v3977
    %4089 = vmatpush.msra.mxu0 %v3973
    %4090 = vmatpush.msra.mxu0 %v3969
    %4091 = vmatpush.msra.mxu0 %v3965
    %4092 = vmatpush.msra.mxu0 %v3961
    %4093 = vmatpush.msra.mxu0 %v3957
    %4094 = vmatmul.f32.gmra.mxu0 %v3948
    %v4095 = vpop.f32.mrf.mxu0
    %v4096 = vadd.f32 0.0, %v4095
    %4097 = vdwg.mxu0
    %v4098 = vadd.f32 %v3950, %v4036
    %v4099 = vadd.f32 %v3951, %v4056
    %v4100 = vadd.f32 %v3952, %v4076
    %v4101 = vadd.f32 %v3953, %v4096
    %v4102 = vxor.u32 %v4098, 2147483648
    %v4103 = vxor.u32 %v4099, 2147483648
    %v4104 = vxor.u32 %v4100, 2147483648
    %v4105 = vmul.f32 %v4102, 1.442695
    %v4106 = vpow.pop %v4105
    %v4107 = vmul.f32 %v4103, 1.442695
    %v4108 = vpow.pop %v4107
    %v4109 = vmul.f32 %v4104, 1.442695
    %v4110 = vpow.pop %v4109
    %v4111 = vadd.f32 %v4106, 1.0
    %v4112 = vadd.f32 %v4108, 1.0
    %v4113 = vadd.f32 %v4110, 1.0
    %v4114 = vrcp.pop %v4111
    %v4115 = vmul.f32 %v4111, %v4114
    %v4116 = vsub.f32 1.0, %v4115
    %v4117 = vmul.f32 %v4114, %v4116
    %v4118 = vadd.f32 %v4114, %v4117
    %vm4119 = vweird.f32 %v4111
    %vm4120 = vweird.f32 %v4114
    %vm4121 = vmor %vm4119, %vm4120
    %v4122 = vsel %vm4121, %v4114, %v4118
    %v4123 = vand.u32 2147483647, %v4111
    %vm4124 = vcmp.eq.f32.partialorder %v4123, 8.507059e+37
    %v4125 = vand.u32 %v4111, 2147483648
    %v4126 = vor.u32 1.1754944e-38, %v4125
    %v4127 = vsel %vm4124, %v4126, %v4122
    %v4128 = vmul.f32 1.0, %v4127
    %v4129 = vrcp.pop %v4112
    %v4130 = vmul.f32 %v4112, %v4129
    %v4131 = vsub.f32 1.0, %v4130
    %v4132 = vmul.f32 %v4129, %v4131
    %v4133 = vadd.f32 %v4129, %v4132
    %vm4134 = vweird.f32 %v4112
    %vm4135 = vweird.f32 %v4129
    %vm4136 = vmor %vm4134, %vm4135
    %v4137 = vsel %vm4136, %v4129, %v4133
    %v4138 = vand.u32 2147483647, %v4112
    %vm4139 = vcmp.eq.f32.partialorder %v4138, 8.507059e+37
    %v4140 = vand.u32 %v4112, 2147483648
    %v4141 = vor.u32 1.1754944e-38, %v4140
    %v4142 = vsel %vm4139, %v4141, %v4137
    %v4143 = vmul.f32 1.0, %v4142
    %v4144 = vrcp.pop %v4113
    %v4145 = vmul.f32 %v4113, %v4144
    %v4146 = vsub.f32 1.0, %v4145
    %v4147 = vmul.f32 %v4144, %v4146
    %v4148 = vadd.f32 %v4144, %v4147
    %vm4149 = vweird.f32 %v4113
    %vm4150 = vweird.f32 %v4144
    %vm4151 = vmor %vm4149, %vm4150
    %v4152 = vsel %vm4151, %v4144, %v4148
    %v4153 = vand.u32 2147483647, %v4113
    %vm4154 = vcmp.eq.f32.partialorder %v4153, 8.507059e+37
    %v4155 = vand.u32 %v4113, 2147483648
    %v4156 = vor.u32 1.1754944e-38, %v4155
    %v4157 = vsel %vm4154, %v4156, %v4152
    %v4158 = vmul.f32 1.0, %v4157
    %v4159 = vtanh.pop %v4101
    %v4160 = vmul.f32 %v4143, %v3946
    %v4161 = vmul.f32 %v4128, %v4159
    %v4162 = vadd.f32 %v4160, %v4161
    %v4163 = vtanh.pop %v4162
    %v4164 = vmul.f32 %v4158, %v4163
    %4165 = vst [vmem:[%s2156] sm:$0xff] %v4164
    %s4166 = scalar_lea.vmem %s6, 8
    %v4167 = vld [vmem:[%s4166] sm:$0xf]
    %v4168 = vld [vmem:[#allocation3] sm:$0xff]
    %v4169 = vld [vmem:[#allocation3 + $0x8] sm:$0xff]
    %v4170 = vld [vmem:[#allocation3 + $0x10] sm:$0xff]
    %v4171 = vld [vmem:[#allocation3 + $0x18] sm:$0xff]
    %v4172 = vld [vmem:[#allocation3 + $0x20] sm:$0xff]
    %v4173 = vld [vmem:[#allocation3 + $0x28] sm:$0xff]
    %v4174 = vld [vmem:[#allocation3 + $0x30] sm:$0xff]
    %v4175 = vld [vmem:[#allocation3 + $0x38] sm:$0xff]
    %v4176 = vld [vmem:[#allocation10] sm:$0xff]
    %v4177 = vld [vmem:[#allocation10 + $0x8] sm:$0xff]
    %v4178 = vld [vmem:[#allocation10 + $0x10] sm:$0xff]
    %v4179 = vld [vmem:[#allocation10 + $0x18] sm:$0xff]
    %v4180 = vld [vmem:[#allocation10 + $0x20] sm:$0xff]
    %v4181 = vld [vmem:[#allocation10 + $0x28] sm:$0xff]
    %v4182 = vld [vmem:[#allocation10 + $0x30] sm:$0xff]
    %v4183 = vld [vmem:[#allocation10 + $0x38] sm:$0xff]
    %v4184 = vld [vmem:[#allocation10 + $0x40] sm:$0xff]
    %v4185 = vld [vmem:[#allocation10 + $0x48] sm:$0xff]
    %v4186 = vld [vmem:[#allocation10 + $0x50] sm:$0xff]
    %v4187 = vld [vmem:[#allocation10 + $0x58] sm:$0xff]
    %v4188 = vld [vmem:[#allocation10 + $0x60] sm:$0xff]
    %v4189 = vld [vmem:[#allocation10 + $0x68] sm:$0xff]
    %v4190 = vld [vmem:[#allocation10 + $0x70] sm:$0xff]
    %v4191 = vld [vmem:[#allocation10 + $0x78] sm:$0xff]
    %v4192 = vld [vmem:[#allocation10 + $0x80] sm:$0xff]
    %v4193 = vld [vmem:[#allocation10 + $0x88] sm:$0xff]
    %v4194 = vld [vmem:[#allocation10 + $0x90] sm:$0xff]
    %v4195 = vld [vmem:[#allocation10 + $0x98] sm:$0xff]
    %v4196 = vld [vmem:[#allocation10 + $0xa0] sm:$0xff]
    %v4197 = vld [vmem:[#allocation10 + $0xa8] sm:$0xff]
    %v4198 = vld [vmem:[#allocation10 + $0xb0] sm:$0xff]
    %v4199 = vld [vmem:[#allocation10 + $0xb8] sm:$0xff]
    %v4200 = vld [vmem:[#allocation10 + $0xc0] sm:$0xff]
    %v4201 = vld [vmem:[#allocation10 + $0xc8] sm:$0xff]
    %v4202 = vld [vmem:[#allocation10 + $0xd0] sm:$0xff]
    %v4203 = vld [vmem:[#allocation10 + $0xd8] sm:$0xff]
    %v4204 = vld [vmem:[#allocation10 + $0xe0] sm:$0xff]
    %v4205 = vld [vmem:[#allocation10 + $0xe8] sm:$0xff]
    %v4206 = vld [vmem:[#allocation10 + $0xf0] sm:$0xff]
    %v4207 = vld [vmem:[#allocation10 + $0xf8] sm:$0xff]
    %v4208 = vld [vmem:[#allocation10 + $0x100] sm:$0xff]
    %v4209 = vld [vmem:[#allocation10 + $0x108] sm:$0xff]
    %v4210 = vld [vmem:[#allocation10 + $0x110] sm:$0xff]
    %v4211 = vld [vmem:[#allocation10 + $0x118] sm:$0xff]
    %v4212 = vld [vmem:[#allocation10 + $0x120] sm:$0xff]
    %v4213 = vld [vmem:[#allocation10 + $0x128] sm:$0xff]
    %v4214 = vld [vmem:[#allocation10 + $0x130] sm:$0xff]
    %v4215 = vld [vmem:[#allocation10 + $0x138] sm:$0xff]
    %v4216 = vld [vmem:[#allocation10 + $0x140] sm:$0xff]
    %v4217 = vld [vmem:[#allocation10 + $0x148] sm:$0xff]
    %v4218 = vld [vmem:[#allocation10 + $0x150] sm:$0xff]
    %v4219 = vld [vmem:[#allocation10 + $0x158] sm:$0xff]
    %v4220 = vld [vmem:[#allocation10 + $0x160] sm:$0xff]
    %v4221 = vld [vmem:[#allocation10 + $0x168] sm:$0xff]
    %v4222 = vld [vmem:[#allocation10 + $0x170] sm:$0xff]
    %v4223 = vld [vmem:[#allocation10 + $0x178] sm:$0xff]
    %v4224 = vld [vmem:[#allocation10 + $0x180] sm:$0xff]
    %v4225 = vld [vmem:[#allocation10 + $0x188] sm:$0xff]
    %v4226 = vld [vmem:[#allocation10 + $0x190] sm:$0xff]
    %v4227 = vld [vmem:[#allocation10 + $0x198] sm:$0xff]
    %v4228 = vld [vmem:[#allocation10 + $0x1a0] sm:$0xff]
    %v4229 = vld [vmem:[#allocation10 + $0x1a8] sm:$0xff]
    %v4230 = vld [vmem:[#allocation10 + $0x1b0] sm:$0xff]
    %v4231 = vld [vmem:[#allocation10 + $0x1b8] sm:$0xff]
    %v4232 = vld [vmem:[#allocation10 + $0x1c0] sm:$0xff]
    %v4233 = vld [vmem:[#allocation10 + $0x1c8] sm:$0xff]
    %v4234 = vld [vmem:[#allocation10 + $0x1d0] sm:$0xff]
    %v4235 = vld [vmem:[#allocation10 + $0x1d8] sm:$0xff]
    %v4236 = vld [vmem:[#allocation10 + $0x1e0] sm:$0xff]
    %v4237 = vld [vmem:[#allocation10 + $0x1e8] sm:$0xff]
    %v4238 = vld [vmem:[#allocation10 + $0x1f0] sm:$0xff]
    %v4239 = vld [vmem:[#allocation10 + $0x1f8] sm:$0xff]
    %v4241 = vperm.slane %v4167, 0
    %v4242 = vperm.slane %v4167, 1
    %v4243 = vperm.slane %v4167, 2
    %v4244 = vperm.slane %v4167, 3
    %4249 = vmatpush.msra.mxu0 %v4236
    %4250 = vmatpush.msra.mxu0 %v4232
    %4251 = vmatpush.msra.mxu0 %v4228
    %4252 = vmatpush.msra.mxu0 %v4224
    %4253 = vmatpush.msra.mxu0 %v4220
    %4254 = vmatpush.msra.mxu0 %v4216
    %4255 = vmatpush.msra.mxu0 %v4212
    %4256 = vmatpush.msra.mxu0 %v4208
    %4257 = vmatpush.msra.mxu0 %v4204
    %4258 = vmatpush.msra.mxu0 %v4200
    %4259 = vmatpush.msra.mxu0 %v4196
    %4260 = vmatpush.msra.mxu0 %v4192
    %4261 = vmatpush.msra.mxu0 %v4188
    %4262 = vmatpush.msra.mxu0 %v4184
    %4263 = vmatpush.msra.mxu0 %v4180
    %4264 = vmatpush.msra.mxu0 %v4176
    %4265 = vmatmul.f32.gmra.mxu0 %v4168
    %v4266 = vpop.f32.mrf.mxu0
    %v4267 = vadd.f32 %v4241, %v4266
    %4268 = vmatmul.f32.gmra.mxu0 %v4169
    %v4269 = vpop.f32.mrf.mxu0
    %v4270 = vadd.f32 %v4241, %v4269
    %4271 = vmatmul.f32.gmra.mxu0 %v4170
    %v4272 = vpop.f32.mrf.mxu0
    %v4273 = vadd.f32 %v4241, %v4272
    %4274 = vmatmul.f32.gmra.mxu0 %v4171
    %v4275 = vpop.f32.mrf.mxu0
    %v4276 = vadd.f32 %v4241, %v4275
    %4277 = vmatmul.f32.gmra.mxu0 %v4172
    %v4278 = vpop.f32.mrf.mxu0
    %v4279 = vadd.f32 %v4241, %v4278
    %4280 = vmatmul.f32.gmra.mxu0 %v4173
    %v4281 = vpop.f32.mrf.mxu0
    %v4282 = vadd.f32 %v4241, %v4281
    %4283 = vmatmul.f32.gmra.mxu0 %v4174
    %v4284 = vpop.f32.mrf.mxu0
    %v4285 = vadd.f32 %v4241, %v4284
    %4286 = vmatmul.f32.gmra.mxu0 %v4175
    %v4287 = vpop.f32.mrf.mxu0
    %v4288 = vadd.f32 %v4241, %v4287
    %4289 = vdwg.mxu0
    %4290 = vmatpush.msra.mxu0 %v4237
    %4291 = vmatpush.msra.mxu0 %v4233
    %4292 = vmatpush.msra.mxu0 %v4229
    %4293 = vmatpush.msra.mxu0 %v4225
    %4294 = vmatpush.msra.mxu0 %v4221
    %4295 = vmatpush.msra.mxu0 %v4217
    %4296 = vmatpush.msra.mxu0 %v4213
    %4297 = vmatpush.msra.mxu0 %v4209
    %4298 = vmatpush.msra.mxu0 %v4205
    %4299 = vmatpush.msra.mxu0 %v4201
    %4300 = vmatpush.msra.mxu0 %v4197
    %4301 = vmatpush.msra.mxu0 %v4193
    %4302 = vmatpush.msra.mxu0 %v4189
    %4303 = vmatpush.msra.mxu0 %v4185
    %4304 = vmatpush.msra.mxu0 %v4181
    %4305 = vmatpush.msra.mxu0 %v4177
    %4306 = vmatmul.f32.gmra.mxu0 %v4168
    %v4307 = vpop.f32.mrf.mxu0
    %v4308 = vadd.f32 %v4242, %v4307
    %4309 = vmatmul.f32.gmra.mxu0 %v4169
    %v4310 = vpop.f32.mrf.mxu0
    %v4311 = vadd.f32 %v4242, %v4310
    %4312 = vmatmul.f32.gmra.mxu0 %v4170
    %v4313 = vpop.f32.mrf.mxu0
    %v4314 = vadd.f32 %v4242, %v4313
    %4315 = vmatmul.f32.gmra.mxu0 %v4171
    %v4316 = vpop.f32.mrf.mxu0
    %v4317 = vadd.f32 %v4242, %v4316
    %4318 = vmatmul.f32.gmra.mxu0 %v4172
    %v4319 = vpop.f32.mrf.mxu0
    %v4320 = vadd.f32 %v4242, %v4319
    %4321 = vmatmul.f32.gmra.mxu0 %v4173
    %v4322 = vpop.f32.mrf.mxu0
    %v4323 = vadd.f32 %v4242, %v4322
    %4324 = vmatmul.f32.gmra.mxu0 %v4174
    %v4325 = vpop.f32.mrf.mxu0
    %v4326 = vadd.f32 %v4242, %v4325
    %4327 = vmatmul.f32.gmra.mxu0 %v4175
    %v4328 = vpop.f32.mrf.mxu0
    %v4329 = vadd.f32 %v4242, %v4328
    %4330 = vdwg.mxu0
    %4331 = vmatpush.msra.mxu0 %v4238
    %4332 = vmatpush.msra.mxu0 %v4234
    %4333 = vmatpush.msra.mxu0 %v4230
    %4334 = vmatpush.msra.mxu0 %v4226
    %4335 = vmatpush.msra.mxu0 %v4222
    %4336 = vmatpush.msra.mxu0 %v4218
    %4337 = vmatpush.msra.mxu0 %v4214
    %4338 = vmatpush.msra.mxu0 %v4210
    %4339 = vmatpush.msra.mxu0 %v4206
    %4340 = vmatpush.msra.mxu0 %v4202
    %4341 = vmatpush.msra.mxu0 %v4198
    %4342 = vmatpush.msra.mxu0 %v4194
    %4343 = vmatpush.msra.mxu0 %v4190
    %4344 = vmatpush.msra.mxu0 %v4186
    %4345 = vmatpush.msra.mxu0 %v4182
    %4346 = vmatpush.msra.mxu0 %v4178
    %4347 = vmatmul.f32.gmra.mxu0 %v4168
    %v4348 = vpop.f32.mrf.mxu0
    %v4349 = vadd.f32 %v4243, %v4348
    %4350 = vmatmul.f32.gmra.mxu0 %v4169
    %v4351 = vpop.f32.mrf.mxu0
    %v4352 = vadd.f32 %v4243, %v4351
    %4353 = vmatmul.f32.gmra.mxu0 %v4170
    %v4354 = vpop.f32.mrf.mxu0
    %v4355 = vadd.f32 %v4243, %v4354
    %4356 = vmatmul.f32.gmra.mxu0 %v4171
    %v4357 = vpop.f32.mrf.mxu0
    %v4358 = vadd.f32 %v4243, %v4357
    %4359 = vmatmul.f32.gmra.mxu0 %v4172
    %v4360 = vpop.f32.mrf.mxu0
    %v4361 = vadd.f32 %v4243, %v4360
    %4362 = vmatmul.f32.gmra.mxu0 %v4173
    %v4363 = vpop.f32.mrf.mxu0
    %v4364 = vadd.f32 %v4243, %v4363
    %4365 = vmatmul.f32.gmra.mxu0 %v4174
    %v4366 = vpop.f32.mrf.mxu0
    %v4367 = vadd.f32 %v4243, %v4366
    %4368 = vmatmul.f32.gmra.mxu0 %v4175
    %v4369 = vpop.f32.mrf.mxu0
    %v4370 = vadd.f32 %v4243, %v4369
    %4371 = vdwg.mxu0
    %4372 = vmatpush.msra.mxu0 %v4239
    %4373 = vmatpush.msra.mxu0 %v4235
    %4374 = vmatpush.msra.mxu0 %v4231
    %4375 = vmatpush.msra.mxu0 %v4227
    %4376 = vmatpush.msra.mxu0 %v4223
    %4377 = vmatpush.msra.mxu0 %v4219
    %4378 = vmatpush.msra.mxu0 %v4215
    %4379 = vmatpush.msra.mxu0 %v4211
    %4380 = vmatpush.msra.mxu0 %v4207
    %4381 = vmatpush.msra.mxu0 %v4203
    %4382 = vmatpush.msra.mxu0 %v4199
    %4383 = vmatpush.msra.mxu0 %v4195
    %4384 = vmatpush.msra.mxu0 %v4191
    %4385 = vmatpush.msra.mxu0 %v4187
    %4386 = vmatpush.msra.mxu0 %v4183
    %4387 = vmatpush.msra.mxu0 %v4179
    %4388 = vmatmul.f32.gmra.mxu0 %v4168
    %v4389 = vpop.f32.mrf.mxu0
    %v4390 = vadd.f32 %v4244, %v4389
    %4391 = vmatmul.f32.gmra.mxu0 %v4169
    %v4392 = vpop.f32.mrf.mxu0
    %v4393 = vadd.f32 %v4244, %v4392
    %4394 = vmatmul.f32.gmra.mxu0 %v4170
    %v4395 = vpop.f32.mrf.mxu0
    %v4396 = vadd.f32 %v4244, %v4395
    %4397 = vmatmul.f32.gmra.mxu0 %v4171
    %v4398 = vpop.f32.mrf.mxu0
    %v4399 = vadd.f32 %v4244, %v4398
    %4400 = vmatmul.f32.gmra.mxu0 %v4172
    %v4401 = vpop.f32.mrf.mxu0
    %v4402 = vadd.f32 %v4244, %v4401
    %4403 = vmatmul.f32.gmra.mxu0 %v4173
    %v4404 = vpop.f32.mrf.mxu0
    %v4405 = vadd.f32 %v4244, %v4404
    %4406 = vmatmul.f32.gmra.mxu0 %v4174
    %v4407 = vpop.f32.mrf.mxu0
    %v4408 = vadd.f32 %v4244, %v4407
    %4409 = vmatmul.f32.gmra.mxu0 %v4175
    %v4410 = vpop.f32.mrf.mxu0
    %v4411 = vadd.f32 %v4244, %v4410
    %4412 = vdwg.mxu0
    %4413 = vst [vmem:[#allocation2] sm:$0xff] %v4267
    %4414 = vst [vmem:[#allocation2 + $0x8] sm:$0xff] %v4308
    %4415 = vst [vmem:[#allocation2 + $0x10] sm:$0xff] %v4349
    %4416 = vst [vmem:[#allocation2 + $0x18] sm:$0xff] %v4390
    %4417 = vst [vmem:[#allocation2 + $0x20] sm:$0xff] %v4270
    %4418 = vst [vmem:[#allocation2 + $0x28] sm:$0xff] %v4311
    %4419 = vst [vmem:[#allocation2 + $0x30] sm:$0xff] %v4352
    %4420 = vst [vmem:[#allocation2 + $0x38] sm:$0xff] %v4393
    %4421 = vst [vmem:[#allocation2 + $0x40] sm:$0xff] %v4273
    %4422 = vst [vmem:[#allocation2 + $0x48] sm:$0xff] %v4314
    %4423 = vst [vmem:[#allocation2 + $0x50] sm:$0xff] %v4355
    %4424 = vst [vmem:[#allocation2 + $0x58] sm:$0xff] %v4396
    %4425 = vst [vmem:[#allocation2 + $0x60] sm:$0xff] %v4276
    %4426 = vst [vmem:[#allocation2 + $0x68] sm:$0xff] %v4317
    %4427 = vst [vmem:[#allocation2 + $0x70] sm:$0xff] %v4358
    %4428 = vst [vmem:[#allocation2 + $0x78] sm:$0xff] %v4399
    %4429 = vst [vmem:[#allocation2 + $0x80] sm:$0xff] %v4279
    %4430 = vst [vmem:[#allocation2 + $0x88] sm:$0xff] %v4320
    %4431 = vst [vmem:[#allocation2 + $0x90] sm:$0xff] %v4361
    %4432 = vst [vmem:[#allocation2 + $0x98] sm:$0xff] %v4402
    %4433 = vst [vmem:[#allocation2 + $0xa0] sm:$0xff] %v4282
    %4434 = vst [vmem:[#allocation2 + $0xa8] sm:$0xff] %v4323
    %4435 = vst [vmem:[#allocation2 + $0xb0] sm:$0xff] %v4364
    %4436 = vst [vmem:[#allocation2 + $0xb8] sm:$0xff] %v4405
    %4437 = vst [vmem:[#allocation2 + $0xc0] sm:$0xff] %v4285
    %4438 = vst [vmem:[#allocation2 + $0xc8] sm:$0xff] %v4326
    %4439 = vst [vmem:[#allocation2 + $0xd0] sm:$0xff] %v4367
    %4440 = vst [vmem:[#allocation2 + $0xd8] sm:$0xff] %v4408
    %4441 = vst [vmem:[#allocation2 + $0xe0] sm:$0xff] %v4288
    %4442 = vst [vmem:[#allocation2 + $0xe8] sm:$0xff] %v4329
    %4443 = vst [vmem:[#allocation2 + $0xf0] sm:$0xff] %v4370
    %4444 = vst [vmem:[#allocation2 + $0xf8] sm:$0xff] %v4411
    %v4445 = vld [vmem:[%s401] sm:$0xff]
    %v4446 = vld [vmem:[%s401 + $0x8] sm:$0xff]
    %v4447 = vld [vmem:[%s401 + $0x10] sm:$0xff]
    %v4448 = vld [vmem:[%s401 + $0x18] sm:$0xff]
    %s4449 = scalar_lea.vmem [#allocation12], 1024
    %v4450 = vld [vmem:[%s4449] sm:$0xff]
    %v4451 = vld [vmem:[%s4449 + $0x8] sm:$0xff]
    %v4452 = vld [vmem:[%s4449 + $0x10] sm:$0xff]
    %v4453 = vld [vmem:[%s4449 + $0x18] sm:$0xff]
    %v4454 = vld [vmem:[%s4449 + $0x20] sm:$0xff]
    %v4455 = vld [vmem:[%s4449 + $0x28] sm:$0xff]
    %v4456 = vld [vmem:[%s4449 + $0x30] sm:$0xff]
    %v4457 = vld [vmem:[%s4449 + $0x38] sm:$0xff]
    %v4458 = vld [vmem:[%s4449 + $0x40] sm:$0xff]
    %v4459 = vld [vmem:[%s4449 + $0x48] sm:$0xff]
    %v4460 = vld [vmem:[%s4449 + $0x50] sm:$0xff]
    %v4461 = vld [vmem:[%s4449 + $0x58] sm:$0xff]
    %v4462 = vld [vmem:[%s4449 + $0x60] sm:$0xff]
    %v4463 = vld [vmem:[%s4449 + $0x68] sm:$0xff]
    %v4464 = vld [vmem:[%s4449 + $0x70] sm:$0xff]
    %v4465 = vld [vmem:[%s4449 + $0x78] sm:$0xff]
    %v4466 = vld [vmem:[%s4449 + $0x80] sm:$0xff]
    %v4467 = vld [vmem:[%s4449 + $0x88] sm:$0xff]
    %v4468 = vld [vmem:[%s4449 + $0x90] sm:$0xff]
    %v4469 = vld [vmem:[%s4449 + $0x98] sm:$0xff]
    %v4470 = vld [vmem:[%s4449 + $0xa0] sm:$0xff]
    %v4471 = vld [vmem:[%s4449 + $0xa8] sm:$0xff]
    %v4472 = vld [vmem:[%s4449 + $0xb0] sm:$0xff]
    %v4473 = vld [vmem:[%s4449 + $0xb8] sm:$0xff]
    %v4474 = vld [vmem:[%s4449 + $0xc0] sm:$0xff]
    %v4475 = vld [vmem:[%s4449 + $0xc8] sm:$0xff]
    %v4476 = vld [vmem:[%s4449 + $0xd0] sm:$0xff]
    %v4477 = vld [vmem:[%s4449 + $0xd8] sm:$0xff]
    %v4478 = vld [vmem:[%s4449 + $0xe0] sm:$0xff]
    %v4479 = vld [vmem:[%s4449 + $0xe8] sm:$0xff]
    %v4480 = vld [vmem:[%s4449 + $0xf0] sm:$0xff]
    %v4481 = vld [vmem:[%s4449 + $0xf8] sm:$0xff]
    %v4482 = vld [vmem:[%s4449 + $0x100] sm:$0xff]
    %v4483 = vld [vmem:[%s4449 + $0x108] sm:$0xff]
    %v4484 = vld [vmem:[%s4449 + $0x110] sm:$0xff]
    %v4485 = vld [vmem:[%s4449 + $0x118] sm:$0xff]
    %v4486 = vld [vmem:[%s4449 + $0x120] sm:$0xff]
    %v4487 = vld [vmem:[%s4449 + $0x128] sm:$0xff]
    %v4488 = vld [vmem:[%s4449 + $0x130] sm:$0xff]
    %v4489 = vld [vmem:[%s4449 + $0x138] sm:$0xff]
    %v4490 = vld [vmem:[%s4449 + $0x140] sm:$0xff]
    %v4491 = vld [vmem:[%s4449 + $0x148] sm:$0xff]
    %v4492 = vld [vmem:[%s4449 + $0x150] sm:$0xff]
    %v4493 = vld [vmem:[%s4449 + $0x158] sm:$0xff]
    %v4494 = vld [vmem:[%s4449 + $0x160] sm:$0xff]
    %v4495 = vld [vmem:[%s4449 + $0x168] sm:$0xff]
    %v4496 = vld [vmem:[%s4449 + $0x170] sm:$0xff]
    %v4497 = vld [vmem:[%s4449 + $0x178] sm:$0xff]
    %v4498 = vld [vmem:[%s4449 + $0x180] sm:$0xff]
    %v4499 = vld [vmem:[%s4449 + $0x188] sm:$0xff]
    %v4500 = vld [vmem:[%s4449 + $0x190] sm:$0xff]
    %v4501 = vld [vmem:[%s4449 + $0x198] sm:$0xff]
    %v4502 = vld [vmem:[%s4449 + $0x1a0] sm:$0xff]
    %v4503 = vld [vmem:[%s4449 + $0x1a8] sm:$0xff]
    %v4504 = vld [vmem:[%s4449 + $0x1b0] sm:$0xff]
    %v4505 = vld [vmem:[%s4449 + $0x1b8] sm:$0xff]
    %v4506 = vld [vmem:[%s4449 + $0x1c0] sm:$0xff]
    %v4507 = vld [vmem:[%s4449 + $0x1c8] sm:$0xff]
    %v4508 = vld [vmem:[%s4449 + $0x1d0] sm:$0xff]
    %v4509 = vld [vmem:[%s4449 + $0x1d8] sm:$0xff]
    %v4510 = vld [vmem:[%s4449 + $0x1e0] sm:$0xff]
    %v4511 = vld [vmem:[%s4449 + $0x1e8] sm:$0xff]
    %v4512 = vld [vmem:[%s4449 + $0x1f0] sm:$0xff]
    %v4513 = vld [vmem:[%s4449 + $0x1f8] sm:$0xff]
    %4514 = vmatpush.msra.mxu0 %v4510
    %4515 = vmatpush.msra.mxu0 %v4506
    %4516 = vmatpush.msra.mxu0 %v4502
    %4517 = vmatpush.msra.mxu0 %v4498
    %4518 = vmatpush.msra.mxu0 %v4494
    %4519 = vmatpush.msra.mxu0 %v4490
    %4520 = vmatpush.msra.mxu0 %v4486
    %4521 = vmatpush.msra.mxu0 %v4482
    %4522 = vmatpush.msra.mxu0 %v4478
    %4523 = vmatpush.msra.mxu0 %v4474
    %4524 = vmatpush.msra.mxu0 %v4470
    %4525 = vmatpush.msra.mxu0 %v4466
    %4526 = vmatpush.msra.mxu0 %v4462
    %4527 = vmatpush.msra.mxu0 %v4458
    %4528 = vmatpush.msra.mxu0 %v4454
    %4529 = vmatpush.msra.mxu0 %v4450
    %4530 = vmatmul.f32.gmra.mxu0 0.0
    %v4531 = vpop.f32.mrf.mxu0
    %v4532 = vadd.f32 0.0, %v4531
    %4533 = vdwg.mxu0
    %4534 = vmatpush.msra.mxu0 %v4511
    %4535 = vmatpush.msra.mxu0 %v4507
    %4536 = vmatpush.msra.mxu0 %v4503
    %4537 = vmatpush.msra.mxu0 %v4499
    %4538 = vmatpush.msra.mxu0 %v4495
    %4539 = vmatpush.msra.mxu0 %v4491
    %4540 = vmatpush.msra.mxu0 %v4487
    %4541 = vmatpush.msra.mxu0 %v4483
    %4542 = vmatpush.msra.mxu0 %v4479
    %4543 = vmatpush.msra.mxu0 %v4475
    %4544 = vmatpush.msra.mxu0 %v4471
    %4545 = vmatpush.msra.mxu0 %v4467
    %4546 = vmatpush.msra.mxu0 %v4463
    %4547 = vmatpush.msra.mxu0 %v4459
    %4548 = vmatpush.msra.mxu0 %v4455
    %4549 = vmatpush.msra.mxu0 %v4451
    %4550 = vmatmul.f32.gmra.mxu0 0.0
    %v4551 = vpop.f32.mrf.mxu0
    %v4552 = vadd.f32 0.0, %v4551
    %4553 = vdwg.mxu0
    %4554 = vmatpush.msra.mxu0 %v4512
    %4555 = vmatpush.msra.mxu0 %v4508
    %4556 = vmatpush.msra.mxu0 %v4504
    %4557 = vmatpush.msra.mxu0 %v4500
    %4558 = vmatpush.msra.mxu0 %v4496
    %4559 = vmatpush.msra.mxu0 %v4492
    %4560 = vmatpush.msra.mxu0 %v4488
    %4561 = vmatpush.msra.mxu0 %v4484
    %4562 = vmatpush.msra.mxu0 %v4480
    %4563 = vmatpush.msra.mxu0 %v4476
    %4564 = vmatpush.msra.mxu0 %v4472
    %4565 = vmatpush.msra.mxu0 %v4468
    %4566 = vmatpush.msra.mxu0 %v4464
    %4567 = vmatpush.msra.mxu0 %v4460
    %4568 = vmatpush.msra.mxu0 %v4456
    %4569 = vmatpush.msra.mxu0 %v4452
    %4570 = vmatmul.f32.gmra.mxu0 0.0
    %v4571 = vpop.f32.mrf.mxu0
    %v4572 = vadd.f32 0.0, %v4571
    %4573 = vdwg.mxu0
    %4574 = vmatpush.msra.mxu0 %v4513
    %4575 = vmatpush.msra.mxu0 %v4509
    %4576 = vmatpush.msra.mxu0 %v4505
    %4577 = vmatpush.msra.mxu0 %v4501
    %4578 = vmatpush.msra.mxu0 %v4497
    %4579 = vmatpush.msra.mxu0 %v4493
    %4580 = vmatpush.msra.mxu0 %v4489
    %4581 = vmatpush.msra.mxu0 %v4485
    %4582 = vmatpush.msra.mxu0 %v4481
    %4583 = vmatpush.msra.mxu0 %v4477
    %4584 = vmatpush.msra.mxu0 %v4473
    %4585 = vmatpush.msra.mxu0 %v4469
    %4586 = vmatpush.msra.mxu0 %v4465
    %4587 = vmatpush.msra.mxu0 %v4461
    %4588 = vmatpush.msra.mxu0 %v4457
    %4589 = vmatpush.msra.mxu0 %v4453
    %4590 = vmatmul.f32.gmra.mxu0 0.0
    %v4591 = vpop.f32.mrf.mxu0
    %v4592 = vadd.f32 0.0, %v4591
    %4593 = vdwg.mxu0
    %v4594 = vadd.f32 %v4445, %v4532
    %v4595 = vadd.f32 %v4446, %v4552
    %v4596 = vadd.f32 %v4447, %v4572
    %v4597 = vadd.f32 %v4448, %v4592
    %v4598 = vxor.u32 %v4594, 2147483648
    %v4599 = vxor.u32 %v4595, 2147483648
    %v4600 = vxor.u32 %v4596, 2147483648
    %v4601 = vmul.f32 %v4598, 1.442695
    %v4602 = vpow.pop %v4601
    %v4603 = vmul.f32 %v4599, 1.442695
    %v4604 = vpow.pop %v4603
    %v4605 = vmul.f32 %v4600, 1.442695
    %v4606 = vpow.pop %v4605
    %v4607 = vadd.f32 %v4602, 1.0
    %v4608 = vadd.f32 %v4604, 1.0
    %v4609 = vadd.f32 %v4606, 1.0
    %v4610 = vrcp.pop %v4607
    %v4611 = vmul.f32 %v4607, %v4610
    %v4612 = vsub.f32 1.0, %v4611
    %v4613 = vmul.f32 %v4610, %v4612
    %v4614 = vadd.f32 %v4610, %v4613
    %vm4615 = vweird.f32 %v4607
    %vm4616 = vweird.f32 %v4610
    %vm4617 = vmor %vm4615, %vm4616
    %v4618 = vsel %vm4617, %v4610, %v4614
    %v4619 = vand.u32 2147483647, %v4607
    %vm4620 = vcmp.eq.f32.partialorder %v4619, 8.507059e+37
    %v4621 = vand.u32 %v4607, 2147483648
    %v4622 = vor.u32 1.1754944e-38, %v4621
    %v4623 = vsel %vm4620, %v4622, %v4618
    %v4624 = vmul.f32 1.0, %v4623
    %v4625 = vrcp.pop %v4608
    %v4626 = vmul.f32 %v4608, %v4625
    %v4627 = vsub.f32 1.0, %v4626
    %v4628 = vmul.f32 %v4625, %v4627
    %v4629 = vadd.f32 %v4625, %v4628
    %vm4630 = vweird.f32 %v4608
    %vm4631 = vweird.f32 %v4625
    %vm4632 = vmor %vm4630, %vm4631
    %v4633 = vsel %vm4632, %v4625, %v4629
    %v4634 = vand.u32 2147483647, %v4608
    %vm4635 = vcmp.eq.f32.partialorder %v4634, 8.507059e+37
    %v4636 = vand.u32 %v4608, 2147483648
    %v4637 = vor.u32 1.1754944e-38, %v4636
    %v4638 = vsel %vm4635, %v4637, %v4633
    %v4639 = vmul.f32 1.0, %v4638
    %v4640 = vrcp.pop %v4609
    %v4641 = vmul.f32 %v4609, %v4640
    %v4642 = vsub.f32 1.0, %v4641
    %v4643 = vmul.f32 %v4640, %v4642
    %v4644 = vadd.f32 %v4640, %v4643
    %vm4645 = vweird.f32 %v4609
    %vm4646 = vweird.f32 %v4640
    %vm4647 = vmor %vm4645, %vm4646
    %v4648 = vsel %vm4647, %v4640, %v4644
    %v4649 = vand.u32 2147483647, %v4609
    %vm4650 = vcmp.eq.f32.partialorder %v4649, 8.507059e+37
    %v4651 = vand.u32 %v4609, 2147483648
    %v4652 = vor.u32 1.1754944e-38, %v4651
    %v4653 = vsel %vm4650, %v4652, %v4648
    %v4654 = vmul.f32 1.0, %v4653
    %v4655 = vtanh.pop %v4597
    %v4656 = vmul.f32 %v4639, 0.0
    %v4657 = vmul.f32 %v4624, %v4655
    %v4658 = vadd.f32 %v4656, %v4657
    %v4659 = vtanh.pop %v4658
    %v4660 = vmul.f32 %v4654, %v4659
    %vm4661 = vcmp.eq.s32.totalorder %v127, 1
    %v4662 = vsel %vm4661, 1, 0
    %4663 = vset.pattern.permute.xlu0 0
    %4664 = vperm.xlu0 %4663, %v4662
    %v4665 = vpop.permute.xlu0 %4664
    %vm4666 = vcmp.eq.s32.totalorder %v4665, 1
    %v4667 = vsel %vm4666, %v4660, 0.0
    %v4668 = vld [vmem:[%s620] sm:$0xff]
    %v4669 = vld [vmem:[%s620 + $0x8] sm:$0xff]
    %v4670 = vld [vmem:[%s620 + $0x10] sm:$0xff]
    %v4671 = vld [vmem:[%s620 + $0x18] sm:$0xff]
    %4672 = vmatpush.msra.mxu0 %v4510
    %4673 = vmatpush.msra.mxu0 %v4506
    %4674 = vmatpush.msra.mxu0 %v4502
    %4675 = vmatpush.msra.mxu0 %v4498
    %4676 = vmatpush.msra.mxu0 %v4494
    %4677 = vmatpush.msra.mxu0 %v4490
    %4678 = vmatpush.msra.mxu0 %v4486
    %4679 = vmatpush.msra.mxu0 %v4482
    %4680 = vmatpush.msra.mxu0 %v4478
    %4681 = vmatpush.msra.mxu0 %v4474
    %4682 = vmatpush.msra.mxu0 %v4470
    %4683 = vmatpush.msra.mxu0 %v4466
    %4684 = vmatpush.msra.mxu0 %v4462
    %4685 = vmatpush.msra.mxu0 %v4458
    %4686 = vmatpush.msra.mxu0 %v4454
    %4687 = vmatpush.msra.mxu0 %v4450
    %4688 = vmatmul.f32.gmra.mxu0 %v4660
    %v4689 = vpop.f32.mrf.mxu0
    %v4690 = vadd.f32 0.0, %v4689
    %4691 = vdwg.mxu0
    %4692 = vmatpush.msra.mxu0 %v4511
    %4693 = vmatpush.msra.mxu0 %v4507
    %4694 = vmatpush.msra.mxu0 %v4503
    %4695 = vmatpush.msra.mxu0 %v4499
    %4696 = vmatpush.msra.mxu0 %v4495
    %4697 = vmatpush.msra.mxu0 %v4491
    %4698 = vmatpush.msra.mxu0 %v4487
    %4699 = vmatpush.msra.mxu0 %v4483
    %4700 = vmatpush.msra.mxu0 %v4479
    %4701 = vmatpush.msra.mxu0 %v4475
    %4702 = vmatpush.msra.mxu0 %v4471
    %4703 = vmatpush.msra.mxu0 %v4467
    %4704 = vmatpush.msra.mxu0 %v4463
    %4705 = vmatpush.msra.mxu0 %v4459
    %4706 = vmatpush.msra.mxu0 %v4455
    %4707 = vmatpush.msra.mxu0 %v4451
    %4708 = vmatmul.f32.gmra.mxu0 %v4660
    %v4709 = vpop.f32.mrf.mxu0
    %v4710 = vadd.f32 0.0, %v4709
    %4711 = vdwg.mxu0
    %4712 = vmatpush.msra.mxu0 %v4512
    %4713 = vmatpush.msra.mxu0 %v4508
    %4714 = vmatpush.msra.mxu0 %v4504
    %4715 = vmatpush.msra.mxu0 %v4500
    %4716 = vmatpush.msra.mxu0 %v4496
    %4717 = vmatpush.msra.mxu0 %v4492
    %4718 = vmatpush.msra.mxu0 %v4488
    %4719 = vmatpush.msra.mxu0 %v4484
    %4720 = vmatpush.msra.mxu0 %v4480
    %4721 = vmatpush.msra.mxu0 %v4476
    %4722 = vmatpush.msra.mxu0 %v4472
    %4723 = vmatpush.msra.mxu0 %v4468
    %4724 = vmatpush.msra.mxu0 %v4464
    %4725 = vmatpush.msra.mxu0 %v4460
    %4726 = vmatpush.msra.mxu0 %v4456
    %4727 = vmatpush.msra.mxu0 %v4452
    %4728 = vmatmul.f32.gmra.mxu0 %v4660
    %v4729 = vpop.f32.mrf.mxu0
    %v4730 = vadd.f32 0.0, %v4729
    %4731 = vdwg.mxu0
    %4732 = vmatpush.msra.mxu0 %v4513
    %4733 = vmatpush.msra.mxu0 %v4509
    %4734 = vmatpush.msra.mxu0 %v4505
    %4735 = vmatpush.msra.mxu0 %v4501
    %4736 = vmatpush.msra.mxu0 %v4497
    %4737 = vmatpush.msra.mxu0 %v4493
    %4738 = vmatpush.msra.mxu0 %v4489
    %4739 = vmatpush.msra.mxu0 %v4485
    %4740 = vmatpush.msra.mxu0 %v4481
    %4741 = vmatpush.msra.mxu0 %v4477
    %4742 = vmatpush.msra.mxu0 %v4473
    %4743 = vmatpush.msra.mxu0 %v4469
    %4744 = vmatpush.msra.mxu0 %v4465
    %4745 = vmatpush.msra.mxu0 %v4461
    %4746 = vmatpush.msra.mxu0 %v4457
    %4747 = vmatpush.msra.mxu0 %v4453
    %4748 = vmatmul.f32.gmra.mxu0 %v4660
    %v4749 = vpop.f32.mrf.mxu0
    %v4750 = vadd.f32 0.0, %v4749
    %4751 = vdwg.mxu0
    %v4752 = vadd.f32 %v4668, %v4690
    %v4753 = vadd.f32 %v4669, %v4710
    %v4754 = vadd.f32 %v4670, %v4730
    %v4755 = vadd.f32 %v4671, %v4750
    %v4756 = vxor.u32 %v4752, 2147483648
    %v4757 = vxor.u32 %v4753, 2147483648
    %v4758 = vxor.u32 %v4754, 2147483648
    %v4759 = vmul.f32 %v4756, 1.442695
    %v4760 = vpow.pop %v4759
    %v4761 = vmul.f32 %v4757, 1.442695
    %v4762 = vpow.pop %v4761
    %v4763 = vmul.f32 %v4758, 1.442695
    %v4764 = vpow.pop %v4763
    %v4765 = vadd.f32 %v4760, 1.0
    %v4766 = vadd.f32 %v4762, 1.0
    %v4767 = vadd.f32 %v4764, 1.0
    %v4768 = vrcp.pop %v4765
    %v4769 = vmul.f32 %v4765, %v4768
    %v4770 = vsub.f32 1.0, %v4769
    %v4771 = vmul.f32 %v4768, %v4770
    %v4772 = vadd.f32 %v4768, %v4771
    %vm4773 = vweird.f32 %v4765
    %vm4774 = vweird.f32 %v4768
    %vm4775 = vmor %vm4773, %vm4774
    %v4776 = vsel %vm4775, %v4768, %v4772
    %v4777 = vand.u32 2147483647, %v4765
    %vm4778 = vcmp.eq.f32.partialorder %v4777, 8.507059e+37
    %v4779 = vand.u32 %v4765, 2147483648
    %v4780 = vor.u32 1.1754944e-38, %v4779
    %v4781 = vsel %vm4778, %v4780, %v4776
    %v4782 = vmul.f32 1.0, %v4781
    %v4783 = vrcp.pop %v4766
    %v4784 = vmul.f32 %v4766, %v4783
    %v4785 = vsub.f32 1.0, %v4784
    %v4786 = vmul.f32 %v4783, %v4785
    %v4787 = vadd.f32 %v4783, %v4786
    %vm4788 = vweird.f32 %v4766
    %vm4789 = vweird.f32 %v4783
    %vm4790 = vmor %vm4788, %vm4789
    %v4791 = vsel %vm4790, %v4783, %v4787
    %v4792 = vand.u32 2147483647, %v4766
    %vm4793 = vcmp.eq.f32.partialorder %v4792, 8.507059e+37
    %v4794 = vand.u32 %v4766, 2147483648
    %v4795 = vor.u32 1.1754944e-38, %v4794
    %v4796 = vsel %vm4793, %v4795, %v4791
    %v4797 = vmul.f32 1.0, %v4796
    %v4798 = vrcp.pop %v4767
    %v4799 = vmul.f32 %v4767, %v4798
    %v4800 = vsub.f32 1.0, %v4799
    %v4801 = vmul.f32 %v4798, %v4800
    %v4802 = vadd.f32 %v4798, %v4801
    %vm4803 = vweird.f32 %v4767
    %vm4804 = vweird.f32 %v4798
    %vm4805 = vmor %vm4803, %vm4804
    %v4806 = vsel %vm4805, %v4798, %v4802
    %v4807 = vand.u32 2147483647, %v4767
    %vm4808 = vcmp.eq.f32.partialorder %v4807, 8.507059e+37
    %v4809 = vand.u32 %v4767, 2147483648
    %v4810 = vor.u32 1.1754944e-38, %v4809
    %v4811 = vsel %vm4808, %v4810, %v4806
    %v4812 = vmul.f32 1.0, %v4811
    %v4813 = vtanh.pop %v4755
    %v4814 = vmul.f32 %v4797, %v4658
    %v4815 = vmul.f32 %v4782, %v4813
    %v4816 = vadd.f32 %v4814, %v4815
    %v4817 = vtanh.pop %v4816
    %v4818 = vmul.f32 %v4812, %v4817
    %vm4819 = vcmp.eq.s32.totalorder %v127, 2
    %v4820 = vsel %vm4819, 1, 0
    %4821 = vset.pattern.permute.xlu0 0
    %4822 = vperm.xlu0 %4821, %v4820
    %v4823 = vpop.permute.xlu0 %4822
    %vm4824 = vcmp.eq.s32.totalorder %v4823, 1
    %v4825 = vsel %vm4824, %v4818, %v4667
    %v4826 = vld [vmem:[%s840] sm:$0xff]
    %v4827 = vld [vmem:[%s840 + $0x8] sm:$0xff]
    %v4828 = vld [vmem:[%s840 + $0x10] sm:$0xff]
    %v4829 = vld [vmem:[%s840 + $0x18] sm:$0xff]
    %4830 = vmatpush.msra.mxu0 %v4510
    %4831 = vmatpush.msra.mxu0 %v4506
    %4832 = vmatpush.msra.mxu0 %v4502
    %4833 = vmatpush.msra.mxu0 %v4498
    %4834 = vmatpush.msra.mxu0 %v4494
    %4835 = vmatpush.msra.mxu0 %v4490
    %4836 = vmatpush.msra.mxu0 %v4486
    %4837 = vmatpush.msra.mxu0 %v4482
    %4838 = vmatpush.msra.mxu0 %v4478
    %4839 = vmatpush.msra.mxu0 %v4474
    %4840 = vmatpush.msra.mxu0 %v4470
    %4841 = vmatpush.msra.mxu0 %v4466
    %4842 = vmatpush.msra.mxu0 %v4462
    %4843 = vmatpush.msra.mxu0 %v4458
    %4844 = vmatpush.msra.mxu0 %v4454
    %4845 = vmatpush.msra.mxu0 %v4450
    %4846 = vmatmul.f32.gmra.mxu0 %v4818
    %v4847 = vpop.f32.mrf.mxu0
    %v4848 = vadd.f32 0.0, %v4847
    %4849 = vdwg.mxu0
    %4850 = vmatpush.msra.mxu0 %v4511
    %4851 = vmatpush.msra.mxu0 %v4507
    %4852 = vmatpush.msra.mxu0 %v4503
    %4853 = vmatpush.msra.mxu0 %v4499
    %4854 = vmatpush.msra.mxu0 %v4495
    %4855 = vmatpush.msra.mxu0 %v4491
    %4856 = vmatpush.msra.mxu0 %v4487
    %4857 = vmatpush.msra.mxu0 %v4483
    %4858 = vmatpush.msra.mxu0 %v4479
    %4859 = vmatpush.msra.mxu0 %v4475
    %4860 = vmatpush.msra.mxu0 %v4471
    %4861 = vmatpush.msra.mxu0 %v4467
    %4862 = vmatpush.msra.mxu0 %v4463
    %4863 = vmatpush.msra.mxu0 %v4459
    %4864 = vmatpush.msra.mxu0 %v4455
    %4865 = vmatpush.msra.mxu0 %v4451
    %4866 = vmatmul.f32.gmra.mxu0 %v4818
    %v4867 = vpop.f32.mrf.mxu0
    %v4868 = vadd.f32 0.0, %v4867
    %4869 = vdwg.mxu0
    %4870 = vmatpush.msra.mxu0 %v4512
    %4871 = vmatpush.msra.mxu0 %v4508
    %4872 = vmatpush.msra.mxu0 %v4504
    %4873 = vmatpush.msra.mxu0 %v4500
    %4874 = vmatpush.msra.mxu0 %v4496
    %4875 = vmatpush.msra.mxu0 %v4492
    %4876 = vmatpush.msra.mxu0 %v4488
    %4877 = vmatpush.msra.mxu0 %v4484
    %4878 = vmatpush.msra.mxu0 %v4480
    %4879 = vmatpush.msra.mxu0 %v4476
    %4880 = vmatpush.msra.mxu0 %v4472
    %4881 = vmatpush.msra.mxu0 %v4468
    %4882 = vmatpush.msra.mxu0 %v4464
    %4883 = vmatpush.msra.mxu0 %v4460
    %4884 = vmatpush.msra.mxu0 %v4456
    %4885 = vmatpush.msra.mxu0 %v4452
    %4886 = vmatmul.f32.gmra.mxu0 %v4818
    %v4887 = vpop.f32.mrf.mxu0
    %v4888 = vadd.f32 0.0, %v4887
    %4889 = vdwg.mxu0
    %4890 = vmatpush.msra.mxu0 %v4513
    %4891 = vmatpush.msra.mxu0 %v4509
    %4892 = vmatpush.msra.mxu0 %v4505
    %4893 = vmatpush.msra.mxu0 %v4501
    %4894 = vmatpush.msra.mxu0 %v4497
    %4895 = vmatpush.msra.mxu0 %v4493
    %4896 = vmatpush.msra.mxu0 %v4489
    %4897 = vmatpush.msra.mxu0 %v4485
    %4898 = vmatpush.msra.mxu0 %v4481
    %4899 = vmatpush.msra.mxu0 %v4477
    %4900 = vmatpush.msra.mxu0 %v4473
    %4901 = vmatpush.msra.mxu0 %v4469
    %4902 = vmatpush.msra.mxu0 %v4465
    %4903 = vmatpush.msra.mxu0 %v4461
    %4904 = vmatpush.msra.mxu0 %v4457
    %4905 = vmatpush.msra.mxu0 %v4453
    %4906 = vmatmul.f32.gmra.mxu0 %v4818
    %v4907 = vpop.f32.mrf.mxu0
    %v4908 = vadd.f32 0.0, %v4907
    %4909 = vdwg.mxu0
    %v4910 = vadd.f32 %v4826, %v4848
    %v4911 = vadd.f32 %v4827, %v4868
    %v4912 = vadd.f32 %v4828, %v4888
    %v4913 = vadd.f32 %v4829, %v4908
    %v4914 = vxor.u32 %v4910, 2147483648
    %v4915 = vxor.u32 %v4911, 2147483648
    %v4916 = vxor.u32 %v4912, 2147483648
    %v4917 = vmul.f32 %v4914, 1.442695
    %v4918 = vpow.pop %v4917
    %v4919 = vmul.f32 %v4915, 1.442695
    %v4920 = vpow.pop %v4919
    %v4921 = vmul.f32 %v4916, 1.442695
    %v4922 = vpow.pop %v4921
    %v4923 = vadd.f32 %v4918, 1.0
    %v4924 = vadd.f32 %v4920, 1.0
    %v4925 = vadd.f32 %v4922, 1.0
    %v4926 = vrcp.pop %v4923
    %v4927 = vmul.f32 %v4923, %v4926
    %v4928 = vsub.f32 1.0, %v4927
    %v4929 = vmul.f32 %v4926, %v4928
    %v4930 = vadd.f32 %v4926, %v4929
    %vm4931 = vweird.f32 %v4923
    %vm4932 = vweird.f32 %v4926
    %vm4933 = vmor %vm4931, %vm4932
    %v4934 = vsel %vm4933, %v4926, %v4930
    %v4935 = vand.u32 2147483647, %v4923
    %vm4936 = vcmp.eq.f32.partialorder %v4935, 8.507059e+37
    %v4937 = vand.u32 %v4923, 2147483648
    %v4938 = vor.u32 1.1754944e-38, %v4937
    %v4939 = vsel %vm4936, %v4938, %v4934
    %v4940 = vmul.f32 1.0, %v4939
    %v4941 = vrcp.pop %v4924
    %v4942 = vmul.f32 %v4924, %v4941
    %v4943 = vsub.f32 1.0, %v4942
    %v4944 = vmul.f32 %v4941, %v4943
    %v4945 = vadd.f32 %v4941, %v4944
    %vm4946 = vweird.f32 %v4924
    %vm4947 = vweird.f32 %v4941
    %vm4948 = vmor %vm4946, %vm4947
    %v4949 = vsel %vm4948, %v4941, %v4945
    %v4950 = vand.u32 2147483647, %v4924
    %vm4951 = vcmp.eq.f32.partialorder %v4950, 8.507059e+37
    %v4952 = vand.u32 %v4924, 2147483648
    %v4953 = vor.u32 1.1754944e-38, %v4952
    %v4954 = vsel %vm4951, %v4953, %v4949
    %v4955 = vmul.f32 1.0, %v4954
    %v4956 = vrcp.pop %v4925
    %v4957 = vmul.f32 %v4925, %v4956
    %v4958 = vsub.f32 1.0, %v4957
    %v4959 = vmul.f32 %v4956, %v4958
    %v4960 = vadd.f32 %v4956, %v4959
    %vm4961 = vweird.f32 %v4925
    %vm4962 = vweird.f32 %v4956
    %vm4963 = vmor %vm4961, %vm4962
    %v4964 = vsel %vm4963, %v4956, %v4960
    %v4965 = vand.u32 2147483647, %v4925
    %vm4966 = vcmp.eq.f32.partialorder %v4965, 8.507059e+37
    %v4967 = vand.u32 %v4925, 2147483648
    %v4968 = vor.u32 1.1754944e-38, %v4967
    %v4969 = vsel %vm4966, %v4968, %v4964
    %v4970 = vmul.f32 1.0, %v4969
    %v4971 = vtanh.pop %v4913
    %v4972 = vmul.f32 %v4955, %v4816
    %v4973 = vmul.f32 %v4940, %v4971
    %v4974 = vadd.f32 %v4972, %v4973
    %v4975 = vtanh.pop %v4974
    %v4976 = vmul.f32 %v4970, %v4975
    %vm4977 = vcmp.eq.s32.totalorder %v127, 3
    %v4978 = vsel %vm4977, 1, 0
    %4979 = vset.pattern.permute.xlu0 0
    %4980 = vperm.xlu0 %4979, %v4978
    %v4981 = vpop.permute.xlu0 %4980
    %vm4982 = vcmp.eq.s32.totalorder %v4981, 1
    %v4983 = vsel %vm4982, %v4976, %v4825
    %v4984 = vld [vmem:[%s1060] sm:$0xff]
    %v4985 = vld [vmem:[%s1060 + $0x8] sm:$0xff]
    %v4986 = vld [vmem:[%s1060 + $0x10] sm:$0xff]
    %v4987 = vld [vmem:[%s1060 + $0x18] sm:$0xff]
    %4988 = vmatpush.msra.mxu0 %v4510
    %4989 = vmatpush.msra.mxu0 %v4506
    %4990 = vmatpush.msra.mxu0 %v4502
    %4991 = vmatpush.msra.mxu0 %v4498
    %4992 = vmatpush.msra.mxu0 %v4494
    %4993 = vmatpush.msra.mxu0 %v4490
    %4994 = vmatpush.msra.mxu0 %v4486
    %4995 = vmatpush.msra.mxu0 %v4482
    %4996 = vmatpush.msra.mxu0 %v4478
    %4997 = vmatpush.msra.mxu0 %v4474
    %4998 = vmatpush.msra.mxu0 %v4470
    %4999 = vmatpush.msra.mxu0 %v4466
    %5000 = vmatpush.msra.mxu0 %v4462
    %5001 = vmatpush.msra.mxu0 %v4458
    %5002 = vmatpush.msra.mxu0 %v4454
    %5003 = vmatpush.msra.mxu0 %v4450
    %5004 = vmatmul.f32.gmra.mxu0 %v4976
    %v5005 = vpop.f32.mrf.mxu0
    %v5006 = vadd.f32 0.0, %v5005
    %5007 = vdwg.mxu0
    %5008 = vmatpush.msra.mxu0 %v4511
    %5009 = vmatpush.msra.mxu0 %v4507
    %5010 = vmatpush.msra.mxu0 %v4503
    %5011 = vmatpush.msra.mxu0 %v4499
    %5012 = vmatpush.msra.mxu0 %v4495
    %5013 = vmatpush.msra.mxu0 %v4491
    %5014 = vmatpush.msra.mxu0 %v4487
    %5015 = vmatpush.msra.mxu0 %v4483
    %5016 = vmatpush.msra.mxu0 %v4479
    %5017 = vmatpush.msra.mxu0 %v4475
    %5018 = vmatpush.msra.mxu0 %v4471
    %5019 = vmatpush.msra.mxu0 %v4467
    %5020 = vmatpush.msra.mxu0 %v4463
    %5021 = vmatpush.msra.mxu0 %v4459
    %5022 = vmatpush.msra.mxu0 %v4455
    %5023 = vmatpush.msra.mxu0 %v4451
    %5024 = vmatmul.f32.gmra.mxu0 %v4976
    %v5025 = vpop.f32.mrf.mxu0
    %v5026 = vadd.f32 0.0, %v5025
    %5027 = vdwg.mxu0
    %5028 = vmatpush.msra.mxu0 %v4512
    %5029 = vmatpush.msra.mxu0 %v4508
    %5030 = vmatpush.msra.mxu0 %v4504
    %5031 = vmatpush.msra.mxu0 %v4500
    %5032 = vmatpush.msra.mxu0 %v4496
    %5033 = vmatpush.msra.mxu0 %v4492
    %5034 = vmatpush.msra.mxu0 %v4488
    %5035 = vmatpush.msra.mxu0 %v4484
    %5036 = vmatpush.msra.mxu0 %v4480
    %5037 = vmatpush.msra.mxu0 %v4476
    %5038 = vmatpush.msra.mxu0 %v4472
    %5039 = vmatpush.msra.mxu0 %v4468
    %5040 = vmatpush.msra.mxu0 %v4464
    %5041 = vmatpush.msra.mxu0 %v4460
    %5042 = vmatpush.msra.mxu0 %v4456
    %5043 = vmatpush.msra.mxu0 %v4452
    %5044 = vmatmul.f32.gmra.mxu0 %v4976
    %v5045 = vpop.f32.mrf.mxu0
    %v5046 = vadd.f32 0.0, %v5045
    %5047 = vdwg.mxu0
    %5048 = vmatpush.msra.mxu0 %v4513
    %5049 = vmatpush.msra.mxu0 %v4509
    %5050 = vmatpush.msra.mxu0 %v4505
    %5051 = vmatpush.msra.mxu0 %v4501
    %5052 = vmatpush.msra.mxu0 %v4497
    %5053 = vmatpush.msra.mxu0 %v4493
    %5054 = vmatpush.msra.mxu0 %v4489
    %5055 = vmatpush.msra.mxu0 %v4485
    %5056 = vmatpush.msra.mxu0 %v4481
    %5057 = vmatpush.msra.mxu0 %v4477
    %5058 = vmatpush.msra.mxu0 %v4473
    %5059 = vmatpush.msra.mxu0 %v4469
    %5060 = vmatpush.msra.mxu0 %v4465
    %5061 = vmatpush.msra.mxu0 %v4461
    %5062 = vmatpush.msra.mxu0 %v4457
    %5063 = vmatpush.msra.mxu0 %v4453
    %5064 = vmatmul.f32.gmra.mxu0 %v4976
    %v5065 = vpop.f32.mrf.mxu0
    %v5066 = vadd.f32 0.0, %v5065
    %5067 = vdwg.mxu0
    %v5068 = vadd.f32 %v4984, %v5006
    %v5069 = vadd.f32 %v4985, %v5026
    %v5070 = vadd.f32 %v4986, %v5046
    %v5071 = vadd.f32 %v4987, %v5066
    %v5072 = vxor.u32 %v5068, 2147483648
    %v5073 = vxor.u32 %v5069, 2147483648
    %v5074 = vxor.u32 %v5070, 2147483648
    %v5075 = vmul.f32 %v5072, 1.442695
    %v5076 = vpow.pop %v5075
    %v5077 = vmul.f32 %v5073, 1.442695
    %v5078 = vpow.pop %v5077
    %v5079 = vmul.f32 %v5074, 1.442695
    %v5080 = vpow.pop %v5079
    %v5081 = vadd.f32 %v5076, 1.0
    %v5082 = vadd.f32 %v5078, 1.0
    %v5083 = vadd.f32 %v5080, 1.0
    %v5084 = vrcp.pop %v5081
    %v5085 = vmul.f32 %v5081, %v5084
    %v5086 = vsub.f32 1.0, %v5085
    %v5087 = vmul.f32 %v5084, %v5086
    %v5088 = vadd.f32 %v5084, %v5087
    %vm5089 = vweird.f32 %v5081
    %vm5090 = vweird.f32 %v5084
    %vm5091 = vmor %vm5089, %vm5090
    %v5092 = vsel %vm5091, %v5084, %v5088
    %v5093 = vand.u32 2147483647, %v5081
    %vm5094 = vcmp.eq.f32.partialorder %v5093, 8.507059e+37
    %v5095 = vand.u32 %v5081, 2147483648
    %v5096 = vor.u32 1.1754944e-38, %v5095
    %v5097 = vsel %vm5094, %v5096, %v5092
    %v5098 = vmul.f32 1.0, %v5097
    %v5099 = vrcp.pop %v5082
    %v5100 = vmul.f32 %v5082, %v5099
    %v5101 = vsub.f32 1.0, %v5100
    %v5102 = vmul.f32 %v5099, %v5101
    %v5103 = vadd.f32 %v5099, %v5102
    %vm5104 = vweird.f32 %v5082
    %vm5105 = vweird.f32 %v5099
    %vm5106 = vmor %vm5104, %vm5105
    %v5107 = vsel %vm5106, %v5099, %v5103
    %v5108 = vand.u32 2147483647, %v5082
    %vm5109 = vcmp.eq.f32.partialorder %v5108, 8.507059e+37
    %v5110 = vand.u32 %v5082, 2147483648
    %v5111 = vor.u32 1.1754944e-38, %v5110
    %v5112 = vsel %vm5109, %v5111, %v5107
    %v5113 = vmul.f32 1.0, %v5112
    %v5114 = vrcp.pop %v5083
    %v5115 = vmul.f32 %v5083, %v5114
    %v5116 = vsub.f32 1.0, %v5115
    %v5117 = vmul.f32 %v5114, %v5116
    %v5118 = vadd.f32 %v5114, %v5117
    %vm5119 = vweird.f32 %v5083
    %vm5120 = vweird.f32 %v5114
    %vm5121 = vmor %vm5119, %vm5120
    %v5122 = vsel %vm5121, %v5114, %v5118
    %v5123 = vand.u32 2147483647, %v5083
    %vm5124 = vcmp.eq.f32.partialorder %v5123, 8.507059e+37
    %v5125 = vand.u32 %v5083, 2147483648
    %v5126 = vor.u32 1.1754944e-38, %v5125
    %v5127 = vsel %vm5124, %v5126, %v5122
    %v5128 = vmul.f32 1.0, %v5127
    %v5129 = vtanh.pop %v5071
    %v5130 = vmul.f32 %v5113, %v4974
    %v5131 = vmul.f32 %v5098, %v5129
    %v5132 = vadd.f32 %v5130, %v5131
    %v5133 = vtanh.pop %v5132
    %v5134 = vmul.f32 %v5128, %v5133
    %vm5135 = vcmp.eq.s32.totalorder %v127, 4
    %v5136 = vsel %vm5135, 1, 0
    %5137 = vset.pattern.permute.xlu0 0
    %5138 = vperm.xlu0 %5137, %v5136
    %v5139 = vpop.permute.xlu0 %5138
    %vm5140 = vcmp.eq.s32.totalorder %v5139, 1
    %v5141 = vsel %vm5140, %v5134, %v4983
    %v5142 = vld [vmem:[%s1280] sm:$0xff]
    %v5143 = vld [vmem:[%s1280 + $0x8] sm:$0xff]
    %v5144 = vld [vmem:[%s1280 + $0x10] sm:$0xff]
    %v5145 = vld [vmem:[%s1280 + $0x18] sm:$0xff]
    %5146 = vmatpush.msra.mxu0 %v4510
    %5147 = vmatpush.msra.mxu0 %v4506
    %5148 = vmatpush.msra.mxu0 %v4502
    %5149 = vmatpush.msra.mxu0 %v4498
    %5150 = vmatpush.msra.mxu0 %v4494
    %5151 = vmatpush.msra.mxu0 %v4490
    %5152 = vmatpush.msra.mxu0 %v4486
    %5153 = vmatpush.msra.mxu0 %v4482
    %5154 = vmatpush.msra.mxu0 %v4478
    %5155 = vmatpush.msra.mxu0 %v4474
    %5156 = vmatpush.msra.mxu0 %v4470
    %5157 = vmatpush.msra.mxu0 %v4466
    %5158 = vmatpush.msra.mxu0 %v4462
    %5159 = vmatpush.msra.mxu0 %v4458
    %5160 = vmatpush.msra.mxu0 %v4454
    %5161 = vmatpush.msra.mxu0 %v4450
    %5162 = vmatmul.f32.gmra.mxu0 %v5134
    %v5163 = vpop.f32.mrf.mxu0
    %v5164 = vadd.f32 0.0, %v5163
    %5165 = vdwg.mxu0
    %5166 = vmatpush.msra.mxu0 %v4511
    %5167 = vmatpush.msra.mxu0 %v4507
    %5168 = vmatpush.msra.mxu0 %v4503
    %5169 = vmatpush.msra.mxu0 %v4499
    %5170 = vmatpush.msra.mxu0 %v4495
    %5171 = vmatpush.msra.mxu0 %v4491
    %5172 = vmatpush.msra.mxu0 %v4487
    %5173 = vmatpush.msra.mxu0 %v4483
    %5174 = vmatpush.msra.mxu0 %v4479
    %5175 = vmatpush.msra.mxu0 %v4475
    %5176 = vmatpush.msra.mxu0 %v4471
    %5177 = vmatpush.msra.mxu0 %v4467
    %5178 = vmatpush.msra.mxu0 %v4463
    %5179 = vmatpush.msra.mxu0 %v4459
    %5180 = vmatpush.msra.mxu0 %v4455
    %5181 = vmatpush.msra.mxu0 %v4451
    %5182 = vmatmul.f32.gmra.mxu0 %v5134
    %v5183 = vpop.f32.mrf.mxu0
    %v5184 = vadd.f32 0.0, %v5183
    %5185 = vdwg.mxu0
    %5186 = vmatpush.msra.mxu0 %v4512
    %5187 = vmatpush.msra.mxu0 %v4508
    %5188 = vmatpush.msra.mxu0 %v4504
    %5189 = vmatpush.msra.mxu0 %v4500
    %5190 = vmatpush.msra.mxu0 %v4496
    %5191 = vmatpush.msra.mxu0 %v4492
    %5192 = vmatpush.msra.mxu0 %v4488
    %5193 = vmatpush.msra.mxu0 %v4484
    %5194 = vmatpush.msra.mxu0 %v4480
    %5195 = vmatpush.msra.mxu0 %v4476
    %5196 = vmatpush.msra.mxu0 %v4472
    %5197 = vmatpush.msra.mxu0 %v4468
    %5198 = vmatpush.msra.mxu0 %v4464
    %5199 = vmatpush.msra.mxu0 %v4460
    %5200 = vmatpush.msra.mxu0 %v4456
    %5201 = vmatpush.msra.mxu0 %v4452
    %5202 = vmatmul.f32.gmra.mxu0 %v5134
    %v5203 = vpop.f32.mrf.mxu0
    %v5204 = vadd.f32 0.0, %v5203
    %5205 = vdwg.mxu0
    %5206 = vmatpush.msra.mxu0 %v4513
    %5207 = vmatpush.msra.mxu0 %v4509
    %5208 = vmatpush.msra.mxu0 %v4505
    %5209 = vmatpush.msra.mxu0 %v4501
    %5210 = vmatpush.msra.mxu0 %v4497
    %5211 = vmatpush.msra.mxu0 %v4493
    %5212 = vmatpush.msra.mxu0 %v4489
    %5213 = vmatpush.msra.mxu0 %v4485
    %5214 = vmatpush.msra.mxu0 %v4481
    %5215 = vmatpush.msra.mxu0 %v4477
    %5216 = vmatpush.msra.mxu0 %v4473
    %5217 = vmatpush.msra.mxu0 %v4469
    %5218 = vmatpush.msra.mxu0 %v4465
    %5219 = vmatpush.msra.mxu0 %v4461
    %5220 = vmatpush.msra.mxu0 %v4457
    %5221 = vmatpush.msra.mxu0 %v4453
    %5222 = vmatmul.f32.gmra.mxu0 %v5134
    %v5223 = vpop.f32.mrf.mxu0
    %v5224 = vadd.f32 0.0, %v5223
    %5225 = vdwg.mxu0
    %v5226 = vadd.f32 %v5142, %v5164
    %v5227 = vadd.f32 %v5143, %v5184
    %v5228 = vadd.f32 %v5144, %v5204
    %v5229 = vadd.f32 %v5145, %v5224
    %v5230 = vxor.u32 %v5226, 2147483648
    %v5231 = vxor.u32 %v5227, 2147483648
    %v5232 = vxor.u32 %v5228, 2147483648
    %v5233 = vmul.f32 %v5230, 1.442695
    %v5234 = vpow.pop %v5233
    %v5235 = vmul.f32 %v5231, 1.442695
    %v5236 = vpow.pop %v5235
    %v5237 = vmul.f32 %v5232, 1.442695
    %v5238 = vpow.pop %v5237
    %v5239 = vadd.f32 %v5234, 1.0
    %v5240 = vadd.f32 %v5236, 1.0
    %v5241 = vadd.f32 %v5238, 1.0
    %v5242 = vrcp.pop %v5239
    %v5243 = vmul.f32 %v5239, %v5242
    %v5244 = vsub.f32 1.0, %v5243
    %v5245 = vmul.f32 %v5242, %v5244
    %v5246 = vadd.f32 %v5242, %v5245
    %vm5247 = vweird.f32 %v5239
    %vm5248 = vweird.f32 %v5242
    %vm5249 = vmor %vm5247, %vm5248
    %v5250 = vsel %vm5249, %v5242, %v5246
    %v5251 = vand.u32 2147483647, %v5239
    %vm5252 = vcmp.eq.f32.partialorder %v5251, 8.507059e+37
    %v5253 = vand.u32 %v5239, 2147483648
    %v5254 = vor.u32 1.1754944e-38, %v5253
    %v5255 = vsel %vm5252, %v5254, %v5250
    %v5256 = vmul.f32 1.0, %v5255
    %v5257 = vrcp.pop %v5240
    %v5258 = vmul.f32 %v5240, %v5257
    %v5259 = vsub.f32 1.0, %v5258
    %v5260 = vmul.f32 %v5257, %v5259
    %v5261 = vadd.f32 %v5257, %v5260
    %vm5262 = vweird.f32 %v5240
    %vm5263 = vweird.f32 %v5257
    %vm5264 = vmor %vm5262, %vm5263
    %v5265 = vsel %vm5264, %v5257, %v5261
    %v5266 = vand.u32 2147483647, %v5240
    %vm5267 = vcmp.eq.f32.partialorder %v5266, 8.507059e+37
    %v5268 = vand.u32 %v5240, 2147483648
    %v5269 = vor.u32 1.1754944e-38, %v5268
    %v5270 = vsel %vm5267, %v5269, %v5265
    %v5271 = vmul.f32 1.0, %v5270
    %v5272 = vrcp.pop %v5241
    %v5273 = vmul.f32 %v5241, %v5272
    %v5274 = vsub.f32 1.0, %v5273
    %v5275 = vmul.f32 %v5272, %v5274
    %v5276 = vadd.f32 %v5272, %v5275
    %vm5277 = vweird.f32 %v5241
    %vm5278 = vweird.f32 %v5272
    %vm5279 = vmor %vm5277, %vm5278
    %v5280 = vsel %vm5279, %v5272, %v5276
    %v5281 = vand.u32 2147483647, %v5241
    %vm5282 = vcmp.eq.f32.partialorder %v5281, 8.507059e+37
    %v5283 = vand.u32 %v5241, 2147483648
    %v5284 = vor.u32 1.1754944e-38, %v5283
    %v5285 = vsel %vm5282, %v5284, %v5280
    %v5286 = vmul.f32 1.0, %v5285
    %v5287 = vtanh.pop %v5229
    %v5288 = vmul.f32 %v5271, %v5132
    %v5289 = vmul.f32 %v5256, %v5287
    %v5290 = vadd.f32 %v5288, %v5289
    %v5291 = vtanh.pop %v5290
    %v5292 = vmul.f32 %v5286, %v5291
    %vm5293 = vcmp.eq.s32.totalorder %v127, 5
    %v5294 = vsel %vm5293, 1, 0
    %5295 = vset.pattern.permute.xlu0 0
    %5296 = vperm.xlu0 %5295, %v5294
    %v5297 = vpop.permute.xlu0 %5296
    %vm5298 = vcmp.eq.s32.totalorder %v5297, 1
    %v5299 = vsel %vm5298, %v5292, %v5141
    %v5300 = vld [vmem:[%s1500] sm:$0xff]
    %v5301 = vld [vmem:[%s1500 + $0x8] sm:$0xff]
    %v5302 = vld [vmem:[%s1500 + $0x10] sm:$0xff]
    %v5303 = vld [vmem:[%s1500 + $0x18] sm:$0xff]
    %5304 = vmatpush.msra.mxu0 %v4510
    %5305 = vmatpush.msra.mxu0 %v4506
    %5306 = vmatpush.msra.mxu0 %v4502
    %5307 = vmatpush.msra.mxu0 %v4498
    %5308 = vmatpush.msra.mxu0 %v4494
    %5309 = vmatpush.msra.mxu0 %v4490
    %5310 = vmatpush.msra.mxu0 %v4486
    %5311 = vmatpush.msra.mxu0 %v4482
    %5312 = vmatpush.msra.mxu0 %v4478
    %5313 = vmatpush.msra.mxu0 %v4474
    %5314 = vmatpush.msra.mxu0 %v4470
    %5315 = vmatpush.msra.mxu0 %v4466
    %5316 = vmatpush.msra.mxu0 %v4462
    %5317 = vmatpush.msra.mxu0 %v4458
    %5318 = vmatpush.msra.mxu0 %v4454
    %5319 = vmatpush.msra.mxu0 %v4450
    %5320 = vmatmul.f32.gmra.mxu0 %v5292
    %v5321 = vpop.f32.mrf.mxu0
    %v5322 = vadd.f32 0.0, %v5321
    %5323 = vdwg.mxu0
    %5324 = vmatpush.msra.mxu0 %v4511
    %5325 = vmatpush.msra.mxu0 %v4507
    %5326 = vmatpush.msra.mxu0 %v4503
    %5327 = vmatpush.msra.mxu0 %v4499
    %5328 = vmatpush.msra.mxu0 %v4495
    %5329 = vmatpush.msra.mxu0 %v4491
    %5330 = vmatpush.msra.mxu0 %v4487
    %5331 = vmatpush.msra.mxu0 %v4483
    %5332 = vmatpush.msra.mxu0 %v4479
    %5333 = vmatpush.msra.mxu0 %v4475
    %5334 = vmatpush.msra.mxu0 %v4471
    %5335 = vmatpush.msra.mxu0 %v4467
    %5336 = vmatpush.msra.mxu0 %v4463
    %5337 = vmatpush.msra.mxu0 %v4459
    %5338 = vmatpush.msra.mxu0 %v4455
    %5339 = vmatpush.msra.mxu0 %v4451
    %5340 = vmatmul.f32.gmra.mxu0 %v5292
    %v5341 = vpop.f32.mrf.mxu0
    %v5342 = vadd.f32 0.0, %v5341
    %5343 = vdwg.mxu0
    %5344 = vmatpush.msra.mxu0 %v4512
    %5345 = vmatpush.msra.mxu0 %v4508
    %5346 = vmatpush.msra.mxu0 %v4504
    %5347 = vmatpush.msra.mxu0 %v4500
    %5348 = vmatpush.msra.mxu0 %v4496
    %5349 = vmatpush.msra.mxu0 %v4492
    %5350 = vmatpush.msra.mxu0 %v4488
    %5351 = vmatpush.msra.mxu0 %v4484
    %5352 = vmatpush.msra.mxu0 %v4480
    %5353 = vmatpush.msra.mxu0 %v4476
    %5354 = vmatpush.msra.mxu0 %v4472
    %5355 = vmatpush.msra.mxu0 %v4468
    %5356 = vmatpush.msra.mxu0 %v4464
    %5357 = vmatpush.msra.mxu0 %v4460
    %5358 = vmatpush.msra.mxu0 %v4456
    %5359 = vmatpush.msra.mxu0 %v4452
    %5360 = vmatmul.f32.gmra.mxu0 %v5292
    %v5361 = vpop.f32.mrf.mxu0
    %v5362 = vadd.f32 0.0, %v5361
    %5363 = vdwg.mxu0
    %5364 = vmatpush.msra.mxu0 %v4513
    %5365 = vmatpush.msra.mxu0 %v4509
    %5366 = vmatpush.msra.mxu0 %v4505
    %5367 = vmatpush.msra.mxu0 %v4501
    %5368 = vmatpush.msra.mxu0 %v4497
    %5369 = vmatpush.msra.mxu0 %v4493
    %5370 = vmatpush.msra.mxu0 %v4489
    %5371 = vmatpush.msra.mxu0 %v4485
    %5372 = vmatpush.msra.mxu0 %v4481
    %5373 = vmatpush.msra.mxu0 %v4477
    %5374 = vmatpush.msra.mxu0 %v4473
    %5375 = vmatpush.msra.mxu0 %v4469
    %5376 = vmatpush.msra.mxu0 %v4465
    %5377 = vmatpush.msra.mxu0 %v4461
    %5378 = vmatpush.msra.mxu0 %v4457
    %5379 = vmatpush.msra.mxu0 %v4453
    %5380 = vmatmul.f32.gmra.mxu0 %v5292
    %v5381 = vpop.f32.mrf.mxu0
    %v5382 = vadd.f32 0.0, %v5381
    %5383 = vdwg.mxu0
    %v5384 = vadd.f32 %v5300, %v5322
    %v5385 = vadd.f32 %v5301, %v5342
    %v5386 = vadd.f32 %v5302, %v5362
    %v5387 = vadd.f32 %v5303, %v5382
    %v5388 = vxor.u32 %v5384, 2147483648
    %v5389 = vxor.u32 %v5385, 2147483648
    %v5390 = vxor.u32 %v5386, 2147483648
    %v5391 = vmul.f32 %v5388, 1.442695
    %v5392 = vpow.pop %v5391
    %v5393 = vmul.f32 %v5389, 1.442695
    %v5394 = vpow.pop %v5393
    %v5395 = vmul.f32 %v5390, 1.442695
    %v5396 = vpow.pop %v5395
    %v5397 = vadd.f32 %v5392, 1.0
    %v5398 = vadd.f32 %v5394, 1.0
    %v5399 = vadd.f32 %v5396, 1.0
    %v5400 = vrcp.pop %v5397
    %v5401 = vmul.f32 %v5397, %v5400
    %v5402 = vsub.f32 1.0, %v5401
    %v5403 = vmul.f32 %v5400, %v5402
    %v5404 = vadd.f32 %v5400, %v5403
    %vm5405 = vweird.f32 %v5397
    %vm5406 = vweird.f32 %v5400
    %vm5407 = vmor %vm5405, %vm5406
    %v5408 = vsel %vm5407, %v5400, %v5404
    %v5409 = vand.u32 2147483647, %v5397
    %vm5410 = vcmp.eq.f32.partialorder %v5409, 8.507059e+37
    %v5411 = vand.u32 %v5397, 2147483648
    %v5412 = vor.u32 1.1754944e-38, %v5411
    %v5413 = vsel %vm5410, %v5412, %v5408
    %v5414 = vmul.f32 1.0, %v5413
    %v5415 = vrcp.pop %v5398
    %v5416 = vmul.f32 %v5398, %v5415
    %v5417 = vsub.f32 1.0, %v5416
    %v5418 = vmul.f32 %v5415, %v5417
    %v5419 = vadd.f32 %v5415, %v5418
    %vm5420 = vweird.f32 %v5398
    %vm5421 = vweird.f32 %v5415
    %vm5422 = vmor %vm5420, %vm5421
    %v5423 = vsel %vm5422, %v5415, %v5419
    %v5424 = vand.u32 2147483647, %v5398
    %vm5425 = vcmp.eq.f32.partialorder %v5424, 8.507059e+37
    %v5426 = vand.u32 %v5398, 2147483648
    %v5427 = vor.u32 1.1754944e-38, %v5426
    %v5428 = vsel %vm5425, %v5427, %v5423
    %v5429 = vmul.f32 1.0, %v5428
    %v5430 = vrcp.pop %v5399
    %v5431 = vmul.f32 %v5399, %v5430
    %v5432 = vsub.f32 1.0, %v5431
    %v5433 = vmul.f32 %v5430, %v5432
    %v5434 = vadd.f32 %v5430, %v5433
    %vm5435 = vweird.f32 %v5399
    %vm5436 = vweird.f32 %v5430
    %vm5437 = vmor %vm5435, %vm5436
    %v5438 = vsel %vm5437, %v5430, %v5434
    %v5439 = vand.u32 2147483647, %v5399
    %vm5440 = vcmp.eq.f32.partialorder %v5439, 8.507059e+37
    %v5441 = vand.u32 %v5399, 2147483648
    %v5442 = vor.u32 1.1754944e-38, %v5441
    %v5443 = vsel %vm5440, %v5442, %v5438
    %v5444 = vmul.f32 1.0, %v5443
    %v5445 = vtanh.pop %v5387
    %v5446 = vmul.f32 %v5429, %v5290
    %v5447 = vmul.f32 %v5414, %v5445
    %v5448 = vadd.f32 %v5446, %v5447
    %v5449 = vtanh.pop %v5448
    %v5450 = vmul.f32 %v5444, %v5449
    %vm5451 = vcmp.eq.s32.totalorder %v127, 6
    %v5452 = vsel %vm5451, 1, 0
    %5453 = vset.pattern.permute.xlu0 0
    %5454 = vperm.xlu0 %5453, %v5452
    %v5455 = vpop.permute.xlu0 %5454
    %vm5456 = vcmp.eq.s32.totalorder %v5455, 1
    %v5457 = vsel %vm5456, %v5450, %v5299
    %v5458 = vld [vmem:[%s1720] sm:$0xff]
    %v5459 = vld [vmem:[%s1720 + $0x8] sm:$0xff]
    %v5460 = vld [vmem:[%s1720 + $0x10] sm:$0xff]
    %v5461 = vld [vmem:[%s1720 + $0x18] sm:$0xff]
    %5462 = vmatpush.msra.mxu0 %v4510
    %5463 = vmatpush.msra.mxu0 %v4506
    %5464 = vmatpush.msra.mxu0 %v4502
    %5465 = vmatpush.msra.mxu0 %v4498
    %5466 = vmatpush.msra.mxu0 %v4494
    %5467 = vmatpush.msra.mxu0 %v4490
    %5468 = vmatpush.msra.mxu0 %v4486
    %5469 = vmatpush.msra.mxu0 %v4482
    %5470 = vmatpush.msra.mxu0 %v4478
    %5471 = vmatpush.msra.mxu0 %v4474
    %5472 = vmatpush.msra.mxu0 %v4470
    %5473 = vmatpush.msra.mxu0 %v4466
    %5474 = vmatpush.msra.mxu0 %v4462
    %5475 = vmatpush.msra.mxu0 %v4458
    %5476 = vmatpush.msra.mxu0 %v4454
    %5477 = vmatpush.msra.mxu0 %v4450
    %5478 = vmatmul.f32.gmra.mxu0 %v5450
    %v5479 = vpop.f32.mrf.mxu0
    %v5480 = vadd.f32 0.0, %v5479
    %5481 = vdwg.mxu0
    %5482 = vmatpush.msra.mxu0 %v4511
    %5483 = vmatpush.msra.mxu0 %v4507
    %5484 = vmatpush.msra.mxu0 %v4503
    %5485 = vmatpush.msra.mxu0 %v4499
    %5486 = vmatpush.msra.mxu0 %v4495
    %5487 = vmatpush.msra.mxu0 %v4491
    %5488 = vmatpush.msra.mxu0 %v4487
    %5489 = vmatpush.msra.mxu0 %v4483
    %5490 = vmatpush.msra.mxu0 %v4479
    %5491 = vmatpush.msra.mxu0 %v4475
    %5492 = vmatpush.msra.mxu0 %v4471
    %5493 = vmatpush.msra.mxu0 %v4467
    %5494 = vmatpush.msra.mxu0 %v4463
    %5495 = vmatpush.msra.mxu0 %v4459
    %5496 = vmatpush.msra.mxu0 %v4455
    %5497 = vmatpush.msra.mxu0 %v4451
    %5498 = vmatmul.f32.gmra.mxu0 %v5450
    %v5499 = vpop.f32.mrf.mxu0
    %v5500 = vadd.f32 0.0, %v5499
    %5501 = vdwg.mxu0
    %5502 = vmatpush.msra.mxu0 %v4512
    %5503 = vmatpush.msra.mxu0 %v4508
    %5504 = vmatpush.msra.mxu0 %v4504
    %5505 = vmatpush.msra.mxu0 %v4500
    %5506 = vmatpush.msra.mxu0 %v4496
    %5507 = vmatpush.msra.mxu0 %v4492
    %5508 = vmatpush.msra.mxu0 %v4488
    %5509 = vmatpush.msra.mxu0 %v4484
    %5510 = vmatpush.msra.mxu0 %v4480
    %5511 = vmatpush.msra.mxu0 %v4476
    %5512 = vmatpush.msra.mxu0 %v4472
    %5513 = vmatpush.msra.mxu0 %v4468
    %5514 = vmatpush.msra.mxu0 %v4464
    %5515 = vmatpush.msra.mxu0 %v4460
    %5516 = vmatpush.msra.mxu0 %v4456
    %5517 = vmatpush.msra.mxu0 %v4452
    %5518 = vmatmul.f32.gmra.mxu0 %v5450
    %v5519 = vpop.f32.mrf.mxu0
    %v5520 = vadd.f32 0.0, %v5519
    %5521 = vdwg.mxu0
    %5522 = vmatpush.msra.mxu0 %v4513
    %5523 = vmatpush.msra.mxu0 %v4509
    %5524 = vmatpush.msra.mxu0 %v4505
    %5525 = vmatpush.msra.mxu0 %v4501
    %5526 = vmatpush.msra.mxu0 %v4497
    %5527 = vmatpush.msra.mxu0 %v4493
    %5528 = vmatpush.msra.mxu0 %v4489
    %5529 = vmatpush.msra.mxu0 %v4485
    %5530 = vmatpush.msra.mxu0 %v4481
    %5531 = vmatpush.msra.mxu0 %v4477
    %5532 = vmatpush.msra.mxu0 %v4473
    %5533 = vmatpush.msra.mxu0 %v4469
    %5534 = vmatpush.msra.mxu0 %v4465
    %5535 = vmatpush.msra.mxu0 %v4461
    %5536 = vmatpush.msra.mxu0 %v4457
    %5537 = vmatpush.msra.mxu0 %v4453
    %5538 = vmatmul.f32.gmra.mxu0 %v5450
    %v5539 = vpop.f32.mrf.mxu0
    %v5540 = vadd.f32 0.0, %v5539
    %5541 = vdwg.mxu0
    %v5542 = vadd.f32 %v5458, %v5480
    %v5543 = vadd.f32 %v5459, %v5500
    %v5544 = vadd.f32 %v5460, %v5520
    %v5545 = vadd.f32 %v5461, %v5540
    %v5546 = vxor.u32 %v5542, 2147483648
    %v5547 = vxor.u32 %v5543, 2147483648
    %v5548 = vxor.u32 %v5544, 2147483648
    %v5549 = vmul.f32 %v5546, 1.442695
    %v5550 = vpow.pop %v5549
    %v5551 = vmul.f32 %v5547, 1.442695
    %v5552 = vpow.pop %v5551
    %v5553 = vmul.f32 %v5548, 1.442695
    %v5554 = vpow.pop %v5553
    %v5555 = vadd.f32 %v5550, 1.0
    %v5556 = vadd.f32 %v5552, 1.0
    %v5557 = vadd.f32 %v5554, 1.0
    %v5558 = vrcp.pop %v5555
    %v5559 = vmul.f32 %v5555, %v5558
    %v5560 = vsub.f32 1.0, %v5559
    %v5561 = vmul.f32 %v5558, %v5560
    %v5562 = vadd.f32 %v5558, %v5561
    %vm5563 = vweird.f32 %v5555
    %vm5564 = vweird.f32 %v5558
    %vm5565 = vmor %vm5563, %vm5564
    %v5566 = vsel %vm5565, %v5558, %v5562
    %v5567 = vand.u32 2147483647, %v5555
    %vm5568 = vcmp.eq.f32.partialorder %v5567, 8.507059e+37
    %v5569 = vand.u32 %v5555, 2147483648
    %v5570 = vor.u32 1.1754944e-38, %v5569
    %v5571 = vsel %vm5568, %v5570, %v5566
    %v5572 = vmul.f32 1.0, %v5571
    %v5573 = vrcp.pop %v5556
    %v5574 = vmul.f32 %v5556, %v5573
    %v5575 = vsub.f32 1.0, %v5574
    %v5576 = vmul.f32 %v5573, %v5575
    %v5577 = vadd.f32 %v5573, %v5576
    %vm5578 = vweird.f32 %v5556
    %vm5579 = vweird.f32 %v5573
    %vm5580 = vmor %vm5578, %vm5579
    %v5581 = vsel %vm5580, %v5573, %v5577
    %v5582 = vand.u32 2147483647, %v5556
    %vm5583 = vcmp.eq.f32.partialorder %v5582, 8.507059e+37
    %v5584 = vand.u32 %v5556, 2147483648
    %v5585 = vor.u32 1.1754944e-38, %v5584
    %v5586 = vsel %vm5583, %v5585, %v5581
    %v5587 = vmul.f32 1.0, %v5586
    %v5588 = vrcp.pop %v5557
    %v5589 = vmul.f32 %v5557, %v5588
    %v5590 = vsub.f32 1.0, %v5589
    %v5591 = vmul.f32 %v5588, %v5590
    %v5592 = vadd.f32 %v5588, %v5591
    %vm5593 = vweird.f32 %v5557
    %vm5594 = vweird.f32 %v5588
    %vm5595 = vmor %vm5593, %vm5594
    %v5596 = vsel %vm5595, %v5588, %v5592
    %v5597 = vand.u32 2147483647, %v5557
    %vm5598 = vcmp.eq.f32.partialorder %v5597, 8.507059e+37
    %v5599 = vand.u32 %v5557, 2147483648
    %v5600 = vor.u32 1.1754944e-38, %v5599
    %v5601 = vsel %vm5598, %v5600, %v5596
    %v5602 = vmul.f32 1.0, %v5601
    %v5603 = vtanh.pop %v5545
    %v5604 = vmul.f32 %v5587, %v5448
    %v5605 = vmul.f32 %v5572, %v5603
    %v5606 = vadd.f32 %v5604, %v5605
    %v5607 = vtanh.pop %v5606
    %v5608 = vmul.f32 %v5602, %v5607
    %vm5609 = vcmp.eq.s32.totalorder %v127, 7
    %v5610 = vsel %vm5609, 1, 0
    %5611 = vset.pattern.permute.xlu0 0
    %5612 = vperm.xlu0 %5611, %v5610
    %v5613 = vpop.permute.xlu0 %5612
    %vm5614 = vcmp.eq.s32.totalorder %v5613, 1
    %v5615 = vsel %vm5614, %v5608, %v5457
    %v5616 = vld [vmem:[%s1940] sm:$0xff]
    %v5617 = vld [vmem:[%s1940 + $0x8] sm:$0xff]
    %v5618 = vld [vmem:[%s1940 + $0x10] sm:$0xff]
    %v5619 = vld [vmem:[%s1940 + $0x18] sm:$0xff]
    %5620 = vmatpush.msra.mxu0 %v4510
    %5621 = vmatpush.msra.mxu0 %v4506
    %5622 = vmatpush.msra.mxu0 %v4502
    %5623 = vmatpush.msra.mxu0 %v4498
    %5624 = vmatpush.msra.mxu0 %v4494
    %5625 = vmatpush.msra.mxu0 %v4490
    %5626 = vmatpush.msra.mxu0 %v4486
    %5627 = vmatpush.msra.mxu0 %v4482
    %5628 = vmatpush.msra.mxu0 %v4478
    %5629 = vmatpush.msra.mxu0 %v4474
    %5630 = vmatpush.msra.mxu0 %v4470
    %5631 = vmatpush.msra.mxu0 %v4466
    %5632 = vmatpush.msra.mxu0 %v4462
    %5633 = vmatpush.msra.mxu0 %v4458
    %5634 = vmatpush.msra.mxu0 %v4454
    %5635 = vmatpush.msra.mxu0 %v4450
    %5636 = vmatmul.f32.gmra.mxu0 %v5608
    %v5637 = vpop.f32.mrf.mxu0
    %v5638 = vadd.f32 0.0, %v5637
    %5639 = vdwg.mxu0
    %5640 = vmatpush.msra.mxu0 %v4511
    %5641 = vmatpush.msra.mxu0 %v4507
    %5642 = vmatpush.msra.mxu0 %v4503
    %5643 = vmatpush.msra.mxu0 %v4499
    %5644 = vmatpush.msra.mxu0 %v4495
    %5645 = vmatpush.msra.mxu0 %v4491
    %5646 = vmatpush.msra.mxu0 %v4487
    %5647 = vmatpush.msra.mxu0 %v4483
    %5648 = vmatpush.msra.mxu0 %v4479
    %5649 = vmatpush.msra.mxu0 %v4475
    %5650 = vmatpush.msra.mxu0 %v4471
    %5651 = vmatpush.msra.mxu0 %v4467
    %5652 = vmatpush.msra.mxu0 %v4463
    %5653 = vmatpush.msra.mxu0 %v4459
    %5654 = vmatpush.msra.mxu0 %v4455
    %5655 = vmatpush.msra.mxu0 %v4451
    %5656 = vmatmul.f32.gmra.mxu0 %v5608
    %v5657 = vpop.f32.mrf.mxu0
    %v5658 = vadd.f32 0.0, %v5657
    %5659 = vdwg.mxu0
    %5660 = vmatpush.msra.mxu0 %v4512
    %5661 = vmatpush.msra.mxu0 %v4508
    %5662 = vmatpush.msra.mxu0 %v4504
    %5663 = vmatpush.msra.mxu0 %v4500
    %5664 = vmatpush.msra.mxu0 %v4496
    %5665 = vmatpush.msra.mxu0 %v4492
    %5666 = vmatpush.msra.mxu0 %v4488
    %5667 = vmatpush.msra.mxu0 %v4484
    %5668 = vmatpush.msra.mxu0 %v4480
    %5669 = vmatpush.msra.mxu0 %v4476
    %5670 = vmatpush.msra.mxu0 %v4472
    %5671 = vmatpush.msra.mxu0 %v4468
    %5672 = vmatpush.msra.mxu0 %v4464
    %5673 = vmatpush.msra.mxu0 %v4460
    %5674 = vmatpush.msra.mxu0 %v4456
    %5675 = vmatpush.msra.mxu0 %v4452
    %5676 = vmatmul.f32.gmra.mxu0 %v5608
    %v5677 = vpop.f32.mrf.mxu0
    %v5678 = vadd.f32 0.0, %v5677
    %5679 = vdwg.mxu0
    %5680 = vmatpush.msra.mxu0 %v4513
    %5681 = vmatpush.msra.mxu0 %v4509
    %5682 = vmatpush.msra.mxu0 %v4505
    %5683 = vmatpush.msra.mxu0 %v4501
    %5684 = vmatpush.msra.mxu0 %v4497
    %5685 = vmatpush.msra.mxu0 %v4493
    %5686 = vmatpush.msra.mxu0 %v4489
    %5687 = vmatpush.msra.mxu0 %v4485
    %5688 = vmatpush.msra.mxu0 %v4481
    %5689 = vmatpush.msra.mxu0 %v4477
    %5690 = vmatpush.msra.mxu0 %v4473
    %5691 = vmatpush.msra.mxu0 %v4469
    %5692 = vmatpush.msra.mxu0 %v4465
    %5693 = vmatpush.msra.mxu0 %v4461
    %5694 = vmatpush.msra.mxu0 %v4457
    %5695 = vmatpush.msra.mxu0 %v4453
    %5696 = vmatmul.f32.gmra.mxu0 %v5608
    %v5697 = vpop.f32.mrf.mxu0
    %v5698 = vadd.f32 0.0, %v5697
    %5699 = vdwg.mxu0
    %v5700 = vadd.f32 %v5616, %v5638
    %v5701 = vadd.f32 %v5617, %v5658
    %v5702 = vadd.f32 %v5618, %v5678
    %v5703 = vadd.f32 %v5619, %v5698
    %v5704 = vxor.u32 %v5700, 2147483648
    %v5705 = vxor.u32 %v5701, 2147483648
    %v5706 = vxor.u32 %v5702, 2147483648
    %v5707 = vmul.f32 %v5704, 1.442695
    %v5708 = vpow.pop %v5707
    %v5709 = vmul.f32 %v5705, 1.442695
    %v5710 = vpow.pop %v5709
    %v5711 = vmul.f32 %v5706, 1.442695
    %v5712 = vpow.pop %v5711
    %v5713 = vadd.f32 %v5708, 1.0
    %v5714 = vadd.f32 %v5710, 1.0
    %v5715 = vadd.f32 %v5712, 1.0
    %v5716 = vrcp.pop %v5713
    %v5717 = vmul.f32 %v5713, %v5716
    %v5718 = vsub.f32 1.0, %v5717
    %v5719 = vmul.f32 %v5716, %v5718
    %v5720 = vadd.f32 %v5716, %v5719
    %vm5721 = vweird.f32 %v5713
    %vm5722 = vweird.f32 %v5716
    %vm5723 = vmor %vm5721, %vm5722
    %v5724 = vsel %vm5723, %v5716, %v5720
    %v5725 = vand.u32 2147483647, %v5713
    %vm5726 = vcmp.eq.f32.partialorder %v5725, 8.507059e+37
    %v5727 = vand.u32 %v5713, 2147483648
    %v5728 = vor.u32 1.1754944e-38, %v5727
    %v5729 = vsel %vm5726, %v5728, %v5724
    %v5730 = vmul.f32 1.0, %v5729
    %v5731 = vrcp.pop %v5714
    %v5732 = vmul.f32 %v5714, %v5731
    %v5733 = vsub.f32 1.0, %v5732
    %v5734 = vmul.f32 %v5731, %v5733
    %v5735 = vadd.f32 %v5731, %v5734
    %vm5736 = vweird.f32 %v5714
    %vm5737 = vweird.f32 %v5731
    %vm5738 = vmor %vm5736, %vm5737
    %v5739 = vsel %vm5738, %v5731, %v5735
    %v5740 = vand.u32 2147483647, %v5714
    %vm5741 = vcmp.eq.f32.partialorder %v5740, 8.507059e+37
    %v5742 = vand.u32 %v5714, 2147483648
    %v5743 = vor.u32 1.1754944e-38, %v5742
    %v5744 = vsel %vm5741, %v5743, %v5739
    %v5745 = vmul.f32 1.0, %v5744
    %v5746 = vrcp.pop %v5715
    %v5747 = vmul.f32 %v5715, %v5746
    %v5748 = vsub.f32 1.0, %v5747
    %v5749 = vmul.f32 %v5746, %v5748
    %v5750 = vadd.f32 %v5746, %v5749
    %vm5751 = vweird.f32 %v5715
    %vm5752 = vweird.f32 %v5746
    %vm5753 = vmor %vm5751, %vm5752
    %v5754 = vsel %vm5753, %v5746, %v5750
    %v5755 = vand.u32 2147483647, %v5715
    %vm5756 = vcmp.eq.f32.partialorder %v5755, 8.507059e+37
    %v5757 = vand.u32 %v5715, 2147483648
    %v5758 = vor.u32 1.1754944e-38, %v5757
    %v5759 = vsel %vm5756, %v5758, %v5754
    %v5760 = vmul.f32 1.0, %v5759
    %v5761 = vtanh.pop %v5703
    %v5762 = vmul.f32 %v5745, %v5606
    %v5763 = vmul.f32 %v5730, %v5761
    %v5764 = vadd.f32 %v5762, %v5763
    %v5765 = vtanh.pop %v5764
    %v5766 = vmul.f32 %v5760, %v5765
    %vm5767 = vcmp.eq.s32.totalorder %v127, 8
    %v5768 = vsel %vm5767, 1, 0
    %5769 = vset.pattern.permute.xlu0 0
    %5770 = vperm.xlu0 %5769, %v5768
    %v5771 = vpop.permute.xlu0 %5770
    %vm5772 = vcmp.eq.s32.totalorder %v5771, 1
    %v5773 = vsel %vm5772, %v5766, %v5615
    %v5774 = vld [vmem:[#allocation13] sm:$0xff]
    %v5775 = vld [vmem:[#allocation13 + $0x8] sm:$0xff]
    %v5776 = vld [vmem:[#allocation13 + $0x10] sm:$0xff]
    %v5777 = vld [vmem:[#allocation13 + $0x18] sm:$0xff]
    %v5778 = vld [vmem:[#allocation13 + $0x20] sm:$0xff]
    %v5779 = vld [vmem:[#allocation13 + $0x28] sm:$0xff]
    %v5780 = vld [vmem:[#allocation13 + $0x30] sm:$0xff]
    %v5781 = vld [vmem:[#allocation13 + $0x38] sm:$0xff]
    %v5782 = vld [vmem:[#allocation13 + $0x40] sm:$0xff]
    %v5783 = vld [vmem:[#allocation13 + $0x48] sm:$0xff]
    %v5784 = vld [vmem:[#allocation13 + $0x50] sm:$0xff]
    %v5785 = vld [vmem:[#allocation13 + $0x58] sm:$0xff]
    %v5786 = vld [vmem:[#allocation13 + $0x60] sm:$0xff]
    %v5787 = vld [vmem:[#allocation13 + $0x68] sm:$0xff]
    %v5788 = vld [vmem:[#allocation13 + $0x70] sm:$0xff]
    %v5789 = vld [vmem:[#allocation13 + $0x78] sm:$0xff]
    %v5790 = vld [vmem:[%s8] sm:$0x1]
    %v5792 = vperm.slane %v5790, 0
    %5794 = vmatpush.msra.mxu0 %v5789
    %5795 = vmatpush.msra.mxu0 %v5788
    %5796 = vmatpush.msra.mxu0 %v5787
    %5797 = vmatpush.msra.mxu0 %v5786
    %5798 = vmatpush.msra.mxu0 %v5785
    %5799 = vmatpush.msra.mxu0 %v5784
    %5800 = vmatpush.msra.mxu0 %v5783
    %5801 = vmatpush.msra.mxu0 %v5782
    %5802 = vmatpush.msra.mxu0 %v5781
    %5803 = vmatpush.msra.mxu0 %v5780
    %5804 = vmatpush.msra.mxu0 %v5779
    %5805 = vmatpush.msra.mxu0 %v5778
    %5806 = vmatpush.msra.mxu0 %v5777
    %5807 = vmatpush.msra.mxu0 %v5776
    %5808 = vmatpush.msra.mxu0 %v5775
    %5809 = vmatpush.msra.mxu0 %v5774
    %5810 = vmatmul.f32.gmra.mxu0 %v5773
    %v5811 = vpop.f32.mrf.mxu0
    %v5812 = vadd.f32 %v5792, %v5811
    %5813 = vdwg.mxu0
    %5814 = vst [vmem:[#allocation15] sm:$0xff] %v5812
    // Predicated region
    $region62: #{tpu_custom_call.1} parent=1 // pred_check
      _
    $region63: #{tpu_custom_call.1} parent=1 // pred_check_branch
      %5816 = sbr.rel (0) target = $region65
    $region64: #{tpu_custom_call.1} parent=1 // pred_region
      %5818 = vsyncadd [#allocation6], 0
      %s5820 = sshll.u32 [#allocation15], 4
      %s5821 = int_to_ptr.vmem [resolvable:$true] %s5820
      %s5822 = sshll.u32 %s9, 4
      %s5823 = int_to_ptr.hbm [resolvable:$true] %s5822
      %5825 = dma.vmem_to_hbm [thread:$0]  %s5821, 128, %s5823, [#allocation6]
    $region65: #{tpu_custom_call.1} parent=1 // pred_fallthru
      _
    // Predicated region
    $region66: #{tpu_custom_call.1} parent=1 // pred_check
      _
    $region67: #{tpu_custom_call.1} parent=1 // pred_check_branch
      %5827 = sbr.rel (0) target = $region69
    $region68: #{tpu_custom_call.1} parent=1 // pred_region
      %5829 = dma.done [#allocation6], 128
    $region69: #{tpu_custom_call.1} parent=1 // pred_fallthru
      _
    %5830 = vsyncpa [#allocation5], 1
    %5831 = vsyncpa [#allocation8], 1
    %5832 = vsyncpa [#allocation11], 1
    %5833 = vsyncpa [#allocation14], 1
    %5834 = vsyncpa [#allocation6], 1

</llo_original>
